<compile_context>
chip_gen: v6e
topology: v6e:2x2x1
jax: 0.10.0
libtpu: 0.0.40
codegen_flags: <defaults>
</compile_context>

<pallas_src>
import functools

import jax
import jax.numpy as jnp
from jax.experimental import pallas as pl
from jax.experimental.pallas import tpu as pltpu

EPS = 1e-5  # PyTorch LayerNorm default eps


def _layernorm(x, w, b):
    mu = jnp.mean(x, axis=-1, keepdims=True)
    xc = x - mu
    var = jnp.mean(xc * xc, axis=-1, keepdims=True)
    return xc * jax.lax.rsqrt(var + EPS) * w + b


# ----------------------------------------------------------------------------
# Kernel 1: tokenizer 1x1x1 conv (bias=False) + ReLU as a row-tiled matmul
# ----------------------------------------------------------------------------
def tokenizer_kernel(x_ref, w_ref, o_ref):
    y = jnp.dot(x_ref[...].astype(jnp.bfloat16), w_ref[...],
                preferred_element_type=jnp.float32)
    o_ref[...] = jnp.maximum(y, 0.0).astype(o_ref.dtype)


def tokenizer(x_cl, w_bf16, *, row_tile=512):
    R, Cin = x_cl.shape
    E = w_bf16.shape[1]
    tile = R if R <= row_tile else row_tile
    Rp = pl.cdiv(R, tile) * tile
    xp = x_cl if Rp == R else jnp.pad(x_cl, ((0, Rp - R), (0, 0)))
    out = pl.pallas_call(
        tokenizer_kernel,
        out_shape=jax.ShapeDtypeStruct((Rp, E), jnp.float32),
        grid=(Rp // tile,),
        in_specs=[pl.BlockSpec((tile, Cin), lambda i: (i, 0)),
                  pl.BlockSpec((Cin, E), lambda i: (0, 0))],
        out_specs=pl.BlockSpec((tile, E), lambda i: (i, 0)),
        compiler_params=pltpu.CompilerParams(dimension_semantics=("parallel",)),
    )(xp, w_bf16)
    return out if Rp == R else out[:R]


# ----------------------------------------------------------------------------
# Kernel 2: fused transformer stack (all encoder layers + final LayerNorm).
# Grid = (num_batch_tiles, L): batch-tile axis parallel, layer axis arbitrary;
# the (B*N, C) activation is resident in a VMEM scratch across all layers.
# ----------------------------------------------------------------------------
def encoder_stack_kernel(x_ref, pre_w, pre_b, wqkv, wout, n1_w, n1_b,
                         w1, b1, w2, b2, fin_w, fin_b, o_ref, act_ref,
                         *, num_heads, tokens_per_sample):
    layer = pl.program_id(1)

    @pl.when(layer == 0)
    def _():
        act_ref[...] = x_ref[...]          # (R, C) f32, R = batch_tile * N

    R, C = act_ref.shape
    hd = C // num_heads
    nseq = tokens_per_sample
    nb = R // nseq                          # samples folded into this block

    # --- attention branch: src + attn(pre_norm(src)) ---
    # qkv Linear and MHA in_proj are pre-folded (q columns pre-scaled by 1/sqrt(hd)).
    h = _layernorm(act_ref[...], pre_w[0], pre_b[0]).astype(jnp.bfloat16)
    qkv = jnp.dot(h, wqkv[0], preferred_element_type=jnp.float32)       # (R, 3C)
    qkv = qkv.astype(jnp.bfloat16).reshape(nb, nseq, 3 * C)             # cast once

    # Per-head attention (per-sample via batched dot_general over the nb axis);
    # head contexts are concatenated along lanes and projected with ONE K=C matmul.
    # TODO(synk): the 32-lane-offset head slices below could be removed entirely by
    # packing wqkv per head offline; at num_heads=4 the slicing cost is minor.
    ctx_heads = []
    for hix in range(num_heads):
        lo = hix * hd
        qh = qkv[:, :, lo:lo + hd]                                      # (nb, N, hd)
        kh = qkv[:, :, C + lo:C + lo + hd]
        vh = qkv[:, :, 2 * C + lo:2 * C + lo + hd]
        s = jnp.einsum('bqd,bkd->bqk', qh, kh,
                       preferred_element_type=jnp.float32)              # (nb, N, N)
        s = s - jnp.max(s, axis=-1, keepdims=True)
        p = jnp.exp(s)
        p = p * pl.reciprocal(jnp.sum(p, axis=-1, keepdims=True), approx=True)
        ctx = jnp.einsum('bqk,bkd->bqd', p.astype(jnp.bfloat16), vh,
                         preferred_element_type=jnp.float32)            # (nb, N, hd)
        ctx_heads.append(ctx.astype(jnp.bfloat16))
    ctx_all = jnp.concatenate(ctx_heads, axis=-1).reshape(R, C)         # (R, C) bf16
    attn = jnp.dot(ctx_all, wout[0], preferred_element_type=jnp.float32)

    x = act_ref[...] + attn        # re-load residual right before the add

    # --- MLP branch: src = norm1(src); src = src + linear2(gelu(linear1(src))) ---
    x = _layernorm(x, n1_w[0], n1_b[0])
    hmid = jnp.dot(x.astype(jnp.bfloat16), w1[0],
                   preferred_element_type=jnp.float32) + b1[0]
    # TODO(synk): tanh-approximate GELU (EUP) instead of PyTorch's exact-erf F.gelu.
    hmid = jax.nn.gelu(hmid, approximate=True)
    ff = jnp.dot(hmid.astype(jnp.bfloat16), w2[0],
                 preferred_element_type=jnp.float32) + b2[0]
    y = x + ff
    act_ref[...] = y

    @pl.when(layer == pl.num_programs(1) - 1)
    def _():
        # fused final LayerNorm; output block is written back to HBM only once.
        o_ref[...] = _layernorm(y, fin_w[...], fin_b[...]).astype(o_ref.dtype)


def encoder_stack(seq2d, kp, *, num_heads, tokens_per_sample, num_batch_tiles=1):
    R, C = seq2d.shape
    L = kp["wqkv"].shape[0]
    Hf = kp["w1"].shape[-1]
    assert R % (num_batch_tiles * tokens_per_sample) == 0
    Rt = R // num_batch_tiles

    kern = functools.partial(encoder_stack_kernel, num_heads=num_heads,
                             tokens_per_sample=tokens_per_sample)

    xmap = lambda bt, l: (bt, 0)          # activation / output, resident over layers
    lmap = lambda bt, l: (l, 0, 0)        # per-layer stacked weights
    cmap = lambda bt, l: (0, 0)           # constants (final LayerNorm)

    in_specs = [
        pl.BlockSpec((Rt, C), xmap),
        pl.BlockSpec((1, 1, C), lmap),        # pre_norm weight
        pl.BlockSpec((1, 1, C), lmap),        # pre_norm bias
        pl.BlockSpec((1, C, 3 * C), lmap),    # folded qkv weight (bf16)
        pl.BlockSpec((1, C, C), lmap),        # out_proj weight (bf16)
        pl.BlockSpec((1, 1, C), lmap),        # norm1 weight
        pl.BlockSpec((1, 1, C), lmap),        # norm1 bias
        pl.BlockSpec((1, C, Hf), lmap),       # linear1 weight (bf16)
        pl.BlockSpec((1, 1, Hf), lmap),       # linear1 bias
        pl.BlockSpec((1, Hf, C), lmap),       # linear2 weight (bf16)
        pl.BlockSpec((1, 1, C), lmap),        # linear2 bias
        pl.BlockSpec((1, C), cmap),           # final norm weight
        pl.BlockSpec((1, C), cmap),           # final norm bias
    ]

    # Explicit VMEM budget (double-buffered in/out activations + scratch +
    # double-buffered per-layer bf16 weights), clamped to v7x's 64 MiB ceiling.
    act_bytes = Rt * C * 4
    w_bytes = 2 * (C * 3 * C + C * C + C * Hf + Hf * C)
    vmem_est = 5 * act_bytes + 2 * w_bytes + (1 << 21)
    vmem_limit = int(min(max(2 * vmem_est, 32 * 2 ** 20), 64 * 2 ** 20))

    return pl.pallas_call(
        kern,
        out_shape=jax.ShapeDtypeStruct((R, C), jnp.float32),
        grid=(num_batch_tiles, L),
        in_specs=in_specs,
        out_specs=pl.BlockSpec((Rt, C), xmap),
        scratch_shapes=[pltpu.VMEM((Rt, C), jnp.float32)],
        compiler_params=pltpu.CompilerParams(
            dimension_semantics=("parallel", "arbitrary"),
            vmem_limit_bytes=vmem_limit),
    )(seq2d, kp["pre_w"], kp["pre_b"], kp["wqkv"], kp["wout"], kp["n1_w"],
      kp["n1_b"], kp["w1"], kp["b1"], kp["w2"], kp["b2"],
      kp["norm_w"], kp["norm_b"])


# ----------------------------------------------------------------------------
# Kernel 3: final Linear (seq_len -> vol^3), bias fused, lane-padded output
# ----------------------------------------------------------------------------
def linear_bias_kernel(x_ref, w_ref, b_ref, o_ref):
    y = jnp.dot(x_ref[...].astype(jnp.bfloat16), w_ref[...],
                preferred_element_type=jnp.float32)
    o_ref[...] = (y + b_ref[...]).astype(o_ref.dtype)


def final_linear(xv, w_bf16, b, *, row_tile=512):
    R, N = xv.shape
    Np = w_bf16.shape[1]
    tile = R if R <= row_tile else row_tile
    Rp = pl.cdiv(R, tile) * tile
    xp = xv if Rp == R else jnp.pad(xv, ((0, Rp - R), (0, 0)))
    out = pl.pallas_call(
        linear_bias_kernel,
        out_shape=jax.ShapeDtypeStruct((Rp, Np), jnp.float32),
        grid=(Rp // tile,),
        in_specs=[pl.BlockSpec((tile, N), lambda i: (i, 0)),
                  pl.BlockSpec((N, Np), lambda i: (0, 0)),
                  pl.BlockSpec((1, Np), lambda i: (0, 0))],
        out_specs=pl.BlockSpec((tile, Np), lambda i: (i, 0)),
        compiler_params=pltpu.CompilerParams(dimension_semantics=("parallel",)),
    )(xp, w_bf16, b)
    return out if Rp == R else out[:R]


# ----------------------------------------------------------------------------
# Forward
# ----------------------------------------------------------------------------
def cct_forward(x, kp, *, num_heads, vol_size, num_batch_tiles=1):
    B, Cin, H, W, D = x.shape
    E = kp["conv_w"].shape[1]

    # --- Tokenizer: 1x1x1 conv + ReLU, channels-last matmul ---
    x_cl = jnp.transpose(x, (0, 2, 3, 4, 1)).reshape(B * H * W * D, Cin)
    y = tokenizer(x_cl, kp["conv_w"])
    # conv padding=(0,0,1) on depth -> zero tokens (bias=False, ReLU(0)=0).
    # TODO(synk): fold this depth pad into the tokenizer out_spec (interior-only
    # writes into a pre-padded buffer) to save one HBM pass over the token tensor.
    y = y.reshape(B, H, W, D, E)
    y = jnp.pad(y, ((0, 0), (0, 0), (0, 0), (1, 1), (0, 0)))
    N = H * W * (D + 2)
    seq = y.reshape(B * N, E)          # == Flatten(2,4).transpose(-2,-1), batch folded

    # --- Fused transformer stack + final LayerNorm ---
    # On v7x use num_batch_tiles=2 so both TensorCores get a parallel batch tile.
    seq = encoder_stack(seq, kp, num_heads=num_heads, tokens_per_sample=N,
                        num_batch_tiles=num_batch_tiles)

    # --- x.view(B, C, N) is a contiguous reinterpretation, then Linear(N, vol^3) ---
    # TODO(synk): the original model hardcodes Linear(640, vol^3) (assumes 8x8x8
    # volume -> N = 640); here it is sized to the actual N.
    # TODO(synk): fusing this (B,N,C)->(B*C,N) reinterpretation + matmul into the
    # encoder epilogue needs an in-kernel non-transpose reshape; kept in XLA glue.
    xv = seq.reshape(B * E, N)
    out = final_linear(xv, kp["final_w"], kp["final_b"])
    out = out[:, :vol_size ** 3]      # drop lane padding
    return out.reshape(B, E, vol_size, vol_size, vol_size)


# ----------------------------------------------------------------------------
# Deterministic synthetic parameters (raw, PyTorch-like) + kernel packing
# ----------------------------------------------------------------------------
def init_params(key, Cin, C, Hf, num_layers, N, vol3):
    keys = jax.random.split(key, 2 + num_layers)

    def trunc(k, shape, std=0.02):
        return std * jax.random.truncated_normal(k, -2.0, 2.0, shape, jnp.float32)

    params = {
        "conv_w_t": trunc(keys[0], (Cin, C), 0.05),   # conv weight, transposed
        "norm_w": jnp.ones((1, C), jnp.float32),
        "norm_b": jnp.zeros((1, C), jnp.float32),
        "final_w_t": trunc(keys[1], (N, vol3)),
        "final_b": jnp.zeros((1, vol3), jnp.float32),
    }
    layers = []
    for i in range(num_layers):
        ks = jax.random.split(keys[2 + i], 7)
        layers.append(dict(
            pre_w=jnp.ones((1, C), jnp.float32), pre_b=jnp.zeros((1, C), jnp.float32),
            wqkv_t=trunc(ks[0], (C, 3 * C)),          # qkv Linear (no bias)
            wq_t=trunc(ks[1], (C, C)),                # MHA in_proj q
            wk_t=trunc(ks[2], (C, C)),                # MHA in_proj k
            wv_t=trunc(ks[3], (C, C)),                # MHA in_proj v
            wout_t=trunc(ks[4], (C, C)),              # MHA out_proj (no bias)
            n1_w=jnp.ones((1, C), jnp.float32), n1_b=jnp.zeros((1, C), jnp.float32),
            w1_t=trunc(ks[5], (C, Hf)), b1=jnp.zeros((1, Hf), jnp.float32),
            w2_t=trunc(ks[6], (Hf, C)), b2=jnp.zeros((1, C), jnp.float32),
        ))
    params["layers"] = layers
    return params


def pack_params(raw, num_heads):
    # TODO(synk): optional int8 weight streaming (per-channel scales) for v5e/v6e.
    layers = raw["layers"]
    C = layers[0]["wqkv_t"].shape[0]
    hd = C // num_heads
    scale = float(hd) ** -0.5

    def fold_qkv(lp):
        # (x @ Wqkv)[:, s] @ Win == x @ (Wqkv[:, s] @ Win); fold MHA 1/sqrt(hd) into q.
        wq = (lp["wqkv_t"][:, :C] @ lp["wq_t"]) * scale
        wk = lp["wqkv_t"][:, C:2 * C] @ lp["wk_t"]
        wv = lp["wqkv_t"][:, 2 * C:] @ lp["wv_t"]
        return jnp.concatenate([wq, wk, wv], axis=1)          # (C, 3C)

    def stack(name):
        return jnp.stack([lp[name] for lp in layers])

    vol3 = raw["final_w_t"].shape[1]
    Np = ((vol3 + 127) // 128) * 128                          # lane-dense output
    fin_w = jnp.pad(raw["final_w_t"], ((0, 0), (0, Np - vol3)))
    fin_b = jnp.pad(raw["final_b"], ((0, 0), (0, Np - vol3)))

    return {
        "conv_w": raw["conv_w_t"].astype(jnp.bfloat16),
        "pre_w": stack("pre_w"), "pre_b": stack("pre_b"),
        "wqkv": jnp.stack([fold_qkv(lp) for lp in layers]).astype(jnp.bfloat16),
        "wout": stack("wout_t").astype(jnp.bfloat16),
        "n1_w": stack("n1_w"), "n1_b": stack("n1_b"),
        "w1": stack("w1_t").astype(jnp.bfloat16), "b1": stack("b1"),
        "w2": stack("w2_t").astype(jnp.bfloat16), "b2": stack("b2"),
        "norm_w": raw["norm_w"], "norm_b": raw["norm_b"],
        "final_w": fin_w.astype(jnp.bfloat16), "final_b": fin_b,
    }


if __name__ == "__main__":
    # small shapes consistent with CCT defaults (scaled down):
    #   vol_size=4, n_input_channels=embedding_dim=128, num_heads=4, num_layers=2
    B, Cin, vol = 2, 128, 4
    C, num_heads, num_layers, mlp_ratio = 128, 4, 2, 4.0
    H = W = D = vol
    N = H * W * (D + 2)            # depth padded by conv padding=(0,0,1)
    Hf = int(C * mlp_ratio)

    key = jax.random.PRNGKey(0)
    kx, kparam = jax.random.split(key)
    x = jax.random.normal(kx, (B, Cin, H, W, D), jnp.float32)
    raw = init_params(kparam, Cin, C, Hf, num_layers, N, vol ** 3)
    params = pack_params(raw, num_heads)

    fwd = jax.jit(functools.partial(cct_forward, num_heads=num_heads,
                                    vol_size=vol, num_batch_tiles=1))
    out = jax.block_until_ready(fwd(x, params))
    assert out.shape == (B, C, vol, vol, vol), out.shape
    assert jnp.all(jnp.isfinite(out))
    print("KERNEL_OK")
</pallas_src>

<mosaic_0001>
module attributes {stable_mosaic.version = 11 : i64} {
  func.func @tokenizer_kernel(%arg0: i32, %arg1: memref<128x128xf32, #tpu.memory_space<vmem>>, %arg2: memref<128x128xbf16, #tpu.memory_space<vmem>>, %arg3: memref<128x128xf32, #tpu.memory_space<vmem>>) attributes {dimension_semantics = [#tpu.dimension_semantics<parallel>], iteration_bounds = array<i64: 1>, scalar_prefetch = 0 : i64, scratch_operands = 0 : i64, tpu.core_type = #tpu.core_type<tc>, window_params = [{transform_indices = @transform_0, window_bounds = array<i64: 128, 128>}, {pipeline_mode = #tpu.pipeline_mode<synchronous>, transform_indices = @transform_1, window_bounds = array<i64: 128, 128>}, {transform_indices = @transform_2, window_bounds = array<i64: 128, 128>}]} {
    %c0 = arith.constant 0 : index
    %c0_0 = arith.constant 0 : index
    %0 = vector.load %arg1[%c0, %c0_0] : memref<128x128xf32, #tpu.memory_space<vmem>>, vector<128x128xf32>
    %1 = arith.truncf %0 : vector<128x128xf32> to vector<128x128xbf16>
    %c0_1 = arith.constant 0 : index
    %c0_2 = arith.constant 0 : index
    %2 = vector.load %arg2[%c0_1, %c0_2] : memref<128x128xbf16, #tpu.memory_space<vmem>>, vector<128x128xbf16>
    %cst = arith.constant dense<0.000000e+00> : vector<128x128xf32>
    %3 = tpu.matmul %1, %2, %cst {dimension_numbers = #tpu.dot_dimension_numbers<[1], [0], [0], [1], [0, 0, 1, 1], [], []>} : vector<128x128xbf16>, vector<128x128xbf16>, vector<128x128xf32> -> vector<128x128xf32>
    %cst_3 = arith.constant 0.000000e+00 : f32
    %4 = vector.broadcast %cst_3 : f32 to vector<128x128xf32>
    %5 = arith.maximumf %3, %4 : vector<128x128xf32>
    %c0_4 = arith.constant 0 : index
    %c0_5 = arith.constant 0 : index
    %6 = vector.load %arg3[%c0_4, %c0_5] : memref<128x128xf32, #tpu.memory_space<vmem>>, vector<128x128xf32>
    tpu.vector_store %arg3[%c0_4, %c0_5], %5 {strides = array<i32>} : memref<128x128xf32, #tpu.memory_space<vmem>>, vector<128x128xf32>,
    return
  }
  func.func @transform_0(%arg0: i32) -> (i32, i32) {
    %c0_i32 = arith.constant 0 : i32
    %c0_i32_0 = arith.constant 0 : i32
    return %arg0, %c0_i32 : i32, i32
  }
  func.func @transform_1(%arg0: i32) -> (i32, i32) {
    %c0_i32 = arith.constant 0 : i32
    %c0_i32_0 = arith.constant 0 : i32
    %c0_i32_1 = arith.constant 0 : i32
    return %c0_i32, %c0_i32_0 : i32, i32
  }
  func.func @transform_2(%arg0: i32) -> (i32, i32) {
    %c0_i32 = arith.constant 0 : i32
    %c0_i32_0 = arith.constant 0 : i32
    return %arg0, %c0_i32 : i32, i32
  }
}

module attributes {stable_mosaic.version = 11 : i64} {
  func.func @encoder_stack_kernel(%arg0: i32, %arg1: i32, %arg2: memref<192x128xf32, #tpu.memory_space<vmem>>, %arg3: memref<1x1x128xf32, #tpu.memory_space<vmem>>, %arg4: memref<1x1x128xf32, #tpu.memory_space<vmem>>, %arg5: memref<1x128x384xbf16, #tpu.memory_space<vmem>>, %arg6: memref<1x128x128xbf16, #tpu.memory_space<vmem>>, %arg7: memref<1x1x128xf32, #tpu.memory_space<vmem>>, %arg8: memref<1x1x128xf32, #tpu.memory_space<vmem>>, %arg9: memref<1x128x512xbf16, #tpu.memory_space<vmem>>, %arg10: memref<1x1x512xf32, #tpu.memory_space<vmem>>, %arg11: memref<1x512x128xbf16, #tpu.memory_space<vmem>>, %arg12: memref<1x1x128xf32, #tpu.memory_space<vmem>>, %arg13: memref<1x128xf32, #tpu.memory_space<vmem>>, %arg14: memref<1x128xf32, #tpu.memory_space<vmem>>, %arg15: memref<192x128xf32, #tpu.memory_space<vmem>>, %arg16: memref<192x128xf32, #tpu.memory_space<vmem>>) attributes {dimension_semantics = [#tpu.dimension_semantics<parallel>, #tpu.dimension_semantics<arbitrary>], iteration_bounds = array<i64: 1, 2>, scalar_prefetch = 0 : i64, scratch_operands = 1 : i64, tpu.core_type = #tpu.core_type<tc>, window_params = [{transform_indices = @transform_0, window_bounds = array<i64: 192, 128>}, {transform_indices = @transform_1, window_bounds = array<i64: 1, 1, 128>}, {transform_indices = @transform_2, window_bounds = array<i64: 1, 1, 128>}, {transform_indices = @transform_3, window_bounds = array<i64: 1, 128, 384>}, {transform_indices = @transform_4, window_bounds = array<i64: 1, 128, 128>}, {transform_indices = @transform_5, window_bounds = array<i64: 1, 1, 128>}, {transform_indices = @transform_6, window_bounds = array<i64: 1, 1, 128>}, {transform_indices = @transform_7, window_bounds = array<i64: 1, 128, 512>}, {transform_indices = @transform_8, window_bounds = array<i64: 1, 1, 512>}, {transform_indices = @transform_9, window_bounds = array<i64: 1, 512, 128>}, {transform_indices = @transform_10, window_bounds = array<i64: 1, 1, 128>}, {pipeline_mode = #tpu.pipeline_mode<synchronous>, transform_indices = @transform_11, window_bounds = array<i64: 1, 128>}, {pipeline_mode = #tpu.pipeline_mode<synchronous>, transform_indices = @transform_12, window_bounds = array<i64: 1, 128>}, {transform_indices = @transform_13, window_bounds = array<i64: 192, 128>}]} {
    %c0_i32 = arith.constant 0 : i32
    %0 = arith.cmpi eq, %arg1, %c0_i32 : i32
    %1 = arith.extui %0 : i1 to i32
    %c0_i32_0 = arith.constant 0 : i32
    %2 = arith.cmpi ne, %1, %c0_i32_0 : i32
    scf.if %2 {
      %c0_70 = arith.constant 0 : index
      %c0_71 = arith.constant 0 : index
      %167 = vector.load %arg2[%c0_70, %c0_71] : memref<192x128xf32, #tpu.memory_space<vmem>>, vector<192x128xf32>
      %c0_72 = arith.constant 0 : index
      %c0_73 = arith.constant 0 : index
      %168 = vector.load %arg16[%c0_72, %c0_73] : memref<192x128xf32, #tpu.memory_space<vmem>>, vector<192x128xf32>
      tpu.vector_store %arg16[%c0_72, %c0_73], %167 {strides = array<i32>} : memref<192x128xf32, #tpu.memory_space<vmem>>, vector<192x128xf32>,
    } else {
    }
    %c0 = arith.constant 0 : index
    %c0_1 = arith.constant 0 : index
    %3 = vector.load %arg16[%c0, %c0_1] : memref<192x128xf32, #tpu.memory_space<vmem>>, vector<192x128xf32>
    %c0_2 = arith.constant 0 : index
    %c0_3 = arith.constant 0 : index
    %c0_4 = arith.constant 0 : index
    %4 = vector.load %arg3[%c0_2, %c0_3, %c0_4] : memref<1x1x128xf32, #tpu.memory_space<vmem>>, vector<1x1x128xf32>
    %5 = vector.shape_cast %4 : vector<1x1x128xf32> to vector<1x128xf32>
    %c0_5 = arith.constant 0 : index
    %c0_6 = arith.constant 0 : index
    %c0_7 = arith.constant 0 : index
    %6 = vector.load %arg4[%c0_5, %c0_6, %c0_7] : memref<1x1x128xf32, #tpu.memory_space<vmem>>, vector<1x1x128xf32>
    %7 = vector.shape_cast %6 : vector<1x1x128xf32> to vector<1x128xf32>
    %cst = arith.constant dense<0.000000e+00> : vector<192xf32>
    %8 = vector.multi_reduction <add>, %3, %cst [1] : vector<192x128xf32> to vector<192xf32>
    %9 = vector.shape_cast %8 : vector<192xf32> to vector<192x1xf32>
    %cst_8 = arith.constant 1.280000e+02 : f32
    %10 = vector.broadcast %cst_8 : f32 to vector<192x1xf32>
    %11 = arith.divf %9, %10 : vector<192x1xf32>
    %12 = vector.broadcast %11 : vector<192x1xf32> to vector<192x128xf32>
    %13 = arith.subf %3, %12 : vector<192x128xf32>
    %14 = arith.mulf %13, %13 : vector<192x128xf32>
    %cst_9 = arith.constant dense<0.000000e+00> : vector<192xf32>
    %15 = vector.multi_reduction <add>, %14, %cst_9 [1] : vector<192x128xf32> to vector<192xf32>
    %16 = vector.shape_cast %15 : vector<192xf32> to vector<192x1xf32>
    %cst_10 = arith.constant 1.280000e+02 : f32
    %17 = vector.broadcast %cst_10 : f32 to vector<192x1xf32>
    %18 = arith.divf %16, %17 : vector<192x1xf32>
    %cst_11 = arith.constant 9.99999974E-6 : f32
    %19 = vector.broadcast %cst_11 : f32 to vector<192x1xf32>
    %20 = arith.addf %18, %19 : vector<192x1xf32>
    %21 = math.rsqrt %20 : vector<192x1xf32>
    %22 = vector.broadcast %21 : vector<192x1xf32> to vector<192x128xf32>
    %23 = arith.mulf %13, %22 : vector<192x128xf32>
    %24 = vector.broadcast %5 : vector<1x128xf32> to vector<192x128xf32>
    %25 = arith.mulf %23, %24 : vector<192x128xf32>
    %26 = vector.broadcast %7 : vector<1x128xf32> to vector<192x128xf32>
    %27 = arith.addf %25, %26 : vector<192x128xf32>
    %28 = arith.truncf %27 : vector<192x128xf32> to vector<192x128xbf16>
    %c0_12 = arith.constant 0 : index
    %c0_13 = arith.constant 0 : index
    %c0_14 = arith.constant 0 : index
    %29 = vector.load %arg5[%c0_12, %c0_13, %c0_14] : memref<1x128x384xbf16, #tpu.memory_space<vmem>>, vector<1x128x384xbf16>
    %30 = vector.shape_cast %29 : vector<1x128x384xbf16> to vector<128x384xbf16>
    %cst_15 = arith.constant dense<0.000000e+00> : vector<192x384xf32>
    %31 = tpu.matmul %28, %30, %cst_15 {dimension_numbers = #tpu.dot_dimension_numbers<[1], [0], [0], [1], [0, 0, 1, 1], [], []>} : vector<192x128xbf16>, vector<128x384xbf16>, vector<192x384xf32> -> vector<192x384xf32>
    %32 = arith.truncf %31 : vector<192x384xf32> to vector<192x384xbf16>
    %33 = vector.shape_cast %32 : vector<192x384xbf16> to vector<2x96x384xbf16>
    %34 = vector.extract_strided_slice %33 {offsets = [0, 0, 0], sizes = [2, 96, 32], strides = [1, 1, 1]} : vector<2x96x384xbf16> to vector<2x96x32xbf16>
    %35 = vector.extract_strided_slice %33 {offsets = [0, 0, 128], sizes = [2, 96, 32], strides = [1, 1, 1]} : vector<2x96x384xbf16> to vector<2x96x32xbf16>
    %36 = vector.extract_strided_slice %33 {offsets = [0, 0, 256], sizes = [2, 96, 32], strides = [1, 1, 1]} : vector<2x96x384xbf16> to vector<2x96x32xbf16>
    "tpu.trace_start"() <{level = 10 : i32, message = "bqd,bkd->bqk"}> : () -> ()
    %cst_16 = arith.constant dense<0.000000e+00> : vector<2x96x96xf32>
    %37 = tpu.matmul %34, %35, %cst_16 {dimension_numbers = #tpu.dot_dimension_numbers<[2], [2], [1], [1], [0, 0, 0, 1, 1, 1], [0], [0]>} : vector<2x96x32xbf16>, vector<2x96x32xbf16>, vector<2x96x96xf32> -> vector<2x96x96xf32>
    "tpu.trace_stop"() : () -> ()
    %cst_17 = arith.constant dense<0xFF800000> : vector<2x96xf32>
    %38 = vector.multi_reduction <maximumf>, %37, %cst_17 [2] : vector<2x96x96xf32> to vector<2x96xf32>
    %39 = vector.shape_cast %38 : vector<2x96xf32> to vector<2x96x1xf32>
    %40 = vector.broadcast %39 : vector<2x96x1xf32> to vector<2x96x96xf32>
    %41 = arith.subf %37, %40 : vector<2x96x96xf32>
    %42 = math.exp %41 : vector<2x96x96xf32>
    %cst_18 = arith.constant dense<0.000000e+00> : vector<2x96xf32>
    %43 = vector.multi_reduction <add>, %42, %cst_18 [2] : vector<2x96x96xf32> to vector<2x96xf32>
    %44 = vector.shape_cast %43 : vector<2x96xf32> to vector<2x96x1xf32>
    %45 = tpu.reciprocal %44 {approx = true} : vector<2x96x1xf32> -> vector<2x96x1xf32>
    %46 = vector.broadcast %45 : vector<2x96x1xf32> to vector<2x96x96xf32>
    %47 = arith.mulf %42, %46 : vector<2x96x96xf32>
    %48 = arith.truncf %47 : vector<2x96x96xf32> to vector<2x96x96xbf16>
    "tpu.trace_start"() <{level = 10 : i32, message = "bqk,bkd->bqd"}> : () -> ()
    %cst_19 = arith.constant dense<0.000000e+00> : vector<2x96x32xf32>
    %49 = tpu.matmul %48, %36, %cst_19 {dimension_numbers = #tpu.dot_dimension_numbers<[2], [1], [1], [2], [0, 0, 0, 1, 1, 2], [0], [0]>} : vector<2x96x96xbf16>, vector<2x96x32xbf16>, vector<2x96x32xf32> -> vector<2x96x32xf32>
    "tpu.trace_stop"() : () -> ()
    %50 = arith.truncf %49 : vector<2x96x32xf32> to vector<2x96x32xbf16>
    %51 = vector.extract_strided_slice %33 {offsets = [0, 0, 32], sizes = [2, 96, 32], strides = [1, 1, 1]} : vector<2x96x384xbf16> to vector<2x96x32xbf16>
    %52 = vector.extract_strided_slice %33 {offsets = [0, 0, 160], sizes = [2, 96, 32], strides = [1, 1, 1]} : vector<2x96x384xbf16> to vector<2x96x32xbf16>
    %53 = vector.extract_strided_slice %33 {offsets = [0, 0, 288], sizes = [2, 96, 32], strides = [1, 1, 1]} : vector<2x96x384xbf16> to vector<2x96x32xbf16>
    "tpu.trace_start"() <{level = 10 : i32, message = "bqd,bkd->bqk"}> : () -> ()
    %cst_20 = arith.constant dense<0.000000e+00> : vector<2x96x96xf32>
    %54 = tpu.matmul %51, %52, %cst_20 {dimension_numbers = #tpu.dot_dimension_numbers<[2], [2], [1], [1], [0, 0, 0, 1, 1, 1], [0], [0]>} : vector<2x96x32xbf16>, vector<2x96x32xbf16>, vector<2x96x96xf32> -> vector<2x96x96xf32>
    "tpu.trace_stop"() : () -> ()
    %cst_21 = arith.constant dense<0xFF800000> : vector<2x96xf32>
    %55 = vector.multi_reduction <maximumf>, %54, %cst_21 [2] : vector<2x96x96xf32> to vector<2x96xf32>
    %56 = vector.shape_cast %55 : vector<2x96xf32> to vector<2x96x1xf32>
    %57 = vector.broadcast %56 : vector<2x96x1xf32> to vector<2x96x96xf32>
    %58 = arith.subf %54, %57 : vector<2x96x96xf32>
    %59 = math.exp %58 : vector<2x96x96xf32>
    %cst_22 = arith.constant dense<0.000000e+00> : vector<2x96xf32>
    %60 = vector.multi_reduction <add>, %59, %cst_22 [2] : vector<2x96x96xf32> to vector<2x96xf32>
    %61 = vector.shape_cast %60 : vector<2x96xf32> to vector<2x96x1xf32>
    %62 = tpu.reciprocal %61 {approx = true} : vector<2x96x1xf32> -> vector<2x96x1xf32>
    %63 = vector.broadcast %62 : vector<2x96x1xf32> to vector<2x96x96xf32>
    %64 = arith.mulf %59, %63 : vector<2x96x96xf32>
    %65 = arith.truncf %64 : vector<2x96x96xf32> to vector<2x96x96xbf16>
    "tpu.trace_start"() <{level = 10 : i32, message = "bqk,bkd->bqd"}> : () -> ()
    %cst_23 = arith.constant dense<0.000000e+00> : vector<2x96x32xf32>
    %66 = tpu.matmul %65, %53, %cst_23 {dimension_numbers = #tpu.dot_dimension_numbers<[2], [1], [1], [2], [0, 0, 0, 1, 1, 2], [0], [0]>} : vector<2x96x96xbf16>, vector<2x96x32xbf16>, vector<2x96x32xf32> -> vector<2x96x32xf32>
    "tpu.trace_stop"() : () -> ()
    %67 = arith.truncf %66 : vector<2x96x32xf32> to vector<2x96x32xbf16>
    %68 = vector.extract_strided_slice %33 {offsets = [0, 0, 64], sizes = [2, 96, 32], strides = [1, 1, 1]} : vector<2x96x384xbf16> to vector<2x96x32xbf16>
    %69 = vector.extract_strided_slice %33 {offsets = [0, 0, 192], sizes = [2, 96, 32], strides = [1, 1, 1]} : vector<2x96x384xbf16> to vector<2x96x32xbf16>
    %70 = vector.extract_strided_slice %33 {offsets = [0, 0, 320], sizes = [2, 96, 32], strides = [1, 1, 1]} : vector<2x96x384xbf16> to vector<2x96x32xbf16>
    "tpu.trace_start"() <{level = 10 : i32, message = "bqd,bkd->bqk"}> : () -> ()
    %cst_24 = arith.constant dense<0.000000e+00> : vector<2x96x96xf32>
    %71 = tpu.matmul %68, %69, %cst_24 {dimension_numbers = #tpu.dot_dimension_numbers<[2], [2], [1], [1], [0, 0, 0, 1, 1, 1], [0], [0]>} : vector<2x96x32xbf16>, vector<2x96x32xbf16>, vector<2x96x96xf32> -> vector<2x96x96xf32>
    "tpu.trace_stop"() : () -> ()
    %cst_25 = arith.constant dense<0xFF800000> : vector<2x96xf32>
    %72 = vector.multi_reduction <maximumf>, %71, %cst_25 [2] : vector<2x96x96xf32> to vector<2x96xf32>
    %73 = vector.shape_cast %72 : vector<2x96xf32> to vector<2x96x1xf32>
    %74 = vector.broadcast %73 : vector<2x96x1xf32> to vector<2x96x96xf32>
    %75 = arith.subf %71, %74 : vector<2x96x96xf32>
    %76 = math.exp %75 : vector<2x96x96xf32>
    %cst_26 = arith.constant dense<0.000000e+00> : vector<2x96xf32>
    %77 = vector.multi_reduction <add>, %76, %cst_26 [2] : vector<2x96x96xf32> to vector<2x96xf32>
    %78 = vector.shape_cast %77 : vector<2x96xf32> to vector<2x96x1xf32>
    %79 = tpu.reciprocal %78 {approx = true} : vector<2x96x1xf32> -> vector<2x96x1xf32>
    %80 = vector.broadcast %79 : vector<2x96x1xf32> to vector<2x96x96xf32>
    %81 = arith.mulf %76, %80 : vector<2x96x96xf32>
    %82 = arith.truncf %81 : vector<2x96x96xf32> to vector<2x96x96xbf16>
    "tpu.trace_start"() <{level = 10 : i32, message = "bqk,bkd->bqd"}> : () -> ()
    %cst_27 = arith.constant dense<0.000000e+00> : vector<2x96x32xf32>
    %83 = tpu.matmul %82, %70, %cst_27 {dimension_numbers = #tpu.dot_dimension_numbers<[2], [1], [1], [2], [0, 0, 0, 1, 1, 2], [0], [0]>} : vector<2x96x96xbf16>, vector<2x96x32xbf16>, vector<2x96x32xf32> -> vector<2x96x32xf32>
    "tpu.trace_stop"() : () -> ()
    %84 = arith.truncf %83 : vector<2x96x32xf32> to vector<2x96x32xbf16>
    %85 = vector.extract_strided_slice %33 {offsets = [0, 0, 96], sizes = [2, 96, 32], strides = [1, 1, 1]} : vector<2x96x384xbf16> to vector<2x96x32xbf16>
    %86 = vector.extract_strided_slice %33 {offsets = [0, 0, 224], sizes = [2, 96, 32], strides = [1, 1, 1]} : vector<2x96x384xbf16> to vector<2x96x32xbf16>
    %87 = vector.extract_strided_slice %33 {offsets = [0, 0, 352], sizes = [2, 96, 32], strides = [1, 1, 1]} : vector<2x96x384xbf16> to vector<2x96x32xbf16>
    "tpu.trace_start"() <{level = 10 : i32, message = "bqd,bkd->bqk"}> : () -> ()
    %cst_28 = arith.constant dense<0.000000e+00> : vector<2x96x96xf32>
    %88 = tpu.matmul %85, %86, %cst_28 {dimension_numbers = #tpu.dot_dimension_numbers<[2], [2], [1], [1], [0, 0, 0, 1, 1, 1], [0], [0]>} : vector<2x96x32xbf16>, vector<2x96x32xbf16>, vector<2x96x96xf32> -> vector<2x96x96xf32>
    "tpu.trace_stop"() : () -> ()
    %cst_29 = arith.constant dense<0xFF800000> : vector<2x96xf32>
    %89 = vector.multi_reduction <maximumf>, %88, %cst_29 [2] : vector<2x96x96xf32> to vector<2x96xf32>
    %90 = vector.shape_cast %89 : vector<2x96xf32> to vector<2x96x1xf32>
    %91 = vector.broadcast %90 : vector<2x96x1xf32> to vector<2x96x96xf32>
    %92 = arith.subf %88, %91 : vector<2x96x96xf32>
    %93 = math.exp %92 : vector<2x96x96xf32>
    %cst_30 = arith.constant dense<0.000000e+00> : vector<2x96xf32>
    %94 = vector.multi_reduction <add>, %93, %cst_30 [2] : vector<2x96x96xf32> to vector<2x96xf32>
    %95 = vector.shape_cast %94 : vector<2x96xf32> to vector<2x96x1xf32>
    %96 = tpu.reciprocal %95 {approx = true} : vector<2x96x1xf32> -> vector<2x96x1xf32>
    %97 = vector.broadcast %96 : vector<2x96x1xf32> to vector<2x96x96xf32>
    %98 = arith.mulf %93, %97 : vector<2x96x96xf32>
    %99 = arith.truncf %98 : vector<2x96x96xf32> to vector<2x96x96xbf16>
    "tpu.trace_start"() <{level = 10 : i32, message = "bqk,bkd->bqd"}> : () -> ()
    %cst_31 = arith.constant dense<0.000000e+00> : vector<2x96x32xf32>
    %100 = tpu.matmul %99, %87, %cst_31 {dimension_numbers = #tpu.dot_dimension_numbers<[2], [1], [1], [2], [0, 0, 0, 1, 1, 2], [0], [0]>} : vector<2x96x96xbf16>, vector<2x96x32xbf16>, vector<2x96x32xf32> -> vector<2x96x32xf32>
    "tpu.trace_stop"() : () -> ()
    %101 = arith.truncf %100 : vector<2x96x32xf32> to vector<2x96x32xbf16>
    %102 = tpu.concatenate %50, %67, %84, %101 in 2 : vector<2x96x32xbf16>, vector<2x96x32xbf16>, vector<2x96x32xbf16>, vector<2x96x32xbf16> -> vector<2x96x128xbf16>
    %103 = vector.shape_cast %102 : vector<2x96x128xbf16> to vector<192x128xbf16>
    %c0_32 = arith.constant 0 : index
    %c0_33 = arith.constant 0 : index
    %c0_34 = arith.constant 0 : index
    %104 = vector.load %arg6[%c0_32, %c0_33, %c0_34] : memref<1x128x128xbf16, #tpu.memory_space<vmem>>, vector<1x128x128xbf16>
    %105 = vector.shape_cast %104 : vector<1x128x128xbf16> to vector<128x128xbf16>
    %cst_35 = arith.constant dense<0.000000e+00> : vector<192x128xf32>
    %106 = tpu.matmul %103, %105, %cst_35 {dimension_numbers = #tpu.dot_dimension_numbers<[1], [0], [0], [1], [0, 0, 1, 1], [], []>} : vector<192x128xbf16>, vector<128x128xbf16>, vector<192x128xf32> -> vector<192x128xf32>
    %c0_36 = arith.constant 0 : index
    %c0_37 = arith.constant 0 : index
    %107 = vector.load %arg16[%c0_36, %c0_37] : memref<192x128xf32, #tpu.memory_space<vmem>>, vector<192x128xf32>
    %108 = arith.addf %107, %106 : vector<192x128xf32>
    %c0_38 = arith.constant 0 : index
    %c0_39 = arith.constant 0 : index
    %c0_40 = arith.constant 0 : index
    %109 = vector.load %arg7[%c0_38, %c0_39, %c0_40] : memref<1x1x128xf32, #tpu.memory_space<vmem>>, vector<1x1x128xf32>
    %110 = vector.shape_cast %109 : vector<1x1x128xf32> to vector<1x128xf32>
    %c0_41 = arith.constant 0 : index
    %c0_42 = arith.constant 0 : index
    %c0_43 = arith.constant 0 : index
    %111 = vector.load %arg8[%c0_41, %c0_42, %c0_43] : memref<1x1x128xf32, #tpu.memory_space<vmem>>, vector<1x1x128xf32>
    %112 = vector.shape_cast %111 : vector<1x1x128xf32> to vector<1x128xf32>
    %cst_44 = arith.constant dense<0.000000e+00> : vector<192xf32>
    %113 = vector.multi_reduction <add>, %108, %cst_44 [1] : vector<192x128xf32> to vector<192xf32>
    %114 = vector.shape_cast %113 : vector<192xf32> to vector<192x1xf32>
    %cst_45 = arith.constant 1.280000e+02 : f32
    %115 = vector.broadcast %cst_45 : f32 to vector<192x1xf32>
    %116 = arith.divf %114, %115 : vector<192x1xf32>
    %117 = vector.broadcast %116 : vector<192x1xf32> to vector<192x128xf32>
    %118 = arith.subf %108, %117 : vector<192x128xf32>
    %119 = arith.mulf %118, %118 : vector<192x128xf32>
    %cst_46 = arith.constant dense<0.000000e+00> : vector<192xf32>
    %120 = vector.multi_reduction <add>, %119, %cst_46 [1] : vector<192x128xf32> to vector<192xf32>
    %121 = vector.shape_cast %120 : vector<192xf32> to vector<192x1xf32>
    %cst_47 = arith.constant 1.280000e+02 : f32
    %122 = vector.broadcast %cst_47 : f32 to vector<192x1xf32>
    %123 = arith.divf %121, %122 : vector<192x1xf32>
    %cst_48 = arith.constant 9.99999974E-6 : f32
    %124 = vector.broadcast %cst_48 : f32 to vector<192x1xf32>
    %125 = arith.addf %123, %124 : vector<192x1xf32>
    %126 = math.rsqrt %125 : vector<192x1xf32>
    %127 = vector.broadcast %126 : vector<192x1xf32> to vector<192x128xf32>
    %128 = arith.mulf %118, %127 : vector<192x128xf32>
    %129 = vector.broadcast %110 : vector<1x128xf32> to vector<192x128xf32>
    %130 = arith.mulf %128, %129 : vector<192x128xf32>
    %131 = vector.broadcast %112 : vector<1x128xf32> to vector<192x128xf32>
    %132 = arith.addf %130, %131 : vector<192x128xf32>
    %133 = arith.truncf %132 : vector<192x128xf32> to vector<192x128xbf16>
    %c0_49 = arith.constant 0 : index
    %c0_50 = arith.constant 0 : index
    %c0_51 = arith.constant 0 : index
    %134 = vector.load %arg9[%c0_49, %c0_50, %c0_51] : memref<1x128x512xbf16, #tpu.memory_space<vmem>>, vector<1x128x512xbf16>
    %135 = vector.shape_cast %134 : vector<1x128x512xbf16> to vector<128x512xbf16>
    %cst_52 = arith.constant dense<0.000000e+00> : vector<192x512xf32>
    %136 = tpu.matmul %133, %135, %cst_52 {dimension_numbers = #tpu.dot_dimension_numbers<[1], [0], [0], [1], [0, 0, 1, 1], [], []>} : vector<192x128xbf16>, vector<128x512xbf16>, vector<192x512xf32> -> vector<192x512xf32>
    %c0_53 = arith.constant 0 : index
    %c0_54 = arith.constant 0 : index
    %c0_55 = arith.constant 0 : index
    %137 = vector.load %arg10[%c0_53, %c0_54, %c0_55] : memref<1x1x512xf32, #tpu.memory_space<vmem>>, vector<1x1x512xf32>
    %138 = vector.shape_cast %137 : vector<1x1x512xf32> to vector<1x512xf32>
    %139 = vector.broadcast %138 : vector<1x512xf32> to vector<192x512xf32>
    %140 = arith.addf %136, %139 : vector<192x512xf32>
    %141 = arith.mulf %140, %140 : vector<192x512xf32>
    %142 = arith.mulf %140, %141 : vector<192x512xf32>
    %cst_56 = arith.constant 4.471500e-02 : f32
    %143 = vector.broadcast %cst_56 : f32 to vector<192x512xf32>
    %144 = arith.mulf %143, %142 : vector<192x512xf32>
    %145 = arith.addf %140, %144 : vector<192x512xf32>
    %cst_57 = arith.constant 0.797884583 : f32
    %146 = vector.broadcast %cst_57 : f32 to vector<192x512xf32>
    %147 = arith.mulf %146, %145 : vector<192x512xf32>
    %148 = math.tanh %147 : vector<192x512xf32>
    %cst_58 = arith.constant 1.000000e+00 : f32
    %149 = vector.broadcast %cst_58 : f32 to vector<192x512xf32>
    %150 = arith.addf %149, %148 : vector<192x512xf32>
    %cst_59 = arith.constant 5.000000e-01 : f32
    %151 = vector.broadcast %cst_59 : f32 to vector<192x512xf32>
    %152 = arith.mulf %151, %150 : vector<192x512xf32>
    %153 = arith.mulf %140, %152 : vector<192x512xf32>
    %154 = arith.truncf %153 : vector<192x512xf32> to vector<192x512xbf16>
    %c0_60 = arith.constant 0 : index
    %c0_61 = arith.constant 0 : index
    %c0_62 = arith.constant 0 : index
    %155 = vector.load %arg11[%c0_60, %c0_61, %c0_62] : memref<1x512x128xbf16, #tpu.memory_space<vmem>>, vector<1x512x128xbf16>
    %156 = vector.shape_cast %155 : vector<1x512x128xbf16> to vector<512x128xbf16>
    %cst_63 = arith.constant dense<0.000000e+00> : vector<192x128xf32>
    %157 = tpu.matmul %154, %156, %cst_63 {dimension_numbers = #tpu.dot_dimension_numbers<[1], [0], [0], [1], [0, 0, 1, 1], [], []>} : vector<192x512xbf16>, vector<512x128xbf16>, vector<192x128xf32> -> vector<192x128xf32>
    %c0_64 = arith.constant 0 : index
    %c0_65 = arith.constant 0 : index
    %c0_66 = arith.constant 0 : index
    %158 = vector.load %arg12[%c0_64, %c0_65, %c0_66] : memref<1x1x128xf32, #tpu.memory_space<vmem>>, vector<1x1x128xf32>
    %159 = vector.shape_cast %158 : vector<1x1x128xf32> to vector<1x128xf32>
    %160 = vector.broadcast %159 : vector<1x128xf32> to vector<192x128xf32>
    %161 = arith.addf %157, %160 : vector<192x128xf32>
    %162 = arith.addf %132, %161 : vector<192x128xf32>
    %c0_67 = arith.constant 0 : index
    %c0_68 = arith.constant 0 : index
    %163 = vector.load %arg16[%c0_67, %c0_68] : memref<192x128xf32, #tpu.memory_space<vmem>>, vector<192x128xf32>
    tpu.vector_store %arg16[%c0_67, %c0_68], %162 {strides = array<i32>} : memref<192x128xf32, #tpu.memory_space<vmem>>, vector<192x128xf32>,
    %c1_i32 = arith.constant 1 : i32
    %164 = arith.cmpi eq, %arg1, %c1_i32 : i32
    %165 = arith.extui %164 : i1 to i32
    %c0_i32_69 = arith.constant 0 : i32
    %166 = arith.cmpi ne, %165, %c0_i32_69 : i32
    scf.if %166 {
      %c0_70 = arith.constant 0 : index
      %c0_71 = arith.constant 0 : index
      %167 = vector.load %arg13[%c0_70, %c0_71] : memref<1x128xf32, #tpu.memory_space<vmem>>, vector<1x128xf32>
      %c0_72 = arith.constant 0 : index
      %c0_73 = arith.constant 0 : index
      %168 = vector.load %arg14[%c0_72, %c0_73] : memref<1x128xf32, #tpu.memory_space<vmem>>, vector<1x128xf32>
      %cst_74 = arith.constant dense<0.000000e+00> : vector<192xf32>
      %169 = vector.multi_reduction <add>, %162, %cst_74 [1] : vector<192x128xf32> to vector<192xf32>
      %170 = vector.shape_cast %169 : vector<192xf32> to vector<192x1xf32>
      %cst_75 = arith.constant 1.280000e+02 : f32
      %171 = vector.broadcast %cst_75 : f32 to vector<192x1xf32>
      %172 = arith.divf %170, %171 : vector<192x1xf32>
      %173 = vector.broadcast %172 : vector<192x1xf32> to vector<192x128xf32>
      %174 = arith.subf %162, %173 : vector<192x128xf32>
      %175 = arith.mulf %174, %174 : vector<192x128xf32>
      %cst_76 = arith.constant dense<0.000000e+00> : vector<192xf32>
      %176 = vector.multi_reduction <add>, %175, %cst_76 [1] : vector<192x128xf32> to vector<192xf32>
      %177 = vector.shape_cast %176 : vector<192xf32> to vector<192x1xf32>
      %cst_77 = arith.constant 1.280000e+02 : f32
      %178 = vector.broadcast %cst_77 : f32 to vector<192x1xf32>
      %179 = arith.divf %177, %178 : vector<192x1xf32>
      %cst_78 = arith.constant 9.99999974E-6 : f32
      %180 = vector.broadcast %cst_78 : f32 to vector<192x1xf32>
      %181 = arith.addf %179, %180 : vector<192x1xf32>
      %182 = math.rsqrt %181 : vector<192x1xf32>
      %183 = vector.broadcast %182 : vector<192x1xf32> to vector<192x128xf32>
      %184 = arith.mulf %174, %183 : vector<192x128xf32>
      %185 = vector.broadcast %167 : vector<1x128xf32> to vector<192x128xf32>
      %186 = arith.mulf %184, %185 : vector<192x128xf32>
      %187 = vector.broadcast %168 : vector<1x128xf32> to vector<192x128xf32>
      %188 = arith.addf %186, %187 : vector<192x128xf32>
      %c0_79 = arith.constant 0 : index
      %c0_80 = arith.constant 0 : index
      %189 = vector.load %arg15[%c0_79, %c0_80] : memref<192x128xf32, #tpu.memory_space<vmem>>, vector<192x128xf32>
      tpu.vector_store %arg15[%c0_79, %c0_80], %188 {strides = array<i32>} : memref<192x128xf32, #tpu.memory_space<vmem>>, vector<192x128xf32>,
    } else {
    }
    return
  }
  func.func @transform_0(%arg0: i32, %arg1: i32) -> (i32, i32) {
    %c0_i32 = arith.constant 0 : i32
    %c0_i32_0 = arith.constant 0 : i32
    return %arg0, %c0_i32 : i32, i32
  }
  func.func @transform_1(%arg0: i32, %arg1: i32) -> (i32, i32, i32) {
    %c0_i32 = arith.constant 0 : i32
    %c0_i32_0 = arith.constant 0 : i32
    %c0_i32_1 = arith.constant 0 : i32
    return %arg1, %c0_i32, %c0_i32_0 : i32, i32, i32
  }
  func.func @transform_2(%arg0: i32, %arg1: i32) -> (i32, i32, i32) {
    %c0_i32 = arith.constant 0 : i32
    %c0_i32_0 = arith.constant 0 : i32
    %c0_i32_1 = arith.constant 0 : i32
    return %arg1, %c0_i32, %c0_i32_0 : i32, i32, i32
  }
  func.func @transform_3(%arg0: i32, %arg1: i32) -> (i32, i32, i32) {
    %c0_i32 = arith.constant 0 : i32
    %c0_i32_0 = arith.constant 0 : i32
    %c0_i32_1 = arith.constant 0 : i32
    return %arg1, %c0_i32, %c0_i32_0 : i32, i32, i32
  }
  func.func @transform_4(%arg0: i32, %arg1: i32) -> (i32, i32, i32) {
    %c0_i32 = arith.constant 0 : i32
    %c0_i32_0 = arith.constant 0 : i32
    %c0_i32_1 = arith.constant 0 : i32
    return %arg1, %c0_i32, %c0_i32_0 : i32, i32, i32
  }
  func.func @transform_5(%arg0: i32, %arg1: i32) -> (i32, i32, i32) {
    %c0_i32 = arith.constant 0 : i32
    %c0_i32_0 = arith.constant 0 : i32
    %c0_i32_1 = arith.constant 0 : i32
    return %arg1, %c0_i32, %c0_i32_0 : i32, i32, i32
  }
  func.func @transform_6(%arg0: i32, %arg1: i32) -> (i32, i32, i32) {
    %c0_i32 = arith.constant 0 : i32
    %c0_i32_0 = arith.constant 0 : i32
    %c0_i32_1 = arith.constant 0 : i32
    return %arg1, %c0_i32, %c0_i32_0 : i32, i32, i32
  }
  func.func @transform_7(%arg0: i32, %arg1: i32) -> (i32, i32, i32) {
    %c0_i32 = arith.constant 0 : i32
    %c0_i32_0 = arith.constant 0 : i32
    %c0_i32_1 = arith.constant 0 : i32
    return %arg1, %c0_i32, %c0_i32_0 : i32, i32, i32
  }
  func.func @transform_8(%arg0: i32, %arg1: i32) -> (i32, i32, i32) {
    %c0_i32 = arith.constant 0 : i32
    %c0_i32_0 = arith.constant 0 : i32
    %c0_i32_1 = arith.constant 0 : i32
    return %arg1, %c0_i32, %c0_i32_0 : i32, i32, i32
  }
  func.func @transform_9(%arg0: i32, %arg1: i32) -> (i32, i32, i32) {
    %c0_i32 = arith.constant 0 : i32
    %c0_i32_0 = arith.constant 0 : i32
    %c0_i32_1 = arith.constant 0 : i32
    return %arg1, %c0_i32, %c0_i32_0 : i32, i32, i32
  }
  func.func @transform_10(%arg0: i32, %arg1: i32) -> (i32, i32, i32) {
    %c0_i32 = arith.constant 0 : i32
    %c0_i32_0 = arith.constant 0 : i32
    %c0_i32_1 = arith.constant 0 : i32
    return %arg1, %c0_i32, %c0_i32_0 : i32, i32, i32
  }
  func.func @transform_11(%arg0: i32, %arg1: i32) -> (i32, i32) {
    %c0_i32 = arith.constant 0 : i32
    %c0_i32_0 = arith.constant 0 : i32
    %c0_i32_1 = arith.constant 0 : i32
    return %c0_i32, %c0_i32_0 : i32, i32
  }
  func.func @transform_12(%arg0: i32, %arg1: i32) -> (i32, i32) {
    %c0_i32 = arith.constant 0 : i32
    %c0_i32_0 = arith.constant 0 : i32
    %c0_i32_1 = arith.constant 0 : i32
    return %c0_i32, %c0_i32_0 : i32, i32
  }
  func.func @transform_13(%arg0: i32, %arg1: i32) -> (i32, i32) {
    %c0_i32 = arith.constant 0 : i32
    %c0_i32_0 = arith.constant 0 : i32
    return %arg0, %c0_i32 : i32, i32
  }
}

module attributes {stable_mosaic.version = 11 : i64} {
  func.func @linear_bias_kernel(%arg0: i32, %arg1: memref<256x96xf32, #tpu.memory_space<vmem>>, %arg2: memref<96x128xbf16, #tpu.memory_space<vmem>>, %arg3: memref<1x128xf32, #tpu.memory_space<vmem>>, %arg4: memref<256x128xf32, #tpu.memory_space<vmem>>) attributes {dimension_semantics = [#tpu.dimension_semantics<parallel>], iteration_bounds = array<i64: 1>, scalar_prefetch = 0 : i64, scratch_operands = 0 : i64, tpu.core_type = #tpu.core_type<tc>, window_params = [{transform_indices = @transform_0, window_bounds = array<i64: 256, 96>}, {pipeline_mode = #tpu.pipeline_mode<synchronous>, transform_indices = @transform_1, window_bounds = array<i64: 96, 128>}, {pipeline_mode = #tpu.pipeline_mode<synchronous>, transform_indices = @transform_2, window_bounds = array<i64: 1, 128>}, {transform_indices = @transform_3, window_bounds = array<i64: 256, 128>}]} {
    %c0 = arith.constant 0 : index
    %c0_0 = arith.constant 0 : index
    %0 = vector.load %arg1[%c0, %c0_0] : memref<256x96xf32, #tpu.memory_space<vmem>>, vector<256x96xf32>
    %1 = arith.truncf %0 : vector<256x96xf32> to vector<256x96xbf16>
    %c0_1 = arith.constant 0 : index
    %c0_2 = arith.constant 0 : index
    %2 = vector.load %arg2[%c0_1, %c0_2] : memref<96x128xbf16, #tpu.memory_space<vmem>>, vector<96x128xbf16>
    %cst = arith.constant dense<0.000000e+00> : vector<256x128xf32>
    %3 = tpu.matmul %1, %2, %cst {dimension_numbers = #tpu.dot_dimension_numbers<[1], [0], [0], [1], [0, 0, 1, 1], [], []>} : vector<256x96xbf16>, vector<96x128xbf16>, vector<256x128xf32> -> vector<256x128xf32>
    %c0_3 = arith.constant 0 : index
    %c0_4 = arith.constant 0 : index
    %4 = vector.load %arg3[%c0_3, %c0_4] : memref<1x128xf32, #tpu.memory_space<vmem>>, vector<1x128xf32>
    %5 = vector.broadcast %4 : vector<1x128xf32> to vector<256x128xf32>
    %6 = arith.addf %3, %5 : vector<256x128xf32>
    %c0_5 = arith.constant 0 : index
    %c0_6 = arith.constant 0 : index
    %7 = vector.load %arg4[%c0_5, %c0_6] : memref<256x128xf32, #tpu.memory_space<vmem>>, vector<256x128xf32>
    tpu.vector_store %arg4[%c0_5, %c0_6], %6 {strides = array<i32>} : memref<256x128xf32, #tpu.memory_space<vmem>>, vector<256x128xf32>,
    return
  }
  func.func @transform_0(%arg0: i32) -> (i32, i32) {
    %c0_i32 = arith.constant 0 : i32
    %c0_i32_0 = arith.constant 0 : i32
    return %arg0, %c0_i32 : i32, i32
  }
  func.func @transform_1(%arg0: i32) -> (i32, i32) {
    %c0_i32 = arith.constant 0 : i32
    %c0_i32_0 = arith.constant 0 : i32
    %c0_i32_1 = arith.constant 0 : i32
    return %c0_i32, %c0_i32_0 : i32, i32
  }
  func.func @transform_2(%arg0: i32) -> (i32, i32) {
    %c0_i32 = arith.constant 0 : i32
    %c0_i32_0 = arith.constant 0 : i32
    %c0_i32_1 = arith.constant 0 : i32
    return %c0_i32, %c0_i32_0 : i32, i32
  }
  func.func @transform_3(%arg0: i32) -> (i32, i32) {
    %c0_i32 = arith.constant 0 : i32
    %c0_i32_0 = arith.constant 0 : i32
    return %arg0, %c0_i32 : i32, i32
  }
}

</mosaic_0001>

<llo_original>
// kernel: cct_forward.3
$region0: #{cct_forward.3}
  #allocation0 [shape = 'u32[]', space=smem, size = 0x4, offset = 0x4, fixed_abs, tag = 'smem constant byte address 0x4 - core index']
  #allocation1 [shape = 'u32[144,128]{1,0:T(1,128)}', space=vmem, size = 0x12000, scoped, tag = 'internal scratch']
  %s0 = inlined_call_operand.hbm [shape: f32[128,128], index: 0, kind: input, shape index: {}]
  %s1 = inlined_call_operand.hbm [shape: bf16[128,128], index: 1, kind: input, shape index: {}]
  %s2 = inlined_call_operand.vmem [shape: f32[128,128], index: 2, kind: output, shape index: {}]
  %s3 = sld [smem:[#allocation0]]
  $region26: #{cct_forward.3} parent=0
    _
  %s5 = ssub.s32 1, %s3
  %s6 = scalar_select 0, %s5, %s3
  $region1: #{cct_forward.3} parent=0
    #allocation2 [shape = 'u8[65536]{0}', space=vmem, size = 0x10000, scoped, tag = 'input window, operand 0, single buffered']
    #allocation3 [shape = 's32[1]{0}', space=sflag, size = 0x4, scoped, tag = 'scoped memory for cct_forward.3']
    #allocation4 [shape = 'u8[32768]{0}', space=vmem, size = 0x8000, scoped, tag = 'input window, operand 1, single buffered']
    #allocation5 [shape = 's32[1]{0}', space=sflag, size = 0x4, scoped, tag = 'scoped memory for cct_forward.3']
    %7 = vsyncpa [#allocation3], 0
    %8 = vsyncpa [#allocation5], 0
    // Predicated region
    $region2: #{cct_forward.3} parent=1 // pred_check
      _
    $region3: #{cct_forward.3} parent=1 // pred_check_branch
      %10 = sbr.rel (0) target = $region5
    $region4: #{cct_forward.3} parent=1 // pred_region
      %s12 = ssub.s32 2048, 2048
      %13 = vsyncadd [#allocation3], %s12
      %s14 = sshll.u32 [#allocation2], 4
      %s15 = int_to_ptr.vmem [resolvable:$true] %s14
      %20 = dma.hbm_to_vmem [thread:$0]  %s0, 2048, %s15, [#allocation3], 128, 128, 8
    $region5: #{cct_forward.3} parent=1 // pred_fallthru
      _
    // Predicated region
    $region6: #{cct_forward.3} parent=1 // pred_check
      _
    $region7: #{cct_forward.3} parent=1 // pred_check_branch
      %22 = sbr.rel (0) target = $region9
    $region8: #{cct_forward.3} parent=1 // pred_region
      %s24 = ssub.s32 1024, 1024
      %25 = vsyncadd [#allocation5], %s24
      %s26 = sshll.u32 [#allocation4], 4
      %s27 = int_to_ptr.vmem [resolvable:$true] %s26
      %32 = dma.hbm_to_vmem [thread:$0]  %s1, 1024, %s27, [#allocation5], 64, 64, 4
    $region9: #{cct_forward.3} parent=1 // pred_fallthru
      _
    // Predicated region
    $region10: #{cct_forward.3} parent=1 // pred_check
      _
    $region11: #{cct_forward.3} parent=1 // pred_check_branch
      %34 = sbr.rel (0) target = $region13
    $region12: #{cct_forward.3} parent=1 // pred_region
      %35 = dma.done [#allocation3], 2048
    $region13: #{cct_forward.3} parent=1 // pred_fallthru
      _
    // Predicated region
    $region14: #{cct_forward.3} parent=1 // pred_check
      _
    $region15: #{cct_forward.3} parent=1 // pred_check_branch
      %37 = sbr.rel (0) target = $region17
    $region16: #{cct_forward.3} parent=1 // pred_region
      %38 = dma.done [#allocation5], 1024
    $region17: #{cct_forward.3} parent=1 // pred_fallthru
      _
    %v40 = vld [vmem:[#allocation2] sm:$0xff]
    %v41 = vld [vmem:[#allocation2 + $0x8] sm:$0xff]
    %v42 = vld [vmem:[#allocation2 + $0x10] sm:$0xff]
    %v43 = vld [vmem:[#allocation2 + $0x18] sm:$0xff]
    %v44 = vld [vmem:[#allocation2 + $0x20] sm:$0xff]
    %v45 = vld [vmem:[#allocation2 + $0x28] sm:$0xff]
    %v46 = vld [vmem:[#allocation2 + $0x30] sm:$0xff]
    %v47 = vld [vmem:[#allocation2 + $0x38] sm:$0xff]
    %v48 = vld [vmem:[#allocation2 + $0x40] sm:$0xff]
    %v49 = vld [vmem:[#allocation2 + $0x48] sm:$0xff]
    %v50 = vld [vmem:[#allocation2 + $0x50] sm:$0xff]
    %v51 = vld [vmem:[#allocation2 + $0x58] sm:$0xff]
    %v52 = vld [vmem:[#allocation2 + $0x60] sm:$0xff]
    %v53 = vld [vmem:[#allocation2 + $0x68] sm:$0xff]
    %v54 = vld [vmem:[#allocation2 + $0x70] sm:$0xff]
    %v55 = vld [vmem:[#allocation2 + $0x78] sm:$0xff]
    %v56 = vpack.c.bf16 %v41, %v40
    %v57 = vpack.c.bf16 %v43, %v42
    %v58 = vpack.c.bf16 %v45, %v44
    %v59 = vpack.c.bf16 %v47, %v46
    %v60 = vpack.c.bf16 %v49, %v48
    %v61 = vpack.c.bf16 %v51, %v50
    %v62 = vpack.c.bf16 %v53, %v52
    %v63 = vpack.c.bf16 %v55, %v54
    %v64 = vld [vmem:[#allocation4] sm:$0xf]
    %v65 = vld [vmem:[#allocation4 + $0x4] sm:$0xf]
    %v66 = vld [vmem:[#allocation4 + $0x8] sm:$0xf]
    %v67 = vld [vmem:[#allocation4 + $0xc] sm:$0xf]
    %v68 = vld [vmem:[#allocation4 + $0x10] sm:$0xf]
    %v69 = vld [vmem:[#allocation4 + $0x14] sm:$0xf]
    %v70 = vld [vmem:[#allocation4 + $0x18] sm:$0xf]
    %v71 = vld [vmem:[#allocation4 + $0x1c] sm:$0xf]
    %v72 = vld [vmem:[#allocation4 + $0x20] sm:$0xf]
    %v73 = vld [vmem:[#allocation4 + $0x24] sm:$0xf]
    %v74 = vld [vmem:[#allocation4 + $0x28] sm:$0xf]
    %v75 = vld [vmem:[#allocation4 + $0x2c] sm:$0xf]
    %v76 = vld [vmem:[#allocation4 + $0x30] sm:$0xf]
    %v77 = vld [vmem:[#allocation4 + $0x34] sm:$0xf]
    %v78 = vld [vmem:[#allocation4 + $0x38] sm:$0xf]
    %v79 = vld [vmem:[#allocation4 + $0x3c] sm:$0xf]
    %v96 = vunpack.c.l.b16 %v64
    %v97 = vunpack.c.l.b16 %v65
    %v98 = vunpack.c.l.b16 %v66
    %v99 = vunpack.c.l.b16 %v67
    %v100 = vunpack.c.l.b16 %v68
    %v101 = vunpack.c.l.b16 %v69
    %v102 = vunpack.c.l.b16 %v70
    %v103 = vunpack.c.l.b16 %v71
    %v104 = vunpack.c.l.b16 %v72
    %v105 = vunpack.c.l.b16 %v73
    %v106 = vunpack.c.l.b16 %v74
    %v107 = vunpack.c.l.b16 %v75
    %v108 = vunpack.c.l.b16 %v76
    %v109 = vunpack.c.l.b16 %v77
    %v110 = vunpack.c.l.b16 %v78
    %v111 = vunpack.c.l.b16 %v79
    %v112 = vpack.c.b16 %v97, %v96
    %v113 = vpack.c.b16 %v99, %v98
    %v114 = vpack.c.b16 %v101, %v100
    %v115 = vpack.c.b16 %v103, %v102
    %v116 = vpack.c.b16 %v105, %v104
    %v117 = vpack.c.b16 %v107, %v106
    %v118 = vpack.c.b16 %v109, %v108
    %v119 = vpack.c.b16 %v111, %v110
    %128 = vmatprep.subr.bf16.mxu0 0
    %129 = vmatpush1.bf16.msra.mxu0 %v119
    %130 = vmatprep.subr.bf16.mxu0 0
    %131 = vmatpush1.bf16.msra.mxu0 %v118
    %132 = vmatprep.subr.bf16.mxu0 0
    %133 = vmatpush1.bf16.msra.mxu0 %v117
    %134 = vmatprep.subr.bf16.mxu0 0
    %135 = vmatpush1.bf16.msra.mxu0 %v116
    %136 = vmatprep.subr.bf16.mxu0 0
    %137 = vmatpush1.bf16.msra.mxu0 %v115
    %138 = vmatprep.subr.bf16.mxu0 0
    %139 = vmatpush1.bf16.msra.mxu0 %v114
    %140 = vmatprep.subr.bf16.mxu0 0
    %141 = vmatpush1.bf16.msra.mxu0 %v113
    %142 = vmatprep.subr.bf16.mxu0 0
    %143 = vmatpush1.bf16.msra.mxu0 %v112
    %144 = vmatprep.subr.bf16.mxu0 0
    %145 = vmatpush2.bf16.msra.mxu0 0
    %146 = vmatprep.subr.bf16.mxu0 0
    %147 = vmatpush2.bf16.msra.mxu0 0
    %148 = vmatprep.subr.bf16.mxu0 0
    %149 = vmatpush2.bf16.msra.mxu0 0
    %150 = vmatprep.subr.bf16.mxu0 0
    %151 = vmatpush2.bf16.msra.mxu0 0
    %152 = vmatprep.subr.bf16.mxu0 0
    %153 = vmatpush2.bf16.msra.mxu0 0
    %154 = vmatprep.subr.bf16.mxu0 0
    %155 = vmatpush2.bf16.msra.mxu0 0
    %156 = vmatprep.subr.bf16.mxu0 0
    %157 = vmatpush2.bf16.msra.mxu0 0
    %158 = vmatprep.subr.bf16.mxu0 0
    %159 = vmatpush2.bf16.msra.mxu0 0
    %160 = vmatprep.mubr.bf16.mxu0 0
    %161 = vmatmul.mubr.bf16.gmra.mxu0 %v56
    %v162 = vpop.f32.mrf.mxu0
    %v163 = vadd.f32 0.0, %v162
    %v164 = vpop.f32.mrf.mxu0
    %v165 = vpop.f32.mrf.mxu0
    %v166 = vadd.f32 0.0, %v165
    %v167 = vpop.f32.mrf.mxu0
    %168 = vmatprep.mubr.bf16.mxu0 0
    %169 = vmatmul.mubr.bf16.gmra.mxu0 %v57
    %v170 = vpop.f32.mrf.mxu0
    %v171 = vadd.f32 0.0, %v170
    %v172 = vpop.f32.mrf.mxu0
    %v173 = vpop.f32.mrf.mxu0
    %v174 = vadd.f32 0.0, %v173
    %v175 = vpop.f32.mrf.mxu0
    %176 = vmatprep.mubr.bf16.mxu0 0
    %177 = vmatmul.mubr.bf16.gmra.mxu0 %v58
    %v178 = vpop.f32.mrf.mxu0
    %v179 = vadd.f32 0.0, %v178
    %v180 = vpop.f32.mrf.mxu0
    %v181 = vpop.f32.mrf.mxu0
    %v182 = vadd.f32 0.0, %v181
    %v183 = vpop.f32.mrf.mxu0
    %184 = vmatprep.mubr.bf16.mxu0 0
    %185 = vmatmul.mubr.bf16.gmra.mxu0 %v59
    %v186 = vpop.f32.mrf.mxu0
    %v187 = vadd.f32 0.0, %v186
    %v188 = vpop.f32.mrf.mxu0
    %v189 = vpop.f32.mrf.mxu0
    %v190 = vadd.f32 0.0, %v189
    %v191 = vpop.f32.mrf.mxu0
    %192 = vmatprep.mubr.bf16.mxu0 0
    %193 = vmatmul.mubr.bf16.gmra.mxu0 %v60
    %v194 = vpop.f32.mrf.mxu0
    %v195 = vadd.f32 0.0, %v194
    %v196 = vpop.f32.mrf.mxu0
    %v197 = vpop.f32.mrf.mxu0
    %v198 = vadd.f32 0.0, %v197
    %v199 = vpop.f32.mrf.mxu0
    %200 = vmatprep.mubr.bf16.mxu0 0
    %201 = vmatmul.mubr.bf16.gmra.mxu0 %v61
    %v202 = vpop.f32.mrf.mxu0
    %v203 = vadd.f32 0.0, %v202
    %v204 = vpop.f32.mrf.mxu0
    %v205 = vpop.f32.mrf.mxu0
    %v206 = vadd.f32 0.0, %v205
    %v207 = vpop.f32.mrf.mxu0
    %208 = vmatprep.mubr.bf16.mxu0 0
    %209 = vmatmul.mubr.bf16.gmra.mxu0 %v62
    %v210 = vpop.f32.mrf.mxu0
    %v211 = vadd.f32 0.0, %v210
    %v212 = vpop.f32.mrf.mxu0
    %v213 = vpop.f32.mrf.mxu0
    %v214 = vadd.f32 0.0, %v213
    %v215 = vpop.f32.mrf.mxu0
    %216 = vmatprep.mubr.bf16.mxu0 0
    %217 = vmatmul.mubr.bf16.gmra.mxu0 %v63
    %v218 = vpop.f32.mrf.mxu0
    %v219 = vadd.f32 0.0, %v218
    %v220 = vpop.f32.mrf.mxu0
    %v221 = vpop.f32.mrf.mxu0
    %v222 = vadd.f32 0.0, %v221
    %v223 = vpop.f32.mrf.mxu0
    %224 = vdwg.mxu0
    %v225 = vmax.f32 %v163, 0.0
    %v226 = vmax.f32 %v166, 0.0
    %v227 = vmax.f32 %v171, 0.0
    %v228 = vmax.f32 %v174, 0.0
    %v229 = vmax.f32 %v179, 0.0
    %v230 = vmax.f32 %v182, 0.0
    %v231 = vmax.f32 %v187, 0.0
    %v232 = vmax.f32 %v190, 0.0
    %v233 = vmax.f32 %v195, 0.0
    %v234 = vmax.f32 %v198, 0.0
    %v235 = vmax.f32 %v203, 0.0
    %v236 = vmax.f32 %v206, 0.0
    %v237 = vmax.f32 %v211, 0.0
    %v238 = vmax.f32 %v214, 0.0
    %v239 = vmax.f32 %v219, 0.0
    %v240 = vmax.f32 %v222, 0.0
    %241 = vst [vmem:[%s2] sm:$0xff] %v225
    %242 = vst [vmem:[%s2 + $0x8] sm:$0xff] %v226
    %243 = vst [vmem:[%s2 + $0x10] sm:$0xff] %v227
    %244 = vst [vmem:[%s2 + $0x18] sm:$0xff] %v228
    %245 = vst [vmem:[%s2 + $0x20] sm:$0xff] %v229
    %246 = vst [vmem:[%s2 + $0x28] sm:$0xff] %v230
    %247 = vst [vmem:[%s2 + $0x30] sm:$0xff] %v231
    %248 = vst [vmem:[%s2 + $0x38] sm:$0xff] %v232
    %249 = vst [vmem:[%s2 + $0x40] sm:$0xff] %v233
    %250 = vst [vmem:[%s2 + $0x48] sm:$0xff] %v234
    %251 = vst [vmem:[%s2 + $0x50] sm:$0xff] %v235
    %252 = vst [vmem:[%s2 + $0x58] sm:$0xff] %v236
    %253 = vst [vmem:[%s2 + $0x60] sm:$0xff] %v237
    %254 = vst [vmem:[%s2 + $0x68] sm:$0xff] %v238
    %255 = vst [vmem:[%s2 + $0x70] sm:$0xff] %v239
    %256 = vst [vmem:[%s2 + $0x78] sm:$0xff] %v240
    // Predicated region
    $region18: #{cct_forward.3} parent=1 // pred_check
      _
    $region19: #{cct_forward.3} parent=1 // pred_check_branch
      %258 = sbr.rel (0) target = $region21
    $region20: #{cct_forward.3} parent=1 // pred_region
      _
    $region21: #{cct_forward.3} parent=1 // pred_fallthru
      _
    // Predicated region
    $region22: #{cct_forward.3} parent=1 // pred_check
      _
    $region23: #{cct_forward.3} parent=1 // pred_check_branch
      %260 = sbr.rel (0) target = $region25
    $region24: #{cct_forward.3} parent=1 // pred_region
      _
    $region25: #{cct_forward.3} parent=1 // pred_fallthru
      _
    %261 = vsyncpa [#allocation3], 1
    %262 = vsyncpa [#allocation5], 1

// kernel: cct_forward.5
$region0: #{cct_forward.5}
  #allocation0 [shape = 'u32[]', space=smem, size = 0x4, offset = 0x4, fixed_abs, tag = 'smem constant byte address 0x4 - core index']
  #allocation1 [shape = 'u32[144,128]{1,0:T(1,128)}', space=vmem, size = 0x12000, scoped, tag = 'internal scratch']
  %s0 = inlined_call_operand.vmem [shape: f32[256,96], index: 0, kind: input, shape index: {}]
  %s1 = inlined_call_operand.vmem [shape: bf16[96,128], index: 1, kind: input, shape index: {}]
  %s2 = inlined_call_operand.vmem [shape: f32[1,128], index: 2, kind: input, shape index: {}]
  %s3 = inlined_call_operand.vmem [shape: f32[256,128], index: 3, kind: output, shape index: {}]
  %s4 = sld [smem:[#allocation0]]
  $region22: #{cct_forward.5} parent=0
    _
  %s6 = ssub.s32 1, %s4
  %s7 = scalar_select 0, %s6, %s4
  // Predicated region
  $region2: #{cct_forward.5} parent=0 // pred_check
    _
  $region3: #{cct_forward.5} parent=0 // pred_check_branch
    %9 = sbr.rel (0) target = $region5
  $region4: #{cct_forward.5} parent=0 // pred_region
    _
  $region5: #{cct_forward.5} parent=0 // pred_fallthru
    _
  // Predicated region
  $region6: #{cct_forward.5} parent=0 // pred_check
    _
  $region7: #{cct_forward.5} parent=0 // pred_check_branch
    %11 = sbr.rel (0) target = $region9
  $region8: #{cct_forward.5} parent=0 // pred_region
    _
  $region9: #{cct_forward.5} parent=0 // pred_fallthru
    _
  // Predicated region
  $region10: #{cct_forward.5} parent=0 // pred_check
    _
  $region11: #{cct_forward.5} parent=0 // pred_check_branch
    %13 = sbr.rel (0) target = $region13
  $region12: #{cct_forward.5} parent=0 // pred_region
    _
  $region13: #{cct_forward.5} parent=0 // pred_fallthru
    _
  %v15 = vld [vmem:[%s0] sm:$0xff]
  %v16 = vld [vmem:[%s0 + $0x8] sm:$0xff]
  %v17 = vld [vmem:[%s0 + $0x10] sm:$0xff]
  %v18 = vld [vmem:[%s0 + $0x18] sm:$0xff]
  %v19 = vld [vmem:[%s0 + $0x20] sm:$0xff]
  %v20 = vld [vmem:[%s0 + $0x28] sm:$0xff]
  %v21 = vld [vmem:[%s0 + $0x30] sm:$0xff]
  %v22 = vld [vmem:[%s0 + $0x38] sm:$0xff]
  %v23 = vld [vmem:[%s0 + $0x40] sm:$0xff]
  %v24 = vld [vmem:[%s0 + $0x48] sm:$0xff]
  %v25 = vld [vmem:[%s0 + $0x50] sm:$0xff]
  %v26 = vld [vmem:[%s0 + $0x58] sm:$0xff]
  %v27 = vld [vmem:[%s0 + $0x60] sm:$0xff]
  %v28 = vld [vmem:[%s0 + $0x68] sm:$0xff]
  %v29 = vld [vmem:[%s0 + $0x70] sm:$0xff]
  %v30 = vld [vmem:[%s0 + $0x78] sm:$0xff]
  %v31 = vld [vmem:[%s0 + $0x80] sm:$0xff]
  %v32 = vld [vmem:[%s0 + $0x88] sm:$0xff]
  %v33 = vld [vmem:[%s0 + $0x90] sm:$0xff]
  %v34 = vld [vmem:[%s0 + $0x98] sm:$0xff]
  %v35 = vld [vmem:[%s0 + $0xa0] sm:$0xff]
  %v36 = vld [vmem:[%s0 + $0xa8] sm:$0xff]
  %v37 = vld [vmem:[%s0 + $0xb0] sm:$0xff]
  %v38 = vld [vmem:[%s0 + $0xb8] sm:$0xff]
  %v39 = vld [vmem:[%s0 + $0xc0] sm:$0xff]
  %v40 = vld [vmem:[%s0 + $0xc8] sm:$0xff]
  %v41 = vld [vmem:[%s0 + $0xd0] sm:$0xff]
  %v42 = vld [vmem:[%s0 + $0xd8] sm:$0xff]
  %v43 = vld [vmem:[%s0 + $0xe0] sm:$0xff]
  %v44 = vld [vmem:[%s0 + $0xe8] sm:$0xff]
  %v45 = vld [vmem:[%s0 + $0xf0] sm:$0xff]
  %v46 = vld [vmem:[%s0 + $0xf8] sm:$0xff]
  %v47 = vpack.c.bf16 %v16, %v15
  %v48 = vpack.c.bf16 %v18, %v17
  %v49 = vpack.c.bf16 %v20, %v19
  %v50 = vpack.c.bf16 %v22, %v21
  %v51 = vpack.c.bf16 %v24, %v23
  %v52 = vpack.c.bf16 %v26, %v25
  %v53 = vpack.c.bf16 %v28, %v27
  %v54 = vpack.c.bf16 %v30, %v29
  %v55 = vpack.c.bf16 %v32, %v31
  %v56 = vpack.c.bf16 %v34, %v33
  %v57 = vpack.c.bf16 %v36, %v35
  %v58 = vpack.c.bf16 %v38, %v37
  %v59 = vpack.c.bf16 %v40, %v39
  %v60 = vpack.c.bf16 %v42, %v41
  %v61 = vpack.c.bf16 %v44, %v43
  %v62 = vpack.c.bf16 %v46, %v45
  %v63 = vld [vmem:[%s1] sm:$0xf]
  %v64 = vld [vmem:[%s1 + $0x4] sm:$0xf]
  %v65 = vld [vmem:[%s1 + $0x8] sm:$0xf]
  %v66 = vld [vmem:[%s1 + $0xc] sm:$0xf]
  %v67 = vld [vmem:[%s1 + $0x10] sm:$0xf]
  %v68 = vld [vmem:[%s1 + $0x14] sm:$0xf]
  %v69 = vld [vmem:[%s1 + $0x18] sm:$0xf]
  %v70 = vld [vmem:[%s1 + $0x1c] sm:$0xf]
  %v71 = vld [vmem:[%s1 + $0x20] sm:$0xf]
  %v72 = vld [vmem:[%s1 + $0x24] sm:$0xf]
  %v73 = vld [vmem:[%s1 + $0x28] sm:$0xf]
  %v74 = vld [vmem:[%s1 + $0x2c] sm:$0xf]
  %v75 = vld [vmem:[%s2] sm:$0x1]
  %v77 = vlaneseq
  %v78 = vshrl.u32 %v77, 7
  %v79 = vsub.s32 0, %v78
  %v80 = vrot.slane %v75, %v79
  %v94 = vunpack.c.l.b16 %v63
  %v95 = vunpack.c.l.b16 %v64
  %v96 = vunpack.c.l.b16 %v65
  %v97 = vunpack.c.l.b16 %v66
  %v98 = vunpack.c.l.b16 %v67
  %v99 = vunpack.c.l.b16 %v68
  %v100 = vunpack.c.l.b16 %v69
  %v101 = vunpack.c.l.b16 %v70
  %v102 = vunpack.c.l.b16 %v71
  %v103 = vunpack.c.l.b16 %v72
  %v104 = vunpack.c.l.b16 %v73
  %v105 = vunpack.c.l.b16 %v74
  %v106 = vpack.c.b16 %v95, %v94
  %v107 = vpack.c.b16 %v97, %v96
  %v108 = vpack.c.b16 %v99, %v98
  %v109 = vpack.c.b16 %v101, %v100
  %v110 = vpack.c.b16 %v103, %v102
  %v111 = vpack.c.b16 %v105, %v104
  %vm118 = vcmask 785408
  %v120 = vsel %vm118, %v47, 0
  %v123 = vsel %vm118, %v48, 0
  %v126 = vsel %vm118, %v49, 0
  %v129 = vsel %vm118, %v50, 0
  %v132 = vsel %vm118, %v51, 0
  %v135 = vsel %vm118, %v52, 0
  %v138 = vsel %vm118, %v53, 0
  %v141 = vsel %vm118, %v54, 0
  %v144 = vsel %vm118, %v55, 0
  %v147 = vsel %vm118, %v56, 0
  %v150 = vsel %vm118, %v57, 0
  %v153 = vsel %vm118, %v58, 0
  %v156 = vsel %vm118, %v59, 0
  %v159 = vsel %vm118, %v60, 0
  %v162 = vsel %vm118, %v61, 0
  %v165 = vsel %vm118, %v62, 0
  %167 = vmatprep.subr.bf16.mxu0 0
  %168 = vmatpush1.bf16.msra.mxu0 0
  %169 = vmatprep.subr.bf16.mxu0 0
  %170 = vmatpush1.bf16.msra.mxu0 0
  %171 = vmatprep.subr.bf16.mxu0 0
  %172 = vmatpush1.bf16.msra.mxu0 %v111
  %173 = vmatprep.subr.bf16.mxu0 0
  %174 = vmatpush1.bf16.msra.mxu0 %v110
  %175 = vmatprep.subr.bf16.mxu0 0
  %176 = vmatpush1.bf16.msra.mxu0 %v109
  %177 = vmatprep.subr.bf16.mxu0 0
  %178 = vmatpush1.bf16.msra.mxu0 %v108
  %179 = vmatprep.subr.bf16.mxu0 0
  %180 = vmatpush1.bf16.msra.mxu0 %v107
  %181 = vmatprep.subr.bf16.mxu0 0
  %182 = vmatpush1.bf16.msra.mxu0 %v106
  %183 = vmatprep.subr.bf16.mxu0 0
  %184 = vmatpush2.bf16.msra.mxu0 0
  %185 = vmatprep.subr.bf16.mxu0 0
  %186 = vmatpush2.bf16.msra.mxu0 0
  %187 = vmatprep.subr.bf16.mxu0 0
  %188 = vmatpush2.bf16.msra.mxu0 0
  %189 = vmatprep.subr.bf16.mxu0 0
  %190 = vmatpush2.bf16.msra.mxu0 0
  %191 = vmatprep.subr.bf16.mxu0 0
  %192 = vmatpush2.bf16.msra.mxu0 0
  %193 = vmatprep.subr.bf16.mxu0 0
  %194 = vmatpush2.bf16.msra.mxu0 0
  %195 = vmatprep.subr.bf16.mxu0 0
  %196 = vmatpush2.bf16.msra.mxu0 0
  %197 = vmatprep.subr.bf16.mxu0 0
  %198 = vmatpush2.bf16.msra.mxu0 0
  %199 = vmatprep.mubr.bf16.mxu0 0
  %200 = vmatmul.mubr.bf16.gmra.mxu0 %v120
  %v201 = vpop.f32.mrf.mxu0
  %v202 = vadd.f32 %v80, %v201
  %v203 = vpop.f32.mrf.mxu0
  %v204 = vpop.f32.mrf.mxu0
  %v205 = vadd.f32 %v80, %v204
  %v206 = vpop.f32.mrf.mxu0
  %207 = vmatprep.mubr.bf16.mxu0 0
  %208 = vmatmul.mubr.bf16.gmra.mxu0 %v123
  %v209 = vpop.f32.mrf.mxu0
  %v210 = vadd.f32 %v80, %v209
  %v211 = vpop.f32.mrf.mxu0
  %v212 = vpop.f32.mrf.mxu0
  %v213 = vadd.f32 %v80, %v212
  %v214 = vpop.f32.mrf.mxu0
  %215 = vmatprep.mubr.bf16.mxu0 0
  %216 = vmatmul.mubr.bf16.gmra.mxu0 %v126
  %v217 = vpop.f32.mrf.mxu0
  %v218 = vadd.f32 %v80, %v217
  %v219 = vpop.f32.mrf.mxu0
  %v220 = vpop.f32.mrf.mxu0
  %v221 = vadd.f32 %v80, %v220
  %v222 = vpop.f32.mrf.mxu0
  %223 = vmatprep.mubr.bf16.mxu0 0
  %224 = vmatmul.mubr.bf16.gmra.mxu0 %v129
  %v225 = vpop.f32.mrf.mxu0
  %v226 = vadd.f32 %v80, %v225
  %v227 = vpop.f32.mrf.mxu0
  %v228 = vpop.f32.mrf.mxu0
  %v229 = vadd.f32 %v80, %v228
  %v230 = vpop.f32.mrf.mxu0
  %231 = vmatprep.mubr.bf16.mxu0 0
  %232 = vmatmul.mubr.bf16.gmra.mxu0 %v132
  %v233 = vpop.f32.mrf.mxu0
  %v234 = vadd.f32 %v80, %v233
  %v235 = vpop.f32.mrf.mxu0
  %v236 = vpop.f32.mrf.mxu0
  %v237 = vadd.f32 %v80, %v236
  %v238 = vpop.f32.mrf.mxu0
  %239 = vmatprep.mubr.bf16.mxu0 0
  %240 = vmatmul.mubr.bf16.gmra.mxu0 %v135
  %v241 = vpop.f32.mrf.mxu0
  %v242 = vadd.f32 %v80, %v241
  %v243 = vpop.f32.mrf.mxu0
  %v244 = vpop.f32.mrf.mxu0
  %v245 = vadd.f32 %v80, %v244
  %v246 = vpop.f32.mrf.mxu0
  %247 = vmatprep.mubr.bf16.mxu0 0
  %248 = vmatmul.mubr.bf16.gmra.mxu0 %v138
  %v249 = vpop.f32.mrf.mxu0
  %v250 = vadd.f32 %v80, %v249
  %v251 = vpop.f32.mrf.mxu0
  %v252 = vpop.f32.mrf.mxu0
  %v253 = vadd.f32 %v80, %v252
  %v254 = vpop.f32.mrf.mxu0
  %255 = vmatprep.mubr.bf16.mxu0 0
  %256 = vmatmul.mubr.bf16.gmra.mxu0 %v141
  %v257 = vpop.f32.mrf.mxu0
  %v258 = vadd.f32 %v80, %v257
  %v259 = vpop.f32.mrf.mxu0
  %v260 = vpop.f32.mrf.mxu0
  %v261 = vadd.f32 %v80, %v260
  %v262 = vpop.f32.mrf.mxu0
  %263 = vmatprep.mubr.bf16.mxu0 0
  %264 = vmatmul.mubr.bf16.gmra.mxu0 %v144
  %v265 = vpop.f32.mrf.mxu0
  %v266 = vadd.f32 %v80, %v265
  %v267 = vpop.f32.mrf.mxu0
  %v268 = vpop.f32.mrf.mxu0
  %v269 = vadd.f32 %v80, %v268
  %v270 = vpop.f32.mrf.mxu0
  %271 = vmatprep.mubr.bf16.mxu0 0
  %272 = vmatmul.mubr.bf16.gmra.mxu0 %v147
  %v273 = vpop.f32.mrf.mxu0
  %v274 = vadd.f32 %v80, %v273
  %v275 = vpop.f32.mrf.mxu0
  %v276 = vpop.f32.mrf.mxu0
  %v277 = vadd.f32 %v80, %v276
  %v278 = vpop.f32.mrf.mxu0
  %279 = vmatprep.mubr.bf16.mxu0 0
  %280 = vmatmul.mubr.bf16.gmra.mxu0 %v150
  %v281 = vpop.f32.mrf.mxu0
  %v282 = vadd.f32 %v80, %v281
  %v283 = vpop.f32.mrf.mxu0
  %v284 = vpop.f32.mrf.mxu0
  %v285 = vadd.f32 %v80, %v284
  %v286 = vpop.f32.mrf.mxu0
  %287 = vmatprep.mubr.bf16.mxu0 0
  %288 = vmatmul.mubr.bf16.gmra.mxu0 %v153
  %v289 = vpop.f32.mrf.mxu0
  %v290 = vadd.f32 %v80, %v289
  %v291 = vpop.f32.mrf.mxu0
  %v292 = vpop.f32.mrf.mxu0
  %v293 = vadd.f32 %v80, %v292
  %v294 = vpop.f32.mrf.mxu0
  %295 = vmatprep.mubr.bf16.mxu0 0
  %296 = vmatmul.mubr.bf16.gmra.mxu0 %v156
  %v297 = vpop.f32.mrf.mxu0
  %v298 = vadd.f32 %v80, %v297
  %v299 = vpop.f32.mrf.mxu0
  %v300 = vpop.f32.mrf.mxu0
  %v301 = vadd.f32 %v80, %v300
  %v302 = vpop.f32.mrf.mxu0
  %303 = vmatprep.mubr.bf16.mxu0 0
  %304 = vmatmul.mubr.bf16.gmra.mxu0 %v159
  %v305 = vpop.f32.mrf.mxu0
  %v306 = vadd.f32 %v80, %v305
  %v307 = vpop.f32.mrf.mxu0
  %v308 = vpop.f32.mrf.mxu0
  %v309 = vadd.f32 %v80, %v308
  %v310 = vpop.f32.mrf.mxu0
  %311 = vmatprep.mubr.bf16.mxu0 0
  %312 = vmatmul.mubr.bf16.gmra.mxu0 %v162
  %v313 = vpop.f32.mrf.mxu0
  %v314 = vadd.f32 %v80, %v313
  %v315 = vpop.f32.mrf.mxu0
  %v316 = vpop.f32.mrf.mxu0
  %v317 = vadd.f32 %v80, %v316
  %v318 = vpop.f32.mrf.mxu0
  %319 = vmatprep.mubr.bf16.mxu0 0
  %320 = vmatmul.mubr.bf16.gmra.mxu0 %v165
  %v321 = vpop.f32.mrf.mxu0
  %v322 = vadd.f32 %v80, %v321
  %v323 = vpop.f32.mrf.mxu0
  %v324 = vpop.f32.mrf.mxu0
  %v325 = vadd.f32 %v80, %v324
  %v326 = vpop.f32.mrf.mxu0
  %327 = vdwg.mxu0
  %328 = vst [vmem:[%s3] sm:$0xff] %v202
  %329 = vst [vmem:[%s3 + $0x8] sm:$0xff] %v205
  %330 = vst [vmem:[%s3 + $0x10] sm:$0xff] %v210
  %331 = vst [vmem:[%s3 + $0x18] sm:$0xff] %v213
  %332 = vst [vmem:[%s3 + $0x20] sm:$0xff] %v218
  %333 = vst [vmem:[%s3 + $0x28] sm:$0xff] %v221
  %334 = vst [vmem:[%s3 + $0x30] sm:$0xff] %v226
  %335 = vst [vmem:[%s3 + $0x38] sm:$0xff] %v229
  %336 = vst [vmem:[%s3 + $0x40] sm:$0xff] %v234
  %337 = vst [vmem:[%s3 + $0x48] sm:$0xff] %v237
  %338 = vst [vmem:[%s3 + $0x50] sm:$0xff] %v242
  %339 = vst [vmem:[%s3 + $0x58] sm:$0xff] %v245
  %340 = vst [vmem:[%s3 + $0x60] sm:$0xff] %v250
  %341 = vst [vmem:[%s3 + $0x68] sm:$0xff] %v253
  %342 = vst [vmem:[%s3 + $0x70] sm:$0xff] %v258
  %343 = vst [vmem:[%s3 + $0x78] sm:$0xff] %v261
  %344 = vst [vmem:[%s3 + $0x80] sm:$0xff] %v266
  %345 = vst [vmem:[%s3 + $0x88] sm:$0xff] %v269
  %346 = vst [vmem:[%s3 + $0x90] sm:$0xff] %v274
  %347 = vst [vmem:[%s3 + $0x98] sm:$0xff] %v277
  %348 = vst [vmem:[%s3 + $0xa0] sm:$0xff] %v282
  %349 = vst [vmem:[%s3 + $0xa8] sm:$0xff] %v285
  %350 = vst [vmem:[%s3 + $0xb0] sm:$0xff] %v290
  %351 = vst [vmem:[%s3 + $0xb8] sm:$0xff] %v293
  %352 = vst [vmem:[%s3 + $0xc0] sm:$0xff] %v298
  %353 = vst [vmem:[%s3 + $0xc8] sm:$0xff] %v301
  %354 = vst [vmem:[%s3 + $0xd0] sm:$0xff] %v306
  %355 = vst [vmem:[%s3 + $0xd8] sm:$0xff] %v309
  %356 = vst [vmem:[%s3 + $0xe0] sm:$0xff] %v314
  %357 = vst [vmem:[%s3 + $0xe8] sm:$0xff] %v317
  %358 = vst [vmem:[%s3 + $0xf0] sm:$0xff] %v322
  %359 = vst [vmem:[%s3 + $0xf8] sm:$0xff] %v325
  // Predicated region
  $region14: #{cct_forward.5} parent=0 // pred_check
    _
  $region15: #{cct_forward.5} parent=0 // pred_check_branch
    %361 = sbr.rel (0) target = $region17
  $region16: #{cct_forward.5} parent=0 // pred_region
    _
  $region17: #{cct_forward.5} parent=0 // pred_fallthru
    _
  // Predicated region
  $region18: #{cct_forward.5} parent=0 // pred_check
    _
  $region19: #{cct_forward.5} parent=0 // pred_check_branch
    %363 = sbr.rel (0) target = $region21
  $region20: #{cct_forward.5} parent=0 // pred_region
    _
  $region21: #{cct_forward.5} parent=0 // pred_fallthru
    _

// kernel: cct_forward.4
$region0: #{cct_forward.4}
  #allocation0 [shape = 'u32[]', space=smem, size = 0x4, offset = 0x4, fixed_abs, tag = 'smem constant byte address 0x4 - core index']
  #allocation1 [shape = 'u32[144,128]{1,0:T(1,128)}', space=vmem, size = 0x12000, scoped, tag = 'internal scratch']
  #allocation2 [shape = 'f32[192,128]{1,0:T(8,128)}', space=vmem, size = 0x18000, scoped, tag = 'scratch operand']
  %s0 = inlined_call_operand.vmem [shape: f32[192,128], index: 0, kind: input, shape index: {}]
  %s1 = inlined_call_operand.vmem [shape: f32[2,1,128], index: 1, kind: input, shape index: {}]
  %s2 = inlined_call_operand.vmem [shape: f32[2,1,128], index: 2, kind: input, shape index: {}]
  %s3 = inlined_call_operand.hbm [shape: bf16[2,128,384], index: 3, kind: input, shape index: {}]
  %s4 = inlined_call_operand.vmem [shape: bf16[2,128,128], index: 4, kind: input, shape index: {}]
  %s5 = inlined_call_operand.vmem [shape: f32[2,1,128], index: 5, kind: input, shape index: {}]
  %s6 = inlined_call_operand.vmem [shape: f32[2,1,128], index: 6, kind: input, shape index: {}]
  %s7 = inlined_call_operand.vmem [shape: bf16[2,128,512], index: 7, kind: input, shape index: {}]
  %s8 = inlined_call_operand.hbm [shape: f32[2,1,512], index: 8, kind: input, shape index: {}]
  %s9 = inlined_call_operand.vmem [shape: bf16[2,512,128], index: 9, kind: input, shape index: {}]
  %s10 = inlined_call_operand.hbm [shape: f32[2,1,128], index: 10, kind: input, shape index: {}]
  %s11 = inlined_call_operand.vmem [shape: f32[1,128], index: 11, kind: input, shape index: {}]
  %s12 = inlined_call_operand.vmem [shape: f32[1,128], index: 12, kind: input, shape index: {}]
  %s13 = inlined_call_operand.vmem [shape: f32[192,128], index: 13, kind: output, shape index: {}]
  %s14 = sld [smem:[#allocation0]]
  $region105: #{cct_forward.4} parent=0
    _
  %s16 = ssub.s32 1, %s14
  %s17 = scalar_select 0, %s16, %s14
  $region1: #{cct_forward.4} parent=0
    #allocation3 [shape = 'u8[196608]{0}', space=vmem, size = 0x30000, scoped, tag = 'input window, operand 3']
    #allocation4 [shape = 's32[2]{0}', space=sflag, size = 0x8, scoped, tag = 'scoped memory for cct_forward.4']
    #allocation5 [shape = 'u8[4096]{0}', space=vmem, size = 0x1000, scoped, tag = 'input window, operand 8']
    #allocation6 [shape = 's32[2]{0}', space=sflag, size = 0x8, scoped, tag = 'scoped memory for cct_forward.4']
    #allocation7 [shape = 'u8[1024]{0}', space=vmem, size = 0x400, scoped, tag = 'input window, operand 10']
    %18 = vsyncpa [#allocation4], 0
    %s19 = scalar_lea.sflag [#allocation4], 1
    %20 = vsyncpa %s19, 0
    %21 = vsyncpa [#allocation6], 0
    %s22 = scalar_lea.sflag [#allocation6], 1
    %23 = vsyncpa %s22, 0
    loop: start=0, step=1, limit=4
    $region2: #{cct_forward.4} parent=1 // loop_pre_header
      _
    $region3: #{cct_forward.4} parent=1 // loop_header
      %s25 = sphi 0, %s29
      %p26 = scmp.ge.s32.totalorder %s25, 4
      %s32 = sphi 0, %s44
      %s33 = sphi 0, %s40
      %s34 = sphi 0, %s32
      %s35 = sphi 0, %s33
      %s36 = sphi 0, %s34
      %s37 = sphi 0, %s35
      %s47 = sphi 0, %s49
      %s50 = sphi 0, %s47
      %s51 = sphi 0, %s50
      %s67 = sphi 0, %s51
      %s73 = sphi 0, %s75
      %s76 = sphi 0, %s73
      %s77 = sphi 0, %s76
      %s93 = sphi 0, %s77
      %s99 = sphi 0, %s101
      %s102 = sphi 0, %s99
      %s103 = sphi 0, %s102
      %s119 = sphi 0, %s103
      %s125 = sphi 0, %s127
      %s128 = sphi 0, %s125
      %s129 = sphi 0, %s128
      %s145 = sphi 0, %s129
      %s151 = sphi 0, %s153
      %s154 = sphi 0, %s151
      %s155 = sphi 0, %s154
      %s171 = sphi 0, %s155
      %s177 = sphi 0, %s179
      %s180 = sphi 0, %s177
      %s181 = sphi 0, %s180
      %s197 = sphi 0, %s181
      %s203 = sphi 0, %s205
      %s206 = sphi 0, %s203
      %s207 = sphi 0, %s206
      %s223 = sphi 0, %s207
      %s229 = sphi 0, %s231
      %s232 = sphi 0, %s229
      %s233 = sphi 0, %s232
      %s249 = sphi 0, %s233
      %s255 = sphi 0, %s257
      %s258 = sphi 0, %s255
      %s259 = sphi 0, %s258
      %s275 = sphi 0, %s259
      %s281 = sphi 0, %s283
      %s284 = sphi 0, %s281
      %s285 = sphi 0, %s284
      %s301 = sphi 0, %s285
      %s307 = sphi 0, %s309
      %s310 = sphi 0, %s307
      %s311 = sphi 0, %s310
      %s327 = sphi 0, %s311
      %s331 = sphi 0, %s331
      %s333 = sphi 0, %s331
      %s334 = sphi 0, %s333
      %s348 = sphi 0, %s334
      %s352 = sphi 0, %s352
      %s354 = sphi 0, %s352
      %s355 = sphi 0, %s354
      %s369 = sphi 0, %s355
      %s375 = sphi 0, %s377
      %s378 = sphi 0, %s375
      %s379 = sphi 0, %s378
      %s395 = sphi 0, %s379
    $region4: #{cct_forward.4} parent=1 // loop_header_branch
      %28 = sbr.rel (%p26) target = $region8
    $region5: #{cct_forward.4} parent=1 // loop_body
      %s30 = ssub.s32 %s25, 1
      %s31 = ssub.s32 %s25, 2
      %s38 = sadd.s32 1, %s33
      %p39 = scmp.ge.s32.totalorder %s38, 2
      %s40 = scalar_select %p39, 0, %s38
      %s41 = sadd.s32 1, %s32
      %s42 = scalar_select %p39, %s41, %s32
      %p43 = scmp.ge.s32.totalorder %s42, 1
      %s44 = scalar_select %p43, 0, %s42
      %s45 = ssub.s32 %s32, %s44
      %p46 = scmp.eq.s32.totalorder %s45, 0
      %s48 = sadd.s32 %s47, 1
      %s49 = scalar_select %p46, %s47, %s48
      %p52 = pneg %p46
      %p53 = scmp.eq.s32.totalorder %s25, 1
      %p54 = por %p52, %p53
      %p55 = scmp.ne.s32.totalorder %s47, %s50
      %p56 = scmp.eq.s32.totalorder %s25, 0
      %p57 = por %p55, %p56
      %p58 = scmp.ne.s32.totalorder %s47, %s50
      %p59 = scmp.eq.s32.totalorder %s30, 1
      %p60 = por %p58, %p59
      %p61 = scmp.ne.s32.totalorder %s50, %s51
      %p62 = scmp.eq.s32.totalorder %s30, 0
      %p63 = por %p61, %p62
      %p64 = scmp.ne.s32.totalorder %s50, %s51
      %p65 = scmp.eq.s32.totalorder %s31, 1
      %p66 = por %p64, %p65
      %p68 = scmp.ne.s32.totalorder %s51, %s67
      %p69 = scmp.eq.s32.totalorder %s31, 0
      %p70 = por %p68, %p69
      %s71 = ssub.s32 %s33, %s40
      %p72 = scmp.eq.s32.totalorder %s71, 0
      %s74 = sadd.s32 %s73, 1
      %s75 = scalar_select %p72, %s73, %s74
      %p78 = pneg %p72
      %p79 = scmp.eq.s32.totalorder %s25, 1
      %p80 = por %p78, %p79
      %p81 = scmp.ne.s32.totalorder %s73, %s76
      %p82 = scmp.eq.s32.totalorder %s25, 0
      %p83 = por %p81, %p82
      %p84 = scmp.ne.s32.totalorder %s73, %s76
      %p85 = scmp.eq.s32.totalorder %s30, 1
      %p86 = por %p84, %p85
      %p87 = scmp.ne.s32.totalorder %s76, %s77
      %p88 = scmp.eq.s32.totalorder %s30, 0
      %p89 = por %p87, %p88
      %p90 = scmp.ne.s32.totalorder %s76, %s77
      %p91 = scmp.eq.s32.totalorder %s31, 1
      %p92 = por %p90, %p91
      %p94 = scmp.ne.s32.totalorder %s77, %s93
      %p95 = scmp.eq.s32.totalorder %s31, 0
      %p96 = por %p94, %p95
      %s97 = ssub.s32 %s33, %s40
      %p98 = scmp.eq.s32.totalorder %s97, 0
      %s100 = sadd.s32 %s99, 1
      %s101 = scalar_select %p98, %s99, %s100
      %p104 = pneg %p98
      %p105 = scmp.eq.s32.totalorder %s25, 1
      %p106 = por %p104, %p105
      %p107 = scmp.ne.s32.totalorder %s99, %s102
      %p108 = scmp.eq.s32.totalorder %s25, 0
      %p109 = por %p107, %p108
      %p110 = scmp.ne.s32.totalorder %s99, %s102
      %p111 = scmp.eq.s32.totalorder %s30, 1
      %p112 = por %p110, %p111
      %p113 = scmp.ne.s32.totalorder %s102, %s103
      %p114 = scmp.eq.s32.totalorder %s30, 0
      %p115 = por %p113, %p114
      %p116 = scmp.ne.s32.totalorder %s102, %s103
      %p117 = scmp.eq.s32.totalorder %s31, 1
      %p118 = por %p116, %p117
      %p120 = scmp.ne.s32.totalorder %s103, %s119
      %p121 = scmp.eq.s32.totalorder %s31, 0
      %p122 = por %p120, %p121
      %s123 = ssub.s32 %s33, %s40
      %p124 = scmp.eq.s32.totalorder %s123, 0
      %s126 = sadd.s32 %s125, 1
      %s127 = scalar_select %p124, %s125, %s126
      %p130 = pneg %p124
      %p131 = scmp.eq.s32.totalorder %s25, 1
      %p132 = por %p130, %p131
      %p133 = scmp.ne.s32.totalorder %s125, %s128
      %p134 = scmp.eq.s32.totalorder %s25, 0
      %p135 = por %p133, %p134
      %p136 = scmp.ne.s32.totalorder %s125, %s128
      %p137 = scmp.eq.s32.totalorder %s30, 1
      %p138 = por %p136, %p137
      %p139 = scmp.ne.s32.totalorder %s128, %s129
      %p140 = scmp.eq.s32.totalorder %s30, 0
      %p141 = por %p139, %p140
      %p142 = scmp.ne.s32.totalorder %s128, %s129
      %p143 = scmp.eq.s32.totalorder %s31, 1
      %p144 = por %p142, %p143
      %p146 = scmp.ne.s32.totalorder %s129, %s145
      %p147 = scmp.eq.s32.totalorder %s31, 0
      %p148 = por %p146, %p147
      %s149 = ssub.s32 %s33, %s40
      %p150 = scmp.eq.s32.totalorder %s149, 0
      %s152 = sadd.s32 %s151, 1
      %s153 = scalar_select %p150, %s151, %s152
      %p156 = pneg %p150
      %p157 = scmp.eq.s32.totalorder %s25, 1
      %p158 = por %p156, %p157
      %p159 = scmp.ne.s32.totalorder %s151, %s154
      %p160 = scmp.eq.s32.totalorder %s25, 0
      %p161 = por %p159, %p160
      %p162 = scmp.ne.s32.totalorder %s151, %s154
      %p163 = scmp.eq.s32.totalorder %s30, 1
      %p164 = por %p162, %p163
      %p165 = scmp.ne.s32.totalorder %s154, %s155
      %p166 = scmp.eq.s32.totalorder %s30, 0
      %p167 = por %p165, %p166
      %p168 = scmp.ne.s32.totalorder %s154, %s155
      %p169 = scmp.eq.s32.totalorder %s31, 1
      %p170 = por %p168, %p169
      %p172 = scmp.ne.s32.totalorder %s155, %s171
      %p173 = scmp.eq.s32.totalorder %s31, 0
      %p174 = por %p172, %p173
      %s175 = ssub.s32 %s33, %s40
      %p176 = scmp.eq.s32.totalorder %s175, 0
      %s178 = sadd.s32 %s177, 1
      %s179 = scalar_select %p176, %s177, %s178
      %p182 = pneg %p176
      %p183 = scmp.eq.s32.totalorder %s25, 1
      %p184 = por %p182, %p183
      %p185 = scmp.ne.s32.totalorder %s177, %s180
      %p186 = scmp.eq.s32.totalorder %s25, 0
      %p187 = por %p185, %p186
      %p188 = scmp.ne.s32.totalorder %s177, %s180
      %p189 = scmp.eq.s32.totalorder %s30, 1
      %p190 = por %p188, %p189
      %p191 = scmp.ne.s32.totalorder %s180, %s181
      %p192 = scmp.eq.s32.totalorder %s30, 0
      %p193 = por %p191, %p192
      %p194 = scmp.ne.s32.totalorder %s180, %s181
      %p195 = scmp.eq.s32.totalorder %s31, 1
      %p196 = por %p194, %p195
      %p198 = scmp.ne.s32.totalorder %s181, %s197
      %p199 = scmp.eq.s32.totalorder %s31, 0
      %p200 = por %p198, %p199
      %s201 = ssub.s32 %s33, %s40
      %p202 = scmp.eq.s32.totalorder %s201, 0
      %s204 = sadd.s32 %s203, 1
      %s205 = scalar_select %p202, %s203, %s204
      %p208 = pneg %p202
      %p209 = scmp.eq.s32.totalorder %s25, 1
      %p210 = por %p208, %p209
      %p211 = scmp.ne.s32.totalorder %s203, %s206
      %p212 = scmp.eq.s32.totalorder %s25, 0
      %p213 = por %p211, %p212
      %p214 = scmp.ne.s32.totalorder %s203, %s206
      %p215 = scmp.eq.s32.totalorder %s30, 1
      %p216 = por %p214, %p215
      %p217 = scmp.ne.s32.totalorder %s206, %s207
      %p218 = scmp.eq.s32.totalorder %s30, 0
      %p219 = por %p217, %p218
      %p220 = scmp.ne.s32.totalorder %s206, %s207
      %p221 = scmp.eq.s32.totalorder %s31, 1
      %p222 = por %p220, %p221
      %p224 = scmp.ne.s32.totalorder %s207, %s223
      %p225 = scmp.eq.s32.totalorder %s31, 0
      %p226 = por %p224, %p225
      %s227 = ssub.s32 %s33, %s40
      %p228 = scmp.eq.s32.totalorder %s227, 0
      %s230 = sadd.s32 %s229, 1
      %s231 = scalar_select %p228, %s229, %s230
      %p234 = pneg %p228
      %p235 = scmp.eq.s32.totalorder %s25, 1
      %p236 = por %p234, %p235
      %p237 = scmp.ne.s32.totalorder %s229, %s232
      %p238 = scmp.eq.s32.totalorder %s25, 0
      %p239 = por %p237, %p238
      %p240 = scmp.ne.s32.totalorder %s229, %s232
      %p241 = scmp.eq.s32.totalorder %s30, 1
      %p242 = por %p240, %p241
      %p243 = scmp.ne.s32.totalorder %s232, %s233
      %p244 = scmp.eq.s32.totalorder %s30, 0
      %p245 = por %p243, %p244
      %p246 = scmp.ne.s32.totalorder %s232, %s233
      %p247 = scmp.eq.s32.totalorder %s31, 1
      %p248 = por %p246, %p247
      %p250 = scmp.ne.s32.totalorder %s233, %s249
      %p251 = scmp.eq.s32.totalorder %s31, 0
      %p252 = por %p250, %p251
      %s253 = ssub.s32 %s33, %s40
      %p254 = scmp.eq.s32.totalorder %s253, 0
      %s256 = sadd.s32 %s255, 1
      %s257 = scalar_select %p254, %s255, %s256
      %p260 = pneg %p254
      %p261 = scmp.eq.s32.totalorder %s25, 1
      %p262 = por %p260, %p261
      %p263 = scmp.ne.s32.totalorder %s255, %s258
      %p264 = scmp.eq.s32.totalorder %s25, 0
      %p265 = por %p263, %p264
      %p266 = scmp.ne.s32.totalorder %s255, %s258
      %p267 = scmp.eq.s32.totalorder %s30, 1
      %p268 = por %p266, %p267
      %p269 = scmp.ne.s32.totalorder %s258, %s259
      %p270 = scmp.eq.s32.totalorder %s30, 0
      %p271 = por %p269, %p270
      %p272 = scmp.ne.s32.totalorder %s258, %s259
      %p273 = scmp.eq.s32.totalorder %s31, 1
      %p274 = por %p272, %p273
      %p276 = scmp.ne.s32.totalorder %s259, %s275
      %p277 = scmp.eq.s32.totalorder %s31, 0
      %p278 = por %p276, %p277
      %s279 = ssub.s32 %s33, %s40
      %p280 = scmp.eq.s32.totalorder %s279, 0
      %s282 = sadd.s32 %s281, 1
      %s283 = scalar_select %p280, %s281, %s282
      %p286 = pneg %p280
      %p287 = scmp.eq.s32.totalorder %s25, 1
      %p288 = por %p286, %p287
      %p289 = scmp.ne.s32.totalorder %s281, %s284
      %p290 = scmp.eq.s32.totalorder %s25, 0
      %p291 = por %p289, %p290
      %p292 = scmp.ne.s32.totalorder %s281, %s284
      %p293 = scmp.eq.s32.totalorder %s30, 1
      %p294 = por %p292, %p293
      %p295 = scmp.ne.s32.totalorder %s284, %s285
      %p296 = scmp.eq.s32.totalorder %s30, 0
      %p297 = por %p295, %p296
      %p298 = scmp.ne.s32.totalorder %s284, %s285
      %p299 = scmp.eq.s32.totalorder %s31, 1
      %p300 = por %p298, %p299
      %p302 = scmp.ne.s32.totalorder %s285, %s301
      %p303 = scmp.eq.s32.totalorder %s31, 0
      %p304 = por %p302, %p303
      %s305 = ssub.s32 %s33, %s40
      %p306 = scmp.eq.s32.totalorder %s305, 0
      %s308 = sadd.s32 %s307, 1
      %s309 = scalar_select %p306, %s307, %s308
      %p312 = pneg %p306
      %p313 = scmp.eq.s32.totalorder %s25, 1
      %p314 = por %p312, %p313
      %p315 = scmp.ne.s32.totalorder %s307, %s310
      %p316 = scmp.eq.s32.totalorder %s25, 0
      %p317 = por %p315, %p316
      %p318 = scmp.ne.s32.totalorder %s307, %s310
      %p319 = scmp.eq.s32.totalorder %s30, 1
      %p320 = por %p318, %p319
      %p321 = scmp.ne.s32.totalorder %s310, %s311
      %p322 = scmp.eq.s32.totalorder %s30, 0
      %p323 = por %p321, %p322
      %p324 = scmp.ne.s32.totalorder %s310, %s311
      %p325 = scmp.eq.s32.totalorder %s31, 1
      %p326 = por %p324, %p325
      %p328 = scmp.ne.s32.totalorder %s311, %s327
      %p329 = scmp.eq.s32.totalorder %s31, 0
      %p330 = por %p328, %p329
      %s332 = sadd.s32 %s331, 1
      %p335 = scmp.eq.s32.totalorder %s25, 1
      %p336 = scmp.ne.s32.totalorder %s331, %s333
      %p337 = scmp.eq.s32.totalorder %s25, 0
      %p338 = por %p336, %p337
      %p339 = scmp.ne.s32.totalorder %s331, %s333
      %p340 = scmp.eq.s32.totalorder %s30, 1
      %p341 = por %p339, %p340
      %p342 = scmp.ne.s32.totalorder %s333, %s334
      %p343 = scmp.eq.s32.totalorder %s30, 0
      %p344 = por %p342, %p343
      %p345 = scmp.ne.s32.totalorder %s333, %s334
      %p346 = scmp.eq.s32.totalorder %s31, 1
      %p347 = por %p345, %p346
      %p349 = scmp.ne.s32.totalorder %s334, %s348
      %p350 = scmp.eq.s32.totalorder %s31, 0
      %p351 = por %p349, %p350
      %s353 = sadd.s32 %s352, 1
      %p356 = scmp.eq.s32.totalorder %s25, 1
      %p357 = scmp.ne.s32.totalorder %s352, %s354
      %p358 = scmp.eq.s32.totalorder %s25, 0
      %p359 = por %p357, %p358
      %p360 = scmp.ne.s32.totalorder %s352, %s354
      %p361 = scmp.eq.s32.totalorder %s30, 1
      %p362 = por %p360, %p361
      %p363 = scmp.ne.s32.totalorder %s354, %s355
      %p364 = scmp.eq.s32.totalorder %s30, 0
      %p365 = por %p363, %p364
      %p366 = scmp.ne.s32.totalorder %s354, %s355
      %p367 = scmp.eq.s32.totalorder %s31, 1
      %p368 = por %p366, %p367
      %p370 = scmp.ne.s32.totalorder %s355, %s369
      %p371 = scmp.eq.s32.totalorder %s31, 0
      %p372 = por %p370, %p371
      %s373 = ssub.s32 %s32, %s44
      %p374 = scmp.eq.s32.totalorder %s373, 0
      %s376 = sadd.s32 %s375, 1
      %s377 = scalar_select %p374, %s375, %s376
      %p380 = pneg %p374
      %p381 = scmp.eq.s32.totalorder %s25, 1
      %p382 = por %p380, %p381
      %p383 = scmp.ne.s32.totalorder %s375, %s378
      %p384 = scmp.eq.s32.totalorder %s25, 0
      %p385 = por %p383, %p384
      %p386 = scmp.ne.s32.totalorder %s375, %s378
      %p387 = scmp.eq.s32.totalorder %s30, 1
      %p388 = por %p386, %p387
      %p389 = scmp.ne.s32.totalorder %s378, %s379
      %p390 = scmp.eq.s32.totalorder %s30, 0
      %p391 = por %p389, %p390
      %p392 = scmp.ne.s32.totalorder %s378, %s379
      %p393 = scmp.eq.s32.totalorder %s31, 1
      %p394 = por %p392, %p393
      %p396 = scmp.ne.s32.totalorder %s379, %s395
      %p397 = scmp.eq.s32.totalorder %s31, 0
      %p398 = por %p396, %p397
      %p399 = scmp.le.s32.totalorder 1, %s25
      %p400 = scmp.lt.s32.totalorder %s25, 3
      %p401 = pnand %p399, %p400
      %p402 = pneg %p401
      // Predicated region
      $region9: #{cct_forward.4} parent=5 // pred_check
        _
      $region10: #{cct_forward.4} parent=5 // pred_check_branch
        %404 = sbr.rel (%p401) target = $region12
      $region11: #{cct_forward.4} parent=5 // pred_region
        %s405 = ssub.s32 %s25, 1
        // Predicated region
        $region13: #{cct_forward.4} parent=11 // pred_check
          %p406 = pneg %p63
        $region14: #{cct_forward.4} parent=11 // pred_check_branch
          %408 = sbr.rel (%p406) target = $region16
        $region15: #{cct_forward.4} parent=11 // pred_region
          %s409 = smul.u32 24, %s34
          %p410 = scmp.lt.s32.totalorder %s409, 23
          %s411 = scalar_select %p410, %s409, 23
          %s412 = smul.addr %s411, 8
          %s413 = scalar_lea.vmem %s0, %s412
          %s414 = smul.u32 24, %s34
        $region16: #{cct_forward.4} parent=11 // pred_fallthru
          _
        // Predicated region
        $region17: #{cct_forward.4} parent=11 // pred_check
          %p415 = pneg %p344
        $region18: #{cct_forward.4} parent=11 // pred_check_branch
          %417 = sbr.rel (%p415) target = $region20
        $region19: #{cct_forward.4} parent=11 // pred_region
          _
        $region20: #{cct_forward.4} parent=11 // pred_fallthru
          _
        // Predicated region
        $region21: #{cct_forward.4} parent=11 // pred_check
          %p418 = pneg %p365
        $region22: #{cct_forward.4} parent=11 // pred_check_branch
          %420 = sbr.rel (%p418) target = $region24
        $region23: #{cct_forward.4} parent=11 // pred_region
          _
        $region24: #{cct_forward.4} parent=11 // pred_fallthru
          _
      $region12: #{cct_forward.4} parent=5 // pred_fallthru
        _
      %p421 = scmp.lt.s32.totalorder %s25, 2
      // Predicated region
      $region25: #{cct_forward.4} parent=5 // pred_check
        %p422 = pneg %p421
      $region26: #{cct_forward.4} parent=5 // pred_check_branch
        %424 = sbr.rel (%p422) target = $region28
      $region27: #{cct_forward.4} parent=5 // pred_region
        // Predicated region
        $region29: #{cct_forward.4} parent=27 // pred_check
          %p425 = pneg %p83
        $region30: #{cct_forward.4} parent=27 // pred_check_branch
          %427 = sbr.rel (%p425) target = $region32
        $region31: #{cct_forward.4} parent=27 // pred_region
          %p428 = scmp.lt.s32.totalorder %s33, 1
          %s429 = scalar_select %p428, %s33, 1
          %s430 = scalar_lea.vmem %s1, %s429
        $region32: #{cct_forward.4} parent=27 // pred_fallthru
          _
        // Predicated region
        $region33: #{cct_forward.4} parent=27 // pred_check
          %p431 = pneg %p109
        $region34: #{cct_forward.4} parent=27 // pred_check_branch
          %433 = sbr.rel (%p431) target = $region36
        $region35: #{cct_forward.4} parent=27 // pred_region
          %p434 = scmp.lt.s32.totalorder %s33, 1
          %s435 = scalar_select %p434, %s33, 1
          %s436 = scalar_lea.vmem %s2, %s435
        $region36: #{cct_forward.4} parent=27 // pred_fallthru
          _
        // Predicated region
        $region37: #{cct_forward.4} parent=27 // pred_check
          %p437 = pneg %p135
        $region38: #{cct_forward.4} parent=27 // pred_check_branch
          %439 = sbr.rel (%p437) target = $region40
        $region39: #{cct_forward.4} parent=27 // pred_region
          %s440 = sand.u32 %s125, 1
          %s441 = scalar_lea.sflag [#allocation4], %s440
          %s442 = sand.u32 %s125, 1
          %s443 = smul.addr %s442, 192
          %s444 = scalar_lea.vmem [#allocation3], %s443
          %s446 = ssub.s32 3072, 3072
          %447 = vsyncadd %s441, %s446
          %s448 = smul.addr %s33, 48
          %s449 = smul.addr %s448, 64
          %s450 = scalar_lea.hbm %s3, %s449
          %s451 = sshll.u32 %s444, 4
          %s452 = int_to_ptr.vmem [resolvable:$true] %s451
          %457 = dma.hbm_to_vmem [thread:$0]  %s450, 3072, %s452, %s441, 192, 192, 12
        $region40: #{cct_forward.4} parent=27 // pred_fallthru
          _
        // Predicated region
        $region41: #{cct_forward.4} parent=27 // pred_check
          %p458 = pneg %p161
        $region42: #{cct_forward.4} parent=27 // pred_check_branch
          %460 = sbr.rel (%p458) target = $region44
        $region43: #{cct_forward.4} parent=27 // pred_region
          %p461 = scmp.lt.s32.totalorder %s33, 1
          %s462 = scalar_select %p461, %s33, 1
          %s463 = smul.addr %s462, 16
          %s464 = smul.addr %s463, 4
          %s465 = scalar_lea.vmem %s4, %s464
        $region44: #{cct_forward.4} parent=27 // pred_fallthru
          _
        // Predicated region
        $region45: #{cct_forward.4} parent=27 // pred_check
          %p466 = pneg %p187
        $region46: #{cct_forward.4} parent=27 // pred_check_branch
          %468 = sbr.rel (%p466) target = $region48
        $region47: #{cct_forward.4} parent=27 // pred_region
          %p469 = scmp.lt.s32.totalorder %s33, 1
          %s470 = scalar_select %p469, %s33, 1
          %s471 = scalar_lea.vmem %s5, %s470
        $region48: #{cct_forward.4} parent=27 // pred_fallthru
          _
        // Predicated region
        $region49: #{cct_forward.4} parent=27 // pred_check
          %p472 = pneg %p213
        $region50: #{cct_forward.4} parent=27 // pred_check_branch
          %474 = sbr.rel (%p472) target = $region52
        $region51: #{cct_forward.4} parent=27 // pred_region
          %p475 = scmp.lt.s32.totalorder %s33, 1
          %s476 = scalar_select %p475, %s33, 1
          %s477 = scalar_lea.vmem %s6, %s476
        $region52: #{cct_forward.4} parent=27 // pred_fallthru
          _
        // Predicated region
        $region53: #{cct_forward.4} parent=27 // pred_check
          %p478 = pneg %p239
        $region54: #{cct_forward.4} parent=27 // pred_check_branch
          %480 = sbr.rel (%p478) target = $region56
        $region55: #{cct_forward.4} parent=27 // pred_region
          %p481 = scmp.lt.s32.totalorder %s33, 1
          %s482 = scalar_select %p481, %s33, 1
          %s483 = smul.addr %s482, 64
          %s484 = smul.addr %s483, 4
          %s485 = scalar_lea.vmem %s7, %s484
        $region56: #{cct_forward.4} parent=27 // pred_fallthru
          _
        // Predicated region
        $region57: #{cct_forward.4} parent=27 // pred_check
          %p486 = pneg %p265
        $region58: #{cct_forward.4} parent=27 // pred_check_branch
          %488 = sbr.rel (%p486) target = $region60
        $region59: #{cct_forward.4} parent=27 // pred_region
          %s489 = sand.u32 %s25, 1
          %s490 = scalar_lea.sflag [#allocation6], %s489
          %s491 = sand.u32 %s255, 1
          %s492 = smul.addr %s491, 4
          %s493 = scalar_lea.vmem [#allocation5], %s492
          %s495 = ssub.s32 64, 64
          %496 = vsyncadd %s490, %s495
          %s497 = smul.addr %s33, 4
          %s498 = smul.addr %s497, 16
          %s499 = scalar_lea.hbm %s8, %s498
          %s501 = sshll.u32 %s493, 4
          %s502 = int_to_ptr.vmem [resolvable:$true] %s501
          %504 = dma.hbm_to_vmem [thread:$0]  %s499, 64, %s502, %s490
        $region60: #{cct_forward.4} parent=27 // pred_fallthru
          _
        // Predicated region
        $region61: #{cct_forward.4} parent=27 // pred_check
          %p505 = pneg %p291
        $region62: #{cct_forward.4} parent=27 // pred_check_branch
          %507 = sbr.rel (%p505) target = $region64
        $region63: #{cct_forward.4} parent=27 // pred_region
          %p508 = scmp.lt.s32.totalorder %s33, 1
          %s509 = scalar_select %p508, %s33, 1
          %s510 = smul.addr %s509, 64
          %s511 = smul.addr %s510, 4
          %s512 = scalar_lea.vmem %s9, %s511
        $region64: #{cct_forward.4} parent=27 // pred_fallthru
          _
        // Predicated region
        $region65: #{cct_forward.4} parent=27 // pred_check
          %p513 = pneg %p317
        $region66: #{cct_forward.4} parent=27 // pred_check_branch
          %515 = sbr.rel (%p513) target = $region68
        $region67: #{cct_forward.4} parent=27 // pred_region
          %s516 = sand.u32 %s25, 1
          %s517 = scalar_lea.sflag [#allocation6], %s516
          %s518 = sand.u32 %s307, 1
          %s519 = scalar_lea.vmem [#allocation7], %s518
          %s521 = ssub.s32 16, 16
          %522 = vsyncadd %s517, %s521
          %s523 = smul.addr %s33, 16
          %s524 = scalar_lea.hbm %s10, %s523
          %s526 = sshll.u32 %s519, 4
          %s527 = int_to_ptr.vmem [resolvable:$true] %s526
          %529 = dma.hbm_to_vmem [thread:$0]  %s524, 16, %s527, %s517
        $region68: #{cct_forward.4} parent=27 // pred_fallthru
          _
      $region28: #{cct_forward.4} parent=5 // pred_fallthru
        _
      %p530 = scmp.le.s32.totalorder 1, %s25
      %p531 = scmp.lt.s32.totalorder %s25, 3
      %p532 = pnand %p530, %p531
      %p533 = pneg %p532
      // Predicated region
      $region69: #{cct_forward.4} parent=5 // pred_check
        _
      $region70: #{cct_forward.4} parent=5 // pred_check_branch
        %535 = sbr.rel (%p532) target = $region72
      $region71: #{cct_forward.4} parent=5 // pred_region
        %s536 = ssub.s32 %s25, 1
        %s537 = sand.u32 %s128, 1
        %s538 = scalar_lea.sflag [#allocation4], %s537
        %s539 = sand.u32 %s128, 1
        %s540 = smul.addr %s539, 192
        %s541 = scalar_lea.vmem [#allocation3], %s540
        // Predicated region
        $region73: #{cct_forward.4} parent=71 // pred_check
          %p542 = pneg %p141
        $region74: #{cct_forward.4} parent=71 // pred_check_branch
          %544 = sbr.rel (%p542) target = $region76
        $region75: #{cct_forward.4} parent=71 // pred_region
          %545 = dma.done %s538, 3072
        $region76: #{cct_forward.4} parent=71 // pred_fallthru
          _
        %s546 = sand.u32 %s30, 1
        %s547 = scalar_lea.sflag [#allocation6], %s546
        %s548 = sand.u32 %s258, 1
        %s549 = smul.addr %s548, 4
        %s550 = scalar_lea.vmem [#allocation5], %s549
        // Predicated region
        $region77: #{cct_forward.4} parent=71 // pred_check
          %p551 = pneg %p271
        $region78: #{cct_forward.4} parent=71 // pred_check_branch
          %553 = sbr.rel (%p551) target = $region80
        $region79: #{cct_forward.4} parent=71 // pred_region
          %554 = dma.done %s547, 64
        $region80: #{cct_forward.4} parent=71 // pred_fallthru
          _
        %s555 = sand.u32 %s30, 1
        %s556 = scalar_lea.sflag [#allocation6], %s555
        %s557 = sand.u32 %s310, 1
        %s558 = scalar_lea.vmem [#allocation7], %s557
        // Predicated region
        $region81: #{cct_forward.4} parent=71 // pred_check
          %p559 = pneg %p323
        $region82: #{cct_forward.4} parent=71 // pred_check_branch
          %561 = sbr.rel (%p559) target = $region84
        $region83: #{cct_forward.4} parent=71 // pred_region
          %562 = dma.done %s556, 16
        $region84: #{cct_forward.4} parent=71 // pred_fallthru
          _
        %s563 = smul.u32 24, %s34
        %p564 = scmp.lt.s32.totalorder %s563, 23
        %s565 = scalar_select %p564, %s563, 23
        %s566 = smul.addr %s565, 8
        %s567 = scalar_lea.vmem %s0, %s566
        %p568 = pneg %p63
        %p569 = pneg %p60
        %p570 = scmp.lt.s32.totalorder %s35, 1
        %s571 = scalar_select %p570, %s35, 1
        %s572 = scalar_lea.vmem %s1, %s571
        %p573 = pneg %p89
        %p574 = pneg %p86
        %p575 = scmp.lt.s32.totalorder %s35, 1
        %s576 = scalar_select %p575, %s35, 1
        %s577 = scalar_lea.vmem %s2, %s576
        %p578 = pneg %p115
        %p579 = pneg %p112
        %s580 = sand.u32 %s128, 1
        %s581 = scalar_lea.sflag [#allocation4], %s580
        %s582 = sand.u32 %s128, 1
        %s583 = smul.addr %s582, 192
        %s584 = scalar_lea.vmem [#allocation3], %s583
        %p585 = pneg %p141
        %p586 = pneg %p138
        %p587 = scmp.lt.s32.totalorder %s35, 1
        %s588 = scalar_select %p587, %s35, 1
        %s589 = smul.addr %s588, 16
        %s590 = smul.addr %s589, 4
        %s591 = scalar_lea.vmem %s4, %s590
        %p592 = pneg %p167
        %p593 = pneg %p164
        %p594 = scmp.lt.s32.totalorder %s35, 1
        %s595 = scalar_select %p594, %s35, 1
        %s596 = scalar_lea.vmem %s5, %s595
        %p597 = pneg %p193
        %p598 = pneg %p190
        %p599 = scmp.lt.s32.totalorder %s35, 1
        %s600 = scalar_select %p599, %s35, 1
        %s601 = scalar_lea.vmem %s6, %s600
        %p602 = pneg %p219
        %p603 = pneg %p216
        %p604 = scmp.lt.s32.totalorder %s35, 1
        %s605 = scalar_select %p604, %s35, 1
        %s606 = smul.addr %s605, 64
        %s607 = smul.addr %s606, 4
        %s608 = scalar_lea.vmem %s7, %s607
        %p609 = pneg %p245
        %p610 = pneg %p242
        %s611 = sand.u32 %s30, 1
        %s612 = scalar_lea.sflag [#allocation6], %s611
        %s613 = sand.u32 %s258, 1
        %s614 = smul.addr %s613, 4
        %s615 = scalar_lea.vmem [#allocation5], %s614
        %p616 = pneg %p271
        %p617 = pneg %p268
        %p618 = scmp.lt.s32.totalorder %s35, 1
        %s619 = scalar_select %p618, %s35, 1
        %s620 = smul.addr %s619, 64
        %s621 = smul.addr %s620, 4
        %s622 = scalar_lea.vmem %s9, %s621
        %p623 = pneg %p297
        %p624 = pneg %p294
        %s625 = sand.u32 %s30, 1
        %s626 = scalar_lea.sflag [#allocation6], %s625
        %s627 = sand.u32 %s310, 1
        %s628 = scalar_lea.vmem [#allocation7], %s627
        %p629 = pneg %p323
        %p630 = pneg %p320
        %p631 = pneg %p344
        %p632 = pneg %p341
        %p633 = pneg %p365
        %p634 = pneg %p362
        %p635 = pneg %p391
        %p636 = pneg %p388
        %s637 = smul.u32 24, %s34
        %p638 = scmp.lt.s32.totalorder %s637, 23
        %s639 = scalar_select %p638, %s637, 23
        %s640 = smul.addr %s639, 8
        %s641 = scalar_lea.vmem %s13, %s640
        %s642 = smul.u32 24, %s34
        %p643 = scmp.lt.s32.totalorder %s642, 23
        %s644 = scalar_select %p643, %s642, 23
        %s645 = smul.addr %s644, 8
        %s646 = scalar_lea.vmem %s0, %s645
        %s647 = smul.u32 24, %s34
        %p648 = scmp.lt.s32.totalorder %s35, 1
        %s649 = scalar_select %p648, %s35, 1
        %s650 = scalar_lea.vmem %s1, %s649
        %p651 = scmp.lt.s32.totalorder %s35, 1
        %s652 = scalar_select %p651, %s35, 1
        %s653 = scalar_lea.vmem %s2, %s652
        %p654 = scmp.lt.s32.totalorder %s35, 1
        %s655 = scalar_select %p654, %s35, 1
        %s656 = smul.addr %s655, 16
        %s657 = smul.addr %s656, 4
        %s658 = scalar_lea.vmem %s4, %s657
        %p659 = scmp.lt.s32.totalorder %s35, 1
        %s660 = scalar_select %p659, %s35, 1
        %s661 = scalar_lea.vmem %s5, %s660
        %p662 = scmp.lt.s32.totalorder %s35, 1
        %s663 = scalar_select %p662, %s35, 1
        %s664 = scalar_lea.vmem %s6, %s663
        %p665 = scmp.lt.s32.totalorder %s35, 1
        %s666 = scalar_select %p665, %s35, 1
        %s667 = smul.addr %s666, 64
        %s668 = smul.addr %s667, 4
        %s669 = scalar_lea.vmem %s7, %s668
        %p670 = scmp.lt.s32.totalorder %s35, 1
        %s671 = scalar_select %p670, %s35, 1
        %s672 = smul.addr %s671, 64
        %s673 = smul.addr %s672, 4
        %s674 = scalar_lea.vmem %s9, %s673
        %s675 = smul.u32 24, %s34
        %p676 = scmp.lt.s32.totalorder %s675, 23
        %s677 = scalar_select %p676, %s675, 23
        %s678 = smul.addr %s677, 8
        %s679 = scalar_lea.vmem %s13, %s678
        %s680 = smul.u32 24, %s34
        %p682 = scmp.eq.s32.totalorder %s35, 0
        // Predicated region
        $region85: #{cct_forward.4} parent=71 // pred_check
          %p683 = pneg %p682
        $region86: #{cct_forward.4} parent=71 // pred_check_branch
          %685 = sbr.rel (%p683) target = $region88
        $region87: #{cct_forward.4} parent=71 // pred_region
          %v686 = vld [vmem:[%s646] sm:$0xff]
          %v687 = vld [vmem:[%s646 + $0x8] sm:$0xff]
          %v688 = vld [vmem:[%s646 + $0x10] sm:$0xff]
          %v689 = vld [vmem:[%s646 + $0x18] sm:$0xff]
          %v690 = vld [vmem:[%s646 + $0x20] sm:$0xff]
          %v691 = vld [vmem:[%s646 + $0x28] sm:$0xff]
          %v692 = vld [vmem:[%s646 + $0x30] sm:$0xff]
          %v693 = vld [vmem:[%s646 + $0x38] sm:$0xff]
          %v694 = vld [vmem:[%s646 + $0x40] sm:$0xff]
          %v695 = vld [vmem:[%s646 + $0x48] sm:$0xff]
          %v696 = vld [vmem:[%s646 + $0x50] sm:$0xff]
          %v697 = vld [vmem:[%s646 + $0x58] sm:$0xff]
          %v698 = vld [vmem:[%s646 + $0x60] sm:$0xff]
          %v699 = vld [vmem:[%s646 + $0x68] sm:$0xff]
          %v700 = vld [vmem:[%s646 + $0x70] sm:$0xff]
          %v701 = vld [vmem:[%s646 + $0x78] sm:$0xff]
          %v702 = vld [vmem:[%s646 + $0x80] sm:$0xff]
          %v703 = vld [vmem:[%s646 + $0x88] sm:$0xff]
          %v704 = vld [vmem:[%s646 + $0x90] sm:$0xff]
          %v705 = vld [vmem:[%s646 + $0x98] sm:$0xff]
          %v706 = vld [vmem:[%s646 + $0xa0] sm:$0xff]
          %v707 = vld [vmem:[%s646 + $0xa8] sm:$0xff]
          %v708 = vld [vmem:[%s646 + $0xb0] sm:$0xff]
          %v709 = vld [vmem:[%s646 + $0xb8] sm:$0xff]
          %710 = vst [vmem:[#allocation2] sm:$0xff] %v686
          %711 = vst [vmem:[#allocation2 + $0x8] sm:$0xff] %v687
          %712 = vst [vmem:[#allocation2 + $0x10] sm:$0xff] %v688
          %713 = vst [vmem:[#allocation2 + $0x18] sm:$0xff] %v689
          %714 = vst [vmem:[#allocation2 + $0x20] sm:$0xff] %v690
          %715 = vst [vmem:[#allocation2 + $0x28] sm:$0xff] %v691
          %716 = vst [vmem:[#allocation2 + $0x30] sm:$0xff] %v692
          %717 = vst [vmem:[#allocation2 + $0x38] sm:$0xff] %v693
          %718 = vst [vmem:[#allocation2 + $0x40] sm:$0xff] %v694
          %719 = vst [vmem:[#allocation2 + $0x48] sm:$0xff] %v695
          %720 = vst [vmem:[#allocation2 + $0x50] sm:$0xff] %v696
          %721 = vst [vmem:[#allocation2 + $0x58] sm:$0xff] %v697
          %722 = vst [vmem:[#allocation2 + $0x60] sm:$0xff] %v698
          %723 = vst [vmem:[#allocation2 + $0x68] sm:$0xff] %v699
          %724 = vst [vmem:[#allocation2 + $0x70] sm:$0xff] %v700
          %725 = vst [vmem:[#allocation2 + $0x78] sm:$0xff] %v701
          %726 = vst [vmem:[#allocation2 + $0x80] sm:$0xff] %v702
          %727 = vst [vmem:[#allocation2 + $0x88] sm:$0xff] %v703
          %728 = vst [vmem:[#allocation2 + $0x90] sm:$0xff] %v704
          %729 = vst [vmem:[#allocation2 + $0x98] sm:$0xff] %v705
          %730 = vst [vmem:[#allocation2 + $0xa0] sm:$0xff] %v706
          %731 = vst [vmem:[#allocation2 + $0xa8] sm:$0xff] %v707
          %732 = vst [vmem:[#allocation2 + $0xb0] sm:$0xff] %v708
          %733 = vst [vmem:[#allocation2 + $0xb8] sm:$0xff] %v709
        $region88: #{cct_forward.4} parent=71 // pred_fallthru
          _
        %v734 = vld [vmem:[#allocation2] sm:$0xff]
        %v735 = vld [vmem:[#allocation2 + $0x8] sm:$0xff]
        %v736 = vld [vmem:[#allocation2 + $0x10] sm:$0xff]
        %v737 = vld [vmem:[#allocation2 + $0x18] sm:$0xff]
        %v738 = vld [vmem:[#allocation2 + $0x20] sm:$0xff]
        %v739 = vld [vmem:[#allocation2 + $0x28] sm:$0xff]
        %v740 = vld [vmem:[#allocation2 + $0x30] sm:$0xff]
        %v741 = vld [vmem:[#allocation2 + $0x38] sm:$0xff]
        %v742 = vld [vmem:[#allocation2 + $0x40] sm:$0xff]
        %v743 = vld [vmem:[#allocation2 + $0x48] sm:$0xff]
        %v744 = vld [vmem:[#allocation2 + $0x50] sm:$0xff]
        %v745 = vld [vmem:[#allocation2 + $0x58] sm:$0xff]
        %v746 = vld [vmem:[#allocation2 + $0x60] sm:$0xff]
        %v747 = vld [vmem:[#allocation2 + $0x68] sm:$0xff]
        %v748 = vld [vmem:[#allocation2 + $0x70] sm:$0xff]
        %v749 = vld [vmem:[#allocation2 + $0x78] sm:$0xff]
        %v750 = vld [vmem:[#allocation2 + $0x80] sm:$0xff]
        %v751 = vld [vmem:[#allocation2 + $0x88] sm:$0xff]
        %v752 = vld [vmem:[#allocation2 + $0x90] sm:$0xff]
        %v753 = vld [vmem:[#allocation2 + $0x98] sm:$0xff]
        %v754 = vld [vmem:[#allocation2 + $0xa0] sm:$0xff]
        %v755 = vld [vmem:[#allocation2 + $0xa8] sm:$0xff]
        %v756 = vld [vmem:[#allocation2 + $0xb0] sm:$0xff]
        %v757 = vld [vmem:[#allocation2 + $0xb8] sm:$0xff]
        %v758 = vld [vmem:[%s650] sm:$0x1]
        %v759 = vld [vmem:[%s653] sm:$0x1]
        %760 = vadd.xlane.f32.xlu0 %v734
        %v761 = vpop.xlane.xlu0 %760
        %762 = vadd.xlane.f32.xlu0 %v735
        %v763 = vpop.xlane.xlu0 %762
        %764 = vadd.xlane.f32.xlu0 %v736
        %v765 = vpop.xlane.xlu0 %764
        %766 = vadd.xlane.f32.xlu0 %v737
        %v767 = vpop.xlane.xlu0 %766
        %768 = vadd.xlane.f32.xlu0 %v738
        %v769 = vpop.xlane.xlu0 %768
        %770 = vadd.xlane.f32.xlu0 %v739
        %v771 = vpop.xlane.xlu0 %770
        %772 = vadd.xlane.f32.xlu0 %v740
        %v773 = vpop.xlane.xlu0 %772
        %774 = vadd.xlane.f32.xlu0 %v741
        %v775 = vpop.xlane.xlu0 %774
        %776 = vadd.xlane.f32.xlu0 %v742
        %v777 = vpop.xlane.xlu0 %776
        %778 = vadd.xlane.f32.xlu0 %v743
        %v779 = vpop.xlane.xlu0 %778
        %780 = vadd.xlane.f32.xlu0 %v744
        %v781 = vpop.xlane.xlu0 %780
        %782 = vadd.xlane.f32.xlu0 %v745
        %v783 = vpop.xlane.xlu0 %782
        %784 = vadd.xlane.f32.xlu0 %v746
        %v785 = vpop.xlane.xlu0 %784
        %786 = vadd.xlane.f32.xlu0 %v747
        %v787 = vpop.xlane.xlu0 %786
        %788 = vadd.xlane.f32.xlu0 %v748
        %v789 = vpop.xlane.xlu0 %788
        %790 = vadd.xlane.f32.xlu0 %v749
        %v791 = vpop.xlane.xlu0 %790
        %792 = vadd.xlane.f32.xlu0 %v750
        %v793 = vpop.xlane.xlu0 %792
        %794 = vadd.xlane.f32.xlu0 %v751
        %v795 = vpop.xlane.xlu0 %794
        %796 = vadd.xlane.f32.xlu0 %v752
        %v797 = vpop.xlane.xlu0 %796
        %798 = vadd.xlane.f32.xlu0 %v753
        %v799 = vpop.xlane.xlu0 %798
        %800 = vadd.xlane.f32.xlu0 %v754
        %v801 = vpop.xlane.xlu0 %800
        %802 = vadd.xlane.f32.xlu0 %v755
        %v803 = vpop.xlane.xlu0 %802
        %804 = vadd.xlane.f32.xlu0 %v756
        %v805 = vpop.xlane.xlu0 %804
        %806 = vadd.xlane.f32.xlu0 %v757
        %v807 = vpop.xlane.xlu0 %806
        %v808 = vrcp.pop 128.0
        %v809 = vmul.f32 %v761, %v808
        %v810 = vmul.f32 %v763, %v808
        %v811 = vmul.f32 %v765, %v808
        %v812 = vmul.f32 %v767, %v808
        %v813 = vmul.f32 %v769, %v808
        %v814 = vmul.f32 %v771, %v808
        %v815 = vmul.f32 %v773, %v808
        %v816 = vmul.f32 %v775, %v808
        %v817 = vmul.f32 %v777, %v808
        %v818 = vmul.f32 %v779, %v808
        %v819 = vmul.f32 %v781, %v808
        %v820 = vmul.f32 %v783, %v808
        %v821 = vmul.f32 %v785, %v808
        %v822 = vmul.f32 %v787, %v808
        %v823 = vmul.f32 %v789, %v808
        %v824 = vmul.f32 %v791, %v808
        %v825 = vmul.f32 %v793, %v808
        %v826 = vmul.f32 %v795, %v808
        %v827 = vmul.f32 %v797, %v808
        %v828 = vmul.f32 %v799, %v808
        %v829 = vmul.f32 %v801, %v808
        %v830 = vmul.f32 %v803, %v808
        %v831 = vmul.f32 %v805, %v808
        %v832 = vmul.f32 %v807, %v808
        %v833 = vsub.f32 %v734, %v809
        %v834 = vsub.f32 %v735, %v810
        %v835 = vsub.f32 %v736, %v811
        %v836 = vsub.f32 %v737, %v812
        %v837 = vsub.f32 %v738, %v813
        %v838 = vsub.f32 %v739, %v814
        %v839 = vsub.f32 %v740, %v815
        %v840 = vsub.f32 %v741, %v816
        %v841 = vsub.f32 %v742, %v817
        %v842 = vsub.f32 %v743, %v818
        %v843 = vsub.f32 %v744, %v819
        %v844 = vsub.f32 %v745, %v820
        %v845 = vsub.f32 %v746, %v821
        %v846 = vsub.f32 %v747, %v822
        %v847 = vsub.f32 %v748, %v823
        %v848 = vsub.f32 %v749, %v824
        %v849 = vsub.f32 %v750, %v825
        %v850 = vsub.f32 %v751, %v826
        %v851 = vsub.f32 %v752, %v827
        %v852 = vsub.f32 %v753, %v828
        %v853 = vsub.f32 %v754, %v829
        %v854 = vsub.f32 %v755, %v830
        %v855 = vsub.f32 %v756, %v831
        %v856 = vsub.f32 %v757, %v832
        %v857 = vmul.f32 %v833, %v833
        %v858 = vmul.f32 %v834, %v834
        %v859 = vmul.f32 %v835, %v835
        %v860 = vmul.f32 %v836, %v836
        %v861 = vmul.f32 %v837, %v837
        %v862 = vmul.f32 %v838, %v838
        %v863 = vmul.f32 %v839, %v839
        %v864 = vmul.f32 %v840, %v840
        %v865 = vmul.f32 %v841, %v841
        %v866 = vmul.f32 %v842, %v842
        %v867 = vmul.f32 %v843, %v843
        %v868 = vmul.f32 %v844, %v844
        %v869 = vmul.f32 %v845, %v845
        %v870 = vmul.f32 %v846, %v846
        %v871 = vmul.f32 %v847, %v847
        %v872 = vmul.f32 %v848, %v848
        %v873 = vmul.f32 %v849, %v849
        %v874 = vmul.f32 %v850, %v850
        %v875 = vmul.f32 %v851, %v851
        %v876 = vmul.f32 %v852, %v852
        %v877 = vmul.f32 %v853, %v853
        %v878 = vmul.f32 %v854, %v854
        %v879 = vmul.f32 %v855, %v855
        %v880 = vmul.f32 %v856, %v856
        %881 = vadd.xlane.f32.xlu0 %v857
        %v882 = vpop.xlane.xlu0 %881
        %883 = vadd.xlane.f32.xlu0 %v858
        %v884 = vpop.xlane.xlu0 %883
        %885 = vadd.xlane.f32.xlu0 %v859
        %v886 = vpop.xlane.xlu0 %885
        %887 = vadd.xlane.f32.xlu0 %v860
        %v888 = vpop.xlane.xlu0 %887
        %889 = vadd.xlane.f32.xlu0 %v861
        %v890 = vpop.xlane.xlu0 %889
        %891 = vadd.xlane.f32.xlu0 %v862
        %v892 = vpop.xlane.xlu0 %891
        %893 = vadd.xlane.f32.xlu0 %v863
        %v894 = vpop.xlane.xlu0 %893
        %895 = vadd.xlane.f32.xlu0 %v864
        %v896 = vpop.xlane.xlu0 %895
        %897 = vadd.xlane.f32.xlu0 %v865
        %v898 = vpop.xlane.xlu0 %897
        %899 = vadd.xlane.f32.xlu0 %v866
        %v900 = vpop.xlane.xlu0 %899
        %901 = vadd.xlane.f32.xlu0 %v867
        %v902 = vpop.xlane.xlu0 %901
        %903 = vadd.xlane.f32.xlu0 %v868
        %v904 = vpop.xlane.xlu0 %903
        %905 = vadd.xlane.f32.xlu0 %v869
        %v906 = vpop.xlane.xlu0 %905
        %907 = vadd.xlane.f32.xlu0 %v870
        %v908 = vpop.xlane.xlu0 %907
        %909 = vadd.xlane.f32.xlu0 %v871
        %v910 = vpop.xlane.xlu0 %909
        %911 = vadd.xlane.f32.xlu0 %v872
        %v912 = vpop.xlane.xlu0 %911
        %913 = vadd.xlane.f32.xlu0 %v873
        %v914 = vpop.xlane.xlu0 %913
        %915 = vadd.xlane.f32.xlu0 %v874
        %v916 = vpop.xlane.xlu0 %915
        %917 = vadd.xlane.f32.xlu0 %v875
        %v918 = vpop.xlane.xlu0 %917
        %919 = vadd.xlane.f32.xlu0 %v876
        %v920 = vpop.xlane.xlu0 %919
        %921 = vadd.xlane.f32.xlu0 %v877
        %v922 = vpop.xlane.xlu0 %921
        %923 = vadd.xlane.f32.xlu0 %v878
        %v924 = vpop.xlane.xlu0 %923
        %925 = vadd.xlane.f32.xlu0 %v879
        %v926 = vpop.xlane.xlu0 %925
        %927 = vadd.xlane.f32.xlu0 %v880
        %v928 = vpop.xlane.xlu0 %927
        %v929 = vmul.f32 %v882, %v808
        %v930 = vmul.f32 %v884, %v808
        %v931 = vmul.f32 %v886, %v808
        %v932 = vmul.f32 %v888, %v808
        %v933 = vmul.f32 %v890, %v808
        %v934 = vmul.f32 %v892, %v808
        %v935 = vmul.f32 %v894, %v808
        %v936 = vmul.f32 %v896, %v808
        %v937 = vmul.f32 %v898, %v808
        %v938 = vmul.f32 %v900, %v808
        %v939 = vmul.f32 %v902, %v808
        %v940 = vmul.f32 %v904, %v808
        %v941 = vmul.f32 %v906, %v808
        %v942 = vmul.f32 %v908, %v808
        %v943 = vmul.f32 %v910, %v808
        %v944 = vmul.f32 %v912, %v808
        %v945 = vmul.f32 %v914, %v808
        %v946 = vmul.f32 %v916, %v808
        %v947 = vmul.f32 %v918, %v808
        %v948 = vmul.f32 %v920, %v808
        %v949 = vmul.f32 %v922, %v808
        %v950 = vmul.f32 %v924, %v808
        %v951 = vmul.f32 %v926, %v808
        %v952 = vmul.f32 %v928, %v808
        %v953 = vadd.f32 %v929, 1e-05
        %v954 = vadd.f32 %v930, 1e-05
        %v955 = vadd.f32 %v931, 1e-05
        %v956 = vadd.f32 %v932, 1e-05
        %v957 = vadd.f32 %v933, 1e-05
        %v958 = vadd.f32 %v934, 1e-05
        %v959 = vadd.f32 %v935, 1e-05
        %v960 = vadd.f32 %v936, 1e-05
        %v961 = vadd.f32 %v937, 1e-05
        %v962 = vadd.f32 %v938, 1e-05
        %v963 = vadd.f32 %v939, 1e-05
        %v964 = vadd.f32 %v940, 1e-05
        %v965 = vadd.f32 %v941, 1e-05
        %v966 = vadd.f32 %v942, 1e-05
        %v967 = vadd.f32 %v943, 1e-05
        %v968 = vadd.f32 %v944, 1e-05
        %v969 = vadd.f32 %v945, 1e-05
        %v970 = vadd.f32 %v946, 1e-05
        %v971 = vadd.f32 %v947, 1e-05
        %v972 = vadd.f32 %v948, 1e-05
        %v973 = vadd.f32 %v949, 1e-05
        %v974 = vadd.f32 %v950, 1e-05
        %v975 = vadd.f32 %v951, 1e-05
        %v976 = vadd.f32 %v952, 1e-05
        %v977 = vrsqrt.pop %v953
        %v978 = vrsqrt.pop %v954
        %v979 = vrsqrt.pop %v955
        %v980 = vrsqrt.pop %v956
        %v981 = vrsqrt.pop %v957
        %v982 = vrsqrt.pop %v958
        %v983 = vrsqrt.pop %v959
        %v984 = vrsqrt.pop %v960
        %v985 = vrsqrt.pop %v961
        %v986 = vrsqrt.pop %v962
        %v987 = vrsqrt.pop %v963
        %v988 = vrsqrt.pop %v964
        %v989 = vrsqrt.pop %v965
        %v990 = vrsqrt.pop %v966
        %v991 = vrsqrt.pop %v967
        %v992 = vrsqrt.pop %v968
        %v993 = vrsqrt.pop %v969
        %v994 = vrsqrt.pop %v970
        %v995 = vrsqrt.pop %v971
        %v996 = vrsqrt.pop %v972
        %v997 = vrsqrt.pop %v973
        %v998 = vrsqrt.pop %v974
        %v999 = vrsqrt.pop %v975
        %v1000 = vrsqrt.pop %v976
        %v1001 = vmul.f32 %v833, %v977
        %v1002 = vmul.f32 %v834, %v978
        %v1003 = vmul.f32 %v835, %v979
        %v1004 = vmul.f32 %v836, %v980
        %v1005 = vmul.f32 %v837, %v981
        %v1006 = vmul.f32 %v838, %v982
        %v1007 = vmul.f32 %v839, %v983
        %v1008 = vmul.f32 %v840, %v984
        %v1009 = vmul.f32 %v841, %v985
        %v1010 = vmul.f32 %v842, %v986
        %v1011 = vmul.f32 %v843, %v987
        %v1012 = vmul.f32 %v844, %v988
        %v1013 = vmul.f32 %v845, %v989
        %v1014 = vmul.f32 %v846, %v990
        %v1015 = vmul.f32 %v847, %v991
        %v1016 = vmul.f32 %v848, %v992
        %v1017 = vmul.f32 %v849, %v993
        %v1018 = vmul.f32 %v850, %v994
        %v1019 = vmul.f32 %v851, %v995
        %v1020 = vmul.f32 %v852, %v996
        %v1021 = vmul.f32 %v853, %v997
        %v1022 = vmul.f32 %v854, %v998
        %v1023 = vmul.f32 %v855, %v999
        %v1024 = vmul.f32 %v856, %v1000
        %v1026 = vlaneseq
        %v1027 = vshrl.u32 %v1026, 7
        %v1028 = vsub.s32 0, %v1027
        %v1029 = vrot.slane %v758, %v1028
        %v1031 = vmul.f32 %v1001, %v1029
        %v1032 = vmul.f32 %v1002, %v1029
        %v1033 = vmul.f32 %v1003, %v1029
        %v1034 = vmul.f32 %v1004, %v1029
        %v1035 = vmul.f32 %v1005, %v1029
        %v1036 = vmul.f32 %v1006, %v1029
        %v1037 = vmul.f32 %v1007, %v1029
        %v1038 = vmul.f32 %v1008, %v1029
        %v1039 = vmul.f32 %v1009, %v1029
        %v1040 = vmul.f32 %v1010, %v1029
        %v1041 = vmul.f32 %v1011, %v1029
        %v1042 = vmul.f32 %v1012, %v1029
        %v1043 = vmul.f32 %v1013, %v1029
        %v1044 = vmul.f32 %v1014, %v1029
        %v1045 = vmul.f32 %v1015, %v1029
        %v1046 = vmul.f32 %v1016, %v1029
        %v1047 = vmul.f32 %v1017, %v1029
        %v1048 = vmul.f32 %v1018, %v1029
        %v1049 = vmul.f32 %v1019, %v1029
        %v1050 = vmul.f32 %v1020, %v1029
        %v1051 = vmul.f32 %v1021, %v1029
        %v1052 = vmul.f32 %v1022, %v1029
        %v1053 = vmul.f32 %v1023, %v1029
        %v1054 = vmul.f32 %v1024, %v1029
        %v1056 = vlaneseq
        %v1057 = vshrl.u32 %v1056, 7
        %v1058 = vsub.s32 0, %v1057
        %v1059 = vrot.slane %v759, %v1058
        %v1061 = vadd.f32 %v1031, %v1059
        %v1062 = vadd.f32 %v1032, %v1059
        %v1063 = vadd.f32 %v1033, %v1059
        %v1064 = vadd.f32 %v1034, %v1059
        %v1065 = vadd.f32 %v1035, %v1059
        %v1066 = vadd.f32 %v1036, %v1059
        %v1067 = vadd.f32 %v1037, %v1059
        %v1068 = vadd.f32 %v1038, %v1059
        %v1069 = vadd.f32 %v1039, %v1059
        %v1070 = vadd.f32 %v1040, %v1059
        %v1071 = vadd.f32 %v1041, %v1059
        %v1072 = vadd.f32 %v1042, %v1059
        %v1073 = vadd.f32 %v1043, %v1059
        %v1074 = vadd.f32 %v1044, %v1059
        %v1075 = vadd.f32 %v1045, %v1059
        %v1076 = vadd.f32 %v1046, %v1059
        %v1077 = vadd.f32 %v1047, %v1059
        %v1078 = vadd.f32 %v1048, %v1059
        %v1079 = vadd.f32 %v1049, %v1059
        %v1080 = vadd.f32 %v1050, %v1059
        %v1081 = vadd.f32 %v1051, %v1059
        %v1082 = vadd.f32 %v1052, %v1059
        %v1083 = vadd.f32 %v1053, %v1059
        %v1084 = vadd.f32 %v1054, %v1059
        %v1085 = vpack.c.bf16 %v1062, %v1061
        %v1086 = vpack.c.bf16 %v1064, %v1063
        %v1087 = vpack.c.bf16 %v1066, %v1065
        %v1088 = vpack.c.bf16 %v1068, %v1067
        %v1089 = vpack.c.bf16 %v1070, %v1069
        %v1090 = vpack.c.bf16 %v1072, %v1071
        %v1091 = vpack.c.bf16 %v1074, %v1073
        %v1092 = vpack.c.bf16 %v1076, %v1075
        %v1093 = vpack.c.bf16 %v1078, %v1077
        %v1094 = vpack.c.bf16 %v1080, %v1079
        %v1095 = vpack.c.bf16 %v1082, %v1081
        %v1096 = vpack.c.bf16 %v1084, %v1083
        %v1097 = vld [vmem:[%s541] sm:$0xff]
        %v1098 = vld [vmem:[%s541 + $0x8] sm:$0xf]
        %v1099 = vld [vmem:[%s541 + $0xc] sm:$0xff]
        %v1100 = vld [vmem:[%s541 + $0x14] sm:$0xf]
        %v1101 = vld [vmem:[%s541 + $0x18] sm:$0xff]
        %v1102 = vld [vmem:[%s541 + $0x20] sm:$0xf]
        %v1103 = vld [vmem:[%s541 + $0x24] sm:$0xff]
        %v1104 = vld [vmem:[%s541 + $0x2c] sm:$0xf]
        %v1105 = vld [vmem:[%s541 + $0x30] sm:$0xff]
        %v1106 = vld [vmem:[%s541 + $0x38] sm:$0xf]
        %v1107 = vld [vmem:[%s541 + $0x3c] sm:$0xff]
        %v1108 = vld [vmem:[%s541 + $0x44] sm:$0xf]
        %v1109 = vld [vmem:[%s541 + $0x48] sm:$0xff]
        %v1110 = vld [vmem:[%s541 + $0x50] sm:$0xf]
        %v1111 = vld [vmem:[%s541 + $0x54] sm:$0xff]
        %v1112 = vld [vmem:[%s541 + $0x5c] sm:$0xf]
        %v1113 = vld [vmem:[%s541 + $0x60] sm:$0xff]
        %v1114 = vld [vmem:[%s541 + $0x68] sm:$0xf]
        %v1115 = vld [vmem:[%s541 + $0x6c] sm:$0xff]
        %v1116 = vld [vmem:[%s541 + $0x74] sm:$0xf]
        %v1117 = vld [vmem:[%s541 + $0x78] sm:$0xff]
        %v1118 = vld [vmem:[%s541 + $0x80] sm:$0xf]
        %v1119 = vld [vmem:[%s541 + $0x84] sm:$0xff]
        %v1120 = vld [vmem:[%s541 + $0x8c] sm:$0xf]
        %v1121 = vld [vmem:[%s541 + $0x90] sm:$0xff]
        %v1122 = vld [vmem:[%s541 + $0x98] sm:$0xf]
        %v1123 = vld [vmem:[%s541 + $0x9c] sm:$0xff]
        %v1124 = vld [vmem:[%s541 + $0xa4] sm:$0xf]
        %v1125 = vld [vmem:[%s541 + $0xa8] sm:$0xff]
        %v1126 = vld [vmem:[%s541 + $0xb0] sm:$0xf]
        %v1127 = vld [vmem:[%s541 + $0xb4] sm:$0xff]
        %v1128 = vld [vmem:[%s541 + $0xbc] sm:$0xf]
        %v1161 = vunpack.c.l.b16 %v1097
        %v1162 = vunpack.c.h.b16 %v1097
        %v1163 = vunpack.c.l.b16 %v1098
        %v1164 = vunpack.c.l.b16 %v1099
        %v1165 = vunpack.c.h.b16 %v1099
        %v1166 = vunpack.c.l.b16 %v1100
        %v1167 = vunpack.c.l.b16 %v1101
        %v1168 = vunpack.c.h.b16 %v1101
        %v1169 = vunpack.c.l.b16 %v1102
        %v1170 = vunpack.c.l.b16 %v1103
        %v1171 = vunpack.c.h.b16 %v1103
        %v1172 = vunpack.c.l.b16 %v1104
        %v1173 = vunpack.c.l.b16 %v1105
        %v1174 = vunpack.c.h.b16 %v1105
        %v1175 = vunpack.c.l.b16 %v1106
        %v1176 = vunpack.c.l.b16 %v1107
        %v1177 = vunpack.c.h.b16 %v1107
        %v1178 = vunpack.c.l.b16 %v1108
        %v1179 = vunpack.c.l.b16 %v1109
        %v1180 = vunpack.c.h.b16 %v1109
        %v1181 = vunpack.c.l.b16 %v1110
        %v1182 = vunpack.c.l.b16 %v1111
        %v1183 = vunpack.c.h.b16 %v1111
        %v1184 = vunpack.c.l.b16 %v1112
        %v1185 = vunpack.c.l.b16 %v1113
        %v1186 = vunpack.c.h.b16 %v1113
        %v1187 = vunpack.c.l.b16 %v1114
        %v1188 = vunpack.c.l.b16 %v1115
        %v1189 = vunpack.c.h.b16 %v1115
        %v1190 = vunpack.c.l.b16 %v1116
        %v1191 = vunpack.c.l.b16 %v1117
        %v1192 = vunpack.c.h.b16 %v1117
        %v1193 = vunpack.c.l.b16 %v1118
        %v1194 = vunpack.c.l.b16 %v1119
        %v1195 = vunpack.c.h.b16 %v1119
        %v1196 = vunpack.c.l.b16 %v1120
        %v1197 = vunpack.c.l.b16 %v1121
        %v1198 = vunpack.c.h.b16 %v1121
        %v1199 = vunpack.c.l.b16 %v1122
        %v1200 = vunpack.c.l.b16 %v1123
        %v1201 = vunpack.c.h.b16 %v1123
        %v1202 = vunpack.c.l.b16 %v1124
        %v1203 = vunpack.c.l.b16 %v1125
        %v1204 = vunpack.c.h.b16 %v1125
        %v1205 = vunpack.c.l.b16 %v1126
        %v1206 = vunpack.c.l.b16 %v1127
        %v1207 = vunpack.c.h.b16 %v1127
        %v1208 = vunpack.c.l.b16 %v1128
        %v1209 = vpack.c.b16 %v1164, %v1161
        %v1210 = vpack.c.b16 %v1165, %v1162
        %v1211 = vpack.c.b16 %v1166, %v1163
        %v1212 = vpack.c.b16 %v1170, %v1167
        %v1213 = vpack.c.b16 %v1171, %v1168
        %v1214 = vpack.c.b16 %v1172, %v1169
        %v1215 = vpack.c.b16 %v1176, %v1173
        %v1216 = vpack.c.b16 %v1177, %v1174
        %v1217 = vpack.c.b16 %v1178, %v1175
        %v1218 = vpack.c.b16 %v1182, %v1179
        %v1219 = vpack.c.b16 %v1183, %v1180
        %v1220 = vpack.c.b16 %v1184, %v1181
        %v1221 = vpack.c.b16 %v1188, %v1185
        %v1222 = vpack.c.b16 %v1189, %v1186
        %v1223 = vpack.c.b16 %v1190, %v1187
        %v1224 = vpack.c.b16 %v1194, %v1191
        %v1225 = vpack.c.b16 %v1195, %v1192
        %v1226 = vpack.c.b16 %v1196, %v1193
        %v1227 = vpack.c.b16 %v1200, %v1197
        %v1228 = vpack.c.b16 %v1201, %v1198
        %v1229 = vpack.c.b16 %v1202, %v1199
        %v1230 = vpack.c.b16 %v1206, %v1203
        %v1231 = vpack.c.b16 %v1207, %v1204
        %v1232 = vpack.c.b16 %v1208, %v1205
        %1257 = vmatprep.subr.bf16.mxu0 %v1231
        %1258 = vmatpush1.bf16.msra.mxu0 %v1230
        %1259 = vmatprep.subr.bf16.mxu0 %v1228
        %1260 = vmatpush1.bf16.msra.mxu0 %v1227
        %1261 = vmatprep.subr.bf16.mxu0 %v1225
        %1262 = vmatpush1.bf16.msra.mxu0 %v1224
        %1263 = vmatprep.subr.bf16.mxu0 %v1222
        %1264 = vmatpush1.bf16.msra.mxu0 %v1221
        %1265 = vmatprep.subr.bf16.mxu0 %v1219
        %1266 = vmatpush1.bf16.msra.mxu0 %v1218
        %1267 = vmatprep.subr.bf16.mxu0 %v1216
        %1268 = vmatpush1.bf16.msra.mxu0 %v1215
        %1269 = vmatprep.subr.bf16.mxu0 %v1213
        %1270 = vmatpush1.bf16.msra.mxu0 %v1212
        %1271 = vmatprep.subr.bf16.mxu0 %v1210
        %1272 = vmatpush1.bf16.msra.mxu0 %v1209
        %1273 = vmatprep.subr.bf16.mxu0 0
        %1274 = vmatpush2.bf16.msra.mxu0 0
        %1275 = vmatprep.subr.bf16.mxu0 0
        %1276 = vmatpush2.bf16.msra.mxu0 0
        %1277 = vmatprep.subr.bf16.mxu0 0
        %1278 = vmatpush2.bf16.msra.mxu0 0
        %1279 = vmatprep.subr.bf16.mxu0 0
        %1280 = vmatpush2.bf16.msra.mxu0 0
        %1281 = vmatprep.subr.bf16.mxu0 0
        %1282 = vmatpush2.bf16.msra.mxu0 0
        %1283 = vmatprep.subr.bf16.mxu0 0
        %1284 = vmatpush2.bf16.msra.mxu0 0
        %1285 = vmatprep.subr.bf16.mxu0 0
        %1286 = vmatpush2.bf16.msra.mxu0 0
        %1287 = vmatprep.subr.bf16.mxu0 0
        %1288 = vmatpush2.bf16.msra.mxu0 0
        %1289 = vmatprep.mubr.bf16.mxu0 0
        %1290 = vmatmul.mubr.bf16.gmra.mxu0 %v1085
        %v1291 = vpop.f32.mrf.mxu0
        %v1292 = vadd.f32 0.0, %v1291
        %v1293 = vpop.f32.mrf.mxu0
        %v1294 = vadd.f32 0.0, %v1293
        %v1295 = vpop.f32.mrf.mxu0
        %v1296 = vadd.f32 0.0, %v1295
        %v1297 = vpop.f32.mrf.mxu0
        %v1298 = vadd.f32 0.0, %v1297
        %1299 = vmatprep.mubr.bf16.mxu0 0
        %1300 = vmatmul.mubr.bf16.gmra.mxu0 %v1086
        %v1301 = vpop.f32.mrf.mxu0
        %v1302 = vadd.f32 0.0, %v1301
        %v1303 = vpop.f32.mrf.mxu0
        %v1304 = vadd.f32 0.0, %v1303
        %v1305 = vpop.f32.mrf.mxu0
        %v1306 = vadd.f32 0.0, %v1305
        %v1307 = vpop.f32.mrf.mxu0
        %v1308 = vadd.f32 0.0, %v1307
        %1309 = vmatprep.mubr.bf16.mxu0 0
        %1310 = vmatmul.mubr.bf16.gmra.mxu0 %v1087
        %v1311 = vpop.f32.mrf.mxu0
        %v1312 = vadd.f32 0.0, %v1311
        %v1313 = vpop.f32.mrf.mxu0
        %v1314 = vadd.f32 0.0, %v1313
        %v1315 = vpop.f32.mrf.mxu0
        %v1316 = vadd.f32 0.0, %v1315
        %v1317 = vpop.f32.mrf.mxu0
        %v1318 = vadd.f32 0.0, %v1317
        %1319 = vmatprep.mubr.bf16.mxu0 0
        %1320 = vmatmul.mubr.bf16.gmra.mxu0 %v1088
        %v1321 = vpop.f32.mrf.mxu0
        %v1322 = vadd.f32 0.0, %v1321
        %v1323 = vpop.f32.mrf.mxu0
        %v1324 = vadd.f32 0.0, %v1323
        %v1325 = vpop.f32.mrf.mxu0
        %v1326 = vadd.f32 0.0, %v1325
        %v1327 = vpop.f32.mrf.mxu0
        %v1328 = vadd.f32 0.0, %v1327
        %1329 = vmatprep.mubr.bf16.mxu0 0
        %1330 = vmatmul.mubr.bf16.gmra.mxu0 %v1089
        %v1331 = vpop.f32.mrf.mxu0
        %v1332 = vadd.f32 0.0, %v1331
        %v1333 = vpop.f32.mrf.mxu0
        %v1334 = vadd.f32 0.0, %v1333
        %v1335 = vpop.f32.mrf.mxu0
        %v1336 = vadd.f32 0.0, %v1335
        %v1337 = vpop.f32.mrf.mxu0
        %v1338 = vadd.f32 0.0, %v1337
        %1339 = vmatprep.mubr.bf16.mxu0 0
        %1340 = vmatmul.mubr.bf16.gmra.mxu0 %v1090
        %v1341 = vpop.f32.mrf.mxu0
        %v1342 = vadd.f32 0.0, %v1341
        %v1343 = vpop.f32.mrf.mxu0
        %v1344 = vadd.f32 0.0, %v1343
        %v1345 = vpop.f32.mrf.mxu0
        %v1346 = vadd.f32 0.0, %v1345
        %v1347 = vpop.f32.mrf.mxu0
        %v1348 = vadd.f32 0.0, %v1347
        %1349 = vmatprep.mubr.bf16.mxu0 0
        %1350 = vmatmul.mubr.bf16.gmra.mxu0 %v1091
        %v1351 = vpop.f32.mrf.mxu0
        %v1352 = vadd.f32 0.0, %v1351
        %v1353 = vpop.f32.mrf.mxu0
        %v1354 = vadd.f32 0.0, %v1353
        %v1355 = vpop.f32.mrf.mxu0
        %v1356 = vadd.f32 0.0, %v1355
        %v1357 = vpop.f32.mrf.mxu0
        %v1358 = vadd.f32 0.0, %v1357
        %1359 = vmatprep.mubr.bf16.mxu0 0
        %1360 = vmatmul.mubr.bf16.gmra.mxu0 %v1092
        %v1361 = vpop.f32.mrf.mxu0
        %v1362 = vadd.f32 0.0, %v1361
        %v1363 = vpop.f32.mrf.mxu0
        %v1364 = vadd.f32 0.0, %v1363
        %v1365 = vpop.f32.mrf.mxu0
        %v1366 = vadd.f32 0.0, %v1365
        %v1367 = vpop.f32.mrf.mxu0
        %v1368 = vadd.f32 0.0, %v1367
        %1369 = vmatprep.mubr.bf16.mxu0 0
        %1370 = vmatmul.mubr.bf16.gmra.mxu0 %v1093
        %v1371 = vpop.f32.mrf.mxu0
        %v1372 = vadd.f32 0.0, %v1371
        %v1373 = vpop.f32.mrf.mxu0
        %v1374 = vadd.f32 0.0, %v1373
        %v1375 = vpop.f32.mrf.mxu0
        %v1376 = vadd.f32 0.0, %v1375
        %v1377 = vpop.f32.mrf.mxu0
        %v1378 = vadd.f32 0.0, %v1377
        %1379 = vmatprep.mubr.bf16.mxu0 0
        %1380 = vmatmul.mubr.bf16.gmra.mxu0 %v1094
        %v1381 = vpop.f32.mrf.mxu0
        %v1382 = vadd.f32 0.0, %v1381
        %v1383 = vpop.f32.mrf.mxu0
        %v1384 = vadd.f32 0.0, %v1383
        %v1385 = vpop.f32.mrf.mxu0
        %v1386 = vadd.f32 0.0, %v1385
        %v1387 = vpop.f32.mrf.mxu0
        %v1388 = vadd.f32 0.0, %v1387
        %1389 = vmatprep.mubr.bf16.mxu0 0
        %1390 = vmatmul.mubr.bf16.gmra.mxu0 %v1095
        %v1391 = vpop.f32.mrf.mxu0
        %v1392 = vadd.f32 0.0, %v1391
        %v1393 = vpop.f32.mrf.mxu0
        %v1394 = vadd.f32 0.0, %v1393
        %v1395 = vpop.f32.mrf.mxu0
        %v1396 = vadd.f32 0.0, %v1395
        %v1397 = vpop.f32.mrf.mxu0
        %v1398 = vadd.f32 0.0, %v1397
        %1399 = vmatprep.mubr.bf16.mxu0 0
        %1400 = vmatmul.mubr.bf16.gmra.mxu0 %v1096
        %v1401 = vpop.f32.mrf.mxu0
        %v1402 = vadd.f32 0.0, %v1401
        %v1403 = vpop.f32.mrf.mxu0
        %v1404 = vadd.f32 0.0, %v1403
        %v1405 = vpop.f32.mrf.mxu0
        %v1406 = vadd.f32 0.0, %v1405
        %v1407 = vpop.f32.mrf.mxu0
        %v1408 = vadd.f32 0.0, %v1407
        %1409 = vdwg.mxu0
        %1410 = vmatprep.subr.bf16.mxu0 0
        %1411 = vmatpush1.bf16.msra.mxu0 %v1232
        %1412 = vmatprep.subr.bf16.mxu0 0
        %1413 = vmatpush1.bf16.msra.mxu0 %v1229
        %1414 = vmatprep.subr.bf16.mxu0 0
        %1415 = vmatpush1.bf16.msra.mxu0 %v1226
        %1416 = vmatprep.subr.bf16.mxu0 0
        %1417 = vmatpush1.bf16.msra.mxu0 %v1223
        %1418 = vmatprep.subr.bf16.mxu0 0
        %1419 = vmatpush1.bf16.msra.mxu0 %v1220
        %1420 = vmatprep.subr.bf16.mxu0 0
        %1421 = vmatpush1.bf16.msra.mxu0 %v1217
        %1422 = vmatprep.subr.bf16.mxu0 0
        %1423 = vmatpush1.bf16.msra.mxu0 %v1214
        %1424 = vmatprep.subr.bf16.mxu0 0
        %1425 = vmatpush1.bf16.msra.mxu0 %v1211
        %1426 = vmatprep.subr.bf16.mxu0 0
        %1427 = vmatpush2.bf16.msra.mxu0 0
        %1428 = vmatprep.subr.bf16.mxu0 0
        %1429 = vmatpush2.bf16.msra.mxu0 0
        %1430 = vmatprep.subr.bf16.mxu0 0
        %1431 = vmatpush2.bf16.msra.mxu0 0
        %1432 = vmatprep.subr.bf16.mxu0 0
        %1433 = vmatpush2.bf16.msra.mxu0 0
        %1434 = vmatprep.subr.bf16.mxu0 0
        %1435 = vmatpush2.bf16.msra.mxu0 0
        %1436 = vmatprep.subr.bf16.mxu0 0
        %1437 = vmatpush2.bf16.msra.mxu0 0
        %1438 = vmatprep.subr.bf16.mxu0 0
        %1439 = vmatpush2.bf16.msra.mxu0 0
        %1440 = vmatprep.subr.bf16.mxu0 0
        %1441 = vmatpush2.bf16.msra.mxu0 0
        %1442 = vmatprep.mubr.bf16.mxu0 0
        %1443 = vmatmul.mubr.bf16.gmra.mxu0 %v1085
        %v1444 = vpop.f32.mrf.mxu0
        %v1445 = vadd.f32 0.0, %v1444
        %v1446 = vpop.f32.mrf.mxu0
        %v1447 = vpop.f32.mrf.mxu0
        %v1448 = vadd.f32 0.0, %v1447
        %v1449 = vpop.f32.mrf.mxu0
        %1450 = vmatprep.mubr.bf16.mxu0 0
        %1451 = vmatmul.mubr.bf16.gmra.mxu0 %v1086
        %v1452 = vpop.f32.mrf.mxu0
        %v1453 = vadd.f32 0.0, %v1452
        %v1454 = vpop.f32.mrf.mxu0
        %v1455 = vpop.f32.mrf.mxu0
        %v1456 = vadd.f32 0.0, %v1455
        %v1457 = vpop.f32.mrf.mxu0
        %1458 = vmatprep.mubr.bf16.mxu0 0
        %1459 = vmatmul.mubr.bf16.gmra.mxu0 %v1087
        %v1460 = vpop.f32.mrf.mxu0
        %v1461 = vadd.f32 0.0, %v1460
        %v1462 = vpop.f32.mrf.mxu0
        %v1463 = vpop.f32.mrf.mxu0
        %v1464 = vadd.f32 0.0, %v1463
        %v1465 = vpop.f32.mrf.mxu0
        %1466 = vmatprep.mubr.bf16.mxu0 0
        %1467 = vmatmul.mubr.bf16.gmra.mxu0 %v1088
        %v1468 = vpop.f32.mrf.mxu0
        %v1469 = vadd.f32 0.0, %v1468
        %v1470 = vpop.f32.mrf.mxu0
        %v1471 = vpop.f32.mrf.mxu0
        %v1472 = vadd.f32 0.0, %v1471
        %v1473 = vpop.f32.mrf.mxu0
        %1474 = vmatprep.mubr.bf16.mxu0 0
        %1475 = vmatmul.mubr.bf16.gmra.mxu0 %v1089
        %v1476 = vpop.f32.mrf.mxu0
        %v1477 = vadd.f32 0.0, %v1476
        %v1478 = vpop.f32.mrf.mxu0
        %v1479 = vpop.f32.mrf.mxu0
        %v1480 = vadd.f32 0.0, %v1479
        %v1481 = vpop.f32.mrf.mxu0
        %1482 = vmatprep.mubr.bf16.mxu0 0
        %1483 = vmatmul.mubr.bf16.gmra.mxu0 %v1090
        %v1484 = vpop.f32.mrf.mxu0
        %v1485 = vadd.f32 0.0, %v1484
        %v1486 = vpop.f32.mrf.mxu0
        %v1487 = vpop.f32.mrf.mxu0
        %v1488 = vadd.f32 0.0, %v1487
        %v1489 = vpop.f32.mrf.mxu0
        %1490 = vmatprep.mubr.bf16.mxu0 0
        %1491 = vmatmul.mubr.bf16.gmra.mxu0 %v1091
        %v1492 = vpop.f32.mrf.mxu0
        %v1493 = vadd.f32 0.0, %v1492
        %v1494 = vpop.f32.mrf.mxu0
        %v1495 = vpop.f32.mrf.mxu0
        %v1496 = vadd.f32 0.0, %v1495
        %v1497 = vpop.f32.mrf.mxu0
        %1498 = vmatprep.mubr.bf16.mxu0 0
        %1499 = vmatmul.mubr.bf16.gmra.mxu0 %v1092
        %v1500 = vpop.f32.mrf.mxu0
        %v1501 = vadd.f32 0.0, %v1500
        %v1502 = vpop.f32.mrf.mxu0
        %v1503 = vpop.f32.mrf.mxu0
        %v1504 = vadd.f32 0.0, %v1503
        %v1505 = vpop.f32.mrf.mxu0
        %1506 = vmatprep.mubr.bf16.mxu0 0
        %1507 = vmatmul.mubr.bf16.gmra.mxu0 %v1093
        %v1508 = vpop.f32.mrf.mxu0
        %v1509 = vadd.f32 0.0, %v1508
        %v1510 = vpop.f32.mrf.mxu0
        %v1511 = vpop.f32.mrf.mxu0
        %v1512 = vadd.f32 0.0, %v1511
        %v1513 = vpop.f32.mrf.mxu0
        %1514 = vmatprep.mubr.bf16.mxu0 0
        %1515 = vmatmul.mubr.bf16.gmra.mxu0 %v1094
        %v1516 = vpop.f32.mrf.mxu0
        %v1517 = vadd.f32 0.0, %v1516
        %v1518 = vpop.f32.mrf.mxu0
        %v1519 = vpop.f32.mrf.mxu0
        %v1520 = vadd.f32 0.0, %v1519
        %v1521 = vpop.f32.mrf.mxu0
        %1522 = vmatprep.mubr.bf16.mxu0 0
        %1523 = vmatmul.mubr.bf16.gmra.mxu0 %v1095
        %v1524 = vpop.f32.mrf.mxu0
        %v1525 = vadd.f32 0.0, %v1524
        %v1526 = vpop.f32.mrf.mxu0
        %v1527 = vpop.f32.mrf.mxu0
        %v1528 = vadd.f32 0.0, %v1527
        %v1529 = vpop.f32.mrf.mxu0
        %1530 = vmatprep.mubr.bf16.mxu0 0
        %1531 = vmatmul.mubr.bf16.gmra.mxu0 %v1096
        %v1532 = vpop.f32.mrf.mxu0
        %v1533 = vadd.f32 0.0, %v1532
        %v1534 = vpop.f32.mrf.mxu0
        %v1535 = vpop.f32.mrf.mxu0
        %v1536 = vadd.f32 0.0, %v1535
        %v1537 = vpop.f32.mrf.mxu0
        %1538 = vdwg.mxu0
        %v1539 = vpack.c.bf16 %v1296, %v1292
        %v1540 = vpack.c.bf16 %v1298, %v1294
        %v1541 = vpack.c.bf16 %v1448, %v1445
        %v1542 = vpack.c.bf16 %v1306, %v1302
        %v1543 = vpack.c.bf16 %v1308, %v1304
        %v1544 = vpack.c.bf16 %v1456, %v1453
        %v1545 = vpack.c.bf16 %v1316, %v1312
        %v1546 = vpack.c.bf16 %v1318, %v1314
        %v1547 = vpack.c.bf16 %v1464, %v1461
        %v1548 = vpack.c.bf16 %v1326, %v1322
        %v1549 = vpack.c.bf16 %v1328, %v1324
        %v1550 = vpack.c.bf16 %v1472, %v1469
        %v1551 = vpack.c.bf16 %v1336, %v1332
        %v1552 = vpack.c.bf16 %v1338, %v1334
        %v1553 = vpack.c.bf16 %v1480, %v1477
        %v1554 = vpack.c.bf16 %v1346, %v1342
        %v1555 = vpack.c.bf16 %v1348, %v1344
        %v1556 = vpack.c.bf16 %v1488, %v1485
        %v1557 = vpack.c.bf16 %v1356, %v1352
        %v1558 = vpack.c.bf16 %v1358, %v1354
        %v1559 = vpack.c.bf16 %v1496, %v1493
        %v1560 = vpack.c.bf16 %v1366, %v1362
        %v1561 = vpack.c.bf16 %v1368, %v1364
        %v1562 = vpack.c.bf16 %v1504, %v1501
        %v1563 = vpack.c.bf16 %v1376, %v1372
        %v1564 = vpack.c.bf16 %v1378, %v1374
        %v1565 = vpack.c.bf16 %v1512, %v1509
        %v1566 = vpack.c.bf16 %v1386, %v1382
        %v1567 = vpack.c.bf16 %v1388, %v1384
        %v1568 = vpack.c.bf16 %v1520, %v1517
        %v1569 = vpack.c.bf16 %v1396, %v1392
        %v1570 = vpack.c.bf16 %v1398, %v1394
        %v1571 = vpack.c.bf16 %v1528, %v1525
        %v1572 = vpack.c.bf16 %v1406, %v1402
        %v1573 = vpack.c.bf16 %v1408, %v1404
        %v1574 = vpack.c.bf16 %v1536, %v1533
        %vm1575 = vcmask 261120
        %v1577 = vsel %vm1575, %v1539, 0
        %v1580 = vsel %vm1575, %v1542, 0
        %v1583 = vsel %vm1575, %v1545, 0
        %v1586 = vsel %vm1575, %v1548, 0
        %v1589 = vsel %vm1575, %v1551, 0
        %v1592 = vsel %vm1575, %v1554, 0
        %v1595 = vsel %vm1575, %v1540, 0
        %v1598 = vsel %vm1575, %v1543, 0
        %v1601 = vsel %vm1575, %v1546, 0
        %v1604 = vsel %vm1575, %v1549, 0
        %v1607 = vsel %vm1575, %v1552, 0
        %v1610 = vsel %vm1575, %v1555, 0
        %1612 = vmatprep.subr.bf16.mxu0 0
        %1613 = vmatpush1.bf16.xpose.msra.mxu0 0
        %1614 = vmatprep.subr.bf16.mxu0 0
        %1615 = vmatpush1.bf16.xpose.msra.mxu0 0
        %1616 = vmatprep.subr.bf16.mxu0 0
        %1617 = vmatpush1.bf16.xpose.msra.mxu0 %v1610
        %1618 = vmatprep.subr.bf16.mxu0 0
        %1619 = vmatpush1.bf16.xpose.msra.mxu0 %v1607
        %1620 = vmatprep.subr.bf16.mxu0 0
        %1621 = vmatpush1.bf16.xpose.msra.mxu0 %v1604
        %1622 = vmatprep.subr.bf16.mxu0 0
        %1623 = vmatpush1.bf16.xpose.msra.mxu0 %v1601
        %1624 = vmatprep.subr.bf16.mxu0 0
        %1625 = vmatpush1.bf16.xpose.msra.mxu0 %v1598
        %1626 = vmatprep.subr.bf16.mxu0 0
        %1627 = vmatpush1.bf16.xpose.msra.mxu0 %v1595
        %1628 = vmatprep.subr.bf16.mxu0 0
        %1629 = vmatpush2.bf16.xpose.msra.mxu0 0
        %1630 = vmatprep.subr.bf16.mxu0 0
        %1631 = vmatpush2.bf16.xpose.msra.mxu0 0
        %1632 = vmatprep.subr.bf16.mxu0 0
        %1633 = vmatpush2.bf16.xpose.msra.mxu0 0
        %1634 = vmatprep.subr.bf16.mxu0 0
        %1635 = vmatpush2.bf16.xpose.msra.mxu0 0
        %1636 = vmatprep.subr.bf16.mxu0 0
        %1637 = vmatpush2.bf16.xpose.msra.mxu0 0
        %1638 = vmatprep.subr.bf16.mxu0 0
        %1639 = vmatpush2.bf16.xpose.msra.mxu0 0
        %1640 = vmatprep.subr.bf16.mxu0 0
        %1641 = vmatpush2.bf16.xpose.msra.mxu0 0
        %1642 = vmatprep.subr.bf16.mxu0 0
        %1643 = vmatpush2.bf16.xpose.msra.mxu0 0
        %1644 = vmatprep.mubr.bf16.mxu0 0
        %1645 = vmatmul.mubr.bf16.gmra.mxu0 %v1577
        %v1646 = vpop.f32.mrf.mxu0
        %v1647 = vadd.f32 0.0, %v1646
        %v1648 = vpop.f32.mrf.mxu0
        %v1649 = vpop.f32.mrf.mxu0
        %v1650 = vadd.f32 0.0, %v1649
        %v1651 = vpop.f32.mrf.mxu0
        %1652 = vmatprep.mubr.bf16.mxu0 0
        %1653 = vmatmul.mubr.bf16.gmra.mxu0 %v1580
        %v1654 = vpop.f32.mrf.mxu0
        %v1655 = vadd.f32 0.0, %v1654
        %v1656 = vpop.f32.mrf.mxu0
        %v1657 = vpop.f32.mrf.mxu0
        %v1658 = vadd.f32 0.0, %v1657
        %v1659 = vpop.f32.mrf.mxu0
        %1660 = vmatprep.mubr.bf16.mxu0 0
        %1661 = vmatmul.mubr.bf16.gmra.mxu0 %v1583
        %v1662 = vpop.f32.mrf.mxu0
        %v1663 = vadd.f32 0.0, %v1662
        %v1664 = vpop.f32.mrf.mxu0
        %v1665 = vpop.f32.mrf.mxu0
        %v1666 = vadd.f32 0.0, %v1665
        %v1667 = vpop.f32.mrf.mxu0
        %1668 = vmatprep.mubr.bf16.mxu0 0
        %1669 = vmatmul.mubr.bf16.gmra.mxu0 %v1586
        %v1670 = vpop.f32.mrf.mxu0
        %v1671 = vadd.f32 0.0, %v1670
        %v1672 = vpop.f32.mrf.mxu0
        %v1673 = vpop.f32.mrf.mxu0
        %v1674 = vadd.f32 0.0, %v1673
        %v1675 = vpop.f32.mrf.mxu0
        %1676 = vmatprep.mubr.bf16.mxu0 0
        %1677 = vmatmul.mubr.bf16.gmra.mxu0 %v1589
        %v1678 = vpop.f32.mrf.mxu0
        %v1679 = vadd.f32 0.0, %v1678
        %v1680 = vpop.f32.mrf.mxu0
        %v1681 = vpop.f32.mrf.mxu0
        %v1682 = vadd.f32 0.0, %v1681
        %v1683 = vpop.f32.mrf.mxu0
        %1684 = vmatprep.mubr.bf16.mxu0 0
        %1685 = vmatmul.mubr.bf16.gmra.mxu0 %v1592
        %v1686 = vpop.f32.mrf.mxu0
        %v1687 = vadd.f32 0.0, %v1686
        %v1688 = vpop.f32.mrf.mxu0
        %v1689 = vpop.f32.mrf.mxu0
        %v1690 = vadd.f32 0.0, %v1689
        %v1691 = vpop.f32.mrf.mxu0
        %1692 = vdwg.mxu0
        %v1694 = vsel %vm1575, %v1557, 0
        %v1697 = vsel %vm1575, %v1560, 0
        %v1700 = vsel %vm1575, %v1563, 0
        %v1703 = vsel %vm1575, %v1566, 0
        %v1706 = vsel %vm1575, %v1569, 0
        %v1709 = vsel %vm1575, %v1572, 0
        %v1712 = vsel %vm1575, %v1558, 0
        %v1715 = vsel %vm1575, %v1561, 0
        %v1718 = vsel %vm1575, %v1564, 0
        %v1721 = vsel %vm1575, %v1567, 0
        %v1724 = vsel %vm1575, %v1570, 0
        %v1727 = vsel %vm1575, %v1573, 0
        %1729 = vmatprep.subr.bf16.mxu0 0
        %1730 = vmatpush1.bf16.xpose.msra.mxu0 0
        %1731 = vmatprep.subr.bf16.mxu0 0
        %1732 = vmatpush1.bf16.xpose.msra.mxu0 0
        %1733 = vmatprep.subr.bf16.mxu0 0
        %1734 = vmatpush1.bf16.xpose.msra.mxu0 %v1727
        %1735 = vmatprep.subr.bf16.mxu0 0
        %1736 = vmatpush1.bf16.xpose.msra.mxu0 %v1724
        %1737 = vmatprep.subr.bf16.mxu0 0
        %1738 = vmatpush1.bf16.xpose.msra.mxu0 %v1721
        %1739 = vmatprep.subr.bf16.mxu0 0
        %1740 = vmatpush1.bf16.xpose.msra.mxu0 %v1718
        %1741 = vmatprep.subr.bf16.mxu0 0
        %1742 = vmatpush1.bf16.xpose.msra.mxu0 %v1715
        %1743 = vmatprep.subr.bf16.mxu0 0
        %1744 = vmatpush1.bf16.xpose.msra.mxu0 %v1712
        %1745 = vmatprep.subr.bf16.mxu0 0
        %1746 = vmatpush2.bf16.xpose.msra.mxu0 0
        %1747 = vmatprep.subr.bf16.mxu0 0
        %1748 = vmatpush2.bf16.xpose.msra.mxu0 0
        %1749 = vmatprep.subr.bf16.mxu0 0
        %1750 = vmatpush2.bf16.xpose.msra.mxu0 0
        %1751 = vmatprep.subr.bf16.mxu0 0
        %1752 = vmatpush2.bf16.xpose.msra.mxu0 0
        %1753 = vmatprep.subr.bf16.mxu0 0
        %1754 = vmatpush2.bf16.xpose.msra.mxu0 0
        %1755 = vmatprep.subr.bf16.mxu0 0
        %1756 = vmatpush2.bf16.xpose.msra.mxu0 0
        %1757 = vmatprep.subr.bf16.mxu0 0
        %1758 = vmatpush2.bf16.xpose.msra.mxu0 0
        %1759 = vmatprep.subr.bf16.mxu0 0
        %1760 = vmatpush2.bf16.xpose.msra.mxu0 0
        %1761 = vmatprep.mubr.bf16.mxu0 0
        %1762 = vmatmul.mubr.bf16.gmra.mxu0 %v1694
        %v1763 = vpop.f32.mrf.mxu0
        %v1764 = vadd.f32 0.0, %v1763
        %v1765 = vpop.f32.mrf.mxu0
        %v1766 = vpop.f32.mrf.mxu0
        %v1767 = vadd.f32 0.0, %v1766
        %v1768 = vpop.f32.mrf.mxu0
        %1769 = vmatprep.mubr.bf16.mxu0 0
        %1770 = vmatmul.mubr.bf16.gmra.mxu0 %v1697
        %v1771 = vpop.f32.mrf.mxu0
        %v1772 = vadd.f32 0.0, %v1771
        %v1773 = vpop.f32.mrf.mxu0
        %v1774 = vpop.f32.mrf.mxu0
        %v1775 = vadd.f32 0.0, %v1774
        %v1776 = vpop.f32.mrf.mxu0
        %1777 = vmatprep.mubr.bf16.mxu0 0
        %1778 = vmatmul.mubr.bf16.gmra.mxu0 %v1700
        %v1779 = vpop.f32.mrf.mxu0
        %v1780 = vadd.f32 0.0, %v1779
        %v1781 = vpop.f32.mrf.mxu0
        %v1782 = vpop.f32.mrf.mxu0
        %v1783 = vadd.f32 0.0, %v1782
        %v1784 = vpop.f32.mrf.mxu0
        %1785 = vmatprep.mubr.bf16.mxu0 0
        %1786 = vmatmul.mubr.bf16.gmra.mxu0 %v1703
        %v1787 = vpop.f32.mrf.mxu0
        %v1788 = vadd.f32 0.0, %v1787
        %v1789 = vpop.f32.mrf.mxu0
        %v1790 = vpop.f32.mrf.mxu0
        %v1791 = vadd.f32 0.0, %v1790
        %v1792 = vpop.f32.mrf.mxu0
        %1793 = vmatprep.mubr.bf16.mxu0 0
        %1794 = vmatmul.mubr.bf16.gmra.mxu0 %v1706
        %v1795 = vpop.f32.mrf.mxu0
        %v1796 = vadd.f32 0.0, %v1795
        %v1797 = vpop.f32.mrf.mxu0
        %v1798 = vpop.f32.mrf.mxu0
        %v1799 = vadd.f32 0.0, %v1798
        %v1800 = vpop.f32.mrf.mxu0
        %1801 = vmatprep.mubr.bf16.mxu0 0
        %1802 = vmatmul.mubr.bf16.gmra.mxu0 %v1709
        %v1803 = vpop.f32.mrf.mxu0
        %v1804 = vadd.f32 0.0, %v1803
        %v1805 = vpop.f32.mrf.mxu0
        %v1806 = vpop.f32.mrf.mxu0
        %v1807 = vadd.f32 0.0, %v1806
        %v1808 = vpop.f32.mrf.mxu0
        %1809 = vdwg.mxu0
        %vm1810 = vcmask 785408
        %v1811 = vsel %vm1810, %v1647, -inf
        %1812 = vmax.xlane.f32.xlu0 %v1811
        %v1813 = vpop.xlane.xlu0 %1812
        %v1814 = vsel %vm1810, %v1650, -inf
        %1815 = vmax.xlane.f32.xlu0 %v1814
        %v1816 = vpop.xlane.xlu0 %1815
        %v1817 = vsel %vm1810, %v1655, -inf
        %1818 = vmax.xlane.f32.xlu0 %v1817
        %v1819 = vpop.xlane.xlu0 %1818
        %v1820 = vsel %vm1810, %v1658, -inf
        %1821 = vmax.xlane.f32.xlu0 %v1820
        %v1822 = vpop.xlane.xlu0 %1821
        %v1823 = vsel %vm1810, %v1663, -inf
        %1824 = vmax.xlane.f32.xlu0 %v1823
        %v1825 = vpop.xlane.xlu0 %1824
        %v1826 = vsel %vm1810, %v1666, -inf
        %1827 = vmax.xlane.f32.xlu0 %v1826
        %v1828 = vpop.xlane.xlu0 %1827
        %v1829 = vsel %vm1810, %v1671, -inf
        %1830 = vmax.xlane.f32.xlu0 %v1829
        %v1831 = vpop.xlane.xlu0 %1830
        %v1832 = vsel %vm1810, %v1674, -inf
        %1833 = vmax.xlane.f32.xlu0 %v1832
        %v1834 = vpop.xlane.xlu0 %1833
        %v1835 = vsel %vm1810, %v1679, -inf
        %1836 = vmax.xlane.f32.xlu0 %v1835
        %v1837 = vpop.xlane.xlu0 %1836
        %v1838 = vsel %vm1810, %v1682, -inf
        %1839 = vmax.xlane.f32.xlu0 %v1838
        %v1840 = vpop.xlane.xlu0 %1839
        %v1841 = vsel %vm1810, %v1687, -inf
        %1842 = vmax.xlane.f32.xlu0 %v1841
        %v1843 = vpop.xlane.xlu0 %1842
        %v1844 = vsel %vm1810, %v1690, -inf
        %1845 = vmax.xlane.f32.xlu0 %v1844
        %v1846 = vpop.xlane.xlu0 %1845
        %v1847 = vsel %vm1810, %v1764, -inf
        %1848 = vmax.xlane.f32.xlu0 %v1847
        %v1849 = vpop.xlane.xlu0 %1848
        %v1850 = vsel %vm1810, %v1767, -inf
        %1851 = vmax.xlane.f32.xlu0 %v1850
        %v1852 = vpop.xlane.xlu0 %1851
        %v1853 = vsel %vm1810, %v1772, -inf
        %1854 = vmax.xlane.f32.xlu0 %v1853
        %v1855 = vpop.xlane.xlu0 %1854
        %v1856 = vsel %vm1810, %v1775, -inf
        %1857 = vmax.xlane.f32.xlu0 %v1856
        %v1858 = vpop.xlane.xlu0 %1857
        %v1859 = vsel %vm1810, %v1780, -inf
        %1860 = vmax.xlane.f32.xlu0 %v1859
        %v1861 = vpop.xlane.xlu0 %1860
        %v1862 = vsel %vm1810, %v1783, -inf
        %1863 = vmax.xlane.f32.xlu0 %v1862
        %v1864 = vpop.xlane.xlu0 %1863
        %v1865 = vsel %vm1810, %v1788, -inf
        %1866 = vmax.xlane.f32.xlu0 %v1865
        %v1867 = vpop.xlane.xlu0 %1866
        %v1868 = vsel %vm1810, %v1791, -inf
        %1869 = vmax.xlane.f32.xlu0 %v1868
        %v1870 = vpop.xlane.xlu0 %1869
        %v1871 = vsel %vm1810, %v1796, -inf
        %1872 = vmax.xlane.f32.xlu0 %v1871
        %v1873 = vpop.xlane.xlu0 %1872
        %v1874 = vsel %vm1810, %v1799, -inf
        %1875 = vmax.xlane.f32.xlu0 %v1874
        %v1876 = vpop.xlane.xlu0 %1875
        %v1877 = vsel %vm1810, %v1804, -inf
        %1878 = vmax.xlane.f32.xlu0 %v1877
        %v1879 = vpop.xlane.xlu0 %1878
        %v1880 = vsel %vm1810, %v1807, -inf
        %1881 = vmax.xlane.f32.xlu0 %v1880
        %v1882 = vpop.xlane.xlu0 %1881
        %v1883 = vsub.f32 %v1647, %v1813
        %v1884 = vsub.f32 %v1650, %v1816
        %v1885 = vsub.f32 %v1655, %v1819
        %v1886 = vsub.f32 %v1658, %v1822
        %v1887 = vsub.f32 %v1663, %v1825
        %v1888 = vsub.f32 %v1666, %v1828
        %v1889 = vsub.f32 %v1671, %v1831
        %v1890 = vsub.f32 %v1674, %v1834
        %v1891 = vsub.f32 %v1679, %v1837
        %v1892 = vsub.f32 %v1682, %v1840
        %v1893 = vsub.f32 %v1687, %v1843
        %v1894 = vsub.f32 %v1690, %v1846
        %v1895 = vsub.f32 %v1764, %v1849
        %v1896 = vsub.f32 %v1767, %v1852
        %v1897 = vsub.f32 %v1772, %v1855
        %v1898 = vsub.f32 %v1775, %v1858
        %v1899 = vsub.f32 %v1780, %v1861
        %v1900 = vsub.f32 %v1783, %v1864
        %v1901 = vsub.f32 %v1788, %v1867
        %v1902 = vsub.f32 %v1791, %v1870
        %v1903 = vsub.f32 %v1796, %v1873
        %v1904 = vsub.f32 %v1799, %v1876
        %v1905 = vsub.f32 %v1804, %v1879
        %v1906 = vsub.f32 %v1807, %v1882
        %v1907 = vmul.f32 %v1883, 1.442695
        %v1908 = vpow.pop %v1907
        %v1909 = vmul.f32 %v1884, 1.442695
        %v1910 = vpow.pop %v1909
        %v1911 = vmul.f32 %v1885, 1.442695
        %v1912 = vpow.pop %v1911
        %v1913 = vmul.f32 %v1886, 1.442695
        %v1914 = vpow.pop %v1913
        %v1915 = vmul.f32 %v1887, 1.442695
        %v1916 = vpow.pop %v1915
        %v1917 = vmul.f32 %v1888, 1.442695
        %v1918 = vpow.pop %v1917
        %v1919 = vmul.f32 %v1889, 1.442695
        %v1920 = vpow.pop %v1919
        %v1921 = vmul.f32 %v1890, 1.442695
        %v1922 = vpow.pop %v1921
        %v1923 = vmul.f32 %v1891, 1.442695
        %v1924 = vpow.pop %v1923
        %v1925 = vmul.f32 %v1892, 1.442695
        %v1926 = vpow.pop %v1925
        %v1927 = vmul.f32 %v1893, 1.442695
        %v1928 = vpow.pop %v1927
        %v1929 = vmul.f32 %v1894, 1.442695
        %v1930 = vpow.pop %v1929
        %v1931 = vmul.f32 %v1895, 1.442695
        %v1932 = vpow.pop %v1931
        %v1933 = vmul.f32 %v1896, 1.442695
        %v1934 = vpow.pop %v1933
        %v1935 = vmul.f32 %v1897, 1.442695
        %v1936 = vpow.pop %v1935
        %v1937 = vmul.f32 %v1898, 1.442695
        %v1938 = vpow.pop %v1937
        %v1939 = vmul.f32 %v1899, 1.442695
        %v1940 = vpow.pop %v1939
        %v1941 = vmul.f32 %v1900, 1.442695
        %v1942 = vpow.pop %v1941
        %v1943 = vmul.f32 %v1901, 1.442695
        %v1944 = vpow.pop %v1943
        %v1945 = vmul.f32 %v1902, 1.442695
        %v1946 = vpow.pop %v1945
        %v1947 = vmul.f32 %v1903, 1.442695
        %v1948 = vpow.pop %v1947
        %v1949 = vmul.f32 %v1904, 1.442695
        %v1950 = vpow.pop %v1949
        %v1951 = vmul.f32 %v1905, 1.442695
        %v1952 = vpow.pop %v1951
        %v1953 = vmul.f32 %v1906, 1.442695
        %v1954 = vpow.pop %v1953
        %v1955 = vsel %vm1810, %v1908, 0.0
        %1956 = vadd.xlane.f32.xlu0 %v1955
        %v1957 = vpop.xlane.xlu0 %1956
        %v1958 = vsel %vm1810, %v1910, 0.0
        %1959 = vadd.xlane.f32.xlu0 %v1958
        %v1960 = vpop.xlane.xlu0 %1959
        %v1961 = vsel %vm1810, %v1912, 0.0
        %1962 = vadd.xlane.f32.xlu0 %v1961
        %v1963 = vpop.xlane.xlu0 %1962
        %v1964 = vsel %vm1810, %v1914, 0.0
        %1965 = vadd.xlane.f32.xlu0 %v1964
        %v1966 = vpop.xlane.xlu0 %1965
        %v1967 = vsel %vm1810, %v1916, 0.0
        %1968 = vadd.xlane.f32.xlu0 %v1967
        %v1969 = vpop.xlane.xlu0 %1968
        %v1970 = vsel %vm1810, %v1918, 0.0
        %1971 = vadd.xlane.f32.xlu0 %v1970
        %v1972 = vpop.xlane.xlu0 %1971
        %v1973 = vsel %vm1810, %v1920, 0.0
        %1974 = vadd.xlane.f32.xlu0 %v1973
        %v1975 = vpop.xlane.xlu0 %1974
        %v1976 = vsel %vm1810, %v1922, 0.0
        %1977 = vadd.xlane.f32.xlu0 %v1976
        %v1978 = vpop.xlane.xlu0 %1977
        %v1979 = vsel %vm1810, %v1924, 0.0
        %1980 = vadd.xlane.f32.xlu0 %v1979
        %v1981 = vpop.xlane.xlu0 %1980
        %v1982 = vsel %vm1810, %v1926, 0.0
        %1983 = vadd.xlane.f32.xlu0 %v1982
        %v1984 = vpop.xlane.xlu0 %1983
        %v1985 = vsel %vm1810, %v1928, 0.0
        %1986 = vadd.xlane.f32.xlu0 %v1985
        %v1987 = vpop.xlane.xlu0 %1986
        %v1988 = vsel %vm1810, %v1930, 0.0
        %1989 = vadd.xlane.f32.xlu0 %v1988
        %v1990 = vpop.xlane.xlu0 %1989
        %v1991 = vsel %vm1810, %v1932, 0.0
        %1992 = vadd.xlane.f32.xlu0 %v1991
        %v1993 = vpop.xlane.xlu0 %1992
        %v1994 = vsel %vm1810, %v1934, 0.0
        %1995 = vadd.xlane.f32.xlu0 %v1994
        %v1996 = vpop.xlane.xlu0 %1995
        %v1997 = vsel %vm1810, %v1936, 0.0
        %1998 = vadd.xlane.f32.xlu0 %v1997
        %v1999 = vpop.xlane.xlu0 %1998
        %v2000 = vsel %vm1810, %v1938, 0.0
        %2001 = vadd.xlane.f32.xlu0 %v2000
        %v2002 = vpop.xlane.xlu0 %2001
        %v2003 = vsel %vm1810, %v1940, 0.0
        %2004 = vadd.xlane.f32.xlu0 %v2003
        %v2005 = vpop.xlane.xlu0 %2004
        %v2006 = vsel %vm1810, %v1942, 0.0
        %2007 = vadd.xlane.f32.xlu0 %v2006
        %v2008 = vpop.xlane.xlu0 %2007
        %v2009 = vsel %vm1810, %v1944, 0.0
        %2010 = vadd.xlane.f32.xlu0 %v2009
        %v2011 = vpop.xlane.xlu0 %2010
        %v2012 = vsel %vm1810, %v1946, 0.0
        %2013 = vadd.xlane.f32.xlu0 %v2012
        %v2014 = vpop.xlane.xlu0 %2013
        %v2015 = vsel %vm1810, %v1948, 0.0
        %2016 = vadd.xlane.f32.xlu0 %v2015
        %v2017 = vpop.xlane.xlu0 %2016
        %v2018 = vsel %vm1810, %v1950, 0.0
        %2019 = vadd.xlane.f32.xlu0 %v2018
        %v2020 = vpop.xlane.xlu0 %2019
        %v2021 = vsel %vm1810, %v1952, 0.0
        %2022 = vadd.xlane.f32.xlu0 %v2021
        %v2023 = vpop.xlane.xlu0 %2022
        %v2024 = vsel %vm1810, %v1954, 0.0
        %2025 = vadd.xlane.f32.xlu0 %v2024
        %v2026 = vpop.xlane.xlu0 %2025
        %v2027 = vrcp.pop %v1957
        %v2028 = vrcp.pop %v1960
        %v2029 = vrcp.pop %v1963
        %v2030 = vrcp.pop %v1966
        %v2031 = vrcp.pop %v1969
        %v2032 = vrcp.pop %v1972
        %v2033 = vrcp.pop %v1975
        %v2034 = vrcp.pop %v1978
        %v2035 = vrcp.pop %v1981
        %v2036 = vrcp.pop %v1984
        %v2037 = vrcp.pop %v1987
        %v2038 = vrcp.pop %v1990
        %v2039 = vrcp.pop %v1993
        %v2040 = vrcp.pop %v1996
        %v2041 = vrcp.pop %v1999
        %v2042 = vrcp.pop %v2002
        %v2043 = vrcp.pop %v2005
        %v2044 = vrcp.pop %v2008
        %v2045 = vrcp.pop %v2011
        %v2046 = vrcp.pop %v2014
        %v2047 = vrcp.pop %v2017
        %v2048 = vrcp.pop %v2020
        %v2049 = vrcp.pop %v2023
        %v2050 = vrcp.pop %v2026
        %v2051 = vmul.f32 %v1908, %v2027
        %v2052 = vmul.f32 %v1910, %v2028
        %v2053 = vmul.f32 %v1912, %v2029
        %v2054 = vmul.f32 %v1914, %v2030
        %v2055 = vmul.f32 %v1916, %v2031
        %v2056 = vmul.f32 %v1918, %v2032
        %v2057 = vmul.f32 %v1920, %v2033
        %v2058 = vmul.f32 %v1922, %v2034
        %v2059 = vmul.f32 %v1924, %v2035
        %v2060 = vmul.f32 %v1926, %v2036
        %v2061 = vmul.f32 %v1928, %v2037
        %v2062 = vmul.f32 %v1930, %v2038
        %v2063 = vmul.f32 %v1932, %v2039
        %v2064 = vmul.f32 %v1934, %v2040
        %v2065 = vmul.f32 %v1936, %v2041
        %v2066 = vmul.f32 %v1938, %v2042
        %v2067 = vmul.f32 %v1940, %v2043
        %v2068 = vmul.f32 %v1942, %v2044
        %v2069 = vmul.f32 %v1944, %v2045
        %v2070 = vmul.f32 %v1946, %v2046
        %v2071 = vmul.f32 %v1948, %v2047
        %v2072 = vmul.f32 %v1950, %v2048
        %v2073 = vmul.f32 %v1952, %v2049
        %v2074 = vmul.f32 %v1954, %v2050
        %v2075 = vpack.c.bf16 %v2052, %v2051
        %v2076 = vpack.c.bf16 %v2054, %v2053
        %v2077 = vpack.c.bf16 %v2056, %v2055
        %v2078 = vpack.c.bf16 %v2058, %v2057
        %v2079 = vpack.c.bf16 %v2060, %v2059
        %v2080 = vpack.c.bf16 %v2062, %v2061
        %v2081 = vpack.c.bf16 %v2064, %v2063
        %v2082 = vpack.c.bf16 %v2066, %v2065
        %v2083 = vpack.c.bf16 %v2068, %v2067
        %v2084 = vpack.c.bf16 %v2070, %v2069
        %v2085 = vpack.c.bf16 %v2072, %v2071
        %v2086 = vpack.c.bf16 %v2074, %v2073
        %v2088 = vsel %vm1810, %v2075, 0
        %v2091 = vsel %vm1810, %v2076, 0
        %v2094 = vsel %vm1810, %v2077, 0
        %v2097 = vsel %vm1810, %v2078, 0
        %v2100 = vsel %vm1810, %v2079, 0
        %v2103 = vsel %vm1810, %v2080, 0
        %2105 = vmatprep.subr.bf16.mxu0 0
        %2106 = vmatpush1.bf16.msra.mxu0 0
        %2107 = vmatprep.subr.bf16.mxu0 0
        %2108 = vmatpush1.bf16.msra.mxu0 0
        %2109 = vmatprep.subr.bf16.mxu0 0
        %2110 = vmatpush1.bf16.msra.mxu0 %v1556
        %2111 = vmatprep.subr.bf16.mxu0 0
        %2112 = vmatpush1.bf16.msra.mxu0 %v1553
        %2113 = vmatprep.subr.bf16.mxu0 0
        %2114 = vmatpush1.bf16.msra.mxu0 %v1550
        %2115 = vmatprep.subr.bf16.mxu0 0
        %2116 = vmatpush1.bf16.msra.mxu0 %v1547
        %2117 = vmatprep.subr.bf16.mxu0 0
        %2118 = vmatpush1.bf16.msra.mxu0 %v1544
        %2119 = vmatprep.subr.bf16.mxu0 0
        %2120 = vmatpush1.bf16.msra.mxu0 %v1541
        %2121 = vmatprep.subr.bf16.mxu0 0
        %2122 = vmatpush2.bf16.msra.mxu0 0
        %2123 = vmatprep.subr.bf16.mxu0 0
        %2124 = vmatpush2.bf16.msra.mxu0 0
        %2125 = vmatprep.subr.bf16.mxu0 0
        %2126 = vmatpush2.bf16.msra.mxu0 0
        %2127 = vmatprep.subr.bf16.mxu0 0
        %2128 = vmatpush2.bf16.msra.mxu0 0
        %2129 = vmatprep.subr.bf16.mxu0 0
        %2130 = vmatpush2.bf16.msra.mxu0 0
        %2131 = vmatprep.subr.bf16.mxu0 0
        %2132 = vmatpush2.bf16.msra.mxu0 0
        %2133 = vmatprep.subr.bf16.mxu0 0
        %2134 = vmatpush2.bf16.msra.mxu0 0
        %2135 = vmatprep.subr.bf16.mxu0 0
        %2136 = vmatpush2.bf16.msra.mxu0 0
        %2137 = vmatprep.mubr.bf16.mxu0 0
        %2138 = vmatmul.mubr.bf16.gmra.mxu0 %v2088
        %v2139 = vpop.f32.mrf.mxu0
        %v2140 = vadd.f32 0.0, %v2139
        %v2141 = vpop.f32.mrf.mxu0
        %v2142 = vpop.f32.mrf.mxu0
        %v2143 = vadd.f32 0.0, %v2142
        %v2144 = vpop.f32.mrf.mxu0
        %2145 = vmatprep.mubr.bf16.mxu0 0
        %2146 = vmatmul.mubr.bf16.gmra.mxu0 %v2091
        %v2147 = vpop.f32.mrf.mxu0
        %v2148 = vadd.f32 0.0, %v2147
        %v2149 = vpop.f32.mrf.mxu0
        %v2150 = vpop.f32.mrf.mxu0
        %v2151 = vadd.f32 0.0, %v2150
        %v2152 = vpop.f32.mrf.mxu0
        %2153 = vmatprep.mubr.bf16.mxu0 0
        %2154 = vmatmul.mubr.bf16.gmra.mxu0 %v2094
        %v2155 = vpop.f32.mrf.mxu0
        %v2156 = vadd.f32 0.0, %v2155
        %v2157 = vpop.f32.mrf.mxu0
        %v2158 = vpop.f32.mrf.mxu0
        %v2159 = vadd.f32 0.0, %v2158
        %v2160 = vpop.f32.mrf.mxu0
        %2161 = vmatprep.mubr.bf16.mxu0 0
        %2162 = vmatmul.mubr.bf16.gmra.mxu0 %v2097
        %v2163 = vpop.f32.mrf.mxu0
        %v2164 = vadd.f32 0.0, %v2163
        %v2165 = vpop.f32.mrf.mxu0
        %v2166 = vpop.f32.mrf.mxu0
        %v2167 = vadd.f32 0.0, %v2166
        %v2168 = vpop.f32.mrf.mxu0
        %2169 = vmatprep.mubr.bf16.mxu0 0
        %2170 = vmatmul.mubr.bf16.gmra.mxu0 %v2100
        %v2171 = vpop.f32.mrf.mxu0
        %v2172 = vadd.f32 0.0, %v2171
        %v2173 = vpop.f32.mrf.mxu0
        %v2174 = vpop.f32.mrf.mxu0
        %v2175 = vadd.f32 0.0, %v2174
        %v2176 = vpop.f32.mrf.mxu0
        %2177 = vmatprep.mubr.bf16.mxu0 0
        %2178 = vmatmul.mubr.bf16.gmra.mxu0 %v2103
        %v2179 = vpop.f32.mrf.mxu0
        %v2180 = vadd.f32 0.0, %v2179
        %v2181 = vpop.f32.mrf.mxu0
        %v2182 = vpop.f32.mrf.mxu0
        %v2183 = vadd.f32 0.0, %v2182
        %v2184 = vpop.f32.mrf.mxu0
        %2185 = vdwg.mxu0
        %v2187 = vsel %vm1810, %v2081, 0
        %v2190 = vsel %vm1810, %v2082, 0
        %v2193 = vsel %vm1810, %v2083, 0
        %v2196 = vsel %vm1810, %v2084, 0
        %v2199 = vsel %vm1810, %v2085, 0
        %v2202 = vsel %vm1810, %v2086, 0
        %2204 = vmatprep.subr.bf16.mxu0 0
        %2205 = vmatpush1.bf16.msra.mxu0 0
        %2206 = vmatprep.subr.bf16.mxu0 0
        %2207 = vmatpush1.bf16.msra.mxu0 0
        %2208 = vmatprep.subr.bf16.mxu0 0
        %2209 = vmatpush1.bf16.msra.mxu0 %v1574
        %2210 = vmatprep.subr.bf16.mxu0 0
        %2211 = vmatpush1.bf16.msra.mxu0 %v1571
        %2212 = vmatprep.subr.bf16.mxu0 0
        %2213 = vmatpush1.bf16.msra.mxu0 %v1568
        %2214 = vmatprep.subr.bf16.mxu0 0
        %2215 = vmatpush1.bf16.msra.mxu0 %v1565
        %2216 = vmatprep.subr.bf16.mxu0 0
        %2217 = vmatpush1.bf16.msra.mxu0 %v1562
        %2218 = vmatprep.subr.bf16.mxu0 0
        %2219 = vmatpush1.bf16.msra.mxu0 %v1559
        %2220 = vmatprep.subr.bf16.mxu0 0
        %2221 = vmatpush2.bf16.msra.mxu0 0
        %2222 = vmatprep.subr.bf16.mxu0 0
        %2223 = vmatpush2.bf16.msra.mxu0 0
        %2224 = vmatprep.subr.bf16.mxu0 0
        %2225 = vmatpush2.bf16.msra.mxu0 0
        %2226 = vmatprep.subr.bf16.mxu0 0
        %2227 = vmatpush2.bf16.msra.mxu0 0
        %2228 = vmatprep.subr.bf16.mxu0 0
        %2229 = vmatpush2.bf16.msra.mxu0 0
        %2230 = vmatprep.subr.bf16.mxu0 0
        %2231 = vmatpush2.bf16.msra.mxu0 0
        %2232 = vmatprep.subr.bf16.mxu0 0
        %2233 = vmatpush2.bf16.msra.mxu0 0
        %2234 = vmatprep.subr.bf16.mxu0 0
        %2235 = vmatpush2.bf16.msra.mxu0 0
        %2236 = vmatprep.mubr.bf16.mxu0 0
        %2237 = vmatmul.mubr.bf16.gmra.mxu0 %v2187
        %v2238 = vpop.f32.mrf.mxu0
        %v2239 = vadd.f32 0.0, %v2238
        %v2240 = vpop.f32.mrf.mxu0
        %v2241 = vpop.f32.mrf.mxu0
        %v2242 = vadd.f32 0.0, %v2241
        %v2243 = vpop.f32.mrf.mxu0
        %2244 = vmatprep.mubr.bf16.mxu0 0
        %2245 = vmatmul.mubr.bf16.gmra.mxu0 %v2190
        %v2246 = vpop.f32.mrf.mxu0
        %v2247 = vadd.f32 0.0, %v2246
        %v2248 = vpop.f32.mrf.mxu0
        %v2249 = vpop.f32.mrf.mxu0
        %v2250 = vadd.f32 0.0, %v2249
        %v2251 = vpop.f32.mrf.mxu0
        %2252 = vmatprep.mubr.bf16.mxu0 0
        %2253 = vmatmul.mubr.bf16.gmra.mxu0 %v2193
        %v2254 = vpop.f32.mrf.mxu0
        %v2255 = vadd.f32 0.0, %v2254
        %v2256 = vpop.f32.mrf.mxu0
        %v2257 = vpop.f32.mrf.mxu0
        %v2258 = vadd.f32 0.0, %v2257
        %v2259 = vpop.f32.mrf.mxu0
        %2260 = vmatprep.mubr.bf16.mxu0 0
        %2261 = vmatmul.mubr.bf16.gmra.mxu0 %v2196
        %v2262 = vpop.f32.mrf.mxu0
        %v2263 = vadd.f32 0.0, %v2262
        %v2264 = vpop.f32.mrf.mxu0
        %v2265 = vpop.f32.mrf.mxu0
        %v2266 = vadd.f32 0.0, %v2265
        %v2267 = vpop.f32.mrf.mxu0
        %2268 = vmatprep.mubr.bf16.mxu0 0
        %2269 = vmatmul.mubr.bf16.gmra.mxu0 %v2199
        %v2270 = vpop.f32.mrf.mxu0
        %v2271 = vadd.f32 0.0, %v2270
        %v2272 = vpop.f32.mrf.mxu0
        %v2273 = vpop.f32.mrf.mxu0
        %v2274 = vadd.f32 0.0, %v2273
        %v2275 = vpop.f32.mrf.mxu0
        %2276 = vmatprep.mubr.bf16.mxu0 0
        %2277 = vmatmul.mubr.bf16.gmra.mxu0 %v2202
        %v2278 = vpop.f32.mrf.mxu0
        %v2279 = vadd.f32 0.0, %v2278
        %v2280 = vpop.f32.mrf.mxu0
        %v2281 = vpop.f32.mrf.mxu0
        %v2282 = vadd.f32 0.0, %v2281
        %v2283 = vpop.f32.mrf.mxu0
        %2284 = vdwg.mxu0
        %v2285 = vpack.c.bf16 %v2143, %v2140
        %v2286 = vpack.c.bf16 %v2151, %v2148
        %v2287 = vpack.c.bf16 %v2159, %v2156
        %v2288 = vpack.c.bf16 %v2167, %v2164
        %v2289 = vpack.c.bf16 %v2175, %v2172
        %v2290 = vpack.c.bf16 %v2183, %v2180
        %v2291 = vpack.c.bf16 %v2242, %v2239
        %v2292 = vpack.c.bf16 %v2250, %v2247
        %v2293 = vpack.c.bf16 %v2258, %v2255
        %v2294 = vpack.c.bf16 %v2266, %v2263
        %v2295 = vpack.c.bf16 %v2274, %v2271
        %v2296 = vpack.c.bf16 %v2282, %v2279
        %2303 = vrot.lane.b32.xlu0 %v1539, 96
        %v2304 = vpop.permute.xlu0 %2303
        %2305 = vrot.lane.b32.xlu0 %v1542, 96
        %v2306 = vpop.permute.xlu0 %2305
        %2307 = vrot.lane.b32.xlu0 %v1545, 96
        %v2308 = vpop.permute.xlu0 %2307
        %2309 = vrot.lane.b32.xlu0 %v1548, 96
        %v2310 = vpop.permute.xlu0 %2309
        %2311 = vrot.lane.b32.xlu0 %v1551, 96
        %v2312 = vpop.permute.xlu0 %2311
        %2313 = vrot.lane.b32.xlu0 %v1554, 96
        %v2314 = vpop.permute.xlu0 %2313
        %2321 = vrot.lane.b32.xlu0 %v1540, 96
        %v2322 = vpop.permute.xlu0 %2321
        %2323 = vrot.lane.b32.xlu0 %v1543, 96
        %v2324 = vpop.permute.xlu0 %2323
        %2325 = vrot.lane.b32.xlu0 %v1546, 96
        %v2326 = vpop.permute.xlu0 %2325
        %2327 = vrot.lane.b32.xlu0 %v1549, 96
        %v2328 = vpop.permute.xlu0 %2327
        %2329 = vrot.lane.b32.xlu0 %v1552, 96
        %v2330 = vpop.permute.xlu0 %2329
        %2331 = vrot.lane.b32.xlu0 %v1555, 96
        %v2332 = vpop.permute.xlu0 %2331
        %v2334 = vsel %vm1575, %v2304, 0
        %v2337 = vsel %vm1575, %v2306, 0
        %v2340 = vsel %vm1575, %v2308, 0
        %v2343 = vsel %vm1575, %v2310, 0
        %v2346 = vsel %vm1575, %v2312, 0
        %v2349 = vsel %vm1575, %v2314, 0
        %v2352 = vsel %vm1575, %v2322, 0
        %v2355 = vsel %vm1575, %v2324, 0
        %v2358 = vsel %vm1575, %v2326, 0
        %v2361 = vsel %vm1575, %v2328, 0
        %v2364 = vsel %vm1575, %v2330, 0
        %v2367 = vsel %vm1575, %v2332, 0
        %2369 = vmatprep.subr.bf16.mxu0 0
        %2370 = vmatpush1.bf16.xpose.msra.mxu0 0
        %2371 = vmatprep.subr.bf16.mxu0 0
        %2372 = vmatpush1.bf16.xpose.msra.mxu0 0
        %2373 = vmatprep.subr.bf16.mxu0 0
        %2374 = vmatpush1.bf16.xpose.msra.mxu0 %v2367
        %2375 = vmatprep.subr.bf16.mxu0 0
        %2376 = vmatpush1.bf16.xpose.msra.mxu0 %v2364
        %2377 = vmatprep.subr.bf16.mxu0 0
        %2378 = vmatpush1.bf16.xpose.msra.mxu0 %v2361
        %2379 = vmatprep.subr.bf16.mxu0 0
        %2380 = vmatpush1.bf16.xpose.msra.mxu0 %v2358
        %2381 = vmatprep.subr.bf16.mxu0 0
        %2382 = vmatpush1.bf16.xpose.msra.mxu0 %v2355
        %2383 = vmatprep.subr.bf16.mxu0 0
        %2384 = vmatpush1.bf16.xpose.msra.mxu0 %v2352
        %2385 = vmatprep.subr.bf16.mxu0 0
        %2386 = vmatpush2.bf16.xpose.msra.mxu0 0
        %2387 = vmatprep.subr.bf16.mxu0 0
        %2388 = vmatpush2.bf16.xpose.msra.mxu0 0
        %2389 = vmatprep.subr.bf16.mxu0 0
        %2390 = vmatpush2.bf16.xpose.msra.mxu0 0
        %2391 = vmatprep.subr.bf16.mxu0 0
        %2392 = vmatpush2.bf16.xpose.msra.mxu0 0
        %2393 = vmatprep.subr.bf16.mxu0 0
        %2394 = vmatpush2.bf16.xpose.msra.mxu0 0
        %2395 = vmatprep.subr.bf16.mxu0 0
        %2396 = vmatpush2.bf16.xpose.msra.mxu0 0
        %2397 = vmatprep.subr.bf16.mxu0 0
        %2398 = vmatpush2.bf16.xpose.msra.mxu0 0
        %2399 = vmatprep.subr.bf16.mxu0 0
        %2400 = vmatpush2.bf16.xpose.msra.mxu0 0
        %2401 = vmatprep.mubr.bf16.mxu0 0
        %2402 = vmatmul.mubr.bf16.gmra.mxu0 %v2334
        %v2403 = vpop.f32.mrf.mxu0
        %v2404 = vadd.f32 0.0, %v2403
        %v2405 = vpop.f32.mrf.mxu0
        %v2406 = vpop.f32.mrf.mxu0
        %v2407 = vadd.f32 0.0, %v2406
        %v2408 = vpop.f32.mrf.mxu0
        %2409 = vmatprep.mubr.bf16.mxu0 0
        %2410 = vmatmul.mubr.bf16.gmra.mxu0 %v2337
        %v2411 = vpop.f32.mrf.mxu0
        %v2412 = vadd.f32 0.0, %v2411
        %v2413 = vpop.f32.mrf.mxu0
        %v2414 = vpop.f32.mrf.mxu0
        %v2415 = vadd.f32 0.0, %v2414
        %v2416 = vpop.f32.mrf.mxu0
        %2417 = vmatprep.mubr.bf16.mxu0 0
        %2418 = vmatmul.mubr.bf16.gmra.mxu0 %v2340
        %v2419 = vpop.f32.mrf.mxu0
        %v2420 = vadd.f32 0.0, %v2419
        %v2421 = vpop.f32.mrf.mxu0
        %v2422 = vpop.f32.mrf.mxu0
        %v2423 = vadd.f32 0.0, %v2422
        %v2424 = vpop.f32.mrf.mxu0
        %2425 = vmatprep.mubr.bf16.mxu0 0
        %2426 = vmatmul.mubr.bf16.gmra.mxu0 %v2343
        %v2427 = vpop.f32.mrf.mxu0
        %v2428 = vadd.f32 0.0, %v2427
        %v2429 = vpop.f32.mrf.mxu0
        %v2430 = vpop.f32.mrf.mxu0
        %v2431 = vadd.f32 0.0, %v2430
        %v2432 = vpop.f32.mrf.mxu0
        %2433 = vmatprep.mubr.bf16.mxu0 0
        %2434 = vmatmul.mubr.bf16.gmra.mxu0 %v2346
        %v2435 = vpop.f32.mrf.mxu0
        %v2436 = vadd.f32 0.0, %v2435
        %v2437 = vpop.f32.mrf.mxu0
        %v2438 = vpop.f32.mrf.mxu0
        %v2439 = vadd.f32 0.0, %v2438
        %v2440 = vpop.f32.mrf.mxu0
        %2441 = vmatprep.mubr.bf16.mxu0 0
        %2442 = vmatmul.mubr.bf16.gmra.mxu0 %v2349
        %v2443 = vpop.f32.mrf.mxu0
        %v2444 = vadd.f32 0.0, %v2443
        %v2445 = vpop.f32.mrf.mxu0
        %v2446 = vpop.f32.mrf.mxu0
        %v2447 = vadd.f32 0.0, %v2446
        %v2448 = vpop.f32.mrf.mxu0
        %2449 = vdwg.mxu0
        %2456 = vrot.lane.b32.xlu0 %v1557, 96
        %v2457 = vpop.permute.xlu0 %2456
        %2458 = vrot.lane.b32.xlu0 %v1560, 96
        %v2459 = vpop.permute.xlu0 %2458
        %2460 = vrot.lane.b32.xlu0 %v1563, 96
        %v2461 = vpop.permute.xlu0 %2460
        %2462 = vrot.lane.b32.xlu0 %v1566, 96
        %v2463 = vpop.permute.xlu0 %2462
        %2464 = vrot.lane.b32.xlu0 %v1569, 96
        %v2465 = vpop.permute.xlu0 %2464
        %2466 = vrot.lane.b32.xlu0 %v1572, 96
        %v2467 = vpop.permute.xlu0 %2466
        %2474 = vrot.lane.b32.xlu0 %v1558, 96
        %v2475 = vpop.permute.xlu0 %2474
        %2476 = vrot.lane.b32.xlu0 %v1561, 96
        %v2477 = vpop.permute.xlu0 %2476
        %2478 = vrot.lane.b32.xlu0 %v1564, 96
        %v2479 = vpop.permute.xlu0 %2478
        %2480 = vrot.lane.b32.xlu0 %v1567, 96
        %v2481 = vpop.permute.xlu0 %2480
        %2482 = vrot.lane.b32.xlu0 %v1570, 96
        %v2483 = vpop.permute.xlu0 %2482
        %2484 = vrot.lane.b32.xlu0 %v1573, 96
        %v2485 = vpop.permute.xlu0 %2484
        %v2487 = vsel %vm1575, %v2457, 0
        %v2490 = vsel %vm1575, %v2459, 0
        %v2493 = vsel %vm1575, %v2461, 0
        %v2496 = vsel %vm1575, %v2463, 0
        %v2499 = vsel %vm1575, %v2465, 0
        %v2502 = vsel %vm1575, %v2467, 0
        %v2505 = vsel %vm1575, %v2475, 0
        %v2508 = vsel %vm1575, %v2477, 0
        %v2511 = vsel %vm1575, %v2479, 0
        %v2514 = vsel %vm1575, %v2481, 0
        %v2517 = vsel %vm1575, %v2483, 0
        %v2520 = vsel %vm1575, %v2485, 0
        %2522 = vmatprep.subr.bf16.mxu0 0
        %2523 = vmatpush1.bf16.xpose.msra.mxu0 0
        %2524 = vmatprep.subr.bf16.mxu0 0
        %2525 = vmatpush1.bf16.xpose.msra.mxu0 0
        %2526 = vmatprep.subr.bf16.mxu0 0
        %2527 = vmatpush1.bf16.xpose.msra.mxu0 %v2520
        %2528 = vmatprep.subr.bf16.mxu0 0
        %2529 = vmatpush1.bf16.xpose.msra.mxu0 %v2517
        %2530 = vmatprep.subr.bf16.mxu0 0
        %2531 = vmatpush1.bf16.xpose.msra.mxu0 %v2514
        %2532 = vmatprep.subr.bf16.mxu0 0
        %2533 = vmatpush1.bf16.xpose.msra.mxu0 %v2511
        %2534 = vmatprep.subr.bf16.mxu0 0
        %2535 = vmatpush1.bf16.xpose.msra.mxu0 %v2508
        %2536 = vmatprep.subr.bf16.mxu0 0
        %2537 = vmatpush1.bf16.xpose.msra.mxu0 %v2505
        %2538 = vmatprep.subr.bf16.mxu0 0
        %2539 = vmatpush2.bf16.xpose.msra.mxu0 0
        %2540 = vmatprep.subr.bf16.mxu0 0
        %2541 = vmatpush2.bf16.xpose.msra.mxu0 0
        %2542 = vmatprep.subr.bf16.mxu0 0
        %2543 = vmatpush2.bf16.xpose.msra.mxu0 0
        %2544 = vmatprep.subr.bf16.mxu0 0
        %2545 = vmatpush2.bf16.xpose.msra.mxu0 0
        %2546 = vmatprep.subr.bf16.mxu0 0
        %2547 = vmatpush2.bf16.xpose.msra.mxu0 0
        %2548 = vmatprep.subr.bf16.mxu0 0
        %2549 = vmatpush2.bf16.xpose.msra.mxu0 0
        %2550 = vmatprep.subr.bf16.mxu0 0
        %2551 = vmatpush2.bf16.xpose.msra.mxu0 0
        %2552 = vmatprep.subr.bf16.mxu0 0
        %2553 = vmatpush2.bf16.xpose.msra.mxu0 0
        %2554 = vmatprep.mubr.bf16.mxu0 0
        %2555 = vmatmul.mubr.bf16.gmra.mxu0 %v2487
        %v2556 = vpop.f32.mrf.mxu0
        %v2557 = vadd.f32 0.0, %v2556
        %v2558 = vpop.f32.mrf.mxu0
        %v2559 = vpop.f32.mrf.mxu0
        %v2560 = vadd.f32 0.0, %v2559
        %v2561 = vpop.f32.mrf.mxu0
        %2562 = vmatprep.mubr.bf16.mxu0 0
        %2563 = vmatmul.mubr.bf16.gmra.mxu0 %v2490
        %v2564 = vpop.f32.mrf.mxu0
        %v2565 = vadd.f32 0.0, %v2564
        %v2566 = vpop.f32.mrf.mxu0
        %v2567 = vpop.f32.mrf.mxu0
        %v2568 = vadd.f32 0.0, %v2567
        %v2569 = vpop.f32.mrf.mxu0
        %2570 = vmatprep.mubr.bf16.mxu0 0
        %2571 = vmatmul.mubr.bf16.gmra.mxu0 %v2493
        %v2572 = vpop.f32.mrf.mxu0
        %v2573 = vadd.f32 0.0, %v2572
        %v2574 = vpop.f32.mrf.mxu0
        %v2575 = vpop.f32.mrf.mxu0
        %v2576 = vadd.f32 0.0, %v2575
        %v2577 = vpop.f32.mrf.mxu0
        %2578 = vmatprep.mubr.bf16.mxu0 0
        %2579 = vmatmul.mubr.bf16.gmra.mxu0 %v2496
        %v2580 = vpop.f32.mrf.mxu0
        %v2581 = vadd.f32 0.0, %v2580
        %v2582 = vpop.f32.mrf.mxu0
        %v2583 = vpop.f32.mrf.mxu0
        %v2584 = vadd.f32 0.0, %v2583
        %v2585 = vpop.f32.mrf.mxu0
        %2586 = vmatprep.mubr.bf16.mxu0 0
        %2587 = vmatmul.mubr.bf16.gmra.mxu0 %v2499
        %v2588 = vpop.f32.mrf.mxu0
        %v2589 = vadd.f32 0.0, %v2588
        %v2590 = vpop.f32.mrf.mxu0
        %v2591 = vpop.f32.mrf.mxu0
        %v2592 = vadd.f32 0.0, %v2591
        %v2593 = vpop.f32.mrf.mxu0
        %2594 = vmatprep.mubr.bf16.mxu0 0
        %2595 = vmatmul.mubr.bf16.gmra.mxu0 %v2502
        %v2596 = vpop.f32.mrf.mxu0
        %v2597 = vadd.f32 0.0, %v2596
        %v2598 = vpop.f32.mrf.mxu0
        %v2599 = vpop.f32.mrf.mxu0
        %v2600 = vadd.f32 0.0, %v2599
        %v2601 = vpop.f32.mrf.mxu0
        %2602 = vdwg.mxu0
        %v2603 = vsel %vm1810, %v2404, -inf
        %2604 = vmax.xlane.f32.xlu0 %v2603
        %v2605 = vpop.xlane.xlu0 %2604
        %v2606 = vsel %vm1810, %v2407, -inf
        %2607 = vmax.xlane.f32.xlu0 %v2606
        %v2608 = vpop.xlane.xlu0 %2607
        %v2609 = vsel %vm1810, %v2412, -inf
        %2610 = vmax.xlane.f32.xlu0 %v2609
        %v2611 = vpop.xlane.xlu0 %2610
        %v2612 = vsel %vm1810, %v2415, -inf
        %2613 = vmax.xlane.f32.xlu0 %v2612
        %v2614 = vpop.xlane.xlu0 %2613
        %v2615 = vsel %vm1810, %v2420, -inf
        %2616 = vmax.xlane.f32.xlu0 %v2615
        %v2617 = vpop.xlane.xlu0 %2616
        %v2618 = vsel %vm1810, %v2423, -inf
        %2619 = vmax.xlane.f32.xlu0 %v2618
        %v2620 = vpop.xlane.xlu0 %2619
        %v2621 = vsel %vm1810, %v2428, -inf
        %2622 = vmax.xlane.f32.xlu0 %v2621
        %v2623 = vpop.xlane.xlu0 %2622
        %v2624 = vsel %vm1810, %v2431, -inf
        %2625 = vmax.xlane.f32.xlu0 %v2624
        %v2626 = vpop.xlane.xlu0 %2625
        %v2627 = vsel %vm1810, %v2436, -inf
        %2628 = vmax.xlane.f32.xlu0 %v2627
        %v2629 = vpop.xlane.xlu0 %2628
        %v2630 = vsel %vm1810, %v2439, -inf
        %2631 = vmax.xlane.f32.xlu0 %v2630
        %v2632 = vpop.xlane.xlu0 %2631
        %v2633 = vsel %vm1810, %v2444, -inf
        %2634 = vmax.xlane.f32.xlu0 %v2633
        %v2635 = vpop.xlane.xlu0 %2634
        %v2636 = vsel %vm1810, %v2447, -inf
        %2637 = vmax.xlane.f32.xlu0 %v2636
        %v2638 = vpop.xlane.xlu0 %2637
        %v2639 = vsel %vm1810, %v2557, -inf
        %2640 = vmax.xlane.f32.xlu0 %v2639
        %v2641 = vpop.xlane.xlu0 %2640
        %v2642 = vsel %vm1810, %v2560, -inf
        %2643 = vmax.xlane.f32.xlu0 %v2642
        %v2644 = vpop.xlane.xlu0 %2643
        %v2645 = vsel %vm1810, %v2565, -inf
        %2646 = vmax.xlane.f32.xlu0 %v2645
        %v2647 = vpop.xlane.xlu0 %2646
        %v2648 = vsel %vm1810, %v2568, -inf
        %2649 = vmax.xlane.f32.xlu0 %v2648
        %v2650 = vpop.xlane.xlu0 %2649
        %v2651 = vsel %vm1810, %v2573, -inf
        %2652 = vmax.xlane.f32.xlu0 %v2651
        %v2653 = vpop.xlane.xlu0 %2652
        %v2654 = vsel %vm1810, %v2576, -inf
        %2655 = vmax.xlane.f32.xlu0 %v2654
        %v2656 = vpop.xlane.xlu0 %2655
        %v2657 = vsel %vm1810, %v2581, -inf
        %2658 = vmax.xlane.f32.xlu0 %v2657
        %v2659 = vpop.xlane.xlu0 %2658
        %v2660 = vsel %vm1810, %v2584, -inf
        %2661 = vmax.xlane.f32.xlu0 %v2660
        %v2662 = vpop.xlane.xlu0 %2661
        %v2663 = vsel %vm1810, %v2589, -inf
        %2664 = vmax.xlane.f32.xlu0 %v2663
        %v2665 = vpop.xlane.xlu0 %2664
        %v2666 = vsel %vm1810, %v2592, -inf
        %2667 = vmax.xlane.f32.xlu0 %v2666
        %v2668 = vpop.xlane.xlu0 %2667
        %v2669 = vsel %vm1810, %v2597, -inf
        %2670 = vmax.xlane.f32.xlu0 %v2669
        %v2671 = vpop.xlane.xlu0 %2670
        %v2672 = vsel %vm1810, %v2600, -inf
        %2673 = vmax.xlane.f32.xlu0 %v2672
        %v2674 = vpop.xlane.xlu0 %2673
        %v2675 = vsub.f32 %v2404, %v2605
        %v2676 = vsub.f32 %v2407, %v2608
        %v2677 = vsub.f32 %v2412, %v2611
        %v2678 = vsub.f32 %v2415, %v2614
        %v2679 = vsub.f32 %v2420, %v2617
        %v2680 = vsub.f32 %v2423, %v2620
        %v2681 = vsub.f32 %v2428, %v2623
        %v2682 = vsub.f32 %v2431, %v2626
        %v2683 = vsub.f32 %v2436, %v2629
        %v2684 = vsub.f32 %v2439, %v2632
        %v2685 = vsub.f32 %v2444, %v2635
        %v2686 = vsub.f32 %v2447, %v2638
        %v2687 = vsub.f32 %v2557, %v2641
        %v2688 = vsub.f32 %v2560, %v2644
        %v2689 = vsub.f32 %v2565, %v2647
        %v2690 = vsub.f32 %v2568, %v2650
        %v2691 = vsub.f32 %v2573, %v2653
        %v2692 = vsub.f32 %v2576, %v2656
        %v2693 = vsub.f32 %v2581, %v2659
        %v2694 = vsub.f32 %v2584, %v2662
        %v2695 = vsub.f32 %v2589, %v2665
        %v2696 = vsub.f32 %v2592, %v2668
        %v2697 = vsub.f32 %v2597, %v2671
        %v2698 = vsub.f32 %v2600, %v2674
        %v2699 = vmul.f32 %v2675, 1.442695
        %v2700 = vpow.pop %v2699
        %v2701 = vmul.f32 %v2676, 1.442695
        %v2702 = vpow.pop %v2701
        %v2703 = vmul.f32 %v2677, 1.442695
        %v2704 = vpow.pop %v2703
        %v2705 = vmul.f32 %v2678, 1.442695
        %v2706 = vpow.pop %v2705
        %v2707 = vmul.f32 %v2679, 1.442695
        %v2708 = vpow.pop %v2707
        %v2709 = vmul.f32 %v2680, 1.442695
        %v2710 = vpow.pop %v2709
        %v2711 = vmul.f32 %v2681, 1.442695
        %v2712 = vpow.pop %v2711
        %v2713 = vmul.f32 %v2682, 1.442695
        %v2714 = vpow.pop %v2713
        %v2715 = vmul.f32 %v2683, 1.442695
        %v2716 = vpow.pop %v2715
        %v2717 = vmul.f32 %v2684, 1.442695
        %v2718 = vpow.pop %v2717
        %v2719 = vmul.f32 %v2685, 1.442695
        %v2720 = vpow.pop %v2719
        %v2721 = vmul.f32 %v2686, 1.442695
        %v2722 = vpow.pop %v2721
        %v2723 = vmul.f32 %v2687, 1.442695
        %v2724 = vpow.pop %v2723
        %v2725 = vmul.f32 %v2688, 1.442695
        %v2726 = vpow.pop %v2725
        %v2727 = vmul.f32 %v2689, 1.442695
        %v2728 = vpow.pop %v2727
        %v2729 = vmul.f32 %v2690, 1.442695
        %v2730 = vpow.pop %v2729
        %v2731 = vmul.f32 %v2691, 1.442695
        %v2732 = vpow.pop %v2731
        %v2733 = vmul.f32 %v2692, 1.442695
        %v2734 = vpow.pop %v2733
        %v2735 = vmul.f32 %v2693, 1.442695
        %v2736 = vpow.pop %v2735
        %v2737 = vmul.f32 %v2694, 1.442695
        %v2738 = vpow.pop %v2737
        %v2739 = vmul.f32 %v2695, 1.442695
        %v2740 = vpow.pop %v2739
        %v2741 = vmul.f32 %v2696, 1.442695
        %v2742 = vpow.pop %v2741
        %v2743 = vmul.f32 %v2697, 1.442695
        %v2744 = vpow.pop %v2743
        %v2745 = vmul.f32 %v2698, 1.442695
        %v2746 = vpow.pop %v2745
        %v2747 = vsel %vm1810, %v2700, 0.0
        %2748 = vadd.xlane.f32.xlu0 %v2747
        %v2749 = vpop.xlane.xlu0 %2748
        %v2750 = vsel %vm1810, %v2702, 0.0
        %2751 = vadd.xlane.f32.xlu0 %v2750
        %v2752 = vpop.xlane.xlu0 %2751
        %v2753 = vsel %vm1810, %v2704, 0.0
        %2754 = vadd.xlane.f32.xlu0 %v2753
        %v2755 = vpop.xlane.xlu0 %2754
        %v2756 = vsel %vm1810, %v2706, 0.0
        %2757 = vadd.xlane.f32.xlu0 %v2756
        %v2758 = vpop.xlane.xlu0 %2757
        %v2759 = vsel %vm1810, %v2708, 0.0
        %2760 = vadd.xlane.f32.xlu0 %v2759
        %v2761 = vpop.xlane.xlu0 %2760
        %v2762 = vsel %vm1810, %v2710, 0.0
        %2763 = vadd.xlane.f32.xlu0 %v2762
        %v2764 = vpop.xlane.xlu0 %2763
        %v2765 = vsel %vm1810, %v2712, 0.0
        %2766 = vadd.xlane.f32.xlu0 %v2765
        %v2767 = vpop.xlane.xlu0 %2766
        %v2768 = vsel %vm1810, %v2714, 0.0
        %2769 = vadd.xlane.f32.xlu0 %v2768
        %v2770 = vpop.xlane.xlu0 %2769
        %v2771 = vsel %vm1810, %v2716, 0.0
        %2772 = vadd.xlane.f32.xlu0 %v2771
        %v2773 = vpop.xlane.xlu0 %2772
        %v2774 = vsel %vm1810, %v2718, 0.0
        %2775 = vadd.xlane.f32.xlu0 %v2774
        %v2776 = vpop.xlane.xlu0 %2775
        %v2777 = vsel %vm1810, %v2720, 0.0
        %2778 = vadd.xlane.f32.xlu0 %v2777
        %v2779 = vpop.xlane.xlu0 %2778
        %v2780 = vsel %vm1810, %v2722, 0.0
        %2781 = vadd.xlane.f32.xlu0 %v2780
        %v2782 = vpop.xlane.xlu0 %2781
        %v2783 = vsel %vm1810, %v2724, 0.0
        %2784 = vadd.xlane.f32.xlu0 %v2783
        %v2785 = vpop.xlane.xlu0 %2784
        %v2786 = vsel %vm1810, %v2726, 0.0
        %2787 = vadd.xlane.f32.xlu0 %v2786
        %v2788 = vpop.xlane.xlu0 %2787
        %v2789 = vsel %vm1810, %v2728, 0.0
        %2790 = vadd.xlane.f32.xlu0 %v2789
        %v2791 = vpop.xlane.xlu0 %2790
        %v2792 = vsel %vm1810, %v2730, 0.0
        %2793 = vadd.xlane.f32.xlu0 %v2792
        %v2794 = vpop.xlane.xlu0 %2793
        %v2795 = vsel %vm1810, %v2732, 0.0
        %2796 = vadd.xlane.f32.xlu0 %v2795
        %v2797 = vpop.xlane.xlu0 %2796
        %v2798 = vsel %vm1810, %v2734, 0.0
        %2799 = vadd.xlane.f32.xlu0 %v2798
        %v2800 = vpop.xlane.xlu0 %2799
        %v2801 = vsel %vm1810, %v2736, 0.0
        %2802 = vadd.xlane.f32.xlu0 %v2801
        %v2803 = vpop.xlane.xlu0 %2802
        %v2804 = vsel %vm1810, %v2738, 0.0
        %2805 = vadd.xlane.f32.xlu0 %v2804
        %v2806 = vpop.xlane.xlu0 %2805
        %v2807 = vsel %vm1810, %v2740, 0.0
        %2808 = vadd.xlane.f32.xlu0 %v2807
        %v2809 = vpop.xlane.xlu0 %2808
        %v2810 = vsel %vm1810, %v2742, 0.0
        %2811 = vadd.xlane.f32.xlu0 %v2810
        %v2812 = vpop.xlane.xlu0 %2811
        %v2813 = vsel %vm1810, %v2744, 0.0
        %2814 = vadd.xlane.f32.xlu0 %v2813
        %v2815 = vpop.xlane.xlu0 %2814
        %v2816 = vsel %vm1810, %v2746, 0.0
        %2817 = vadd.xlane.f32.xlu0 %v2816
        %v2818 = vpop.xlane.xlu0 %2817
        %v2819 = vrcp.pop %v2749
        %v2820 = vrcp.pop %v2752
        %v2821 = vrcp.pop %v2755
        %v2822 = vrcp.pop %v2758
        %v2823 = vrcp.pop %v2761
        %v2824 = vrcp.pop %v2764
        %v2825 = vrcp.pop %v2767
        %v2826 = vrcp.pop %v2770
        %v2827 = vrcp.pop %v2773
        %v2828 = vrcp.pop %v2776
        %v2829 = vrcp.pop %v2779
        %v2830 = vrcp.pop %v2782
        %v2831 = vrcp.pop %v2785
        %v2832 = vrcp.pop %v2788
        %v2833 = vrcp.pop %v2791
        %v2834 = vrcp.pop %v2794
        %v2835 = vrcp.pop %v2797
        %v2836 = vrcp.pop %v2800
        %v2837 = vrcp.pop %v2803
        %v2838 = vrcp.pop %v2806
        %v2839 = vrcp.pop %v2809
        %v2840 = vrcp.pop %v2812
        %v2841 = vrcp.pop %v2815
        %v2842 = vrcp.pop %v2818
        %v2843 = vmul.f32 %v2700, %v2819
        %v2844 = vmul.f32 %v2702, %v2820
        %v2845 = vmul.f32 %v2704, %v2821
        %v2846 = vmul.f32 %v2706, %v2822
        %v2847 = vmul.f32 %v2708, %v2823
        %v2848 = vmul.f32 %v2710, %v2824
        %v2849 = vmul.f32 %v2712, %v2825
        %v2850 = vmul.f32 %v2714, %v2826
        %v2851 = vmul.f32 %v2716, %v2827
        %v2852 = vmul.f32 %v2718, %v2828
        %v2853 = vmul.f32 %v2720, %v2829
        %v2854 = vmul.f32 %v2722, %v2830
        %v2855 = vmul.f32 %v2724, %v2831
        %v2856 = vmul.f32 %v2726, %v2832
        %v2857 = vmul.f32 %v2728, %v2833
        %v2858 = vmul.f32 %v2730, %v2834
        %v2859 = vmul.f32 %v2732, %v2835
        %v2860 = vmul.f32 %v2734, %v2836
        %v2861 = vmul.f32 %v2736, %v2837
        %v2862 = vmul.f32 %v2738, %v2838
        %v2863 = vmul.f32 %v2740, %v2839
        %v2864 = vmul.f32 %v2742, %v2840
        %v2865 = vmul.f32 %v2744, %v2841
        %v2866 = vmul.f32 %v2746, %v2842
        %v2867 = vpack.c.bf16 %v2844, %v2843
        %v2868 = vpack.c.bf16 %v2846, %v2845
        %v2869 = vpack.c.bf16 %v2848, %v2847
        %v2870 = vpack.c.bf16 %v2850, %v2849
        %v2871 = vpack.c.bf16 %v2852, %v2851
        %v2872 = vpack.c.bf16 %v2854, %v2853
        %v2873 = vpack.c.bf16 %v2856, %v2855
        %v2874 = vpack.c.bf16 %v2858, %v2857
        %v2875 = vpack.c.bf16 %v2860, %v2859
        %v2876 = vpack.c.bf16 %v2862, %v2861
        %v2877 = vpack.c.bf16 %v2864, %v2863
        %v2878 = vpack.c.bf16 %v2866, %v2865
        %2885 = vrot.lane.b32.xlu0 %v1541, 96
        %v2886 = vpop.permute.xlu0 %2885
        %2887 = vrot.lane.b32.xlu0 %v1544, 96
        %v2888 = vpop.permute.xlu0 %2887
        %2889 = vrot.lane.b32.xlu0 %v1547, 96
        %v2890 = vpop.permute.xlu0 %2889
        %2891 = vrot.lane.b32.xlu0 %v1550, 96
        %v2892 = vpop.permute.xlu0 %2891
        %2893 = vrot.lane.b32.xlu0 %v1553, 96
        %v2894 = vpop.permute.xlu0 %2893
        %2895 = vrot.lane.b32.xlu0 %v1556, 96
        %v2896 = vpop.permute.xlu0 %2895
        %v2904 = vsel %vm1810, %v2867, 0
        %v2907 = vsel %vm1810, %v2868, 0
        %v2910 = vsel %vm1810, %v2869, 0
        %v2913 = vsel %vm1810, %v2870, 0
        %v2916 = vsel %vm1810, %v2871, 0
        %v2919 = vsel %vm1810, %v2872, 0
        %2921 = vmatprep.subr.bf16.mxu0 0
        %2922 = vmatpush1.bf16.msra.mxu0 0
        %2923 = vmatprep.subr.bf16.mxu0 0
        %2924 = vmatpush1.bf16.msra.mxu0 0
        %2925 = vmatprep.subr.bf16.mxu0 0
        %2926 = vmatpush1.bf16.msra.mxu0 %v2896
        %2927 = vmatprep.subr.bf16.mxu0 0
        %2928 = vmatpush1.bf16.msra.mxu0 %v2894
        %2929 = vmatprep.subr.bf16.mxu0 0
        %2930 = vmatpush1.bf16.msra.mxu0 %v2892
        %2931 = vmatprep.subr.bf16.mxu0 0
        %2932 = vmatpush1.bf16.msra.mxu0 %v2890
        %2933 = vmatprep.subr.bf16.mxu0 0
        %2934 = vmatpush1.bf16.msra.mxu0 %v2888
        %2935 = vmatprep.subr.bf16.mxu0 0
        %2936 = vmatpush1.bf16.msra.mxu0 %v2886
        %2937 = vmatprep.subr.bf16.mxu0 0
        %2938 = vmatpush2.bf16.msra.mxu0 0
        %2939 = vmatprep.subr.bf16.mxu0 0
        %2940 = vmatpush2.bf16.msra.mxu0 0
        %2941 = vmatprep.subr.bf16.mxu0 0
        %2942 = vmatpush2.bf16.msra.mxu0 0
        %2943 = vmatprep.subr.bf16.mxu0 0
        %2944 = vmatpush2.bf16.msra.mxu0 0
        %2945 = vmatprep.subr.bf16.mxu0 0
        %2946 = vmatpush2.bf16.msra.mxu0 0
        %2947 = vmatprep.subr.bf16.mxu0 0
        %2948 = vmatpush2.bf16.msra.mxu0 0
        %2949 = vmatprep.subr.bf16.mxu0 0
        %2950 = vmatpush2.bf16.msra.mxu0 0
        %2951 = vmatprep.subr.bf16.mxu0 0
        %2952 = vmatpush2.bf16.msra.mxu0 0
        %2953 = vmatprep.mubr.bf16.mxu0 0
        %2954 = vmatmul.mubr.bf16.gmra.mxu0 %v2904
        %v2955 = vpop.f32.mrf.mxu0
        %v2956 = vadd.f32 0.0, %v2955
        %v2957 = vpop.f32.mrf.mxu0
        %v2958 = vpop.f32.mrf.mxu0
        %v2959 = vadd.f32 0.0, %v2958
        %v2960 = vpop.f32.mrf.mxu0
        %2961 = vmatprep.mubr.bf16.mxu0 0
        %2962 = vmatmul.mubr.bf16.gmra.mxu0 %v2907
        %v2963 = vpop.f32.mrf.mxu0
        %v2964 = vadd.f32 0.0, %v2963
        %v2965 = vpop.f32.mrf.mxu0
        %v2966 = vpop.f32.mrf.mxu0
        %v2967 = vadd.f32 0.0, %v2966
        %v2968 = vpop.f32.mrf.mxu0
        %2969 = vmatprep.mubr.bf16.mxu0 0
        %2970 = vmatmul.mubr.bf16.gmra.mxu0 %v2910
        %v2971 = vpop.f32.mrf.mxu0
        %v2972 = vadd.f32 0.0, %v2971
        %v2973 = vpop.f32.mrf.mxu0
        %v2974 = vpop.f32.mrf.mxu0
        %v2975 = vadd.f32 0.0, %v2974
        %v2976 = vpop.f32.mrf.mxu0
        %2977 = vmatprep.mubr.bf16.mxu0 0
        %2978 = vmatmul.mubr.bf16.gmra.mxu0 %v2913
        %v2979 = vpop.f32.mrf.mxu0
        %v2980 = vadd.f32 0.0, %v2979
        %v2981 = vpop.f32.mrf.mxu0
        %v2982 = vpop.f32.mrf.mxu0
        %v2983 = vadd.f32 0.0, %v2982
        %v2984 = vpop.f32.mrf.mxu0
        %2985 = vmatprep.mubr.bf16.mxu0 0
        %2986 = vmatmul.mubr.bf16.gmra.mxu0 %v2916
        %v2987 = vpop.f32.mrf.mxu0
        %v2988 = vadd.f32 0.0, %v2987
        %v2989 = vpop.f32.mrf.mxu0
        %v2990 = vpop.f32.mrf.mxu0
        %v2991 = vadd.f32 0.0, %v2990
        %v2992 = vpop.f32.mrf.mxu0
        %2993 = vmatprep.mubr.bf16.mxu0 0
        %2994 = vmatmul.mubr.bf16.gmra.mxu0 %v2919
        %v2995 = vpop.f32.mrf.mxu0
        %v2996 = vadd.f32 0.0, %v2995
        %v2997 = vpop.f32.mrf.mxu0
        %v2998 = vpop.f32.mrf.mxu0
        %v2999 = vadd.f32 0.0, %v2998
        %v3000 = vpop.f32.mrf.mxu0
        %3001 = vdwg.mxu0
        %3008 = vrot.lane.b32.xlu0 %v1559, 96
        %v3009 = vpop.permute.xlu0 %3008
        %3010 = vrot.lane.b32.xlu0 %v1562, 96
        %v3011 = vpop.permute.xlu0 %3010
        %3012 = vrot.lane.b32.xlu0 %v1565, 96
        %v3013 = vpop.permute.xlu0 %3012
        %3014 = vrot.lane.b32.xlu0 %v1568, 96
        %v3015 = vpop.permute.xlu0 %3014
        %3016 = vrot.lane.b32.xlu0 %v1571, 96
        %v3017 = vpop.permute.xlu0 %3016
        %3018 = vrot.lane.b32.xlu0 %v1574, 96
        %v3019 = vpop.permute.xlu0 %3018
        %v3027 = vsel %vm1810, %v2873, 0
        %v3030 = vsel %vm1810, %v2874, 0
        %v3033 = vsel %vm1810, %v2875, 0
        %v3036 = vsel %vm1810, %v2876, 0
        %v3039 = vsel %vm1810, %v2877, 0
        %v3042 = vsel %vm1810, %v2878, 0
        %3044 = vmatprep.subr.bf16.mxu0 0
        %3045 = vmatpush1.bf16.msra.mxu0 0
        %3046 = vmatprep.subr.bf16.mxu0 0
        %3047 = vmatpush1.bf16.msra.mxu0 0
        %3048 = vmatprep.subr.bf16.mxu0 0
        %3049 = vmatpush1.bf16.msra.mxu0 %v3019
        %3050 = vmatprep.subr.bf16.mxu0 0
        %3051 = vmatpush1.bf16.msra.mxu0 %v3017
        %3052 = vmatprep.subr.bf16.mxu0 0
        %3053 = vmatpush1.bf16.msra.mxu0 %v3015
        %3054 = vmatprep.subr.bf16.mxu0 0
        %3055 = vmatpush1.bf16.msra.mxu0 %v3013
        %3056 = vmatprep.subr.bf16.mxu0 0
        %3057 = vmatpush1.bf16.msra.mxu0 %v3011
        %3058 = vmatprep.subr.bf16.mxu0 0
        %3059 = vmatpush1.bf16.msra.mxu0 %v3009
        %3060 = vmatprep.subr.bf16.mxu0 0
        %3061 = vmatpush2.bf16.msra.mxu0 0
        %3062 = vmatprep.subr.bf16.mxu0 0
        %3063 = vmatpush2.bf16.msra.mxu0 0
        %3064 = vmatprep.subr.bf16.mxu0 0
        %3065 = vmatpush2.bf16.msra.mxu0 0
        %3066 = vmatprep.subr.bf16.mxu0 0
        %3067 = vmatpush2.bf16.msra.mxu0 0
        %3068 = vmatprep.subr.bf16.mxu0 0
        %3069 = vmatpush2.bf16.msra.mxu0 0
        %3070 = vmatprep.subr.bf16.mxu0 0
        %3071 = vmatpush2.bf16.msra.mxu0 0
        %3072 = vmatprep.subr.bf16.mxu0 0
        %3073 = vmatpush2.bf16.msra.mxu0 0
        %3074 = vmatprep.subr.bf16.mxu0 0
        %3075 = vmatpush2.bf16.msra.mxu0 0
        %3076 = vmatprep.mubr.bf16.mxu0 0
        %3077 = vmatmul.mubr.bf16.gmra.mxu0 %v3027
        %v3078 = vpop.f32.mrf.mxu0
        %v3079 = vadd.f32 0.0, %v3078
        %v3080 = vpop.f32.mrf.mxu0
        %v3081 = vpop.f32.mrf.mxu0
        %v3082 = vadd.f32 0.0, %v3081
        %v3083 = vpop.f32.mrf.mxu0
        %3084 = vmatprep.mubr.bf16.mxu0 0
        %3085 = vmatmul.mubr.bf16.gmra.mxu0 %v3030
        %v3086 = vpop.f32.mrf.mxu0
        %v3087 = vadd.f32 0.0, %v3086
        %v3088 = vpop.f32.mrf.mxu0
        %v3089 = vpop.f32.mrf.mxu0
        %v3090 = vadd.f32 0.0, %v3089
        %v3091 = vpop.f32.mrf.mxu0
        %3092 = vmatprep.mubr.bf16.mxu0 0
        %3093 = vmatmul.mubr.bf16.gmra.mxu0 %v3033
        %v3094 = vpop.f32.mrf.mxu0
        %v3095 = vadd.f32 0.0, %v3094
        %v3096 = vpop.f32.mrf.mxu0
        %v3097 = vpop.f32.mrf.mxu0
        %v3098 = vadd.f32 0.0, %v3097
        %v3099 = vpop.f32.mrf.mxu0
        %3100 = vmatprep.mubr.bf16.mxu0 0
        %3101 = vmatmul.mubr.bf16.gmra.mxu0 %v3036
        %v3102 = vpop.f32.mrf.mxu0
        %v3103 = vadd.f32 0.0, %v3102
        %v3104 = vpop.f32.mrf.mxu0
        %v3105 = vpop.f32.mrf.mxu0
        %v3106 = vadd.f32 0.0, %v3105
        %v3107 = vpop.f32.mrf.mxu0
        %3108 = vmatprep.mubr.bf16.mxu0 0
        %3109 = vmatmul.mubr.bf16.gmra.mxu0 %v3039
        %v3110 = vpop.f32.mrf.mxu0
        %v3111 = vadd.f32 0.0, %v3110
        %v3112 = vpop.f32.mrf.mxu0
        %v3113 = vpop.f32.mrf.mxu0
        %v3114 = vadd.f32 0.0, %v3113
        %v3115 = vpop.f32.mrf.mxu0
        %3116 = vmatprep.mubr.bf16.mxu0 0
        %3117 = vmatmul.mubr.bf16.gmra.mxu0 %v3042
        %v3118 = vpop.f32.mrf.mxu0
        %v3119 = vadd.f32 0.0, %v3118
        %v3120 = vpop.f32.mrf.mxu0
        %v3121 = vpop.f32.mrf.mxu0
        %v3122 = vadd.f32 0.0, %v3121
        %v3123 = vpop.f32.mrf.mxu0
        %3124 = vdwg.mxu0
        %v3125 = vpack.c.bf16 %v2959, %v2956
        %v3126 = vpack.c.bf16 %v2967, %v2964
        %v3127 = vpack.c.bf16 %v2975, %v2972
        %v3128 = vpack.c.bf16 %v2983, %v2980
        %v3129 = vpack.c.bf16 %v2991, %v2988
        %v3130 = vpack.c.bf16 %v2999, %v2996
        %v3131 = vpack.c.bf16 %v3082, %v3079
        %v3132 = vpack.c.bf16 %v3090, %v3087
        %v3133 = vpack.c.bf16 %v3098, %v3095
        %v3134 = vpack.c.bf16 %v3106, %v3103
        %v3135 = vpack.c.bf16 %v3114, %v3111
        %v3136 = vpack.c.bf16 %v3122, %v3119
        %3137 = vrot.lane.b32.xlu0 %v1539, 64
        %v3138 = vpop.permute.xlu0 %3137
        %3139 = vrot.lane.b32.xlu0 %v1542, 64
        %v3140 = vpop.permute.xlu0 %3139
        %3141 = vrot.lane.b32.xlu0 %v1545, 64
        %v3142 = vpop.permute.xlu0 %3141
        %3143 = vrot.lane.b32.xlu0 %v1548, 64
        %v3144 = vpop.permute.xlu0 %3143
        %3145 = vrot.lane.b32.xlu0 %v1551, 64
        %v3146 = vpop.permute.xlu0 %3145
        %3147 = vrot.lane.b32.xlu0 %v1554, 64
        %v3148 = vpop.permute.xlu0 %3147
        %3149 = vrot.lane.b32.xlu0 %v1540, 64
        %v3150 = vpop.permute.xlu0 %3149
        %3151 = vrot.lane.b32.xlu0 %v1543, 64
        %v3152 = vpop.permute.xlu0 %3151
        %3153 = vrot.lane.b32.xlu0 %v1546, 64
        %v3154 = vpop.permute.xlu0 %3153
        %3155 = vrot.lane.b32.xlu0 %v1549, 64
        %v3156 = vpop.permute.xlu0 %3155
        %3157 = vrot.lane.b32.xlu0 %v1552, 64
        %v3158 = vpop.permute.xlu0 %3157
        %3159 = vrot.lane.b32.xlu0 %v1555, 64
        %v3160 = vpop.permute.xlu0 %3159
        %v3162 = vsel %vm1575, %v3138, 0
        %v3165 = vsel %vm1575, %v3140, 0
        %v3168 = vsel %vm1575, %v3142, 0
        %v3171 = vsel %vm1575, %v3144, 0
        %v3174 = vsel %vm1575, %v3146, 0
        %v3177 = vsel %vm1575, %v3148, 0
        %v3180 = vsel %vm1575, %v3150, 0
        %v3183 = vsel %vm1575, %v3152, 0
        %v3186 = vsel %vm1575, %v3154, 0
        %v3189 = vsel %vm1575, %v3156, 0
        %v3192 = vsel %vm1575, %v3158, 0
        %v3195 = vsel %vm1575, %v3160, 0
        %3197 = vmatprep.subr.bf16.mxu0 0
        %3198 = vmatpush1.bf16.xpose.msra.mxu0 0
        %3199 = vmatprep.subr.bf16.mxu0 0
        %3200 = vmatpush1.bf16.xpose.msra.mxu0 0
        %3201 = vmatprep.subr.bf16.mxu0 0
        %3202 = vmatpush1.bf16.xpose.msra.mxu0 %v3195
        %3203 = vmatprep.subr.bf16.mxu0 0
        %3204 = vmatpush1.bf16.xpose.msra.mxu0 %v3192
        %3205 = vmatprep.subr.bf16.mxu0 0
        %3206 = vmatpush1.bf16.xpose.msra.mxu0 %v3189
        %3207 = vmatprep.subr.bf16.mxu0 0
        %3208 = vmatpush1.bf16.xpose.msra.mxu0 %v3186
        %3209 = vmatprep.subr.bf16.mxu0 0
        %3210 = vmatpush1.bf16.xpose.msra.mxu0 %v3183
        %3211 = vmatprep.subr.bf16.mxu0 0
        %3212 = vmatpush1.bf16.xpose.msra.mxu0 %v3180
        %3213 = vmatprep.subr.bf16.mxu0 0
        %3214 = vmatpush2.bf16.xpose.msra.mxu0 0
        %3215 = vmatprep.subr.bf16.mxu0 0
        %3216 = vmatpush2.bf16.xpose.msra.mxu0 0
        %3217 = vmatprep.subr.bf16.mxu0 0
        %3218 = vmatpush2.bf16.xpose.msra.mxu0 0
        %3219 = vmatprep.subr.bf16.mxu0 0
        %3220 = vmatpush2.bf16.xpose.msra.mxu0 0
        %3221 = vmatprep.subr.bf16.mxu0 0
        %3222 = vmatpush2.bf16.xpose.msra.mxu0 0
        %3223 = vmatprep.subr.bf16.mxu0 0
        %3224 = vmatpush2.bf16.xpose.msra.mxu0 0
        %3225 = vmatprep.subr.bf16.mxu0 0
        %3226 = vmatpush2.bf16.xpose.msra.mxu0 0
        %3227 = vmatprep.subr.bf16.mxu0 0
        %3228 = vmatpush2.bf16.xpose.msra.mxu0 0
        %3229 = vmatprep.mubr.bf16.mxu0 0
        %3230 = vmatmul.mubr.bf16.gmra.mxu0 %v3162
        %v3231 = vpop.f32.mrf.mxu0
        %v3232 = vadd.f32 0.0, %v3231
        %v3233 = vpop.f32.mrf.mxu0
        %v3234 = vpop.f32.mrf.mxu0
        %v3235 = vadd.f32 0.0, %v3234
        %v3236 = vpop.f32.mrf.mxu0
        %3237 = vmatprep.mubr.bf16.mxu0 0
        %3238 = vmatmul.mubr.bf16.gmra.mxu0 %v3165
        %v3239 = vpop.f32.mrf.mxu0
        %v3240 = vadd.f32 0.0, %v3239
        %v3241 = vpop.f32.mrf.mxu0
        %v3242 = vpop.f32.mrf.mxu0
        %v3243 = vadd.f32 0.0, %v3242
        %v3244 = vpop.f32.mrf.mxu0
        %3245 = vmatprep.mubr.bf16.mxu0 0
        %3246 = vmatmul.mubr.bf16.gmra.mxu0 %v3168
        %v3247 = vpop.f32.mrf.mxu0
        %v3248 = vadd.f32 0.0, %v3247
        %v3249 = vpop.f32.mrf.mxu0
        %v3250 = vpop.f32.mrf.mxu0
        %v3251 = vadd.f32 0.0, %v3250
        %v3252 = vpop.f32.mrf.mxu0
        %3253 = vmatprep.mubr.bf16.mxu0 0
        %3254 = vmatmul.mubr.bf16.gmra.mxu0 %v3171
        %v3255 = vpop.f32.mrf.mxu0
        %v3256 = vadd.f32 0.0, %v3255
        %v3257 = vpop.f32.mrf.mxu0
        %v3258 = vpop.f32.mrf.mxu0
        %v3259 = vadd.f32 0.0, %v3258
        %v3260 = vpop.f32.mrf.mxu0
        %3261 = vmatprep.mubr.bf16.mxu0 0
        %3262 = vmatmul.mubr.bf16.gmra.mxu0 %v3174
        %v3263 = vpop.f32.mrf.mxu0
        %v3264 = vadd.f32 0.0, %v3263
        %v3265 = vpop.f32.mrf.mxu0
        %v3266 = vpop.f32.mrf.mxu0
        %v3267 = vadd.f32 0.0, %v3266
        %v3268 = vpop.f32.mrf.mxu0
        %3269 = vmatprep.mubr.bf16.mxu0 0
        %3270 = vmatmul.mubr.bf16.gmra.mxu0 %v3177
        %v3271 = vpop.f32.mrf.mxu0
        %v3272 = vadd.f32 0.0, %v3271
        %v3273 = vpop.f32.mrf.mxu0
        %v3274 = vpop.f32.mrf.mxu0
        %v3275 = vadd.f32 0.0, %v3274
        %v3276 = vpop.f32.mrf.mxu0
        %3277 = vdwg.mxu0
        %3278 = vrot.lane.b32.xlu0 %v1557, 64
        %v3279 = vpop.permute.xlu0 %3278
        %3280 = vrot.lane.b32.xlu0 %v1560, 64
        %v3281 = vpop.permute.xlu0 %3280
        %3282 = vrot.lane.b32.xlu0 %v1563, 64
        %v3283 = vpop.permute.xlu0 %3282
        %3284 = vrot.lane.b32.xlu0 %v1566, 64
        %v3285 = vpop.permute.xlu0 %3284
        %3286 = vrot.lane.b32.xlu0 %v1569, 64
        %v3287 = vpop.permute.xlu0 %3286
        %3288 = vrot.lane.b32.xlu0 %v1572, 64
        %v3289 = vpop.permute.xlu0 %3288
        %3290 = vrot.lane.b32.xlu0 %v1558, 64
        %v3291 = vpop.permute.xlu0 %3290
        %3292 = vrot.lane.b32.xlu0 %v1561, 64
        %v3293 = vpop.permute.xlu0 %3292
        %3294 = vrot.lane.b32.xlu0 %v1564, 64
        %v3295 = vpop.permute.xlu0 %3294
        %3296 = vrot.lane.b32.xlu0 %v1567, 64
        %v3297 = vpop.permute.xlu0 %3296
        %3298 = vrot.lane.b32.xlu0 %v1570, 64
        %v3299 = vpop.permute.xlu0 %3298
        %3300 = vrot.lane.b32.xlu0 %v1573, 64
        %v3301 = vpop.permute.xlu0 %3300
        %v3303 = vsel %vm1575, %v3279, 0
        %v3306 = vsel %vm1575, %v3281, 0
        %v3309 = vsel %vm1575, %v3283, 0
        %v3312 = vsel %vm1575, %v3285, 0
        %v3315 = vsel %vm1575, %v3287, 0
        %v3318 = vsel %vm1575, %v3289, 0
        %v3321 = vsel %vm1575, %v3291, 0
        %v3324 = vsel %vm1575, %v3293, 0
        %v3327 = vsel %vm1575, %v3295, 0
        %v3330 = vsel %vm1575, %v3297, 0
        %v3333 = vsel %vm1575, %v3299, 0
        %v3336 = vsel %vm1575, %v3301, 0
        %3338 = vmatprep.subr.bf16.mxu0 0
        %3339 = vmatpush1.bf16.xpose.msra.mxu0 0
        %3340 = vmatprep.subr.bf16.mxu0 0
        %3341 = vmatpush1.bf16.xpose.msra.mxu0 0
        %3342 = vmatprep.subr.bf16.mxu0 0
        %3343 = vmatpush1.bf16.xpose.msra.mxu0 %v3336
        %3344 = vmatprep.subr.bf16.mxu0 0
        %3345 = vmatpush1.bf16.xpose.msra.mxu0 %v3333
        %3346 = vmatprep.subr.bf16.mxu0 0
        %3347 = vmatpush1.bf16.xpose.msra.mxu0 %v3330
        %3348 = vmatprep.subr.bf16.mxu0 0
        %3349 = vmatpush1.bf16.xpose.msra.mxu0 %v3327
        %3350 = vmatprep.subr.bf16.mxu0 0
        %3351 = vmatpush1.bf16.xpose.msra.mxu0 %v3324
        %3352 = vmatprep.subr.bf16.mxu0 0
        %3353 = vmatpush1.bf16.xpose.msra.mxu0 %v3321
        %3354 = vmatprep.subr.bf16.mxu0 0
        %3355 = vmatpush2.bf16.xpose.msra.mxu0 0
        %3356 = vmatprep.subr.bf16.mxu0 0
        %3357 = vmatpush2.bf16.xpose.msra.mxu0 0
        %3358 = vmatprep.subr.bf16.mxu0 0
        %3359 = vmatpush2.bf16.xpose.msra.mxu0 0
        %3360 = vmatprep.subr.bf16.mxu0 0
        %3361 = vmatpush2.bf16.xpose.msra.mxu0 0
        %3362 = vmatprep.subr.bf16.mxu0 0
        %3363 = vmatpush2.bf16.xpose.msra.mxu0 0
        %3364 = vmatprep.subr.bf16.mxu0 0
        %3365 = vmatpush2.bf16.xpose.msra.mxu0 0
        %3366 = vmatprep.subr.bf16.mxu0 0
        %3367 = vmatpush2.bf16.xpose.msra.mxu0 0
        %3368 = vmatprep.subr.bf16.mxu0 0
        %3369 = vmatpush2.bf16.xpose.msra.mxu0 0
        %3370 = vmatprep.mubr.bf16.mxu0 0
        %3371 = vmatmul.mubr.bf16.gmra.mxu0 %v3303
        %v3372 = vpop.f32.mrf.mxu0
        %v3373 = vadd.f32 0.0, %v3372
        %v3374 = vpop.f32.mrf.mxu0
        %v3375 = vpop.f32.mrf.mxu0
        %v3376 = vadd.f32 0.0, %v3375
        %v3377 = vpop.f32.mrf.mxu0
        %3378 = vmatprep.mubr.bf16.mxu0 0
        %3379 = vmatmul.mubr.bf16.gmra.mxu0 %v3306
        %v3380 = vpop.f32.mrf.mxu0
        %v3381 = vadd.f32 0.0, %v3380
        %v3382 = vpop.f32.mrf.mxu0
        %v3383 = vpop.f32.mrf.mxu0
        %v3384 = vadd.f32 0.0, %v3383
        %v3385 = vpop.f32.mrf.mxu0
        %3386 = vmatprep.mubr.bf16.mxu0 0
        %3387 = vmatmul.mubr.bf16.gmra.mxu0 %v3309
        %v3388 = vpop.f32.mrf.mxu0
        %v3389 = vadd.f32 0.0, %v3388
        %v3390 = vpop.f32.mrf.mxu0
        %v3391 = vpop.f32.mrf.mxu0
        %v3392 = vadd.f32 0.0, %v3391
        %v3393 = vpop.f32.mrf.mxu0
        %3394 = vmatprep.mubr.bf16.mxu0 0
        %3395 = vmatmul.mubr.bf16.gmra.mxu0 %v3312
        %v3396 = vpop.f32.mrf.mxu0
        %v3397 = vadd.f32 0.0, %v3396
        %v3398 = vpop.f32.mrf.mxu0
        %v3399 = vpop.f32.mrf.mxu0
        %v3400 = vadd.f32 0.0, %v3399
        %v3401 = vpop.f32.mrf.mxu0
        %3402 = vmatprep.mubr.bf16.mxu0 0
        %3403 = vmatmul.mubr.bf16.gmra.mxu0 %v3315
        %v3404 = vpop.f32.mrf.mxu0
        %v3405 = vadd.f32 0.0, %v3404
        %v3406 = vpop.f32.mrf.mxu0
        %v3407 = vpop.f32.mrf.mxu0
        %v3408 = vadd.f32 0.0, %v3407
        %v3409 = vpop.f32.mrf.mxu0
        %3410 = vmatprep.mubr.bf16.mxu0 0
        %3411 = vmatmul.mubr.bf16.gmra.mxu0 %v3318
        %v3412 = vpop.f32.mrf.mxu0
        %v3413 = vadd.f32 0.0, %v3412
        %v3414 = vpop.f32.mrf.mxu0
        %v3415 = vpop.f32.mrf.mxu0
        %v3416 = vadd.f32 0.0, %v3415
        %v3417 = vpop.f32.mrf.mxu0
        %3418 = vdwg.mxu0
        %v3419 = vsel %vm1810, %v3232, -inf
        %3420 = vmax.xlane.f32.xlu0 %v3419
        %v3421 = vpop.xlane.xlu0 %3420
        %v3422 = vsel %vm1810, %v3235, -inf
        %3423 = vmax.xlane.f32.xlu0 %v3422
        %v3424 = vpop.xlane.xlu0 %3423
        %v3425 = vsel %vm1810, %v3240, -inf
        %3426 = vmax.xlane.f32.xlu0 %v3425
        %v3427 = vpop.xlane.xlu0 %3426
        %v3428 = vsel %vm1810, %v3243, -inf
        %3429 = vmax.xlane.f32.xlu0 %v3428
        %v3430 = vpop.xlane.xlu0 %3429
        %v3431 = vsel %vm1810, %v3248, -inf
        %3432 = vmax.xlane.f32.xlu0 %v3431
        %v3433 = vpop.xlane.xlu0 %3432
        %v3434 = vsel %vm1810, %v3251, -inf
        %3435 = vmax.xlane.f32.xlu0 %v3434
        %v3436 = vpop.xlane.xlu0 %3435
        %v3437 = vsel %vm1810, %v3256, -inf
        %3438 = vmax.xlane.f32.xlu0 %v3437
        %v3439 = vpop.xlane.xlu0 %3438
        %v3440 = vsel %vm1810, %v3259, -inf
        %3441 = vmax.xlane.f32.xlu0 %v3440
        %v3442 = vpop.xlane.xlu0 %3441
        %v3443 = vsel %vm1810, %v3264, -inf
        %3444 = vmax.xlane.f32.xlu0 %v3443
        %v3445 = vpop.xlane.xlu0 %3444
        %v3446 = vsel %vm1810, %v3267, -inf
        %3447 = vmax.xlane.f32.xlu0 %v3446
        %v3448 = vpop.xlane.xlu0 %3447
        %v3449 = vsel %vm1810, %v3272, -inf
        %3450 = vmax.xlane.f32.xlu0 %v3449
        %v3451 = vpop.xlane.xlu0 %3450
        %v3452 = vsel %vm1810, %v3275, -inf
        %3453 = vmax.xlane.f32.xlu0 %v3452
        %v3454 = vpop.xlane.xlu0 %3453
        %v3455 = vsel %vm1810, %v3373, -inf
        %3456 = vmax.xlane.f32.xlu0 %v3455
        %v3457 = vpop.xlane.xlu0 %3456
        %v3458 = vsel %vm1810, %v3376, -inf
        %3459 = vmax.xlane.f32.xlu0 %v3458
        %v3460 = vpop.xlane.xlu0 %3459
        %v3461 = vsel %vm1810, %v3381, -inf
        %3462 = vmax.xlane.f32.xlu0 %v3461
        %v3463 = vpop.xlane.xlu0 %3462
        %v3464 = vsel %vm1810, %v3384, -inf
        %3465 = vmax.xlane.f32.xlu0 %v3464
        %v3466 = vpop.xlane.xlu0 %3465
        %v3467 = vsel %vm1810, %v3389, -inf
        %3468 = vmax.xlane.f32.xlu0 %v3467
        %v3469 = vpop.xlane.xlu0 %3468
        %v3470 = vsel %vm1810, %v3392, -inf
        %3471 = vmax.xlane.f32.xlu0 %v3470
        %v3472 = vpop.xlane.xlu0 %3471
        %v3473 = vsel %vm1810, %v3397, -inf
        %3474 = vmax.xlane.f32.xlu0 %v3473
        %v3475 = vpop.xlane.xlu0 %3474
        %v3476 = vsel %vm1810, %v3400, -inf
        %3477 = vmax.xlane.f32.xlu0 %v3476
        %v3478 = vpop.xlane.xlu0 %3477
        %v3479 = vsel %vm1810, %v3405, -inf
        %3480 = vmax.xlane.f32.xlu0 %v3479
        %v3481 = vpop.xlane.xlu0 %3480
        %v3482 = vsel %vm1810, %v3408, -inf
        %3483 = vmax.xlane.f32.xlu0 %v3482
        %v3484 = vpop.xlane.xlu0 %3483
        %v3485 = vsel %vm1810, %v3413, -inf
        %3486 = vmax.xlane.f32.xlu0 %v3485
        %v3487 = vpop.xlane.xlu0 %3486
        %v3488 = vsel %vm1810, %v3416, -inf
        %3489 = vmax.xlane.f32.xlu0 %v3488
        %v3490 = vpop.xlane.xlu0 %3489
        %v3491 = vsub.f32 %v3232, %v3421
        %v3492 = vsub.f32 %v3235, %v3424
        %v3493 = vsub.f32 %v3240, %v3427
        %v3494 = vsub.f32 %v3243, %v3430
        %v3495 = vsub.f32 %v3248, %v3433
        %v3496 = vsub.f32 %v3251, %v3436
        %v3497 = vsub.f32 %v3256, %v3439
        %v3498 = vsub.f32 %v3259, %v3442
        %v3499 = vsub.f32 %v3264, %v3445
        %v3500 = vsub.f32 %v3267, %v3448
        %v3501 = vsub.f32 %v3272, %v3451
        %v3502 = vsub.f32 %v3275, %v3454
        %v3503 = vsub.f32 %v3373, %v3457
        %v3504 = vsub.f32 %v3376, %v3460
        %v3505 = vsub.f32 %v3381, %v3463
        %v3506 = vsub.f32 %v3384, %v3466
        %v3507 = vsub.f32 %v3389, %v3469
        %v3508 = vsub.f32 %v3392, %v3472
        %v3509 = vsub.f32 %v3397, %v3475
        %v3510 = vsub.f32 %v3400, %v3478
        %v3511 = vsub.f32 %v3405, %v3481
        %v3512 = vsub.f32 %v3408, %v3484
        %v3513 = vsub.f32 %v3413, %v3487
        %v3514 = vsub.f32 %v3416, %v3490
        %v3515 = vmul.f32 %v3491, 1.442695
        %v3516 = vpow.pop %v3515
        %v3517 = vmul.f32 %v3492, 1.442695
        %v3518 = vpow.pop %v3517
        %v3519 = vmul.f32 %v3493, 1.442695
        %v3520 = vpow.pop %v3519
        %v3521 = vmul.f32 %v3494, 1.442695
        %v3522 = vpow.pop %v3521
        %v3523 = vmul.f32 %v3495, 1.442695
        %v3524 = vpow.pop %v3523
        %v3525 = vmul.f32 %v3496, 1.442695
        %v3526 = vpow.pop %v3525
        %v3527 = vmul.f32 %v3497, 1.442695
        %v3528 = vpow.pop %v3527
        %v3529 = vmul.f32 %v3498, 1.442695
        %v3530 = vpow.pop %v3529
        %v3531 = vmul.f32 %v3499, 1.442695
        %v3532 = vpow.pop %v3531
        %v3533 = vmul.f32 %v3500, 1.442695
        %v3534 = vpow.pop %v3533
        %v3535 = vmul.f32 %v3501, 1.442695
        %v3536 = vpow.pop %v3535
        %v3537 = vmul.f32 %v3502, 1.442695
        %v3538 = vpow.pop %v3537
        %v3539 = vmul.f32 %v3503, 1.442695
        %v3540 = vpow.pop %v3539
        %v3541 = vmul.f32 %v3504, 1.442695
        %v3542 = vpow.pop %v3541
        %v3543 = vmul.f32 %v3505, 1.442695
        %v3544 = vpow.pop %v3543
        %v3545 = vmul.f32 %v3506, 1.442695
        %v3546 = vpow.pop %v3545
        %v3547 = vmul.f32 %v3507, 1.442695
        %v3548 = vpow.pop %v3547
        %v3549 = vmul.f32 %v3508, 1.442695
        %v3550 = vpow.pop %v3549
        %v3551 = vmul.f32 %v3509, 1.442695
        %v3552 = vpow.pop %v3551
        %v3553 = vmul.f32 %v3510, 1.442695
        %v3554 = vpow.pop %v3553
        %v3555 = vmul.f32 %v3511, 1.442695
        %v3556 = vpow.pop %v3555
        %v3557 = vmul.f32 %v3512, 1.442695
        %v3558 = vpow.pop %v3557
        %v3559 = vmul.f32 %v3513, 1.442695
        %v3560 = vpow.pop %v3559
        %v3561 = vmul.f32 %v3514, 1.442695
        %v3562 = vpow.pop %v3561
        %v3563 = vsel %vm1810, %v3516, 0.0
        %3564 = vadd.xlane.f32.xlu0 %v3563
        %v3565 = vpop.xlane.xlu0 %3564
        %v3566 = vsel %vm1810, %v3518, 0.0
        %3567 = vadd.xlane.f32.xlu0 %v3566
        %v3568 = vpop.xlane.xlu0 %3567
        %v3569 = vsel %vm1810, %v3520, 0.0
        %3570 = vadd.xlane.f32.xlu0 %v3569
        %v3571 = vpop.xlane.xlu0 %3570
        %v3572 = vsel %vm1810, %v3522, 0.0
        %3573 = vadd.xlane.f32.xlu0 %v3572
        %v3574 = vpop.xlane.xlu0 %3573
        %v3575 = vsel %vm1810, %v3524, 0.0
        %3576 = vadd.xlane.f32.xlu0 %v3575
        %v3577 = vpop.xlane.xlu0 %3576
        %v3578 = vsel %vm1810, %v3526, 0.0
        %3579 = vadd.xlane.f32.xlu0 %v3578
        %v3580 = vpop.xlane.xlu0 %3579
        %v3581 = vsel %vm1810, %v3528, 0.0
        %3582 = vadd.xlane.f32.xlu0 %v3581
        %v3583 = vpop.xlane.xlu0 %3582
        %v3584 = vsel %vm1810, %v3530, 0.0
        %3585 = vadd.xlane.f32.xlu0 %v3584
        %v3586 = vpop.xlane.xlu0 %3585
        %v3587 = vsel %vm1810, %v3532, 0.0
        %3588 = vadd.xlane.f32.xlu0 %v3587
        %v3589 = vpop.xlane.xlu0 %3588
        %v3590 = vsel %vm1810, %v3534, 0.0
        %3591 = vadd.xlane.f32.xlu0 %v3590
        %v3592 = vpop.xlane.xlu0 %3591
        %v3593 = vsel %vm1810, %v3536, 0.0
        %3594 = vadd.xlane.f32.xlu0 %v3593
        %v3595 = vpop.xlane.xlu0 %3594
        %v3596 = vsel %vm1810, %v3538, 0.0
        %3597 = vadd.xlane.f32.xlu0 %v3596
        %v3598 = vpop.xlane.xlu0 %3597
        %v3599 = vsel %vm1810, %v3540, 0.0
        %3600 = vadd.xlane.f32.xlu0 %v3599
        %v3601 = vpop.xlane.xlu0 %3600
        %v3602 = vsel %vm1810, %v3542, 0.0
        %3603 = vadd.xlane.f32.xlu0 %v3602
        %v3604 = vpop.xlane.xlu0 %3603
        %v3605 = vsel %vm1810, %v3544, 0.0
        %3606 = vadd.xlane.f32.xlu0 %v3605
        %v3607 = vpop.xlane.xlu0 %3606
        %v3608 = vsel %vm1810, %v3546, 0.0
        %3609 = vadd.xlane.f32.xlu0 %v3608
        %v3610 = vpop.xlane.xlu0 %3609
        %v3611 = vsel %vm1810, %v3548, 0.0
        %3612 = vadd.xlane.f32.xlu0 %v3611
        %v3613 = vpop.xlane.xlu0 %3612
        %v3614 = vsel %vm1810, %v3550, 0.0
        %3615 = vadd.xlane.f32.xlu0 %v3614
        %v3616 = vpop.xlane.xlu0 %3615
        %v3617 = vsel %vm1810, %v3552, 0.0
        %3618 = vadd.xlane.f32.xlu0 %v3617
        %v3619 = vpop.xlane.xlu0 %3618
        %v3620 = vsel %vm1810, %v3554, 0.0
        %3621 = vadd.xlane.f32.xlu0 %v3620
        %v3622 = vpop.xlane.xlu0 %3621
        %v3623 = vsel %vm1810, %v3556, 0.0
        %3624 = vadd.xlane.f32.xlu0 %v3623
        %v3625 = vpop.xlane.xlu0 %3624
        %v3626 = vsel %vm1810, %v3558, 0.0
        %3627 = vadd.xlane.f32.xlu0 %v3626
        %v3628 = vpop.xlane.xlu0 %3627
        %v3629 = vsel %vm1810, %v3560, 0.0
        %3630 = vadd.xlane.f32.xlu0 %v3629
        %v3631 = vpop.xlane.xlu0 %3630
        %v3632 = vsel %vm1810, %v3562, 0.0
        %3633 = vadd.xlane.f32.xlu0 %v3632
        %v3634 = vpop.xlane.xlu0 %3633
        %v3635 = vrcp.pop %v3565
        %v3636 = vrcp.pop %v3568
        %v3637 = vrcp.pop %v3571
        %v3638 = vrcp.pop %v3574
        %v3639 = vrcp.pop %v3577
        %v3640 = vrcp.pop %v3580
        %v3641 = vrcp.pop %v3583
        %v3642 = vrcp.pop %v3586
        %v3643 = vrcp.pop %v3589
        %v3644 = vrcp.pop %v3592
        %v3645 = vrcp.pop %v3595
        %v3646 = vrcp.pop %v3598
        %v3647 = vrcp.pop %v3601
        %v3648 = vrcp.pop %v3604
        %v3649 = vrcp.pop %v3607
        %v3650 = vrcp.pop %v3610
        %v3651 = vrcp.pop %v3613
        %v3652 = vrcp.pop %v3616
        %v3653 = vrcp.pop %v3619
        %v3654 = vrcp.pop %v3622
        %v3655 = vrcp.pop %v3625
        %v3656 = vrcp.pop %v3628
        %v3657 = vrcp.pop %v3631
        %v3658 = vrcp.pop %v3634
        %v3659 = vmul.f32 %v3516, %v3635
        %v3660 = vmul.f32 %v3518, %v3636
        %v3661 = vmul.f32 %v3520, %v3637
        %v3662 = vmul.f32 %v3522, %v3638
        %v3663 = vmul.f32 %v3524, %v3639
        %v3664 = vmul.f32 %v3526, %v3640
        %v3665 = vmul.f32 %v3528, %v3641
        %v3666 = vmul.f32 %v3530, %v3642
        %v3667 = vmul.f32 %v3532, %v3643
        %v3668 = vmul.f32 %v3534, %v3644
        %v3669 = vmul.f32 %v3536, %v3645
        %v3670 = vmul.f32 %v3538, %v3646
        %v3671 = vmul.f32 %v3540, %v3647
        %v3672 = vmul.f32 %v3542, %v3648
        %v3673 = vmul.f32 %v3544, %v3649
        %v3674 = vmul.f32 %v3546, %v3650
        %v3675 = vmul.f32 %v3548, %v3651
        %v3676 = vmul.f32 %v3550, %v3652
        %v3677 = vmul.f32 %v3552, %v3653
        %v3678 = vmul.f32 %v3554, %v3654
        %v3679 = vmul.f32 %v3556, %v3655
        %v3680 = vmul.f32 %v3558, %v3656
        %v3681 = vmul.f32 %v3560, %v3657
        %v3682 = vmul.f32 %v3562, %v3658
        %v3683 = vpack.c.bf16 %v3660, %v3659
        %v3684 = vpack.c.bf16 %v3662, %v3661
        %v3685 = vpack.c.bf16 %v3664, %v3663
        %v3686 = vpack.c.bf16 %v3666, %v3665
        %v3687 = vpack.c.bf16 %v3668, %v3667
        %v3688 = vpack.c.bf16 %v3670, %v3669
        %v3689 = vpack.c.bf16 %v3672, %v3671
        %v3690 = vpack.c.bf16 %v3674, %v3673
        %v3691 = vpack.c.bf16 %v3676, %v3675
        %v3692 = vpack.c.bf16 %v3678, %v3677
        %v3693 = vpack.c.bf16 %v3680, %v3679
        %v3694 = vpack.c.bf16 %v3682, %v3681
        %3695 = vrot.lane.b32.xlu0 %v1541, 64
        %v3696 = vpop.permute.xlu0 %3695
        %3697 = vrot.lane.b32.xlu0 %v1544, 64
        %v3698 = vpop.permute.xlu0 %3697
        %3699 = vrot.lane.b32.xlu0 %v1547, 64
        %v3700 = vpop.permute.xlu0 %3699
        %3701 = vrot.lane.b32.xlu0 %v1550, 64
        %v3702 = vpop.permute.xlu0 %3701
        %3703 = vrot.lane.b32.xlu0 %v1553, 64
        %v3704 = vpop.permute.xlu0 %3703
        %3705 = vrot.lane.b32.xlu0 %v1556, 64
        %v3706 = vpop.permute.xlu0 %3705
        %v3714 = vsel %vm1810, %v3683, 0
        %v3717 = vsel %vm1810, %v3684, 0
        %v3720 = vsel %vm1810, %v3685, 0
        %v3723 = vsel %vm1810, %v3686, 0
        %v3726 = vsel %vm1810, %v3687, 0
        %v3729 = vsel %vm1810, %v3688, 0
        %3731 = vmatprep.subr.bf16.mxu0 0
        %3732 = vmatpush1.bf16.msra.mxu0 0
        %3733 = vmatprep.subr.bf16.mxu0 0
        %3734 = vmatpush1.bf16.msra.mxu0 0
        %3735 = vmatprep.subr.bf16.mxu0 0
        %3736 = vmatpush1.bf16.msra.mxu0 %v3706
        %3737 = vmatprep.subr.bf16.mxu0 0
        %3738 = vmatpush1.bf16.msra.mxu0 %v3704
        %3739 = vmatprep.subr.bf16.mxu0 0
        %3740 = vmatpush1.bf16.msra.mxu0 %v3702
        %3741 = vmatprep.subr.bf16.mxu0 0
        %3742 = vmatpush1.bf16.msra.mxu0 %v3700
        %3743 = vmatprep.subr.bf16.mxu0 0
        %3744 = vmatpush1.bf16.msra.mxu0 %v3698
        %3745 = vmatprep.subr.bf16.mxu0 0
        %3746 = vmatpush1.bf16.msra.mxu0 %v3696
        %3747 = vmatprep.subr.bf16.mxu0 0
        %3748 = vmatpush2.bf16.msra.mxu0 0
        %3749 = vmatprep.subr.bf16.mxu0 0
        %3750 = vmatpush2.bf16.msra.mxu0 0
        %3751 = vmatprep.subr.bf16.mxu0 0
        %3752 = vmatpush2.bf16.msra.mxu0 0
        %3753 = vmatprep.subr.bf16.mxu0 0
        %3754 = vmatpush2.bf16.msra.mxu0 0
        %3755 = vmatprep.subr.bf16.mxu0 0
        %3756 = vmatpush2.bf16.msra.mxu0 0
        %3757 = vmatprep.subr.bf16.mxu0 0
        %3758 = vmatpush2.bf16.msra.mxu0 0
        %3759 = vmatprep.subr.bf16.mxu0 0
        %3760 = vmatpush2.bf16.msra.mxu0 0
        %3761 = vmatprep.subr.bf16.mxu0 0
        %3762 = vmatpush2.bf16.msra.mxu0 0
        %3763 = vmatprep.mubr.bf16.mxu0 0
        %3764 = vmatmul.mubr.bf16.gmra.mxu0 %v3714
        %v3765 = vpop.f32.mrf.mxu0
        %v3766 = vadd.f32 0.0, %v3765
        %v3767 = vpop.f32.mrf.mxu0
        %v3768 = vpop.f32.mrf.mxu0
        %v3769 = vadd.f32 0.0, %v3768
        %v3770 = vpop.f32.mrf.mxu0
        %3771 = vmatprep.mubr.bf16.mxu0 0
        %3772 = vmatmul.mubr.bf16.gmra.mxu0 %v3717
        %v3773 = vpop.f32.mrf.mxu0
        %v3774 = vadd.f32 0.0, %v3773
        %v3775 = vpop.f32.mrf.mxu0
        %v3776 = vpop.f32.mrf.mxu0
        %v3777 = vadd.f32 0.0, %v3776
        %v3778 = vpop.f32.mrf.mxu0
        %3779 = vmatprep.mubr.bf16.mxu0 0
        %3780 = vmatmul.mubr.bf16.gmra.mxu0 %v3720
        %v3781 = vpop.f32.mrf.mxu0
        %v3782 = vadd.f32 0.0, %v3781
        %v3783 = vpop.f32.mrf.mxu0
        %v3784 = vpop.f32.mrf.mxu0
        %v3785 = vadd.f32 0.0, %v3784
        %v3786 = vpop.f32.mrf.mxu0
        %3787 = vmatprep.mubr.bf16.mxu0 0
        %3788 = vmatmul.mubr.bf16.gmra.mxu0 %v3723
        %v3789 = vpop.f32.mrf.mxu0
        %v3790 = vadd.f32 0.0, %v3789
        %v3791 = vpop.f32.mrf.mxu0
        %v3792 = vpop.f32.mrf.mxu0
        %v3793 = vadd.f32 0.0, %v3792
        %v3794 = vpop.f32.mrf.mxu0
        %3795 = vmatprep.mubr.bf16.mxu0 0
        %3796 = vmatmul.mubr.bf16.gmra.mxu0 %v3726
        %v3797 = vpop.f32.mrf.mxu0
        %v3798 = vadd.f32 0.0, %v3797
        %v3799 = vpop.f32.mrf.mxu0
        %v3800 = vpop.f32.mrf.mxu0
        %v3801 = vadd.f32 0.0, %v3800
        %v3802 = vpop.f32.mrf.mxu0
        %3803 = vmatprep.mubr.bf16.mxu0 0
        %3804 = vmatmul.mubr.bf16.gmra.mxu0 %v3729
        %v3805 = vpop.f32.mrf.mxu0
        %v3806 = vadd.f32 0.0, %v3805
        %v3807 = vpop.f32.mrf.mxu0
        %v3808 = vpop.f32.mrf.mxu0
        %v3809 = vadd.f32 0.0, %v3808
        %v3810 = vpop.f32.mrf.mxu0
        %3811 = vdwg.mxu0
        %3812 = vrot.lane.b32.xlu0 %v1559, 64
        %v3813 = vpop.permute.xlu0 %3812
        %3814 = vrot.lane.b32.xlu0 %v1562, 64
        %v3815 = vpop.permute.xlu0 %3814
        %3816 = vrot.lane.b32.xlu0 %v1565, 64
        %v3817 = vpop.permute.xlu0 %3816
        %3818 = vrot.lane.b32.xlu0 %v1568, 64
        %v3819 = vpop.permute.xlu0 %3818
        %3820 = vrot.lane.b32.xlu0 %v1571, 64
        %v3821 = vpop.permute.xlu0 %3820
        %3822 = vrot.lane.b32.xlu0 %v1574, 64
        %v3823 = vpop.permute.xlu0 %3822
        %v3831 = vsel %vm1810, %v3689, 0
        %v3834 = vsel %vm1810, %v3690, 0
        %v3837 = vsel %vm1810, %v3691, 0
        %v3840 = vsel %vm1810, %v3692, 0
        %v3843 = vsel %vm1810, %v3693, 0
        %v3846 = vsel %vm1810, %v3694, 0
        %3848 = vmatprep.subr.bf16.mxu0 0
        %3849 = vmatpush1.bf16.msra.mxu0 0
        %3850 = vmatprep.subr.bf16.mxu0 0
        %3851 = vmatpush1.bf16.msra.mxu0 0
        %3852 = vmatprep.subr.bf16.mxu0 0
        %3853 = vmatpush1.bf16.msra.mxu0 %v3823
        %3854 = vmatprep.subr.bf16.mxu0 0
        %3855 = vmatpush1.bf16.msra.mxu0 %v3821
        %3856 = vmatprep.subr.bf16.mxu0 0
        %3857 = vmatpush1.bf16.msra.mxu0 %v3819
        %3858 = vmatprep.subr.bf16.mxu0 0
        %3859 = vmatpush1.bf16.msra.mxu0 %v3817
        %3860 = vmatprep.subr.bf16.mxu0 0
        %3861 = vmatpush1.bf16.msra.mxu0 %v3815
        %3862 = vmatprep.subr.bf16.mxu0 0
        %3863 = vmatpush1.bf16.msra.mxu0 %v3813
        %3864 = vmatprep.subr.bf16.mxu0 0
        %3865 = vmatpush2.bf16.msra.mxu0 0
        %3866 = vmatprep.subr.bf16.mxu0 0
        %3867 = vmatpush2.bf16.msra.mxu0 0
        %3868 = vmatprep.subr.bf16.mxu0 0
        %3869 = vmatpush2.bf16.msra.mxu0 0
        %3870 = vmatprep.subr.bf16.mxu0 0
        %3871 = vmatpush2.bf16.msra.mxu0 0
        %3872 = vmatprep.subr.bf16.mxu0 0
        %3873 = vmatpush2.bf16.msra.mxu0 0
        %3874 = vmatprep.subr.bf16.mxu0 0
        %3875 = vmatpush2.bf16.msra.mxu0 0
        %3876 = vmatprep.subr.bf16.mxu0 0
        %3877 = vmatpush2.bf16.msra.mxu0 0
        %3878 = vmatprep.subr.bf16.mxu0 0
        %3879 = vmatpush2.bf16.msra.mxu0 0
        %3880 = vmatprep.mubr.bf16.mxu0 0
        %3881 = vmatmul.mubr.bf16.gmra.mxu0 %v3831
        %v3882 = vpop.f32.mrf.mxu0
        %v3883 = vadd.f32 0.0, %v3882
        %v3884 = vpop.f32.mrf.mxu0
        %v3885 = vpop.f32.mrf.mxu0
        %v3886 = vadd.f32 0.0, %v3885
        %v3887 = vpop.f32.mrf.mxu0
        %3888 = vmatprep.mubr.bf16.mxu0 0
        %3889 = vmatmul.mubr.bf16.gmra.mxu0 %v3834
        %v3890 = vpop.f32.mrf.mxu0
        %v3891 = vadd.f32 0.0, %v3890
        %v3892 = vpop.f32.mrf.mxu0
        %v3893 = vpop.f32.mrf.mxu0
        %v3894 = vadd.f32 0.0, %v3893
        %v3895 = vpop.f32.mrf.mxu0
        %3896 = vmatprep.mubr.bf16.mxu0 0
        %3897 = vmatmul.mubr.bf16.gmra.mxu0 %v3837
        %v3898 = vpop.f32.mrf.mxu0
        %v3899 = vadd.f32 0.0, %v3898
        %v3900 = vpop.f32.mrf.mxu0
        %v3901 = vpop.f32.mrf.mxu0
        %v3902 = vadd.f32 0.0, %v3901
        %v3903 = vpop.f32.mrf.mxu0
        %3904 = vmatprep.mubr.bf16.mxu0 0
        %3905 = vmatmul.mubr.bf16.gmra.mxu0 %v3840
        %v3906 = vpop.f32.mrf.mxu0
        %v3907 = vadd.f32 0.0, %v3906
        %v3908 = vpop.f32.mrf.mxu0
        %v3909 = vpop.f32.mrf.mxu0
        %v3910 = vadd.f32 0.0, %v3909
        %v3911 = vpop.f32.mrf.mxu0
        %3912 = vmatprep.mubr.bf16.mxu0 0
        %3913 = vmatmul.mubr.bf16.gmra.mxu0 %v3843
        %v3914 = vpop.f32.mrf.mxu0
        %v3915 = vadd.f32 0.0, %v3914
        %v3916 = vpop.f32.mrf.mxu0
        %v3917 = vpop.f32.mrf.mxu0
        %v3918 = vadd.f32 0.0, %v3917
        %v3919 = vpop.f32.mrf.mxu0
        %3920 = vmatprep.mubr.bf16.mxu0 0
        %3921 = vmatmul.mubr.bf16.gmra.mxu0 %v3846
        %v3922 = vpop.f32.mrf.mxu0
        %v3923 = vadd.f32 0.0, %v3922
        %v3924 = vpop.f32.mrf.mxu0
        %v3925 = vpop.f32.mrf.mxu0
        %v3926 = vadd.f32 0.0, %v3925
        %v3927 = vpop.f32.mrf.mxu0
        %3928 = vdwg.mxu0
        %v3929 = vpack.c.bf16 %v3769, %v3766
        %v3930 = vpack.c.bf16 %v3777, %v3774
        %v3931 = vpack.c.bf16 %v3785, %v3782
        %v3932 = vpack.c.bf16 %v3793, %v3790
        %v3933 = vpack.c.bf16 %v3801, %v3798
        %v3934 = vpack.c.bf16 %v3809, %v3806
        %v3935 = vpack.c.bf16 %v3886, %v3883
        %v3936 = vpack.c.bf16 %v3894, %v3891
        %v3937 = vpack.c.bf16 %v3902, %v3899
        %v3938 = vpack.c.bf16 %v3910, %v3907
        %v3939 = vpack.c.bf16 %v3918, %v3915
        %v3940 = vpack.c.bf16 %v3926, %v3923
        %3941 = vrot.lane.b32.xlu0 %v1539, 32
        %v3942 = vpop.permute.xlu0 %3941
        %3943 = vrot.lane.b32.xlu0 %v1542, 32
        %v3944 = vpop.permute.xlu0 %3943
        %3945 = vrot.lane.b32.xlu0 %v1545, 32
        %v3946 = vpop.permute.xlu0 %3945
        %3947 = vrot.lane.b32.xlu0 %v1548, 32
        %v3948 = vpop.permute.xlu0 %3947
        %3949 = vrot.lane.b32.xlu0 %v1551, 32
        %v3950 = vpop.permute.xlu0 %3949
        %3951 = vrot.lane.b32.xlu0 %v1554, 32
        %v3952 = vpop.permute.xlu0 %3951
        %3953 = vrot.lane.b32.xlu0 %v1540, 32
        %v3954 = vpop.permute.xlu0 %3953
        %3955 = vrot.lane.b32.xlu0 %v1543, 32
        %v3956 = vpop.permute.xlu0 %3955
        %3957 = vrot.lane.b32.xlu0 %v1546, 32
        %v3958 = vpop.permute.xlu0 %3957
        %3959 = vrot.lane.b32.xlu0 %v1549, 32
        %v3960 = vpop.permute.xlu0 %3959
        %3961 = vrot.lane.b32.xlu0 %v1552, 32
        %v3962 = vpop.permute.xlu0 %3961
        %3963 = vrot.lane.b32.xlu0 %v1555, 32
        %v3964 = vpop.permute.xlu0 %3963
        %v3966 = vsel %vm1575, %v3942, 0
        %v3969 = vsel %vm1575, %v3944, 0
        %v3972 = vsel %vm1575, %v3946, 0
        %v3975 = vsel %vm1575, %v3948, 0
        %v3978 = vsel %vm1575, %v3950, 0
        %v3981 = vsel %vm1575, %v3952, 0
        %v3984 = vsel %vm1575, %v3954, 0
        %v3987 = vsel %vm1575, %v3956, 0
        %v3990 = vsel %vm1575, %v3958, 0
        %v3993 = vsel %vm1575, %v3960, 0
        %v3996 = vsel %vm1575, %v3962, 0
        %v3999 = vsel %vm1575, %v3964, 0
        %4001 = vmatprep.subr.bf16.mxu0 0
        %4002 = vmatpush1.bf16.xpose.msra.mxu0 0
        %4003 = vmatprep.subr.bf16.mxu0 0
        %4004 = vmatpush1.bf16.xpose.msra.mxu0 0
        %4005 = vmatprep.subr.bf16.mxu0 0
        %4006 = vmatpush1.bf16.xpose.msra.mxu0 %v3999
        %4007 = vmatprep.subr.bf16.mxu0 0
        %4008 = vmatpush1.bf16.xpose.msra.mxu0 %v3996
        %4009 = vmatprep.subr.bf16.mxu0 0
        %4010 = vmatpush1.bf16.xpose.msra.mxu0 %v3993
        %4011 = vmatprep.subr.bf16.mxu0 0
        %4012 = vmatpush1.bf16.xpose.msra.mxu0 %v3990
        %4013 = vmatprep.subr.bf16.mxu0 0
        %4014 = vmatpush1.bf16.xpose.msra.mxu0 %v3987
        %4015 = vmatprep.subr.bf16.mxu0 0
        %4016 = vmatpush1.bf16.xpose.msra.mxu0 %v3984
        %4017 = vmatprep.subr.bf16.mxu0 0
        %4018 = vmatpush2.bf16.xpose.msra.mxu0 0
        %4019 = vmatprep.subr.bf16.mxu0 0
        %4020 = vmatpush2.bf16.xpose.msra.mxu0 0
        %4021 = vmatprep.subr.bf16.mxu0 0
        %4022 = vmatpush2.bf16.xpose.msra.mxu0 0
        %4023 = vmatprep.subr.bf16.mxu0 0
        %4024 = vmatpush2.bf16.xpose.msra.mxu0 0
        %4025 = vmatprep.subr.bf16.mxu0 0
        %4026 = vmatpush2.bf16.xpose.msra.mxu0 0
        %4027 = vmatprep.subr.bf16.mxu0 0
        %4028 = vmatpush2.bf16.xpose.msra.mxu0 0
        %4029 = vmatprep.subr.bf16.mxu0 0
        %4030 = vmatpush2.bf16.xpose.msra.mxu0 0
        %4031 = vmatprep.subr.bf16.mxu0 0
        %4032 = vmatpush2.bf16.xpose.msra.mxu0 0
        %4033 = vmatprep.mubr.bf16.mxu0 0
        %4034 = vmatmul.mubr.bf16.gmra.mxu0 %v3966
        %v4035 = vpop.f32.mrf.mxu0
        %v4036 = vadd.f32 0.0, %v4035
        %v4037 = vpop.f32.mrf.mxu0
        %v4038 = vpop.f32.mrf.mxu0
        %v4039 = vadd.f32 0.0, %v4038
        %v4040 = vpop.f32.mrf.mxu0
        %4041 = vmatprep.mubr.bf16.mxu0 0
        %4042 = vmatmul.mubr.bf16.gmra.mxu0 %v3969
        %v4043 = vpop.f32.mrf.mxu0
        %v4044 = vadd.f32 0.0, %v4043
        %v4045 = vpop.f32.mrf.mxu0
        %v4046 = vpop.f32.mrf.mxu0
        %v4047 = vadd.f32 0.0, %v4046
        %v4048 = vpop.f32.mrf.mxu0
        %4049 = vmatprep.mubr.bf16.mxu0 0
        %4050 = vmatmul.mubr.bf16.gmra.mxu0 %v3972
        %v4051 = vpop.f32.mrf.mxu0
        %v4052 = vadd.f32 0.0, %v4051
        %v4053 = vpop.f32.mrf.mxu0
        %v4054 = vpop.f32.mrf.mxu0
        %v4055 = vadd.f32 0.0, %v4054
        %v4056 = vpop.f32.mrf.mxu0
        %4057 = vmatprep.mubr.bf16.mxu0 0
        %4058 = vmatmul.mubr.bf16.gmra.mxu0 %v3975
        %v4059 = vpop.f32.mrf.mxu0
        %v4060 = vadd.f32 0.0, %v4059
        %v4061 = vpop.f32.mrf.mxu0
        %v4062 = vpop.f32.mrf.mxu0
        %v4063 = vadd.f32 0.0, %v4062
        %v4064 = vpop.f32.mrf.mxu0
        %4065 = vmatprep.mubr.bf16.mxu0 0
        %4066 = vmatmul.mubr.bf16.gmra.mxu0 %v3978
        %v4067 = vpop.f32.mrf.mxu0
        %v4068 = vadd.f32 0.0, %v4067
        %v4069 = vpop.f32.mrf.mxu0
        %v4070 = vpop.f32.mrf.mxu0
        %v4071 = vadd.f32 0.0, %v4070
        %v4072 = vpop.f32.mrf.mxu0
        %4073 = vmatprep.mubr.bf16.mxu0 0
        %4074 = vmatmul.mubr.bf16.gmra.mxu0 %v3981
        %v4075 = vpop.f32.mrf.mxu0
        %v4076 = vadd.f32 0.0, %v4075
        %v4077 = vpop.f32.mrf.mxu0
        %v4078 = vpop.f32.mrf.mxu0
        %v4079 = vadd.f32 0.0, %v4078
        %v4080 = vpop.f32.mrf.mxu0
        %4081 = vdwg.mxu0
        %4082 = vrot.lane.b32.xlu0 %v1557, 32
        %v4083 = vpop.permute.xlu0 %4082
        %4084 = vrot.lane.b32.xlu0 %v1560, 32
        %v4085 = vpop.permute.xlu0 %4084
        %4086 = vrot.lane.b32.xlu0 %v1563, 32
        %v4087 = vpop.permute.xlu0 %4086
        %4088 = vrot.lane.b32.xlu0 %v1566, 32
        %v4089 = vpop.permute.xlu0 %4088
        %4090 = vrot.lane.b32.xlu0 %v1569, 32
        %v4091 = vpop.permute.xlu0 %4090
        %4092 = vrot.lane.b32.xlu0 %v1572, 32
        %v4093 = vpop.permute.xlu0 %4092
        %4094 = vrot.lane.b32.xlu0 %v1558, 32
        %v4095 = vpop.permute.xlu0 %4094
        %4096 = vrot.lane.b32.xlu0 %v1561, 32
        %v4097 = vpop.permute.xlu0 %4096
        %4098 = vrot.lane.b32.xlu0 %v1564, 32
        %v4099 = vpop.permute.xlu0 %4098
        %4100 = vrot.lane.b32.xlu0 %v1567, 32
        %v4101 = vpop.permute.xlu0 %4100
        %4102 = vrot.lane.b32.xlu0 %v1570, 32
        %v4103 = vpop.permute.xlu0 %4102
        %4104 = vrot.lane.b32.xlu0 %v1573, 32
        %v4105 = vpop.permute.xlu0 %4104
        %v4107 = vsel %vm1575, %v4083, 0
        %v4110 = vsel %vm1575, %v4085, 0
        %v4113 = vsel %vm1575, %v4087, 0
        %v4116 = vsel %vm1575, %v4089, 0
        %v4119 = vsel %vm1575, %v4091, 0
        %v4122 = vsel %vm1575, %v4093, 0
        %v4125 = vsel %vm1575, %v4095, 0
        %v4128 = vsel %vm1575, %v4097, 0
        %v4131 = vsel %vm1575, %v4099, 0
        %v4134 = vsel %vm1575, %v4101, 0
        %v4137 = vsel %vm1575, %v4103, 0
        %v4140 = vsel %vm1575, %v4105, 0
        %4142 = vmatprep.subr.bf16.mxu0 0
        %4143 = vmatpush1.bf16.xpose.msra.mxu0 0
        %4144 = vmatprep.subr.bf16.mxu0 0
        %4145 = vmatpush1.bf16.xpose.msra.mxu0 0
        %4146 = vmatprep.subr.bf16.mxu0 0
        %4147 = vmatpush1.bf16.xpose.msra.mxu0 %v4140
        %4148 = vmatprep.subr.bf16.mxu0 0
        %4149 = vmatpush1.bf16.xpose.msra.mxu0 %v4137
        %4150 = vmatprep.subr.bf16.mxu0 0
        %4151 = vmatpush1.bf16.xpose.msra.mxu0 %v4134
        %4152 = vmatprep.subr.bf16.mxu0 0
        %4153 = vmatpush1.bf16.xpose.msra.mxu0 %v4131
        %4154 = vmatprep.subr.bf16.mxu0 0
        %4155 = vmatpush1.bf16.xpose.msra.mxu0 %v4128
        %4156 = vmatprep.subr.bf16.mxu0 0
        %4157 = vmatpush1.bf16.xpose.msra.mxu0 %v4125
        %4158 = vmatprep.subr.bf16.mxu0 0
        %4159 = vmatpush2.bf16.xpose.msra.mxu0 0
        %4160 = vmatprep.subr.bf16.mxu0 0
        %4161 = vmatpush2.bf16.xpose.msra.mxu0 0
        %4162 = vmatprep.subr.bf16.mxu0 0
        %4163 = vmatpush2.bf16.xpose.msra.mxu0 0
        %4164 = vmatprep.subr.bf16.mxu0 0
        %4165 = vmatpush2.bf16.xpose.msra.mxu0 0
        %4166 = vmatprep.subr.bf16.mxu0 0
        %4167 = vmatpush2.bf16.xpose.msra.mxu0 0
        %4168 = vmatprep.subr.bf16.mxu0 0
        %4169 = vmatpush2.bf16.xpose.msra.mxu0 0
        %4170 = vmatprep.subr.bf16.mxu0 0
        %4171 = vmatpush2.bf16.xpose.msra.mxu0 0
        %4172 = vmatprep.subr.bf16.mxu0 0
        %4173 = vmatpush2.bf16.xpose.msra.mxu0 0
        %4174 = vmatprep.mubr.bf16.mxu0 0
        %4175 = vmatmul.mubr.bf16.gmra.mxu0 %v4107
        %v4176 = vpop.f32.mrf.mxu0
        %v4177 = vadd.f32 0.0, %v4176
        %v4178 = vpop.f32.mrf.mxu0
        %v4179 = vpop.f32.mrf.mxu0
        %v4180 = vadd.f32 0.0, %v4179
        %v4181 = vpop.f32.mrf.mxu0
        %4182 = vmatprep.mubr.bf16.mxu0 0
        %4183 = vmatmul.mubr.bf16.gmra.mxu0 %v4110
        %v4184 = vpop.f32.mrf.mxu0
        %v4185 = vadd.f32 0.0, %v4184
        %v4186 = vpop.f32.mrf.mxu0
        %v4187 = vpop.f32.mrf.mxu0
        %v4188 = vadd.f32 0.0, %v4187
        %v4189 = vpop.f32.mrf.mxu0
        %4190 = vmatprep.mubr.bf16.mxu0 0
        %4191 = vmatmul.mubr.bf16.gmra.mxu0 %v4113
        %v4192 = vpop.f32.mrf.mxu0
        %v4193 = vadd.f32 0.0, %v4192
        %v4194 = vpop.f32.mrf.mxu0
        %v4195 = vpop.f32.mrf.mxu0
        %v4196 = vadd.f32 0.0, %v4195
        %v4197 = vpop.f32.mrf.mxu0
        %4198 = vmatprep.mubr.bf16.mxu0 0
        %4199 = vmatmul.mubr.bf16.gmra.mxu0 %v4116
        %v4200 = vpop.f32.mrf.mxu0
        %v4201 = vadd.f32 0.0, %v4200
        %v4202 = vpop.f32.mrf.mxu0
        %v4203 = vpop.f32.mrf.mxu0
        %v4204 = vadd.f32 0.0, %v4203
        %v4205 = vpop.f32.mrf.mxu0
        %4206 = vmatprep.mubr.bf16.mxu0 0
        %4207 = vmatmul.mubr.bf16.gmra.mxu0 %v4119
        %v4208 = vpop.f32.mrf.mxu0
        %v4209 = vadd.f32 0.0, %v4208
        %v4210 = vpop.f32.mrf.mxu0
        %v4211 = vpop.f32.mrf.mxu0
        %v4212 = vadd.f32 0.0, %v4211
        %v4213 = vpop.f32.mrf.mxu0
        %4214 = vmatprep.mubr.bf16.mxu0 0
        %4215 = vmatmul.mubr.bf16.gmra.mxu0 %v4122
        %v4216 = vpop.f32.mrf.mxu0
        %v4217 = vadd.f32 0.0, %v4216
        %v4218 = vpop.f32.mrf.mxu0
        %v4219 = vpop.f32.mrf.mxu0
        %v4220 = vadd.f32 0.0, %v4219
        %v4221 = vpop.f32.mrf.mxu0
        %4222 = vdwg.mxu0
        %v4223 = vsel %vm1810, %v4036, -inf
        %4224 = vmax.xlane.f32.xlu0 %v4223
        %v4225 = vpop.xlane.xlu0 %4224
        %v4226 = vsel %vm1810, %v4039, -inf
        %4227 = vmax.xlane.f32.xlu0 %v4226
        %v4228 = vpop.xlane.xlu0 %4227
        %v4229 = vsel %vm1810, %v4044, -inf
        %4230 = vmax.xlane.f32.xlu0 %v4229
        %v4231 = vpop.xlane.xlu0 %4230
        %v4232 = vsel %vm1810, %v4047, -inf
        %4233 = vmax.xlane.f32.xlu0 %v4232
        %v4234 = vpop.xlane.xlu0 %4233
        %v4235 = vsel %vm1810, %v4052, -inf
        %4236 = vmax.xlane.f32.xlu0 %v4235
        %v4237 = vpop.xlane.xlu0 %4236
        %v4238 = vsel %vm1810, %v4055, -inf
        %4239 = vmax.xlane.f32.xlu0 %v4238
        %v4240 = vpop.xlane.xlu0 %4239
        %v4241 = vsel %vm1810, %v4060, -inf
        %4242 = vmax.xlane.f32.xlu0 %v4241
        %v4243 = vpop.xlane.xlu0 %4242
        %v4244 = vsel %vm1810, %v4063, -inf
        %4245 = vmax.xlane.f32.xlu0 %v4244
        %v4246 = vpop.xlane.xlu0 %4245
        %v4247 = vsel %vm1810, %v4068, -inf
        %4248 = vmax.xlane.f32.xlu0 %v4247
        %v4249 = vpop.xlane.xlu0 %4248
        %v4250 = vsel %vm1810, %v4071, -inf
        %4251 = vmax.xlane.f32.xlu0 %v4250
        %v4252 = vpop.xlane.xlu0 %4251
        %v4253 = vsel %vm1810, %v4076, -inf
        %4254 = vmax.xlane.f32.xlu0 %v4253
        %v4255 = vpop.xlane.xlu0 %4254
        %v4256 = vsel %vm1810, %v4079, -inf
        %4257 = vmax.xlane.f32.xlu0 %v4256
        %v4258 = vpop.xlane.xlu0 %4257
        %v4259 = vsel %vm1810, %v4177, -inf
        %4260 = vmax.xlane.f32.xlu0 %v4259
        %v4261 = vpop.xlane.xlu0 %4260
        %v4262 = vsel %vm1810, %v4180, -inf
        %4263 = vmax.xlane.f32.xlu0 %v4262
        %v4264 = vpop.xlane.xlu0 %4263
        %v4265 = vsel %vm1810, %v4185, -inf
        %4266 = vmax.xlane.f32.xlu0 %v4265
        %v4267 = vpop.xlane.xlu0 %4266
        %v4268 = vsel %vm1810, %v4188, -inf
        %4269 = vmax.xlane.f32.xlu0 %v4268
        %v4270 = vpop.xlane.xlu0 %4269
        %v4271 = vsel %vm1810, %v4193, -inf
        %4272 = vmax.xlane.f32.xlu0 %v4271
        %v4273 = vpop.xlane.xlu0 %4272
        %v4274 = vsel %vm1810, %v4196, -inf
        %4275 = vmax.xlane.f32.xlu0 %v4274
        %v4276 = vpop.xlane.xlu0 %4275
        %v4277 = vsel %vm1810, %v4201, -inf
        %4278 = vmax.xlane.f32.xlu0 %v4277
        %v4279 = vpop.xlane.xlu0 %4278
        %v4280 = vsel %vm1810, %v4204, -inf
        %4281 = vmax.xlane.f32.xlu0 %v4280
        %v4282 = vpop.xlane.xlu0 %4281
        %v4283 = vsel %vm1810, %v4209, -inf
        %4284 = vmax.xlane.f32.xlu0 %v4283
        %v4285 = vpop.xlane.xlu0 %4284
        %v4286 = vsel %vm1810, %v4212, -inf
        %4287 = vmax.xlane.f32.xlu0 %v4286
        %v4288 = vpop.xlane.xlu0 %4287
        %v4289 = vsel %vm1810, %v4217, -inf
        %4290 = vmax.xlane.f32.xlu0 %v4289
        %v4291 = vpop.xlane.xlu0 %4290
        %v4292 = vsel %vm1810, %v4220, -inf
        %4293 = vmax.xlane.f32.xlu0 %v4292
        %v4294 = vpop.xlane.xlu0 %4293
        %v4295 = vsub.f32 %v4036, %v4225
        %v4296 = vsub.f32 %v4039, %v4228
        %v4297 = vsub.f32 %v4044, %v4231
        %v4298 = vsub.f32 %v4047, %v4234
        %v4299 = vsub.f32 %v4052, %v4237
        %v4300 = vsub.f32 %v4055, %v4240
        %v4301 = vsub.f32 %v4060, %v4243
        %v4302 = vsub.f32 %v4063, %v4246
        %v4303 = vsub.f32 %v4068, %v4249
        %v4304 = vsub.f32 %v4071, %v4252
        %v4305 = vsub.f32 %v4076, %v4255
        %v4306 = vsub.f32 %v4079, %v4258
        %v4307 = vsub.f32 %v4177, %v4261
        %v4308 = vsub.f32 %v4180, %v4264
        %v4309 = vsub.f32 %v4185, %v4267
        %v4310 = vsub.f32 %v4188, %v4270
        %v4311 = vsub.f32 %v4193, %v4273
        %v4312 = vsub.f32 %v4196, %v4276
        %v4313 = vsub.f32 %v4201, %v4279
        %v4314 = vsub.f32 %v4204, %v4282
        %v4315 = vsub.f32 %v4209, %v4285
        %v4316 = vsub.f32 %v4212, %v4288
        %v4317 = vsub.f32 %v4217, %v4291
        %v4318 = vsub.f32 %v4220, %v4294
        %v4319 = vmul.f32 %v4295, 1.442695
        %v4320 = vpow.pop %v4319
        %v4321 = vmul.f32 %v4296, 1.442695
        %v4322 = vpow.pop %v4321
        %v4323 = vmul.f32 %v4297, 1.442695
        %v4324 = vpow.pop %v4323
        %v4325 = vmul.f32 %v4298, 1.442695
        %v4326 = vpow.pop %v4325
        %v4327 = vmul.f32 %v4299, 1.442695
        %v4328 = vpow.pop %v4327
        %v4329 = vmul.f32 %v4300, 1.442695
        %v4330 = vpow.pop %v4329
        %v4331 = vmul.f32 %v4301, 1.442695
        %v4332 = vpow.pop %v4331
        %v4333 = vmul.f32 %v4302, 1.442695
        %v4334 = vpow.pop %v4333
        %v4335 = vmul.f32 %v4303, 1.442695
        %v4336 = vpow.pop %v4335
        %v4337 = vmul.f32 %v4304, 1.442695
        %v4338 = vpow.pop %v4337
        %v4339 = vmul.f32 %v4305, 1.442695
        %v4340 = vpow.pop %v4339
        %v4341 = vmul.f32 %v4306, 1.442695
        %v4342 = vpow.pop %v4341
        %v4343 = vmul.f32 %v4307, 1.442695
        %v4344 = vpow.pop %v4343
        %v4345 = vmul.f32 %v4308, 1.442695
        %v4346 = vpow.pop %v4345
        %v4347 = vmul.f32 %v4309, 1.442695
        %v4348 = vpow.pop %v4347
        %v4349 = vmul.f32 %v4310, 1.442695
        %v4350 = vpow.pop %v4349
        %v4351 = vmul.f32 %v4311, 1.442695
        %v4352 = vpow.pop %v4351
        %v4353 = vmul.f32 %v4312, 1.442695
        %v4354 = vpow.pop %v4353
        %v4355 = vmul.f32 %v4313, 1.442695
        %v4356 = vpow.pop %v4355
        %v4357 = vmul.f32 %v4314, 1.442695
        %v4358 = vpow.pop %v4357
        %v4359 = vmul.f32 %v4315, 1.442695
        %v4360 = vpow.pop %v4359
        %v4361 = vmul.f32 %v4316, 1.442695
        %v4362 = vpow.pop %v4361
        %v4363 = vmul.f32 %v4317, 1.442695
        %v4364 = vpow.pop %v4363
        %v4365 = vmul.f32 %v4318, 1.442695
        %v4366 = vpow.pop %v4365
        %v4367 = vsel %vm1810, %v4320, 0.0
        %4368 = vadd.xlane.f32.xlu0 %v4367
        %v4369 = vpop.xlane.xlu0 %4368
        %v4370 = vsel %vm1810, %v4322, 0.0
        %4371 = vadd.xlane.f32.xlu0 %v4370
        %v4372 = vpop.xlane.xlu0 %4371
        %v4373 = vsel %vm1810, %v4324, 0.0
        %4374 = vadd.xlane.f32.xlu0 %v4373
        %v4375 = vpop.xlane.xlu0 %4374
        %v4376 = vsel %vm1810, %v4326, 0.0
        %4377 = vadd.xlane.f32.xlu0 %v4376
        %v4378 = vpop.xlane.xlu0 %4377
        %v4379 = vsel %vm1810, %v4328, 0.0
        %4380 = vadd.xlane.f32.xlu0 %v4379
        %v4381 = vpop.xlane.xlu0 %4380
        %v4382 = vsel %vm1810, %v4330, 0.0
        %4383 = vadd.xlane.f32.xlu0 %v4382
        %v4384 = vpop.xlane.xlu0 %4383
        %v4385 = vsel %vm1810, %v4332, 0.0
        %4386 = vadd.xlane.f32.xlu0 %v4385
        %v4387 = vpop.xlane.xlu0 %4386
        %v4388 = vsel %vm1810, %v4334, 0.0
        %4389 = vadd.xlane.f32.xlu0 %v4388
        %v4390 = vpop.xlane.xlu0 %4389
        %v4391 = vsel %vm1810, %v4336, 0.0
        %4392 = vadd.xlane.f32.xlu0 %v4391
        %v4393 = vpop.xlane.xlu0 %4392
        %v4394 = vsel %vm1810, %v4338, 0.0
        %4395 = vadd.xlane.f32.xlu0 %v4394
        %v4396 = vpop.xlane.xlu0 %4395
        %v4397 = vsel %vm1810, %v4340, 0.0
        %4398 = vadd.xlane.f32.xlu0 %v4397
        %v4399 = vpop.xlane.xlu0 %4398
        %v4400 = vsel %vm1810, %v4342, 0.0
        %4401 = vadd.xlane.f32.xlu0 %v4400
        %v4402 = vpop.xlane.xlu0 %4401
        %v4403 = vsel %vm1810, %v4344, 0.0
        %4404 = vadd.xlane.f32.xlu0 %v4403
        %v4405 = vpop.xlane.xlu0 %4404
        %v4406 = vsel %vm1810, %v4346, 0.0
        %4407 = vadd.xlane.f32.xlu0 %v4406
        %v4408 = vpop.xlane.xlu0 %4407
        %v4409 = vsel %vm1810, %v4348, 0.0
        %4410 = vadd.xlane.f32.xlu0 %v4409
        %v4411 = vpop.xlane.xlu0 %4410
        %v4412 = vsel %vm1810, %v4350, 0.0
        %4413 = vadd.xlane.f32.xlu0 %v4412
        %v4414 = vpop.xlane.xlu0 %4413
        %v4415 = vsel %vm1810, %v4352, 0.0
        %4416 = vadd.xlane.f32.xlu0 %v4415
        %v4417 = vpop.xlane.xlu0 %4416
        %v4418 = vsel %vm1810, %v4354, 0.0
        %4419 = vadd.xlane.f32.xlu0 %v4418
        %v4420 = vpop.xlane.xlu0 %4419
        %v4421 = vsel %vm1810, %v4356, 0.0
        %4422 = vadd.xlane.f32.xlu0 %v4421
        %v4423 = vpop.xlane.xlu0 %4422
        %v4424 = vsel %vm1810, %v4358, 0.0
        %4425 = vadd.xlane.f32.xlu0 %v4424
        %v4426 = vpop.xlane.xlu0 %4425
        %v4427 = vsel %vm1810, %v4360, 0.0
        %4428 = vadd.xlane.f32.xlu0 %v4427
        %v4429 = vpop.xlane.xlu0 %4428
        %v4430 = vsel %vm1810, %v4362, 0.0
        %4431 = vadd.xlane.f32.xlu0 %v4430
        %v4432 = vpop.xlane.xlu0 %4431
        %v4433 = vsel %vm1810, %v4364, 0.0
        %4434 = vadd.xlane.f32.xlu0 %v4433
        %v4435 = vpop.xlane.xlu0 %4434
        %v4436 = vsel %vm1810, %v4366, 0.0
        %4437 = vadd.xlane.f32.xlu0 %v4436
        %v4438 = vpop.xlane.xlu0 %4437
        %v4439 = vrcp.pop %v4369
        %v4440 = vrcp.pop %v4372
        %v4441 = vrcp.pop %v4375
        %v4442 = vrcp.pop %v4378
        %v4443 = vrcp.pop %v4381
        %v4444 = vrcp.pop %v4384
        %v4445 = vrcp.pop %v4387
        %v4446 = vrcp.pop %v4390
        %v4447 = vrcp.pop %v4393
        %v4448 = vrcp.pop %v4396
        %v4449 = vrcp.pop %v4399
        %v4450 = vrcp.pop %v4402
        %v4451 = vrcp.pop %v4405
        %v4452 = vrcp.pop %v4408
        %v4453 = vrcp.pop %v4411
        %v4454 = vrcp.pop %v4414
        %v4455 = vrcp.pop %v4417
        %v4456 = vrcp.pop %v4420
        %v4457 = vrcp.pop %v4423
        %v4458 = vrcp.pop %v4426
        %v4459 = vrcp.pop %v4429
        %v4460 = vrcp.pop %v4432
        %v4461 = vrcp.pop %v4435
        %v4462 = vrcp.pop %v4438
        %v4463 = vmul.f32 %v4320, %v4439
        %v4464 = vmul.f32 %v4322, %v4440
        %v4465 = vmul.f32 %v4324, %v4441
        %v4466 = vmul.f32 %v4326, %v4442
        %v4467 = vmul.f32 %v4328, %v4443
        %v4468 = vmul.f32 %v4330, %v4444
        %v4469 = vmul.f32 %v4332, %v4445
        %v4470 = vmul.f32 %v4334, %v4446
        %v4471 = vmul.f32 %v4336, %v4447
        %v4472 = vmul.f32 %v4338, %v4448
        %v4473 = vmul.f32 %v4340, %v4449
        %v4474 = vmul.f32 %v4342, %v4450
        %v4475 = vmul.f32 %v4344, %v4451
        %v4476 = vmul.f32 %v4346, %v4452
        %v4477 = vmul.f32 %v4348, %v4453
        %v4478 = vmul.f32 %v4350, %v4454
        %v4479 = vmul.f32 %v4352, %v4455
        %v4480 = vmul.f32 %v4354, %v4456
        %v4481 = vmul.f32 %v4356, %v4457
        %v4482 = vmul.f32 %v4358, %v4458
        %v4483 = vmul.f32 %v4360, %v4459
        %v4484 = vmul.f32 %v4362, %v4460
        %v4485 = vmul.f32 %v4364, %v4461
        %v4486 = vmul.f32 %v4366, %v4462
        %v4487 = vpack.c.bf16 %v4464, %v4463
        %v4488 = vpack.c.bf16 %v4466, %v4465
        %v4489 = vpack.c.bf16 %v4468, %v4467
        %v4490 = vpack.c.bf16 %v4470, %v4469
        %v4491 = vpack.c.bf16 %v4472, %v4471
        %v4492 = vpack.c.bf16 %v4474, %v4473
        %v4493 = vpack.c.bf16 %v4476, %v4475
        %v4494 = vpack.c.bf16 %v4478, %v4477
        %v4495 = vpack.c.bf16 %v4480, %v4479
        %v4496 = vpack.c.bf16 %v4482, %v4481
        %v4497 = vpack.c.bf16 %v4484, %v4483
        %v4498 = vpack.c.bf16 %v4486, %v4485
        %4499 = vrot.lane.b32.xlu0 %v1541, 32
        %v4500 = vpop.permute.xlu0 %4499
        %4501 = vrot.lane.b32.xlu0 %v1544, 32
        %v4502 = vpop.permute.xlu0 %4501
        %4503 = vrot.lane.b32.xlu0 %v1547, 32
        %v4504 = vpop.permute.xlu0 %4503
        %4505 = vrot.lane.b32.xlu0 %v1550, 32
        %v4506 = vpop.permute.xlu0 %4505
        %4507 = vrot.lane.b32.xlu0 %v1553, 32
        %v4508 = vpop.permute.xlu0 %4507
        %4509 = vrot.lane.b32.xlu0 %v1556, 32
        %v4510 = vpop.permute.xlu0 %4509
        %v4518 = vsel %vm1810, %v4487, 0
        %v4521 = vsel %vm1810, %v4488, 0
        %v4524 = vsel %vm1810, %v4489, 0
        %v4527 = vsel %vm1810, %v4490, 0
        %v4530 = vsel %vm1810, %v4491, 0
        %v4533 = vsel %vm1810, %v4492, 0
        %4535 = vmatprep.subr.bf16.mxu0 0
        %4536 = vmatpush1.bf16.msra.mxu0 0
        %4537 = vmatprep.subr.bf16.mxu0 0
        %4538 = vmatpush1.bf16.msra.mxu0 0
        %4539 = vmatprep.subr.bf16.mxu0 0
        %4540 = vmatpush1.bf16.msra.mxu0 %v4510
        %4541 = vmatprep.subr.bf16.mxu0 0
        %4542 = vmatpush1.bf16.msra.mxu0 %v4508
        %4543 = vmatprep.subr.bf16.mxu0 0
        %4544 = vmatpush1.bf16.msra.mxu0 %v4506
        %4545 = vmatprep.subr.bf16.mxu0 0
        %4546 = vmatpush1.bf16.msra.mxu0 %v4504
        %4547 = vmatprep.subr.bf16.mxu0 0
        %4548 = vmatpush1.bf16.msra.mxu0 %v4502
        %4549 = vmatprep.subr.bf16.mxu0 0
        %4550 = vmatpush1.bf16.msra.mxu0 %v4500
        %4551 = vmatprep.subr.bf16.mxu0 0
        %4552 = vmatpush2.bf16.msra.mxu0 0
        %4553 = vmatprep.subr.bf16.mxu0 0
        %4554 = vmatpush2.bf16.msra.mxu0 0
        %4555 = vmatprep.subr.bf16.mxu0 0
        %4556 = vmatpush2.bf16.msra.mxu0 0
        %4557 = vmatprep.subr.bf16.mxu0 0
        %4558 = vmatpush2.bf16.msra.mxu0 0
        %4559 = vmatprep.subr.bf16.mxu0 0
        %4560 = vmatpush2.bf16.msra.mxu0 0
        %4561 = vmatprep.subr.bf16.mxu0 0
        %4562 = vmatpush2.bf16.msra.mxu0 0
        %4563 = vmatprep.subr.bf16.mxu0 0
        %4564 = vmatpush2.bf16.msra.mxu0 0
        %4565 = vmatprep.subr.bf16.mxu0 0
        %4566 = vmatpush2.bf16.msra.mxu0 0
        %4567 = vmatprep.mubr.bf16.mxu0 0
        %4568 = vmatmul.mubr.bf16.gmra.mxu0 %v4518
        %v4569 = vpop.f32.mrf.mxu0
        %v4570 = vadd.f32 0.0, %v4569
        %v4571 = vpop.f32.mrf.mxu0
        %v4572 = vpop.f32.mrf.mxu0
        %v4573 = vadd.f32 0.0, %v4572
        %v4574 = vpop.f32.mrf.mxu0
        %4575 = vmatprep.mubr.bf16.mxu0 0
        %4576 = vmatmul.mubr.bf16.gmra.mxu0 %v4521
        %v4577 = vpop.f32.mrf.mxu0
        %v4578 = vadd.f32 0.0, %v4577
        %v4579 = vpop.f32.mrf.mxu0
        %v4580 = vpop.f32.mrf.mxu0
        %v4581 = vadd.f32 0.0, %v4580
        %v4582 = vpop.f32.mrf.mxu0
        %4583 = vmatprep.mubr.bf16.mxu0 0
        %4584 = vmatmul.mubr.bf16.gmra.mxu0 %v4524
        %v4585 = vpop.f32.mrf.mxu0
        %v4586 = vadd.f32 0.0, %v4585
        %v4587 = vpop.f32.mrf.mxu0
        %v4588 = vpop.f32.mrf.mxu0
        %v4589 = vadd.f32 0.0, %v4588
        %v4590 = vpop.f32.mrf.mxu0
        %4591 = vmatprep.mubr.bf16.mxu0 0
        %4592 = vmatmul.mubr.bf16.gmra.mxu0 %v4527
        %v4593 = vpop.f32.mrf.mxu0
        %v4594 = vadd.f32 0.0, %v4593
        %v4595 = vpop.f32.mrf.mxu0
        %v4596 = vpop.f32.mrf.mxu0
        %v4597 = vadd.f32 0.0, %v4596
        %v4598 = vpop.f32.mrf.mxu0
        %4599 = vmatprep.mubr.bf16.mxu0 0
        %4600 = vmatmul.mubr.bf16.gmra.mxu0 %v4530
        %v4601 = vpop.f32.mrf.mxu0
        %v4602 = vadd.f32 0.0, %v4601
        %v4603 = vpop.f32.mrf.mxu0
        %v4604 = vpop.f32.mrf.mxu0
        %v4605 = vadd.f32 0.0, %v4604
        %v4606 = vpop.f32.mrf.mxu0
        %4607 = vmatprep.mubr.bf16.mxu0 0
        %4608 = vmatmul.mubr.bf16.gmra.mxu0 %v4533
        %v4609 = vpop.f32.mrf.mxu0
        %v4610 = vadd.f32 0.0, %v4609
        %v4611 = vpop.f32.mrf.mxu0
        %v4612 = vpop.f32.mrf.mxu0
        %v4613 = vadd.f32 0.0, %v4612
        %v4614 = vpop.f32.mrf.mxu0
        %4615 = vdwg.mxu0
        %4616 = vrot.lane.b32.xlu0 %v1559, 32
        %v4617 = vpop.permute.xlu0 %4616
        %4618 = vrot.lane.b32.xlu0 %v1562, 32
        %v4619 = vpop.permute.xlu0 %4618
        %4620 = vrot.lane.b32.xlu0 %v1565, 32
        %v4621 = vpop.permute.xlu0 %4620
        %4622 = vrot.lane.b32.xlu0 %v1568, 32
        %v4623 = vpop.permute.xlu0 %4622
        %4624 = vrot.lane.b32.xlu0 %v1571, 32
        %v4625 = vpop.permute.xlu0 %4624
        %4626 = vrot.lane.b32.xlu0 %v1574, 32
        %v4627 = vpop.permute.xlu0 %4626
        %v4635 = vsel %vm1810, %v4493, 0
        %v4638 = vsel %vm1810, %v4494, 0
        %v4641 = vsel %vm1810, %v4495, 0
        %v4644 = vsel %vm1810, %v4496, 0
        %v4647 = vsel %vm1810, %v4497, 0
        %v4650 = vsel %vm1810, %v4498, 0
        %4652 = vmatprep.subr.bf16.mxu0 0
        %4653 = vmatpush1.bf16.msra.mxu0 0
        %4654 = vmatprep.subr.bf16.mxu0 0
        %4655 = vmatpush1.bf16.msra.mxu0 0
        %4656 = vmatprep.subr.bf16.mxu0 0
        %4657 = vmatpush1.bf16.msra.mxu0 %v4627
        %4658 = vmatprep.subr.bf16.mxu0 0
        %4659 = vmatpush1.bf16.msra.mxu0 %v4625
        %4660 = vmatprep.subr.bf16.mxu0 0
        %4661 = vmatpush1.bf16.msra.mxu0 %v4623
        %4662 = vmatprep.subr.bf16.mxu0 0
        %4663 = vmatpush1.bf16.msra.mxu0 %v4621
        %4664 = vmatprep.subr.bf16.mxu0 0
        %4665 = vmatpush1.bf16.msra.mxu0 %v4619
        %4666 = vmatprep.subr.bf16.mxu0 0
        %4667 = vmatpush1.bf16.msra.mxu0 %v4617
        %4668 = vmatprep.subr.bf16.mxu0 0
        %4669 = vmatpush2.bf16.msra.mxu0 0
        %4670 = vmatprep.subr.bf16.mxu0 0
        %4671 = vmatpush2.bf16.msra.mxu0 0
        %4672 = vmatprep.subr.bf16.mxu0 0
        %4673 = vmatpush2.bf16.msra.mxu0 0
        %4674 = vmatprep.subr.bf16.mxu0 0
        %4675 = vmatpush2.bf16.msra.mxu0 0
        %4676 = vmatprep.subr.bf16.mxu0 0
        %4677 = vmatpush2.bf16.msra.mxu0 0
        %4678 = vmatprep.subr.bf16.mxu0 0
        %4679 = vmatpush2.bf16.msra.mxu0 0
        %4680 = vmatprep.subr.bf16.mxu0 0
        %4681 = vmatpush2.bf16.msra.mxu0 0
        %4682 = vmatprep.subr.bf16.mxu0 0
        %4683 = vmatpush2.bf16.msra.mxu0 0
        %4684 = vmatprep.mubr.bf16.mxu0 0
        %4685 = vmatmul.mubr.bf16.gmra.mxu0 %v4635
        %v4686 = vpop.f32.mrf.mxu0
        %v4687 = vadd.f32 0.0, %v4686
        %v4688 = vpop.f32.mrf.mxu0
        %v4689 = vpop.f32.mrf.mxu0
        %v4690 = vadd.f32 0.0, %v4689
        %v4691 = vpop.f32.mrf.mxu0
        %4692 = vmatprep.mubr.bf16.mxu0 0
        %4693 = vmatmul.mubr.bf16.gmra.mxu0 %v4638
        %v4694 = vpop.f32.mrf.mxu0
        %v4695 = vadd.f32 0.0, %v4694
        %v4696 = vpop.f32.mrf.mxu0
        %v4697 = vpop.f32.mrf.mxu0
        %v4698 = vadd.f32 0.0, %v4697
        %v4699 = vpop.f32.mrf.mxu0
        %4700 = vmatprep.mubr.bf16.mxu0 0
        %4701 = vmatmul.mubr.bf16.gmra.mxu0 %v4641
        %v4702 = vpop.f32.mrf.mxu0
        %v4703 = vadd.f32 0.0, %v4702
        %v4704 = vpop.f32.mrf.mxu0
        %v4705 = vpop.f32.mrf.mxu0
        %v4706 = vadd.f32 0.0, %v4705
        %v4707 = vpop.f32.mrf.mxu0
        %4708 = vmatprep.mubr.bf16.mxu0 0
        %4709 = vmatmul.mubr.bf16.gmra.mxu0 %v4644
        %v4710 = vpop.f32.mrf.mxu0
        %v4711 = vadd.f32 0.0, %v4710
        %v4712 = vpop.f32.mrf.mxu0
        %v4713 = vpop.f32.mrf.mxu0
        %v4714 = vadd.f32 0.0, %v4713
        %v4715 = vpop.f32.mrf.mxu0
        %4716 = vmatprep.mubr.bf16.mxu0 0
        %4717 = vmatmul.mubr.bf16.gmra.mxu0 %v4647
        %v4718 = vpop.f32.mrf.mxu0
        %v4719 = vadd.f32 0.0, %v4718
        %v4720 = vpop.f32.mrf.mxu0
        %v4721 = vpop.f32.mrf.mxu0
        %v4722 = vadd.f32 0.0, %v4721
        %v4723 = vpop.f32.mrf.mxu0
        %4724 = vmatprep.mubr.bf16.mxu0 0
        %4725 = vmatmul.mubr.bf16.gmra.mxu0 %v4650
        %v4726 = vpop.f32.mrf.mxu0
        %v4727 = vadd.f32 0.0, %v4726
        %v4728 = vpop.f32.mrf.mxu0
        %v4729 = vpop.f32.mrf.mxu0
        %v4730 = vadd.f32 0.0, %v4729
        %v4731 = vpop.f32.mrf.mxu0
        %4732 = vdwg.mxu0
        %v4733 = vpack.c.bf16 %v4573, %v4570
        %v4734 = vpack.c.bf16 %v4581, %v4578
        %v4735 = vpack.c.bf16 %v4589, %v4586
        %v4736 = vpack.c.bf16 %v4597, %v4594
        %v4737 = vpack.c.bf16 %v4605, %v4602
        %v4738 = vpack.c.bf16 %v4613, %v4610
        %v4739 = vpack.c.bf16 %v4690, %v4687
        %v4740 = vpack.c.bf16 %v4698, %v4695
        %v4741 = vpack.c.bf16 %v4706, %v4703
        %v4742 = vpack.c.bf16 %v4714, %v4711
        %v4743 = vpack.c.bf16 %v4722, %v4719
        %v4744 = vpack.c.bf16 %v4730, %v4727
        %4757 = vrot.lane.b32.xlu0 %v3125, 32
        %v4758 = vpop.permute.xlu0 %4757
        %4759 = vrot.lane.b32.xlu0 %v3126, 32
        %v4760 = vpop.permute.xlu0 %4759
        %4761 = vrot.lane.b32.xlu0 %v3127, 32
        %v4762 = vpop.permute.xlu0 %4761
        %4763 = vrot.lane.b32.xlu0 %v3128, 32
        %v4764 = vpop.permute.xlu0 %4763
        %4765 = vrot.lane.b32.xlu0 %v3129, 32
        %v4766 = vpop.permute.xlu0 %4765
        %4767 = vrot.lane.b32.xlu0 %v3130, 32
        %v4768 = vpop.permute.xlu0 %4767
        %4769 = vrot.lane.b32.xlu0 %v3131, 32
        %v4770 = vpop.permute.xlu0 %4769
        %4771 = vrot.lane.b32.xlu0 %v3132, 32
        %v4772 = vpop.permute.xlu0 %4771
        %4773 = vrot.lane.b32.xlu0 %v3133, 32
        %v4774 = vpop.permute.xlu0 %4773
        %4775 = vrot.lane.b32.xlu0 %v3134, 32
        %v4776 = vpop.permute.xlu0 %4775
        %4777 = vrot.lane.b32.xlu0 %v3135, 32
        %v4778 = vpop.permute.xlu0 %4777
        %4779 = vrot.lane.b32.xlu0 %v3136, 32
        %v4780 = vpop.permute.xlu0 %4779
        %4793 = vrot.lane.b32.xlu0 %v3929, 64
        %v4794 = vpop.permute.xlu0 %4793
        %4795 = vrot.lane.b32.xlu0 %v3930, 64
        %v4796 = vpop.permute.xlu0 %4795
        %4797 = vrot.lane.b32.xlu0 %v3931, 64
        %v4798 = vpop.permute.xlu0 %4797
        %4799 = vrot.lane.b32.xlu0 %v3932, 64
        %v4800 = vpop.permute.xlu0 %4799
        %4801 = vrot.lane.b32.xlu0 %v3933, 64
        %v4802 = vpop.permute.xlu0 %4801
        %4803 = vrot.lane.b32.xlu0 %v3934, 64
        %v4804 = vpop.permute.xlu0 %4803
        %4805 = vrot.lane.b32.xlu0 %v3935, 64
        %v4806 = vpop.permute.xlu0 %4805
        %4807 = vrot.lane.b32.xlu0 %v3936, 64
        %v4808 = vpop.permute.xlu0 %4807
        %4809 = vrot.lane.b32.xlu0 %v3937, 64
        %v4810 = vpop.permute.xlu0 %4809
        %4811 = vrot.lane.b32.xlu0 %v3938, 64
        %v4812 = vpop.permute.xlu0 %4811
        %4813 = vrot.lane.b32.xlu0 %v3939, 64
        %v4814 = vpop.permute.xlu0 %4813
        %4815 = vrot.lane.b32.xlu0 %v3940, 64
        %v4816 = vpop.permute.xlu0 %4815
        %4829 = vrot.lane.b32.xlu0 %v4733, 96
        %v4830 = vpop.permute.xlu0 %4829
        %4831 = vrot.lane.b32.xlu0 %v4734, 96
        %v4832 = vpop.permute.xlu0 %4831
        %4833 = vrot.lane.b32.xlu0 %v4735, 96
        %v4834 = vpop.permute.xlu0 %4833
        %4835 = vrot.lane.b32.xlu0 %v4736, 96
        %v4836 = vpop.permute.xlu0 %4835
        %4837 = vrot.lane.b32.xlu0 %v4737, 96
        %v4838 = vpop.permute.xlu0 %4837
        %4839 = vrot.lane.b32.xlu0 %v4738, 96
        %v4840 = vpop.permute.xlu0 %4839
        %4841 = vrot.lane.b32.xlu0 %v4739, 96
        %v4842 = vpop.permute.xlu0 %4841
        %4843 = vrot.lane.b32.xlu0 %v4740, 96
        %v4844 = vpop.permute.xlu0 %4843
        %4845 = vrot.lane.b32.xlu0 %v4741, 96
        %v4846 = vpop.permute.xlu0 %4845
        %4847 = vrot.lane.b32.xlu0 %v4742, 96
        %v4848 = vpop.permute.xlu0 %4847
        %4849 = vrot.lane.b32.xlu0 %v4743, 96
        %v4850 = vpop.permute.xlu0 %4849
        %4851 = vrot.lane.b32.xlu0 %v4744, 96
        %v4852 = vpop.permute.xlu0 %4851
        %v4855 = vsel %vm1575, %v2285, %v4758
        %v4858 = vsel %vm1575, %v2286, %v4760
        %v4861 = vsel %vm1575, %v2287, %v4762
        %v4864 = vsel %vm1575, %v2288, %v4764
        %v4867 = vsel %vm1575, %v2289, %v4766
        %v4870 = vsel %vm1575, %v2290, %v4768
        %v4873 = vsel %vm1575, %v2291, %v4770
        %v4876 = vsel %vm1575, %v2292, %v4772
        %v4879 = vsel %vm1575, %v2293, %v4774
        %v4882 = vsel %vm1575, %v2294, %v4776
        %v4885 = vsel %vm1575, %v2295, %v4778
        %v4888 = vsel %vm1575, %v2296, %v4780
        %vm4889 = vcmask 523264
        %v4891 = vsel %vm4889, %v4855, %v4794
        %v4893 = vsel %vm4889, %v4858, %v4796
        %v4895 = vsel %vm4889, %v4861, %v4798
        %v4897 = vsel %vm4889, %v4864, %v4800
        %v4899 = vsel %vm4889, %v4867, %v4802
        %v4901 = vsel %vm4889, %v4870, %v4804
        %v4903 = vsel %vm4889, %v4873, %v4806
        %v4905 = vsel %vm4889, %v4876, %v4808
        %v4907 = vsel %vm4889, %v4879, %v4810
        %v4909 = vsel %vm4889, %v4882, %v4812
        %v4911 = vsel %vm4889, %v4885, %v4814
        %v4913 = vsel %vm4889, %v4888, %v4816
        %v4915 = vsel %vm1810, %v4891, %v4830
        %v4918 = vsel %vm1810, %v4893, %v4832
        %v4921 = vsel %vm1810, %v4895, %v4834
        %v4924 = vsel %vm1810, %v4897, %v4836
        %v4927 = vsel %vm1810, %v4899, %v4838
        %v4930 = vsel %vm1810, %v4901, %v4840
        %v4933 = vsel %vm1810, %v4903, %v4842
        %v4936 = vsel %vm1810, %v4905, %v4844
        %v4939 = vsel %vm1810, %v4907, %v4846
        %v4942 = vsel %vm1810, %v4909, %v4848
        %v4945 = vsel %vm1810, %v4911, %v4850
        %v4948 = vsel %vm1810, %v4913, %v4852
        %v4950 = vld [vmem:[%s658] sm:$0xf]
        %v4951 = vld [vmem:[%s658 + $0x4] sm:$0xf]
        %v4952 = vld [vmem:[%s658 + $0x8] sm:$0xf]
        %v4953 = vld [vmem:[%s658 + $0xc] sm:$0xf]
        %v4954 = vld [vmem:[%s658 + $0x10] sm:$0xf]
        %v4955 = vld [vmem:[%s658 + $0x14] sm:$0xf]
        %v4956 = vld [vmem:[%s658 + $0x18] sm:$0xf]
        %v4957 = vld [vmem:[%s658 + $0x1c] sm:$0xf]
        %v4958 = vld [vmem:[%s658 + $0x20] sm:$0xf]
        %v4959 = vld [vmem:[%s658 + $0x24] sm:$0xf]
        %v4960 = vld [vmem:[%s658 + $0x28] sm:$0xf]
        %v4961 = vld [vmem:[%s658 + $0x2c] sm:$0xf]
        %v4962 = vld [vmem:[%s658 + $0x30] sm:$0xf]
        %v4963 = vld [vmem:[%s658 + $0x34] sm:$0xf]
        %v4964 = vld [vmem:[%s658 + $0x38] sm:$0xf]
        %v4965 = vld [vmem:[%s658 + $0x3c] sm:$0xf]
        %v4982 = vunpack.c.l.b16 %v4950
        %v4983 = vunpack.c.l.b16 %v4951
        %v4984 = vunpack.c.l.b16 %v4952
        %v4985 = vunpack.c.l.b16 %v4953
        %v4986 = vunpack.c.l.b16 %v4954
        %v4987 = vunpack.c.l.b16 %v4955
        %v4988 = vunpack.c.l.b16 %v4956
        %v4989 = vunpack.c.l.b16 %v4957
        %v4990 = vunpack.c.l.b16 %v4958
        %v4991 = vunpack.c.l.b16 %v4959
        %v4992 = vunpack.c.l.b16 %v4960
        %v4993 = vunpack.c.l.b16 %v4961
        %v4994 = vunpack.c.l.b16 %v4962
        %v4995 = vunpack.c.l.b16 %v4963
        %v4996 = vunpack.c.l.b16 %v4964
        %v4997 = vunpack.c.l.b16 %v4965
        %v4998 = vpack.c.b16 %v4983, %v4982
        %v4999 = vpack.c.b16 %v4985, %v4984
        %v5000 = vpack.c.b16 %v4987, %v4986
        %v5001 = vpack.c.b16 %v4989, %v4988
        %v5002 = vpack.c.b16 %v4991, %v4990
        %v5003 = vpack.c.b16 %v4993, %v4992
        %v5004 = vpack.c.b16 %v4995, %v4994
        %v5005 = vpack.c.b16 %v4997, %v4996
        %5014 = vmatprep.subr.bf16.mxu0 0
        %5015 = vmatpush1.bf16.msra.mxu0 %v5005
        %5016 = vmatprep.subr.bf16.mxu0 0
        %5017 = vmatpush1.bf16.msra.mxu0 %v5004
        %5018 = vmatprep.subr.bf16.mxu0 0
        %5019 = vmatpush1.bf16.msra.mxu0 %v5003
        %5020 = vmatprep.subr.bf16.mxu0 0
        %5021 = vmatpush1.bf16.msra.mxu0 %v5002
        %5022 = vmatprep.subr.bf16.mxu0 0
        %5023 = vmatpush1.bf16.msra.mxu0 %v5001
        %5024 = vmatprep.subr.bf16.mxu0 0
        %5025 = vmatpush1.bf16.msra.mxu0 %v5000
        %5026 = vmatprep.subr.bf16.mxu0 0
        %5027 = vmatpush1.bf16.msra.mxu0 %v4999
        %5028 = vmatprep.subr.bf16.mxu0 0
        %5029 = vmatpush1.bf16.msra.mxu0 %v4998
        %5030 = vmatprep.subr.bf16.mxu0 0
        %5031 = vmatpush2.bf16.msra.mxu0 0
        %5032 = vmatprep.subr.bf16.mxu0 0
        %5033 = vmatpush2.bf16.msra.mxu0 0
        %5034 = vmatprep.subr.bf16.mxu0 0
        %5035 = vmatpush2.bf16.msra.mxu0 0
        %5036 = vmatprep.subr.bf16.mxu0 0
        %5037 = vmatpush2.bf16.msra.mxu0 0
        %5038 = vmatprep.subr.bf16.mxu0 0
        %5039 = vmatpush2.bf16.msra.mxu0 0
        %5040 = vmatprep.subr.bf16.mxu0 0
        %5041 = vmatpush2.bf16.msra.mxu0 0
        %5042 = vmatprep.subr.bf16.mxu0 0
        %5043 = vmatpush2.bf16.msra.mxu0 0
        %5044 = vmatprep.subr.bf16.mxu0 0
        %5045 = vmatpush2.bf16.msra.mxu0 0
        %5046 = vmatprep.mubr.bf16.mxu0 0
        %5047 = vmatmul.mubr.bf16.gmra.mxu0 %v4915
        %v5048 = vpop.f32.mrf.mxu0
        %v5049 = vadd.f32 0.0, %v5048
        %v5050 = vpop.f32.mrf.mxu0
        %v5051 = vpop.f32.mrf.mxu0
        %v5052 = vadd.f32 0.0, %v5051
        %v5053 = vpop.f32.mrf.mxu0
        %5054 = vmatprep.mubr.bf16.mxu0 0
        %5055 = vmatmul.mubr.bf16.gmra.mxu0 %v4918
        %v5056 = vpop.f32.mrf.mxu0
        %v5057 = vadd.f32 0.0, %v5056
        %v5058 = vpop.f32.mrf.mxu0
        %v5059 = vpop.f32.mrf.mxu0
        %v5060 = vadd.f32 0.0, %v5059
        %v5061 = vpop.f32.mrf.mxu0
        %5062 = vmatprep.mubr.bf16.mxu0 0
        %5063 = vmatmul.mubr.bf16.gmra.mxu0 %v4921
        %v5064 = vpop.f32.mrf.mxu0
        %v5065 = vadd.f32 0.0, %v5064
        %v5066 = vpop.f32.mrf.mxu0
        %v5067 = vpop.f32.mrf.mxu0
        %v5068 = vadd.f32 0.0, %v5067
        %v5069 = vpop.f32.mrf.mxu0
        %5070 = vmatprep.mubr.bf16.mxu0 0
        %5071 = vmatmul.mubr.bf16.gmra.mxu0 %v4924
        %v5072 = vpop.f32.mrf.mxu0
        %v5073 = vadd.f32 0.0, %v5072
        %v5074 = vpop.f32.mrf.mxu0
        %v5075 = vpop.f32.mrf.mxu0
        %v5076 = vadd.f32 0.0, %v5075
        %v5077 = vpop.f32.mrf.mxu0
        %5078 = vmatprep.mubr.bf16.mxu0 0
        %5079 = vmatmul.mubr.bf16.gmra.mxu0 %v4927
        %v5080 = vpop.f32.mrf.mxu0
        %v5081 = vadd.f32 0.0, %v5080
        %v5082 = vpop.f32.mrf.mxu0
        %v5083 = vpop.f32.mrf.mxu0
        %v5084 = vadd.f32 0.0, %v5083
        %v5085 = vpop.f32.mrf.mxu0
        %5086 = vmatprep.mubr.bf16.mxu0 0
        %5087 = vmatmul.mubr.bf16.gmra.mxu0 %v4930
        %v5088 = vpop.f32.mrf.mxu0
        %v5089 = vadd.f32 0.0, %v5088
        %v5090 = vpop.f32.mrf.mxu0
        %v5091 = vpop.f32.mrf.mxu0
        %v5092 = vadd.f32 0.0, %v5091
        %v5093 = vpop.f32.mrf.mxu0
        %5094 = vmatprep.mubr.bf16.mxu0 0
        %5095 = vmatmul.mubr.bf16.gmra.mxu0 %v4933
        %v5096 = vpop.f32.mrf.mxu0
        %v5097 = vadd.f32 0.0, %v5096
        %v5098 = vpop.f32.mrf.mxu0
        %v5099 = vpop.f32.mrf.mxu0
        %v5100 = vadd.f32 0.0, %v5099
        %v5101 = vpop.f32.mrf.mxu0
        %5102 = vmatprep.mubr.bf16.mxu0 0
        %5103 = vmatmul.mubr.bf16.gmra.mxu0 %v4936
        %v5104 = vpop.f32.mrf.mxu0
        %v5105 = vadd.f32 0.0, %v5104
        %v5106 = vpop.f32.mrf.mxu0
        %v5107 = vpop.f32.mrf.mxu0
        %v5108 = vadd.f32 0.0, %v5107
        %v5109 = vpop.f32.mrf.mxu0
        %5110 = vmatprep.mubr.bf16.mxu0 0
        %5111 = vmatmul.mubr.bf16.gmra.mxu0 %v4939
        %v5112 = vpop.f32.mrf.mxu0
        %v5113 = vadd.f32 0.0, %v5112
        %v5114 = vpop.f32.mrf.mxu0
        %v5115 = vpop.f32.mrf.mxu0
        %v5116 = vadd.f32 0.0, %v5115
        %v5117 = vpop.f32.mrf.mxu0
        %5118 = vmatprep.mubr.bf16.mxu0 0
        %5119 = vmatmul.mubr.bf16.gmra.mxu0 %v4942
        %v5120 = vpop.f32.mrf.mxu0
        %v5121 = vadd.f32 0.0, %v5120
        %v5122 = vpop.f32.mrf.mxu0
        %v5123 = vpop.f32.mrf.mxu0
        %v5124 = vadd.f32 0.0, %v5123
        %v5125 = vpop.f32.mrf.mxu0
        %5126 = vmatprep.mubr.bf16.mxu0 0
        %5127 = vmatmul.mubr.bf16.gmra.mxu0 %v4945
        %v5128 = vpop.f32.mrf.mxu0
        %v5129 = vadd.f32 0.0, %v5128
        %v5130 = vpop.f32.mrf.mxu0
        %v5131 = vpop.f32.mrf.mxu0
        %v5132 = vadd.f32 0.0, %v5131
        %v5133 = vpop.f32.mrf.mxu0
        %5134 = vmatprep.mubr.bf16.mxu0 0
        %5135 = vmatmul.mubr.bf16.gmra.mxu0 %v4948
        %v5136 = vpop.f32.mrf.mxu0
        %v5137 = vadd.f32 0.0, %v5136
        %v5138 = vpop.f32.mrf.mxu0
        %v5139 = vpop.f32.mrf.mxu0
        %v5140 = vadd.f32 0.0, %v5139
        %v5141 = vpop.f32.mrf.mxu0
        %5142 = vdwg.mxu0
        %v5143 = vld [vmem:[#allocation2] sm:$0xff]
        %v5144 = vld [vmem:[#allocation2 + $0x8] sm:$0xff]
        %v5145 = vld [vmem:[#allocation2 + $0x10] sm:$0xff]
        %v5146 = vld [vmem:[#allocation2 + $0x18] sm:$0xff]
        %v5147 = vld [vmem:[#allocation2 + $0x20] sm:$0xff]
        %v5148 = vld [vmem:[#allocation2 + $0x28] sm:$0xff]
        %v5149 = vld [vmem:[#allocation2 + $0x30] sm:$0xff]
        %v5150 = vld [vmem:[#allocation2 + $0x38] sm:$0xff]
        %v5151 = vld [vmem:[#allocation2 + $0x40] sm:$0xff]
        %v5152 = vld [vmem:[#allocation2 + $0x48] sm:$0xff]
        %v5153 = vld [vmem:[#allocation2 + $0x50] sm:$0xff]
        %v5154 = vld [vmem:[#allocation2 + $0x58] sm:$0xff]
        %v5155 = vld [vmem:[#allocation2 + $0x60] sm:$0xff]
        %v5156 = vld [vmem:[#allocation2 + $0x68] sm:$0xff]
        %v5157 = vld [vmem:[#allocation2 + $0x70] sm:$0xff]
        %v5158 = vld [vmem:[#allocation2 + $0x78] sm:$0xff]
        %v5159 = vld [vmem:[#allocation2 + $0x80] sm:$0xff]
        %v5160 = vld [vmem:[#allocation2 + $0x88] sm:$0xff]
        %v5161 = vld [vmem:[#allocation2 + $0x90] sm:$0xff]
        %v5162 = vld [vmem:[#allocation2 + $0x98] sm:$0xff]
        %v5163 = vld [vmem:[#allocation2 + $0xa0] sm:$0xff]
        %v5164 = vld [vmem:[#allocation2 + $0xa8] sm:$0xff]
        %v5165 = vld [vmem:[#allocation2 + $0xb0] sm:$0xff]
        %v5166 = vld [vmem:[#allocation2 + $0xb8] sm:$0xff]
        %v5167 = vadd.f32 %v5143, %v5049
        %v5168 = vadd.f32 %v5144, %v5052
        %v5169 = vadd.f32 %v5145, %v5057
        %v5170 = vadd.f32 %v5146, %v5060
        %v5171 = vadd.f32 %v5147, %v5065
        %v5172 = vadd.f32 %v5148, %v5068
        %v5173 = vadd.f32 %v5149, %v5073
        %v5174 = vadd.f32 %v5150, %v5076
        %v5175 = vadd.f32 %v5151, %v5081
        %v5176 = vadd.f32 %v5152, %v5084
        %v5177 = vadd.f32 %v5153, %v5089
        %v5178 = vadd.f32 %v5154, %v5092
        %v5179 = vadd.f32 %v5155, %v5097
        %v5180 = vadd.f32 %v5156, %v5100
        %v5181 = vadd.f32 %v5157, %v5105
        %v5182 = vadd.f32 %v5158, %v5108
        %v5183 = vadd.f32 %v5159, %v5113
        %v5184 = vadd.f32 %v5160, %v5116
        %v5185 = vadd.f32 %v5161, %v5121
        %v5186 = vadd.f32 %v5162, %v5124
        %v5187 = vadd.f32 %v5163, %v5129
        %v5188 = vadd.f32 %v5164, %v5132
        %v5189 = vadd.f32 %v5165, %v5137
        %v5190 = vadd.f32 %v5166, %v5140
        %v5191 = vld [vmem:[%s661] sm:$0x1]
        %v5192 = vld [vmem:[%s664] sm:$0x1]
        %5193 = vadd.xlane.f32.xlu0 %v5167
        %v5194 = vpop.xlane.xlu0 %5193
        %5195 = vadd.xlane.f32.xlu0 %v5168
        %v5196 = vpop.xlane.xlu0 %5195
        %5197 = vadd.xlane.f32.xlu0 %v5169
        %v5198 = vpop.xlane.xlu0 %5197
        %5199 = vadd.xlane.f32.xlu0 %v5170
        %v5200 = vpop.xlane.xlu0 %5199
        %5201 = vadd.xlane.f32.xlu0 %v5171
        %v5202 = vpop.xlane.xlu0 %5201
        %5203 = vadd.xlane.f32.xlu0 %v5172
        %v5204 = vpop.xlane.xlu0 %5203
        %5205 = vadd.xlane.f32.xlu0 %v5173
        %v5206 = vpop.xlane.xlu0 %5205
        %5207 = vadd.xlane.f32.xlu0 %v5174
        %v5208 = vpop.xlane.xlu0 %5207
        %5209 = vadd.xlane.f32.xlu0 %v5175
        %v5210 = vpop.xlane.xlu0 %5209
        %5211 = vadd.xlane.f32.xlu0 %v5176
        %v5212 = vpop.xlane.xlu0 %5211
        %5213 = vadd.xlane.f32.xlu0 %v5177
        %v5214 = vpop.xlane.xlu0 %5213
        %5215 = vadd.xlane.f32.xlu0 %v5178
        %v5216 = vpop.xlane.xlu0 %5215
        %5217 = vadd.xlane.f32.xlu0 %v5179
        %v5218 = vpop.xlane.xlu0 %5217
        %5219 = vadd.xlane.f32.xlu0 %v5180
        %v5220 = vpop.xlane.xlu0 %5219
        %5221 = vadd.xlane.f32.xlu0 %v5181
        %v5222 = vpop.xlane.xlu0 %5221
        %5223 = vadd.xlane.f32.xlu0 %v5182
        %v5224 = vpop.xlane.xlu0 %5223
        %5225 = vadd.xlane.f32.xlu0 %v5183
        %v5226 = vpop.xlane.xlu0 %5225
        %5227 = vadd.xlane.f32.xlu0 %v5184
        %v5228 = vpop.xlane.xlu0 %5227
        %5229 = vadd.xlane.f32.xlu0 %v5185
        %v5230 = vpop.xlane.xlu0 %5229
        %5231 = vadd.xlane.f32.xlu0 %v5186
        %v5232 = vpop.xlane.xlu0 %5231
        %5233 = vadd.xlane.f32.xlu0 %v5187
        %v5234 = vpop.xlane.xlu0 %5233
        %5235 = vadd.xlane.f32.xlu0 %v5188
        %v5236 = vpop.xlane.xlu0 %5235
        %5237 = vadd.xlane.f32.xlu0 %v5189
        %v5238 = vpop.xlane.xlu0 %5237
        %5239 = vadd.xlane.f32.xlu0 %v5190
        %v5240 = vpop.xlane.xlu0 %5239
        %v5241 = vmul.f32 %v5194, %v808
        %v5242 = vmul.f32 %v5196, %v808
        %v5243 = vmul.f32 %v5198, %v808
        %v5244 = vmul.f32 %v5200, %v808
        %v5245 = vmul.f32 %v5202, %v808
        %v5246 = vmul.f32 %v5204, %v808
        %v5247 = vmul.f32 %v5206, %v808
        %v5248 = vmul.f32 %v5208, %v808
        %v5249 = vmul.f32 %v5210, %v808
        %v5250 = vmul.f32 %v5212, %v808
        %v5251 = vmul.f32 %v5214, %v808
        %v5252 = vmul.f32 %v5216, %v808
        %v5253 = vmul.f32 %v5218, %v808
        %v5254 = vmul.f32 %v5220, %v808
        %v5255 = vmul.f32 %v5222, %v808
        %v5256 = vmul.f32 %v5224, %v808
        %v5257 = vmul.f32 %v5226, %v808
        %v5258 = vmul.f32 %v5228, %v808
        %v5259 = vmul.f32 %v5230, %v808
        %v5260 = vmul.f32 %v5232, %v808
        %v5261 = vmul.f32 %v5234, %v808
        %v5262 = vmul.f32 %v5236, %v808
        %v5263 = vmul.f32 %v5238, %v808
        %v5264 = vmul.f32 %v5240, %v808
        %v5265 = vsub.f32 %v5167, %v5241
        %v5266 = vsub.f32 %v5168, %v5242
        %v5267 = vsub.f32 %v5169, %v5243
        %v5268 = vsub.f32 %v5170, %v5244
        %v5269 = vsub.f32 %v5171, %v5245
        %v5270 = vsub.f32 %v5172, %v5246
        %v5271 = vsub.f32 %v5173, %v5247
        %v5272 = vsub.f32 %v5174, %v5248
        %v5273 = vsub.f32 %v5175, %v5249
        %v5274 = vsub.f32 %v5176, %v5250
        %v5275 = vsub.f32 %v5177, %v5251
        %v5276 = vsub.f32 %v5178, %v5252
        %v5277 = vsub.f32 %v5179, %v5253
        %v5278 = vsub.f32 %v5180, %v5254
        %v5279 = vsub.f32 %v5181, %v5255
        %v5280 = vsub.f32 %v5182, %v5256
        %v5281 = vsub.f32 %v5183, %v5257
        %v5282 = vsub.f32 %v5184, %v5258
        %v5283 = vsub.f32 %v5185, %v5259
        %v5284 = vsub.f32 %v5186, %v5260
        %v5285 = vsub.f32 %v5187, %v5261
        %v5286 = vsub.f32 %v5188, %v5262
        %v5287 = vsub.f32 %v5189, %v5263
        %v5288 = vsub.f32 %v5190, %v5264
        %v5289 = vmul.f32 %v5265, %v5265
        %v5290 = vmul.f32 %v5266, %v5266
        %v5291 = vmul.f32 %v5267, %v5267
        %v5292 = vmul.f32 %v5268, %v5268
        %v5293 = vmul.f32 %v5269, %v5269
        %v5294 = vmul.f32 %v5270, %v5270
        %v5295 = vmul.f32 %v5271, %v5271
        %v5296 = vmul.f32 %v5272, %v5272
        %v5297 = vmul.f32 %v5273, %v5273
        %v5298 = vmul.f32 %v5274, %v5274
        %v5299 = vmul.f32 %v5275, %v5275
        %v5300 = vmul.f32 %v5276, %v5276
        %v5301 = vmul.f32 %v5277, %v5277
        %v5302 = vmul.f32 %v5278, %v5278
        %v5303 = vmul.f32 %v5279, %v5279
        %v5304 = vmul.f32 %v5280, %v5280
        %v5305 = vmul.f32 %v5281, %v5281
        %v5306 = vmul.f32 %v5282, %v5282
        %v5307 = vmul.f32 %v5283, %v5283
        %v5308 = vmul.f32 %v5284, %v5284
        %v5309 = vmul.f32 %v5285, %v5285
        %v5310 = vmul.f32 %v5286, %v5286
        %v5311 = vmul.f32 %v5287, %v5287
        %v5312 = vmul.f32 %v5288, %v5288
        %5313 = vadd.xlane.f32.xlu0 %v5289
        %v5314 = vpop.xlane.xlu0 %5313
        %5315 = vadd.xlane.f32.xlu0 %v5290
        %v5316 = vpop.xlane.xlu0 %5315
        %5317 = vadd.xlane.f32.xlu0 %v5291
        %v5318 = vpop.xlane.xlu0 %5317
        %5319 = vadd.xlane.f32.xlu0 %v5292
        %v5320 = vpop.xlane.xlu0 %5319
        %5321 = vadd.xlane.f32.xlu0 %v5293
        %v5322 = vpop.xlane.xlu0 %5321
        %5323 = vadd.xlane.f32.xlu0 %v5294
        %v5324 = vpop.xlane.xlu0 %5323
        %5325 = vadd.xlane.f32.xlu0 %v5295
        %v5326 = vpop.xlane.xlu0 %5325
        %5327 = vadd.xlane.f32.xlu0 %v5296
        %v5328 = vpop.xlane.xlu0 %5327
        %5329 = vadd.xlane.f32.xlu0 %v5297
        %v5330 = vpop.xlane.xlu0 %5329
        %5331 = vadd.xlane.f32.xlu0 %v5298
        %v5332 = vpop.xlane.xlu0 %5331
        %5333 = vadd.xlane.f32.xlu0 %v5299
        %v5334 = vpop.xlane.xlu0 %5333
        %5335 = vadd.xlane.f32.xlu0 %v5300
        %v5336 = vpop.xlane.xlu0 %5335
        %5337 = vadd.xlane.f32.xlu0 %v5301
        %v5338 = vpop.xlane.xlu0 %5337
        %5339 = vadd.xlane.f32.xlu0 %v5302
        %v5340 = vpop.xlane.xlu0 %5339
        %5341 = vadd.xlane.f32.xlu0 %v5303
        %v5342 = vpop.xlane.xlu0 %5341
        %5343 = vadd.xlane.f32.xlu0 %v5304
        %v5344 = vpop.xlane.xlu0 %5343
        %5345 = vadd.xlane.f32.xlu0 %v5305
        %v5346 = vpop.xlane.xlu0 %5345
        %5347 = vadd.xlane.f32.xlu0 %v5306
        %v5348 = vpop.xlane.xlu0 %5347
        %5349 = vadd.xlane.f32.xlu0 %v5307
        %v5350 = vpop.xlane.xlu0 %5349
        %5351 = vadd.xlane.f32.xlu0 %v5308
        %v5352 = vpop.xlane.xlu0 %5351
        %5353 = vadd.xlane.f32.xlu0 %v5309
        %v5354 = vpop.xlane.xlu0 %5353
        %5355 = vadd.xlane.f32.xlu0 %v5310
        %v5356 = vpop.xlane.xlu0 %5355
        %5357 = vadd.xlane.f32.xlu0 %v5311
        %v5358 = vpop.xlane.xlu0 %5357
        %5359 = vadd.xlane.f32.xlu0 %v5312
        %v5360 = vpop.xlane.xlu0 %5359
        %v5361 = vmul.f32 %v5314, %v808
        %v5362 = vmul.f32 %v5316, %v808
        %v5363 = vmul.f32 %v5318, %v808
        %v5364 = vmul.f32 %v5320, %v808
        %v5365 = vmul.f32 %v5322, %v808
        %v5366 = vmul.f32 %v5324, %v808
        %v5367 = vmul.f32 %v5326, %v808
        %v5368 = vmul.f32 %v5328, %v808
        %v5369 = vmul.f32 %v5330, %v808
        %v5370 = vmul.f32 %v5332, %v808
        %v5371 = vmul.f32 %v5334, %v808
        %v5372 = vmul.f32 %v5336, %v808
        %v5373 = vmul.f32 %v5338, %v808
        %v5374 = vmul.f32 %v5340, %v808
        %v5375 = vmul.f32 %v5342, %v808
        %v5376 = vmul.f32 %v5344, %v808
        %v5377 = vmul.f32 %v5346, %v808
        %v5378 = vmul.f32 %v5348, %v808
        %v5379 = vmul.f32 %v5350, %v808
        %v5380 = vmul.f32 %v5352, %v808
        %v5381 = vmul.f32 %v5354, %v808
        %v5382 = vmul.f32 %v5356, %v808
        %v5383 = vmul.f32 %v5358, %v808
        %v5384 = vmul.f32 %v5360, %v808
        %v5385 = vadd.f32 %v5361, 1e-05
        %v5386 = vadd.f32 %v5362, 1e-05
        %v5387 = vadd.f32 %v5363, 1e-05
        %v5388 = vadd.f32 %v5364, 1e-05
        %v5389 = vadd.f32 %v5365, 1e-05
        %v5390 = vadd.f32 %v5366, 1e-05
        %v5391 = vadd.f32 %v5367, 1e-05
        %v5392 = vadd.f32 %v5368, 1e-05
        %v5393 = vadd.f32 %v5369, 1e-05
        %v5394 = vadd.f32 %v5370, 1e-05
        %v5395 = vadd.f32 %v5371, 1e-05
        %v5396 = vadd.f32 %v5372, 1e-05
        %v5397 = vadd.f32 %v5373, 1e-05
        %v5398 = vadd.f32 %v5374, 1e-05
        %v5399 = vadd.f32 %v5375, 1e-05
        %v5400 = vadd.f32 %v5376, 1e-05
        %v5401 = vadd.f32 %v5377, 1e-05
        %v5402 = vadd.f32 %v5378, 1e-05
        %v5403 = vadd.f32 %v5379, 1e-05
        %v5404 = vadd.f32 %v5380, 1e-05
        %v5405 = vadd.f32 %v5381, 1e-05
        %v5406 = vadd.f32 %v5382, 1e-05
        %v5407 = vadd.f32 %v5383, 1e-05
        %v5408 = vadd.f32 %v5384, 1e-05
        %v5409 = vrsqrt.pop %v5385
        %v5410 = vrsqrt.pop %v5386
        %v5411 = vrsqrt.pop %v5387
        %v5412 = vrsqrt.pop %v5388
        %v5413 = vrsqrt.pop %v5389
        %v5414 = vrsqrt.pop %v5390
        %v5415 = vrsqrt.pop %v5391
        %v5416 = vrsqrt.pop %v5392
        %v5417 = vrsqrt.pop %v5393
        %v5418 = vrsqrt.pop %v5394
        %v5419 = vrsqrt.pop %v5395
        %v5420 = vrsqrt.pop %v5396
        %v5421 = vrsqrt.pop %v5397
        %v5422 = vrsqrt.pop %v5398
        %v5423 = vrsqrt.pop %v5399
        %v5424 = vrsqrt.pop %v5400
        %v5425 = vrsqrt.pop %v5401
        %v5426 = vrsqrt.pop %v5402
        %v5427 = vrsqrt.pop %v5403
        %v5428 = vrsqrt.pop %v5404
        %v5429 = vrsqrt.pop %v5405
        %v5430 = vrsqrt.pop %v5406
        %v5431 = vrsqrt.pop %v5407
        %v5432 = vrsqrt.pop %v5408
        %v5433 = vmul.f32 %v5265, %v5409
        %v5434 = vmul.f32 %v5266, %v5410
        %v5435 = vmul.f32 %v5267, %v5411
        %v5436 = vmul.f32 %v5268, %v5412
        %v5437 = vmul.f32 %v5269, %v5413
        %v5438 = vmul.f32 %v5270, %v5414
        %v5439 = vmul.f32 %v5271, %v5415
        %v5440 = vmul.f32 %v5272, %v5416
        %v5441 = vmul.f32 %v5273, %v5417
        %v5442 = vmul.f32 %v5274, %v5418
        %v5443 = vmul.f32 %v5275, %v5419
        %v5444 = vmul.f32 %v5276, %v5420
        %v5445 = vmul.f32 %v5277, %v5421
        %v5446 = vmul.f32 %v5278, %v5422
        %v5447 = vmul.f32 %v5279, %v5423
        %v5448 = vmul.f32 %v5280, %v5424
        %v5449 = vmul.f32 %v5281, %v5425
        %v5450 = vmul.f32 %v5282, %v5426
        %v5451 = vmul.f32 %v5283, %v5427
        %v5452 = vmul.f32 %v5284, %v5428
        %v5453 = vmul.f32 %v5285, %v5429
        %v5454 = vmul.f32 %v5286, %v5430
        %v5455 = vmul.f32 %v5287, %v5431
        %v5456 = vmul.f32 %v5288, %v5432
        %v5458 = vlaneseq
        %v5459 = vshrl.u32 %v5458, 7
        %v5460 = vsub.s32 0, %v5459
        %v5461 = vrot.slane %v5191, %v5460
        %v5463 = vmul.f32 %v5433, %v5461
        %v5464 = vmul.f32 %v5434, %v5461
        %v5465 = vmul.f32 %v5435, %v5461
        %v5466 = vmul.f32 %v5436, %v5461
        %v5467 = vmul.f32 %v5437, %v5461
        %v5468 = vmul.f32 %v5438, %v5461
        %v5469 = vmul.f32 %v5439, %v5461
        %v5470 = vmul.f32 %v5440, %v5461
        %v5471 = vmul.f32 %v5441, %v5461
        %v5472 = vmul.f32 %v5442, %v5461
        %v5473 = vmul.f32 %v5443, %v5461
        %v5474 = vmul.f32 %v5444, %v5461
        %v5475 = vmul.f32 %v5445, %v5461
        %v5476 = vmul.f32 %v5446, %v5461
        %v5477 = vmul.f32 %v5447, %v5461
        %v5478 = vmul.f32 %v5448, %v5461
        %v5479 = vmul.f32 %v5449, %v5461
        %v5480 = vmul.f32 %v5450, %v5461
        %v5481 = vmul.f32 %v5451, %v5461
        %v5482 = vmul.f32 %v5452, %v5461
        %v5483 = vmul.f32 %v5453, %v5461
        %v5484 = vmul.f32 %v5454, %v5461
        %v5485 = vmul.f32 %v5455, %v5461
        %v5486 = vmul.f32 %v5456, %v5461
        %v5488 = vlaneseq
        %v5489 = vshrl.u32 %v5488, 7
        %v5490 = vsub.s32 0, %v5489
        %v5491 = vrot.slane %v5192, %v5490
        %v5493 = vadd.f32 %v5463, %v5491
        %v5494 = vadd.f32 %v5464, %v5491
        %v5495 = vadd.f32 %v5465, %v5491
        %v5496 = vadd.f32 %v5466, %v5491
        %v5497 = vadd.f32 %v5467, %v5491
        %v5498 = vadd.f32 %v5468, %v5491
        %v5499 = vadd.f32 %v5469, %v5491
        %v5500 = vadd.f32 %v5470, %v5491
        %v5501 = vadd.f32 %v5471, %v5491
        %v5502 = vadd.f32 %v5472, %v5491
        %v5503 = vadd.f32 %v5473, %v5491
        %v5504 = vadd.f32 %v5474, %v5491
        %v5505 = vadd.f32 %v5475, %v5491
        %v5506 = vadd.f32 %v5476, %v5491
        %v5507 = vadd.f32 %v5477, %v5491
        %v5508 = vadd.f32 %v5478, %v5491
        %v5509 = vadd.f32 %v5479, %v5491
        %v5510 = vadd.f32 %v5480, %v5491
        %v5511 = vadd.f32 %v5481, %v5491
        %v5512 = vadd.f32 %v5482, %v5491
        %v5513 = vadd.f32 %v5483, %v5491
        %v5514 = vadd.f32 %v5484, %v5491
        %v5515 = vadd.f32 %v5485, %v5491
        %v5516 = vadd.f32 %v5486, %v5491
        %v5517 = vpack.c.bf16 %v5494, %v5493
        %v5518 = vpack.c.bf16 %v5496, %v5495
        %v5519 = vpack.c.bf16 %v5498, %v5497
        %v5520 = vpack.c.bf16 %v5500, %v5499
        %v5521 = vpack.c.bf16 %v5502, %v5501
        %v5522 = vpack.c.bf16 %v5504, %v5503
        %v5523 = vpack.c.bf16 %v5506, %v5505
        %v5524 = vpack.c.bf16 %v5508, %v5507
        %v5525 = vpack.c.bf16 %v5510, %v5509
        %v5526 = vpack.c.bf16 %v5512, %v5511
        %v5527 = vpack.c.bf16 %v5514, %v5513
        %v5528 = vpack.c.bf16 %v5516, %v5515
        %v5529 = vld [vmem:[%s669] sm:$0xff]
        %v5530 = vld [vmem:[%s669 + $0x8] sm:$0xff]
        %v5531 = vld [vmem:[%s669 + $0x10] sm:$0xff]
        %v5532 = vld [vmem:[%s669 + $0x18] sm:$0xff]
        %v5533 = vld [vmem:[%s669 + $0x20] sm:$0xff]
        %v5534 = vld [vmem:[%s669 + $0x28] sm:$0xff]
        %v5535 = vld [vmem:[%s669 + $0x30] sm:$0xff]
        %v5536 = vld [vmem:[%s669 + $0x38] sm:$0xff]
        %v5537 = vld [vmem:[%s669 + $0x40] sm:$0xff]
        %v5538 = vld [vmem:[%s669 + $0x48] sm:$0xff]
        %v5539 = vld [vmem:[%s669 + $0x50] sm:$0xff]
        %v5540 = vld [vmem:[%s669 + $0x58] sm:$0xff]
        %v5541 = vld [vmem:[%s669 + $0x60] sm:$0xff]
        %v5542 = vld [vmem:[%s669 + $0x68] sm:$0xff]
        %v5543 = vld [vmem:[%s669 + $0x70] sm:$0xff]
        %v5544 = vld [vmem:[%s669 + $0x78] sm:$0xff]
        %v5545 = vld [vmem:[%s669 + $0x80] sm:$0xff]
        %v5546 = vld [vmem:[%s669 + $0x88] sm:$0xff]
        %v5547 = vld [vmem:[%s669 + $0x90] sm:$0xff]
        %v5548 = vld [vmem:[%s669 + $0x98] sm:$0xff]
        %v5549 = vld [vmem:[%s669 + $0xa0] sm:$0xff]
        %v5550 = vld [vmem:[%s669 + $0xa8] sm:$0xff]
        %v5551 = vld [vmem:[%s669 + $0xb0] sm:$0xff]
        %v5552 = vld [vmem:[%s669 + $0xb8] sm:$0xff]
        %v5553 = vld [vmem:[%s669 + $0xc0] sm:$0xff]
        %v5554 = vld [vmem:[%s669 + $0xc8] sm:$0xff]
        %v5555 = vld [vmem:[%s669 + $0xd0] sm:$0xff]
        %v5556 = vld [vmem:[%s669 + $0xd8] sm:$0xff]
        %v5557 = vld [vmem:[%s669 + $0xe0] sm:$0xff]
        %v5558 = vld [vmem:[%s669 + $0xe8] sm:$0xff]
        %v5559 = vld [vmem:[%s669 + $0xf0] sm:$0xff]
        %v5560 = vld [vmem:[%s669 + $0xf8] sm:$0xff]
        %v5561 = vld [vmem:[%s550] sm:$0xf]
        %v5563 = vlaneseq
        %v5564 = vshrl.u32 %v5563, 7
        %v5565 = vsub.s32 0, %v5564
        %v5566 = vrot.slane %v5561, %v5565
        %v5567 = vlaneseq
        %v5568 = vshrl.u32 %v5567, 7
        %v5569 = vsub.s32 1, %v5568
        %v5570 = vrot.slane %v5561, %v5569
        %v5571 = vlaneseq
        %v5572 = vshrl.u32 %v5571, 7
        %v5573 = vsub.s32 2, %v5572
        %v5574 = vrot.slane %v5561, %v5573
        %v5575 = vlaneseq
        %v5576 = vshrl.u32 %v5575, 7
        %v5577 = vsub.s32 3, %v5576
        %v5578 = vrot.slane %v5561, %v5577
        %v5615 = vunpack.c.l.b16 %v5529
        %v5616 = vunpack.c.h.b16 %v5529
        %v5617 = vunpack.c.l.b16 %v5530
        %v5618 = vunpack.c.h.b16 %v5530
        %v5619 = vunpack.c.l.b16 %v5531
        %v5620 = vunpack.c.h.b16 %v5531
        %v5621 = vunpack.c.l.b16 %v5532
        %v5622 = vunpack.c.h.b16 %v5532
        %v5623 = vunpack.c.l.b16 %v5533
        %v5624 = vunpack.c.h.b16 %v5533
        %v5625 = vunpack.c.l.b16 %v5534
        %v5626 = vunpack.c.h.b16 %v5534
        %v5627 = vunpack.c.l.b16 %v5535
        %v5628 = vunpack.c.h.b16 %v5535
        %v5629 = vunpack.c.l.b16 %v5536
        %v5630 = vunpack.c.h.b16 %v5536
        %v5631 = vunpack.c.l.b16 %v5537
        %v5632 = vunpack.c.h.b16 %v5537
        %v5633 = vunpack.c.l.b16 %v5538
        %v5634 = vunpack.c.h.b16 %v5538
        %v5635 = vunpack.c.l.b16 %v5539
        %v5636 = vunpack.c.h.b16 %v5539
        %v5637 = vunpack.c.l.b16 %v5540
        %v5638 = vunpack.c.h.b16 %v5540
        %v5639 = vunpack.c.l.b16 %v5541
        %v5640 = vunpack.c.h.b16 %v5541
        %v5641 = vunpack.c.l.b16 %v5542
        %v5642 = vunpack.c.h.b16 %v5542
        %v5643 = vunpack.c.l.b16 %v5543
        %v5644 = vunpack.c.h.b16 %v5543
        %v5645 = vunpack.c.l.b16 %v5544
        %v5646 = vunpack.c.h.b16 %v5544
        %v5647 = vunpack.c.l.b16 %v5545
        %v5648 = vunpack.c.h.b16 %v5545
        %v5649 = vunpack.c.l.b16 %v5546
        %v5650 = vunpack.c.h.b16 %v5546
        %v5651 = vunpack.c.l.b16 %v5547
        %v5652 = vunpack.c.h.b16 %v5547
        %v5653 = vunpack.c.l.b16 %v5548
        %v5654 = vunpack.c.h.b16 %v5548
        %v5655 = vunpack.c.l.b16 %v5549
        %v5656 = vunpack.c.h.b16 %v5549
        %v5657 = vunpack.c.l.b16 %v5550
        %v5658 = vunpack.c.h.b16 %v5550
        %v5659 = vunpack.c.l.b16 %v5551
        %v5660 = vunpack.c.h.b16 %v5551
        %v5661 = vunpack.c.l.b16 %v5552
        %v5662 = vunpack.c.h.b16 %v5552
        %v5663 = vunpack.c.l.b16 %v5553
        %v5664 = vunpack.c.h.b16 %v5553
        %v5665 = vunpack.c.l.b16 %v5554
        %v5666 = vunpack.c.h.b16 %v5554
        %v5667 = vunpack.c.l.b16 %v5555
        %v5668 = vunpack.c.h.b16 %v5555
        %v5669 = vunpack.c.l.b16 %v5556
        %v5670 = vunpack.c.h.b16 %v5556
        %v5671 = vunpack.c.l.b16 %v5557
        %v5672 = vunpack.c.h.b16 %v5557
        %v5673 = vunpack.c.l.b16 %v5558
        %v5674 = vunpack.c.h.b16 %v5558
        %v5675 = vunpack.c.l.b16 %v5559
        %v5676 = vunpack.c.h.b16 %v5559
        %v5677 = vunpack.c.l.b16 %v5560
        %v5678 = vunpack.c.h.b16 %v5560
        %v5679 = vpack.c.b16 %v5619, %v5615
        %v5680 = vpack.c.b16 %v5620, %v5616
        %v5681 = vpack.c.b16 %v5621, %v5617
        %v5682 = vpack.c.b16 %v5622, %v5618
        %v5683 = vpack.c.b16 %v5627, %v5623
        %v5684 = vpack.c.b16 %v5628, %v5624
        %v5685 = vpack.c.b16 %v5629, %v5625
        %v5686 = vpack.c.b16 %v5630, %v5626
        %v5687 = vpack.c.b16 %v5635, %v5631
        %v5688 = vpack.c.b16 %v5636, %v5632
        %v5689 = vpack.c.b16 %v5637, %v5633
        %v5690 = vpack.c.b16 %v5638, %v5634
        %v5691 = vpack.c.b16 %v5643, %v5639
        %v5692 = vpack.c.b16 %v5644, %v5640
        %v5693 = vpack.c.b16 %v5645, %v5641
        %v5694 = vpack.c.b16 %v5646, %v5642
        %v5695 = vpack.c.b16 %v5651, %v5647
        %v5696 = vpack.c.b16 %v5652, %v5648
        %v5697 = vpack.c.b16 %v5653, %v5649
        %v5698 = vpack.c.b16 %v5654, %v5650
        %v5699 = vpack.c.b16 %v5659, %v5655
        %v5700 = vpack.c.b16 %v5660, %v5656
        %v5701 = vpack.c.b16 %v5661, %v5657
        %v5702 = vpack.c.b16 %v5662, %v5658
        %v5703 = vpack.c.b16 %v5667, %v5663
        %v5704 = vpack.c.b16 %v5668, %v5664
        %v5705 = vpack.c.b16 %v5669, %v5665
        %v5706 = vpack.c.b16 %v5670, %v5666
        %v5707 = vpack.c.b16 %v5675, %v5671
        %v5708 = vpack.c.b16 %v5676, %v5672
        %v5709 = vpack.c.b16 %v5677, %v5673
        %v5710 = vpack.c.b16 %v5678, %v5674
        %5743 = vmatprep.subr.bf16.mxu0 %v5708
        %5744 = vmatpush1.bf16.msra.mxu0 %v5707
        %5745 = vmatprep.subr.bf16.mxu0 %v5704
        %5746 = vmatpush1.bf16.msra.mxu0 %v5703
        %5747 = vmatprep.subr.bf16.mxu0 %v5700
        %5748 = vmatpush1.bf16.msra.mxu0 %v5699
        %5749 = vmatprep.subr.bf16.mxu0 %v5696
        %5750 = vmatpush1.bf16.msra.mxu0 %v5695
        %5751 = vmatprep.subr.bf16.mxu0 %v5692
        %5752 = vmatpush1.bf16.msra.mxu0 %v5691
        %5753 = vmatprep.subr.bf16.mxu0 %v5688
        %5754 = vmatpush1.bf16.msra.mxu0 %v5687
        %5755 = vmatprep.subr.bf16.mxu0 %v5684
        %5756 = vmatpush1.bf16.msra.mxu0 %v5683
        %5757 = vmatprep.subr.bf16.mxu0 %v5680
        %5758 = vmatpush1.bf16.msra.mxu0 %v5679
        %5759 = vmatprep.subr.bf16.mxu0 0
        %5760 = vmatpush2.bf16.msra.mxu0 0
        %5761 = vmatprep.subr.bf16.mxu0 0
        %5762 = vmatpush2.bf16.msra.mxu0 0
        %5763 = vmatprep.subr.bf16.mxu0 0
        %5764 = vmatpush2.bf16.msra.mxu0 0
        %5765 = vmatprep.subr.bf16.mxu0 0
        %5766 = vmatpush2.bf16.msra.mxu0 0
        %5767 = vmatprep.subr.bf16.mxu0 0
        %5768 = vmatpush2.bf16.msra.mxu0 0
        %5769 = vmatprep.subr.bf16.mxu0 0
        %5770 = vmatpush2.bf16.msra.mxu0 0
        %5771 = vmatprep.subr.bf16.mxu0 0
        %5772 = vmatpush2.bf16.msra.mxu0 0
        %5773 = vmatprep.subr.bf16.mxu0 0
        %5774 = vmatpush2.bf16.msra.mxu0 0
        %5775 = vmatprep.mubr.bf16.mxu0 0
        %5776 = vmatmul.mubr.bf16.gmra.mxu0 %v5517
        %v5777 = vpop.f32.mrf.mxu0
        %v5778 = vadd.f32 %v5566, %v5777
        %v5779 = vpop.f32.mrf.mxu0
        %v5780 = vadd.f32 %v5570, %v5779
        %v5781 = vpop.f32.mrf.mxu0
        %v5782 = vadd.f32 %v5566, %v5781
        %v5783 = vpop.f32.mrf.mxu0
        %v5784 = vadd.f32 %v5570, %v5783
        %5785 = vmatprep.mubr.bf16.mxu0 0
        %5786 = vmatmul.mubr.bf16.gmra.mxu0 %v5518
        %v5787 = vpop.f32.mrf.mxu0
        %v5788 = vadd.f32 %v5566, %v5787
        %v5789 = vpop.f32.mrf.mxu0
        %v5790 = vadd.f32 %v5570, %v5789
        %v5791 = vpop.f32.mrf.mxu0
        %v5792 = vadd.f32 %v5566, %v5791
        %v5793 = vpop.f32.mrf.mxu0
        %v5794 = vadd.f32 %v5570, %v5793
        %5795 = vmatprep.mubr.bf16.mxu0 0
        %5796 = vmatmul.mubr.bf16.gmra.mxu0 %v5519
        %v5797 = vpop.f32.mrf.mxu0
        %v5798 = vadd.f32 %v5566, %v5797
        %v5799 = vpop.f32.mrf.mxu0
        %v5800 = vadd.f32 %v5570, %v5799
        %v5801 = vpop.f32.mrf.mxu0
        %v5802 = vadd.f32 %v5566, %v5801
        %v5803 = vpop.f32.mrf.mxu0
        %v5804 = vadd.f32 %v5570, %v5803
        %5805 = vmatprep.mubr.bf16.mxu0 0
        %5806 = vmatmul.mubr.bf16.gmra.mxu0 %v5520
        %v5807 = vpop.f32.mrf.mxu0
        %v5808 = vadd.f32 %v5566, %v5807
        %v5809 = vpop.f32.mrf.mxu0
        %v5810 = vadd.f32 %v5570, %v5809
        %v5811 = vpop.f32.mrf.mxu0
        %v5812 = vadd.f32 %v5566, %v5811
        %v5813 = vpop.f32.mrf.mxu0
        %v5814 = vadd.f32 %v5570, %v5813
        %5815 = vmatprep.mubr.bf16.mxu0 0
        %5816 = vmatmul.mubr.bf16.gmra.mxu0 %v5521
        %v5817 = vpop.f32.mrf.mxu0
        %v5818 = vadd.f32 %v5566, %v5817
        %v5819 = vpop.f32.mrf.mxu0
        %v5820 = vadd.f32 %v5570, %v5819
        %v5821 = vpop.f32.mrf.mxu0
        %v5822 = vadd.f32 %v5566, %v5821
        %v5823 = vpop.f32.mrf.mxu0
        %v5824 = vadd.f32 %v5570, %v5823
        %5825 = vmatprep.mubr.bf16.mxu0 0
        %5826 = vmatmul.mubr.bf16.gmra.mxu0 %v5522
        %v5827 = vpop.f32.mrf.mxu0
        %v5828 = vadd.f32 %v5566, %v5827
        %v5829 = vpop.f32.mrf.mxu0
        %v5830 = vadd.f32 %v5570, %v5829
        %v5831 = vpop.f32.mrf.mxu0
        %v5832 = vadd.f32 %v5566, %v5831
        %v5833 = vpop.f32.mrf.mxu0
        %v5834 = vadd.f32 %v5570, %v5833
        %5835 = vmatprep.mubr.bf16.mxu0 0
        %5836 = vmatmul.mubr.bf16.gmra.mxu0 %v5523
        %v5837 = vpop.f32.mrf.mxu0
        %v5838 = vadd.f32 %v5566, %v5837
        %v5839 = vpop.f32.mrf.mxu0
        %v5840 = vadd.f32 %v5570, %v5839
        %v5841 = vpop.f32.mrf.mxu0
        %v5842 = vadd.f32 %v5566, %v5841
        %v5843 = vpop.f32.mrf.mxu0
        %v5844 = vadd.f32 %v5570, %v5843
        %5845 = vmatprep.mubr.bf16.mxu0 0
        %5846 = vmatmul.mubr.bf16.gmra.mxu0 %v5524
        %v5847 = vpop.f32.mrf.mxu0
        %v5848 = vadd.f32 %v5566, %v5847
        %v5849 = vpop.f32.mrf.mxu0
        %v5850 = vadd.f32 %v5570, %v5849
        %v5851 = vpop.f32.mrf.mxu0
        %v5852 = vadd.f32 %v5566, %v5851
        %v5853 = vpop.f32.mrf.mxu0
        %v5854 = vadd.f32 %v5570, %v5853
        %5855 = vmatprep.mubr.bf16.mxu0 0
        %5856 = vmatmul.mubr.bf16.gmra.mxu0 %v5525
        %v5857 = vpop.f32.mrf.mxu0
        %v5858 = vadd.f32 %v5566, %v5857
        %v5859 = vpop.f32.mrf.mxu0
        %v5860 = vadd.f32 %v5570, %v5859
        %v5861 = vpop.f32.mrf.mxu0
        %v5862 = vadd.f32 %v5566, %v5861
        %v5863 = vpop.f32.mrf.mxu0
        %v5864 = vadd.f32 %v5570, %v5863
        %5865 = vmatprep.mubr.bf16.mxu0 0
        %5866 = vmatmul.mubr.bf16.gmra.mxu0 %v5526
        %v5867 = vpop.f32.mrf.mxu0
        %v5868 = vadd.f32 %v5566, %v5867
        %v5869 = vpop.f32.mrf.mxu0
        %v5870 = vadd.f32 %v5570, %v5869
        %v5871 = vpop.f32.mrf.mxu0
        %v5872 = vadd.f32 %v5566, %v5871
        %v5873 = vpop.f32.mrf.mxu0
        %v5874 = vadd.f32 %v5570, %v5873
        %5875 = vmatprep.mubr.bf16.mxu0 0
        %5876 = vmatmul.mubr.bf16.gmra.mxu0 %v5527
        %v5877 = vpop.f32.mrf.mxu0
        %v5878 = vadd.f32 %v5566, %v5877
        %v5879 = vpop.f32.mrf.mxu0
        %v5880 = vadd.f32 %v5570, %v5879
        %v5881 = vpop.f32.mrf.mxu0
        %v5882 = vadd.f32 %v5566, %v5881
        %v5883 = vpop.f32.mrf.mxu0
        %v5884 = vadd.f32 %v5570, %v5883
        %5885 = vmatprep.mubr.bf16.mxu0 0
        %5886 = vmatmul.mubr.bf16.gmra.mxu0 %v5528
        %v5887 = vpop.f32.mrf.mxu0
        %v5888 = vadd.f32 %v5566, %v5887
        %v5889 = vpop.f32.mrf.mxu0
        %v5890 = vadd.f32 %v5570, %v5889
        %v5891 = vpop.f32.mrf.mxu0
        %v5892 = vadd.f32 %v5566, %v5891
        %v5893 = vpop.f32.mrf.mxu0
        %v5894 = vadd.f32 %v5570, %v5893
        %5895 = vdwg.mxu0
        %5896 = vmatprep.subr.bf16.mxu0 %v5710
        %5897 = vmatpush1.bf16.msra.mxu0 %v5709
        %5898 = vmatprep.subr.bf16.mxu0 %v5706
        %5899 = vmatpush1.bf16.msra.mxu0 %v5705
        %5900 = vmatprep.subr.bf16.mxu0 %v5702
        %5901 = vmatpush1.bf16.msra.mxu0 %v5701
        %5902 = vmatprep.subr.bf16.mxu0 %v5698
        %5903 = vmatpush1.bf16.msra.mxu0 %v5697
        %5904 = vmatprep.subr.bf16.mxu0 %v5694
        %5905 = vmatpush1.bf16.msra.mxu0 %v5693
        %5906 = vmatprep.subr.bf16.mxu0 %v5690
        %5907 = vmatpush1.bf16.msra.mxu0 %v5689
        %5908 = vmatprep.subr.bf16.mxu0 %v5686
        %5909 = vmatpush1.bf16.msra.mxu0 %v5685
        %5910 = vmatprep.subr.bf16.mxu0 %v5682
        %5911 = vmatpush1.bf16.msra.mxu0 %v5681
        %5912 = vmatprep.subr.bf16.mxu0 0
        %5913 = vmatpush2.bf16.msra.mxu0 0
        %5914 = vmatprep.subr.bf16.mxu0 0
        %5915 = vmatpush2.bf16.msra.mxu0 0
        %5916 = vmatprep.subr.bf16.mxu0 0
        %5917 = vmatpush2.bf16.msra.mxu0 0
        %5918 = vmatprep.subr.bf16.mxu0 0
        %5919 = vmatpush2.bf16.msra.mxu0 0
        %5920 = vmatprep.subr.bf16.mxu0 0
        %5921 = vmatpush2.bf16.msra.mxu0 0
        %5922 = vmatprep.subr.bf16.mxu0 0
        %5923 = vmatpush2.bf16.msra.mxu0 0
        %5924 = vmatprep.subr.bf16.mxu0 0
        %5925 = vmatpush2.bf16.msra.mxu0 0
        %5926 = vmatprep.subr.bf16.mxu0 0
        %5927 = vmatpush2.bf16.msra.mxu0 0
        %5928 = vmatprep.mubr.bf16.mxu0 0
        %5929 = vmatmul.mubr.bf16.gmra.mxu0 %v5517
        %v5930 = vpop.f32.mrf.mxu0
        %v5931 = vadd.f32 %v5574, %v5930
        %v5932 = vpop.f32.mrf.mxu0
        %v5933 = vadd.f32 %v5578, %v5932
        %v5934 = vpop.f32.mrf.mxu0
        %v5935 = vadd.f32 %v5574, %v5934
        %v5936 = vpop.f32.mrf.mxu0
        %v5937 = vadd.f32 %v5578, %v5936
        %5938 = vmatprep.mubr.bf16.mxu0 0
        %5939 = vmatmul.mubr.bf16.gmra.mxu0 %v5518
        %v5940 = vpop.f32.mrf.mxu0
        %v5941 = vadd.f32 %v5574, %v5940
        %v5942 = vpop.f32.mrf.mxu0
        %v5943 = vadd.f32 %v5578, %v5942
        %v5944 = vpop.f32.mrf.mxu0
        %v5945 = vadd.f32 %v5574, %v5944
        %v5946 = vpop.f32.mrf.mxu0
        %v5947 = vadd.f32 %v5578, %v5946
        %5948 = vmatprep.mubr.bf16.mxu0 0
        %5949 = vmatmul.mubr.bf16.gmra.mxu0 %v5519
        %v5950 = vpop.f32.mrf.mxu0
        %v5951 = vadd.f32 %v5574, %v5950
        %v5952 = vpop.f32.mrf.mxu0
        %v5953 = vadd.f32 %v5578, %v5952
        %v5954 = vpop.f32.mrf.mxu0
        %v5955 = vadd.f32 %v5574, %v5954
        %v5956 = vpop.f32.mrf.mxu0
        %v5957 = vadd.f32 %v5578, %v5956
        %5958 = vmatprep.mubr.bf16.mxu0 0
        %5959 = vmatmul.mubr.bf16.gmra.mxu0 %v5520
        %v5960 = vpop.f32.mrf.mxu0
        %v5961 = vadd.f32 %v5574, %v5960
        %v5962 = vpop.f32.mrf.mxu0
        %v5963 = vadd.f32 %v5578, %v5962
        %v5964 = vpop.f32.mrf.mxu0
        %v5965 = vadd.f32 %v5574, %v5964
        %v5966 = vpop.f32.mrf.mxu0
        %v5967 = vadd.f32 %v5578, %v5966
        %5968 = vmatprep.mubr.bf16.mxu0 0
        %5969 = vmatmul.mubr.bf16.gmra.mxu0 %v5521
        %v5970 = vpop.f32.mrf.mxu0
        %v5971 = vadd.f32 %v5574, %v5970
        %v5972 = vpop.f32.mrf.mxu0
        %v5973 = vadd.f32 %v5578, %v5972
        %v5974 = vpop.f32.mrf.mxu0
        %v5975 = vadd.f32 %v5574, %v5974
        %v5976 = vpop.f32.mrf.mxu0
        %v5977 = vadd.f32 %v5578, %v5976
        %5978 = vmatprep.mubr.bf16.mxu0 0
        %5979 = vmatmul.mubr.bf16.gmra.mxu0 %v5522
        %v5980 = vpop.f32.mrf.mxu0
        %v5981 = vadd.f32 %v5574, %v5980
        %v5982 = vpop.f32.mrf.mxu0
        %v5983 = vadd.f32 %v5578, %v5982
        %v5984 = vpop.f32.mrf.mxu0
        %v5985 = vadd.f32 %v5574, %v5984
        %v5986 = vpop.f32.mrf.mxu0
        %v5987 = vadd.f32 %v5578, %v5986
        %5988 = vmatprep.mubr.bf16.mxu0 0
        %5989 = vmatmul.mubr.bf16.gmra.mxu0 %v5523
        %v5990 = vpop.f32.mrf.mxu0
        %v5991 = vadd.f32 %v5574, %v5990
        %v5992 = vpop.f32.mrf.mxu0
        %v5993 = vadd.f32 %v5578, %v5992
        %v5994 = vpop.f32.mrf.mxu0
        %v5995 = vadd.f32 %v5574, %v5994
        %v5996 = vpop.f32.mrf.mxu0
        %v5997 = vadd.f32 %v5578, %v5996
        %5998 = vmatprep.mubr.bf16.mxu0 0
        %5999 = vmatmul.mubr.bf16.gmra.mxu0 %v5524
        %v6000 = vpop.f32.mrf.mxu0
        %v6001 = vadd.f32 %v5574, %v6000
        %v6002 = vpop.f32.mrf.mxu0
        %v6003 = vadd.f32 %v5578, %v6002
        %v6004 = vpop.f32.mrf.mxu0
        %v6005 = vadd.f32 %v5574, %v6004
        %v6006 = vpop.f32.mrf.mxu0
        %v6007 = vadd.f32 %v5578, %v6006
        %6008 = vmatprep.mubr.bf16.mxu0 0
        %6009 = vmatmul.mubr.bf16.gmra.mxu0 %v5525
        %v6010 = vpop.f32.mrf.mxu0
        %v6011 = vadd.f32 %v5574, %v6010
        %v6012 = vpop.f32.mrf.mxu0
        %v6013 = vadd.f32 %v5578, %v6012
        %v6014 = vpop.f32.mrf.mxu0
        %v6015 = vadd.f32 %v5574, %v6014
        %v6016 = vpop.f32.mrf.mxu0
        %v6017 = vadd.f32 %v5578, %v6016
        %6018 = vmatprep.mubr.bf16.mxu0 0
        %6019 = vmatmul.mubr.bf16.gmra.mxu0 %v5526
        %v6020 = vpop.f32.mrf.mxu0
        %v6021 = vadd.f32 %v5574, %v6020
        %v6022 = vpop.f32.mrf.mxu0
        %v6023 = vadd.f32 %v5578, %v6022
        %v6024 = vpop.f32.mrf.mxu0
        %v6025 = vadd.f32 %v5574, %v6024
        %v6026 = vpop.f32.mrf.mxu0
        %v6027 = vadd.f32 %v5578, %v6026
        %6028 = vmatprep.mubr.bf16.mxu0 0
        %6029 = vmatmul.mubr.bf16.gmra.mxu0 %v5527
        %v6030 = vpop.f32.mrf.mxu0
        %v6031 = vadd.f32 %v5574, %v6030
        %v6032 = vpop.f32.mrf.mxu0
        %v6033 = vadd.f32 %v5578, %v6032
        %v6034 = vpop.f32.mrf.mxu0
        %v6035 = vadd.f32 %v5574, %v6034
        %v6036 = vpop.f32.mrf.mxu0
        %v6037 = vadd.f32 %v5578, %v6036
        %6038 = vmatprep.mubr.bf16.mxu0 0
        %6039 = vmatmul.mubr.bf16.gmra.mxu0 %v5528
        %v6040 = vpop.f32.mrf.mxu0
        %v6041 = vadd.f32 %v5574, %v6040
        %v6042 = vpop.f32.mrf.mxu0
        %v6043 = vadd.f32 %v5578, %v6042
        %v6044 = vpop.f32.mrf.mxu0
        %v6045 = vadd.f32 %v5574, %v6044
        %v6046 = vpop.f32.mrf.mxu0
        %v6047 = vadd.f32 %v5578, %v6046
        %6048 = vdwg.mxu0
        %v6049 = vmul.f32 %v5778, %v5778
        %v6050 = vmul.f32 %v5780, %v5780
        %v6051 = vmul.f32 %v5931, %v5931
        %v6052 = vmul.f32 %v5933, %v5933
        %v6053 = vmul.f32 %v5782, %v5782
        %v6054 = vmul.f32 %v5784, %v5784
        %v6055 = vmul.f32 %v5935, %v5935
        %v6056 = vmul.f32 %v5937, %v5937
        %v6057 = vmul.f32 %v5788, %v5788
        %v6058 = vmul.f32 %v5790, %v5790
        %v6059 = vmul.f32 %v5941, %v5941
        %v6060 = vmul.f32 %v5943, %v5943
        %v6061 = vmul.f32 %v5792, %v5792
        %v6062 = vmul.f32 %v5794, %v5794
        %v6063 = vmul.f32 %v5945, %v5945
        %v6064 = vmul.f32 %v5947, %v5947
        %v6065 = vmul.f32 %v5798, %v5798
        %v6066 = vmul.f32 %v5800, %v5800
        %v6067 = vmul.f32 %v5951, %v5951
        %v6068 = vmul.f32 %v5953, %v5953
        %v6069 = vmul.f32 %v5802, %v5802
        %v6070 = vmul.f32 %v5804, %v5804
        %v6071 = vmul.f32 %v5955, %v5955
        %v6072 = vmul.f32 %v5957, %v5957
        %v6073 = vmul.f32 %v5808, %v5808
        %v6074 = vmul.f32 %v5810, %v5810
        %v6075 = vmul.f32 %v5961, %v5961
        %v6076 = vmul.f32 %v5963, %v5963
        %v6077 = vmul.f32 %v5812, %v5812
        %v6078 = vmul.f32 %v5814, %v5814
        %v6079 = vmul.f32 %v5965, %v5965
        %v6080 = vmul.f32 %v5967, %v5967
        %v6081 = vmul.f32 %v5818, %v5818
        %v6082 = vmul.f32 %v5820, %v5820
        %v6083 = vmul.f32 %v5971, %v5971
        %v6084 = vmul.f32 %v5973, %v5973
        %v6085 = vmul.f32 %v5822, %v5822
        %v6086 = vmul.f32 %v5824, %v5824
        %v6087 = vmul.f32 %v5975, %v5975
        %v6088 = vmul.f32 %v5977, %v5977
        %v6089 = vmul.f32 %v5828, %v5828
        %v6090 = vmul.f32 %v5830, %v5830
        %v6091 = vmul.f32 %v5981, %v5981
        %v6092 = vmul.f32 %v5983, %v5983
        %v6093 = vmul.f32 %v5832, %v5832
        %v6094 = vmul.f32 %v5834, %v5834
        %v6095 = vmul.f32 %v5985, %v5985
        %v6096 = vmul.f32 %v5987, %v5987
        %v6097 = vmul.f32 %v5838, %v5838
        %v6098 = vmul.f32 %v5840, %v5840
        %v6099 = vmul.f32 %v5991, %v5991
        %v6100 = vmul.f32 %v5993, %v5993
        %v6101 = vmul.f32 %v5842, %v5842
        %v6102 = vmul.f32 %v5844, %v5844
        %v6103 = vmul.f32 %v5995, %v5995
        %v6104 = vmul.f32 %v5997, %v5997
        %v6105 = vmul.f32 %v5848, %v5848
        %v6106 = vmul.f32 %v5850, %v5850
        %v6107 = vmul.f32 %v6001, %v6001
        %v6108 = vmul.f32 %v6003, %v6003
        %v6109 = vmul.f32 %v5852, %v5852
        %v6110 = vmul.f32 %v5854, %v5854
        %v6111 = vmul.f32 %v6005, %v6005
        %v6112 = vmul.f32 %v6007, %v6007
        %v6113 = vmul.f32 %v5858, %v5858
        %v6114 = vmul.f32 %v5860, %v5860
        %v6115 = vmul.f32 %v6011, %v6011
        %v6116 = vmul.f32 %v6013, %v6013
        %v6117 = vmul.f32 %v5862, %v5862
        %v6118 = vmul.f32 %v5864, %v5864
        %v6119 = vmul.f32 %v6015, %v6015
        %v6120 = vmul.f32 %v6017, %v6017
        %v6121 = vmul.f32 %v5868, %v5868
        %v6122 = vmul.f32 %v5870, %v5870
        %v6123 = vmul.f32 %v6021, %v6021
        %v6124 = vmul.f32 %v6023, %v6023
        %v6125 = vmul.f32 %v5872, %v5872
        %v6126 = vmul.f32 %v5874, %v5874
        %v6127 = vmul.f32 %v6025, %v6025
        %v6128 = vmul.f32 %v6027, %v6027
        %v6129 = vmul.f32 %v5878, %v5878
        %v6130 = vmul.f32 %v5880, %v5880
        %v6131 = vmul.f32 %v6031, %v6031
        %v6132 = vmul.f32 %v6033, %v6033
        %v6133 = vmul.f32 %v5882, %v5882
        %v6134 = vmul.f32 %v5884, %v5884
        %v6135 = vmul.f32 %v6035, %v6035
        %v6136 = vmul.f32 %v6037, %v6037
        %v6137 = vmul.f32 %v5888, %v5888
        %v6138 = vmul.f32 %v5890, %v5890
        %v6139 = vmul.f32 %v6041, %v6041
        %v6140 = vmul.f32 %v6043, %v6043
        %v6141 = vmul.f32 %v5892, %v5892
        %v6142 = vmul.f32 %v5894, %v5894
        %v6143 = vmul.f32 %v6045, %v6045
        %v6144 = vmul.f32 %v6047, %v6047
        %v6145 = vmul.f32 %v5778, %v6049
        %v6146 = vmul.f32 %v5780, %v6050
        %v6147 = vmul.f32 %v5931, %v6051
        %v6148 = vmul.f32 %v5933, %v6052
        %v6149 = vmul.f32 %v5782, %v6053
        %v6150 = vmul.f32 %v5784, %v6054
        %v6151 = vmul.f32 %v5935, %v6055
        %v6152 = vmul.f32 %v5937, %v6056
        %v6153 = vmul.f32 %v5788, %v6057
        %v6154 = vmul.f32 %v5790, %v6058
        %v6155 = vmul.f32 %v5941, %v6059
        %v6156 = vmul.f32 %v5943, %v6060
        %v6157 = vmul.f32 %v5792, %v6061
        %v6158 = vmul.f32 %v5794, %v6062
        %v6159 = vmul.f32 %v5945, %v6063
        %v6160 = vmul.f32 %v5947, %v6064
        %v6161 = vmul.f32 %v5798, %v6065
        %v6162 = vmul.f32 %v5800, %v6066
        %v6163 = vmul.f32 %v5951, %v6067
        %v6164 = vmul.f32 %v5953, %v6068
        %v6165 = vmul.f32 %v5802, %v6069
        %v6166 = vmul.f32 %v5804, %v6070
        %v6167 = vmul.f32 %v5955, %v6071
        %v6168 = vmul.f32 %v5957, %v6072
        %v6169 = vmul.f32 %v5808, %v6073
        %v6170 = vmul.f32 %v5810, %v6074
        %v6171 = vmul.f32 %v5961, %v6075
        %v6172 = vmul.f32 %v5963, %v6076
        %v6173 = vmul.f32 %v5812, %v6077
        %v6174 = vmul.f32 %v5814, %v6078
        %v6175 = vmul.f32 %v5965, %v6079
        %v6176 = vmul.f32 %v5967, %v6080
        %v6177 = vmul.f32 %v5818, %v6081
        %v6178 = vmul.f32 %v5820, %v6082
        %v6179 = vmul.f32 %v5971, %v6083
        %v6180 = vmul.f32 %v5973, %v6084
        %v6181 = vmul.f32 %v5822, %v6085
        %v6182 = vmul.f32 %v5824, %v6086
        %v6183 = vmul.f32 %v5975, %v6087
        %v6184 = vmul.f32 %v5977, %v6088
        %v6185 = vmul.f32 %v5828, %v6089
        %v6186 = vmul.f32 %v5830, %v6090
        %v6187 = vmul.f32 %v5981, %v6091
        %v6188 = vmul.f32 %v5983, %v6092
        %v6189 = vmul.f32 %v5832, %v6093
        %v6190 = vmul.f32 %v5834, %v6094
        %v6191 = vmul.f32 %v5985, %v6095
        %v6192 = vmul.f32 %v5987, %v6096
        %v6193 = vmul.f32 %v5838, %v6097
        %v6194 = vmul.f32 %v5840, %v6098
        %v6195 = vmul.f32 %v5991, %v6099
        %v6196 = vmul.f32 %v5993, %v6100
        %v6197 = vmul.f32 %v5842, %v6101
        %v6198 = vmul.f32 %v5844, %v6102
        %v6199 = vmul.f32 %v5995, %v6103
        %v6200 = vmul.f32 %v5997, %v6104
        %v6201 = vmul.f32 %v5848, %v6105
        %v6202 = vmul.f32 %v5850, %v6106
        %v6203 = vmul.f32 %v6001, %v6107
        %v6204 = vmul.f32 %v6003, %v6108
        %v6205 = vmul.f32 %v5852, %v6109
        %v6206 = vmul.f32 %v5854, %v6110
        %v6207 = vmul.f32 %v6005, %v6111
        %v6208 = vmul.f32 %v6007, %v6112
        %v6209 = vmul.f32 %v5858, %v6113
        %v6210 = vmul.f32 %v5860, %v6114
        %v6211 = vmul.f32 %v6011, %v6115
        %v6212 = vmul.f32 %v6013, %v6116
        %v6213 = vmul.f32 %v5862, %v6117
        %v6214 = vmul.f32 %v5864, %v6118
        %v6215 = vmul.f32 %v6015, %v6119
        %v6216 = vmul.f32 %v6017, %v6120
        %v6217 = vmul.f32 %v5868, %v6121
        %v6218 = vmul.f32 %v5870, %v6122
        %v6219 = vmul.f32 %v6021, %v6123
        %v6220 = vmul.f32 %v6023, %v6124
        %v6221 = vmul.f32 %v5872, %v6125
        %v6222 = vmul.f32 %v5874, %v6126
        %v6223 = vmul.f32 %v6025, %v6127
        %v6224 = vmul.f32 %v6027, %v6128
        %v6225 = vmul.f32 %v5878, %v6129
        %v6226 = vmul.f32 %v5880, %v6130
        %v6227 = vmul.f32 %v6031, %v6131
        %v6228 = vmul.f32 %v6033, %v6132
        %v6229 = vmul.f32 %v5882, %v6133
        %v6230 = vmul.f32 %v5884, %v6134
        %v6231 = vmul.f32 %v6035, %v6135
        %v6232 = vmul.f32 %v6037, %v6136
        %v6233 = vmul.f32 %v5888, %v6137
        %v6234 = vmul.f32 %v5890, %v6138
        %v6235 = vmul.f32 %v6041, %v6139
        %v6236 = vmul.f32 %v6043, %v6140
        %v6237 = vmul.f32 %v5892, %v6141
        %v6238 = vmul.f32 %v5894, %v6142
        %v6239 = vmul.f32 %v6045, %v6143
        %v6240 = vmul.f32 %v6047, %v6144
        %v6241 = vmul.f32 %v6145, 0.044715
        %v6242 = vmul.f32 %v6146, 0.044715
        %v6243 = vmul.f32 %v6147, 0.044715
        %v6244 = vmul.f32 %v6148, 0.044715
        %v6245 = vmul.f32 %v6149, 0.044715
        %v6246 = vmul.f32 %v6150, 0.044715
        %v6247 = vmul.f32 %v6151, 0.044715
        %v6248 = vmul.f32 %v6152, 0.044715
        %v6249 = vmul.f32 %v6153, 0.044715
        %v6250 = vmul.f32 %v6154, 0.044715
        %v6251 = vmul.f32 %v6155, 0.044715
        %v6252 = vmul.f32 %v6156, 0.044715
        %v6253 = vmul.f32 %v6157, 0.044715
        %v6254 = vmul.f32 %v6158, 0.044715
        %v6255 = vmul.f32 %v6159, 0.044715
        %v6256 = vmul.f32 %v6160, 0.044715
        %v6257 = vmul.f32 %v6161, 0.044715
        %v6258 = vmul.f32 %v6162, 0.044715
        %v6259 = vmul.f32 %v6163, 0.044715
        %v6260 = vmul.f32 %v6164, 0.044715
        %v6261 = vmul.f32 %v6165, 0.044715
        %v6262 = vmul.f32 %v6166, 0.044715
        %v6263 = vmul.f32 %v6167, 0.044715
        %v6264 = vmul.f32 %v6168, 0.044715
        %v6265 = vmul.f32 %v6169, 0.044715
        %v6266 = vmul.f32 %v6170, 0.044715
        %v6267 = vmul.f32 %v6171, 0.044715
        %v6268 = vmul.f32 %v6172, 0.044715
        %v6269 = vmul.f32 %v6173, 0.044715
        %v6270 = vmul.f32 %v6174, 0.044715
        %v6271 = vmul.f32 %v6175, 0.044715
        %v6272 = vmul.f32 %v6176, 0.044715
        %v6273 = vmul.f32 %v6177, 0.044715
        %v6274 = vmul.f32 %v6178, 0.044715
        %v6275 = vmul.f32 %v6179, 0.044715
        %v6276 = vmul.f32 %v6180, 0.044715
        %v6277 = vmul.f32 %v6181, 0.044715
        %v6278 = vmul.f32 %v6182, 0.044715
        %v6279 = vmul.f32 %v6183, 0.044715
        %v6280 = vmul.f32 %v6184, 0.044715
        %v6281 = vmul.f32 %v6185, 0.044715
        %v6282 = vmul.f32 %v6186, 0.044715
        %v6283 = vmul.f32 %v6187, 0.044715
        %v6284 = vmul.f32 %v6188, 0.044715
        %v6285 = vmul.f32 %v6189, 0.044715
        %v6286 = vmul.f32 %v6190, 0.044715
        %v6287 = vmul.f32 %v6191, 0.044715
        %v6288 = vmul.f32 %v6192, 0.044715
        %v6289 = vmul.f32 %v6193, 0.044715
        %v6290 = vmul.f32 %v6194, 0.044715
        %v6291 = vmul.f32 %v6195, 0.044715
        %v6292 = vmul.f32 %v6196, 0.044715
        %v6293 = vmul.f32 %v6197, 0.044715
        %v6294 = vmul.f32 %v6198, 0.044715
        %v6295 = vmul.f32 %v6199, 0.044715
        %v6296 = vmul.f32 %v6200, 0.044715
        %v6297 = vmul.f32 %v6201, 0.044715
        %v6298 = vmul.f32 %v6202, 0.044715
        %v6299 = vmul.f32 %v6203, 0.044715
        %v6300 = vmul.f32 %v6204, 0.044715
        %v6301 = vmul.f32 %v6205, 0.044715
        %v6302 = vmul.f32 %v6206, 0.044715
        %v6303 = vmul.f32 %v6207, 0.044715
        %v6304 = vmul.f32 %v6208, 0.044715
        %v6305 = vmul.f32 %v6209, 0.044715
        %v6306 = vmul.f32 %v6210, 0.044715
        %v6307 = vmul.f32 %v6211, 0.044715
        %v6308 = vmul.f32 %v6212, 0.044715
        %v6309 = vmul.f32 %v6213, 0.044715
        %v6310 = vmul.f32 %v6214, 0.044715
        %v6311 = vmul.f32 %v6215, 0.044715
        %v6312 = vmul.f32 %v6216, 0.044715
        %v6313 = vmul.f32 %v6217, 0.044715
        %v6314 = vmul.f32 %v6218, 0.044715
        %v6315 = vmul.f32 %v6219, 0.044715
        %v6316 = vmul.f32 %v6220, 0.044715
        %v6317 = vmul.f32 %v6221, 0.044715
        %v6318 = vmul.f32 %v6222, 0.044715
        %v6319 = vmul.f32 %v6223, 0.044715
        %v6320 = vmul.f32 %v6224, 0.044715
        %v6321 = vmul.f32 %v6225, 0.044715
        %v6322 = vmul.f32 %v6226, 0.044715
        %v6323 = vmul.f32 %v6227, 0.044715
        %v6324 = vmul.f32 %v6228, 0.044715
        %v6325 = vmul.f32 %v6229, 0.044715
        %v6326 = vmul.f32 %v6230, 0.044715
        %v6327 = vmul.f32 %v6231, 0.044715
        %v6328 = vmul.f32 %v6232, 0.044715
        %v6329 = vmul.f32 %v6233, 0.044715
        %v6330 = vmul.f32 %v6234, 0.044715
        %v6331 = vmul.f32 %v6235, 0.044715
        %v6332 = vmul.f32 %v6236, 0.044715
        %v6333 = vmul.f32 %v6237, 0.044715
        %v6334 = vmul.f32 %v6238, 0.044715
        %v6335 = vmul.f32 %v6239, 0.044715
        %v6336 = vmul.f32 %v6240, 0.044715
        %v6337 = vadd.f32 %v5778, %v6241
        %v6338 = vadd.f32 %v5780, %v6242
        %v6339 = vadd.f32 %v5931, %v6243
        %v6340 = vadd.f32 %v5933, %v6244
        %v6341 = vadd.f32 %v5782, %v6245
        %v6342 = vadd.f32 %v5784, %v6246
        %v6343 = vadd.f32 %v5935, %v6247
        %v6344 = vadd.f32 %v5937, %v6248
        %v6345 = vadd.f32 %v5788, %v6249
        %v6346 = vadd.f32 %v5790, %v6250
        %v6347 = vadd.f32 %v5941, %v6251
        %v6348 = vadd.f32 %v5943, %v6252
        %v6349 = vadd.f32 %v5792, %v6253
        %v6350 = vadd.f32 %v5794, %v6254
        %v6351 = vadd.f32 %v5945, %v6255
        %v6352 = vadd.f32 %v5947, %v6256
        %v6353 = vadd.f32 %v5798, %v6257
        %v6354 = vadd.f32 %v5800, %v6258
        %v6355 = vadd.f32 %v5951, %v6259
        %v6356 = vadd.f32 %v5953, %v6260
        %v6357 = vadd.f32 %v5802, %v6261
        %v6358 = vadd.f32 %v5804, %v6262
        %v6359 = vadd.f32 %v5955, %v6263
        %v6360 = vadd.f32 %v5957, %v6264
        %v6361 = vadd.f32 %v5808, %v6265
        %v6362 = vadd.f32 %v5810, %v6266
        %v6363 = vadd.f32 %v5961, %v6267
        %v6364 = vadd.f32 %v5963, %v6268
        %v6365 = vadd.f32 %v5812, %v6269
        %v6366 = vadd.f32 %v5814, %v6270
        %v6367 = vadd.f32 %v5965, %v6271
        %v6368 = vadd.f32 %v5967, %v6272
        %v6369 = vadd.f32 %v5818, %v6273
        %v6370 = vadd.f32 %v5820, %v6274
        %v6371 = vadd.f32 %v5971, %v6275
        %v6372 = vadd.f32 %v5973, %v6276
        %v6373 = vadd.f32 %v5822, %v6277
        %v6374 = vadd.f32 %v5824, %v6278
        %v6375 = vadd.f32 %v5975, %v6279
        %v6376 = vadd.f32 %v5977, %v6280
        %v6377 = vadd.f32 %v5828, %v6281
        %v6378 = vadd.f32 %v5830, %v6282
        %v6379 = vadd.f32 %v5981, %v6283
        %v6380 = vadd.f32 %v5983, %v6284
        %v6381 = vadd.f32 %v5832, %v6285
        %v6382 = vadd.f32 %v5834, %v6286
        %v6383 = vadd.f32 %v5985, %v6287
        %v6384 = vadd.f32 %v5987, %v6288
        %v6385 = vadd.f32 %v5838, %v6289
        %v6386 = vadd.f32 %v5840, %v6290
        %v6387 = vadd.f32 %v5991, %v6291
        %v6388 = vadd.f32 %v5993, %v6292
        %v6389 = vadd.f32 %v5842, %v6293
        %v6390 = vadd.f32 %v5844, %v6294
        %v6391 = vadd.f32 %v5995, %v6295
        %v6392 = vadd.f32 %v5997, %v6296
        %v6393 = vadd.f32 %v5848, %v6297
        %v6394 = vadd.f32 %v5850, %v6298
        %v6395 = vadd.f32 %v6001, %v6299
        %v6396 = vadd.f32 %v6003, %v6300
        %v6397 = vadd.f32 %v5852, %v6301
        %v6398 = vadd.f32 %v5854, %v6302
        %v6399 = vadd.f32 %v6005, %v6303
        %v6400 = vadd.f32 %v6007, %v6304
        %v6401 = vadd.f32 %v5858, %v6305
        %v6402 = vadd.f32 %v5860, %v6306
        %v6403 = vadd.f32 %v6011, %v6307
        %v6404 = vadd.f32 %v6013, %v6308
        %v6405 = vadd.f32 %v5862, %v6309
        %v6406 = vadd.f32 %v5864, %v6310
        %v6407 = vadd.f32 %v6015, %v6311
        %v6408 = vadd.f32 %v6017, %v6312
        %v6409 = vadd.f32 %v5868, %v6313
        %v6410 = vadd.f32 %v5870, %v6314
        %v6411 = vadd.f32 %v6021, %v6315
        %v6412 = vadd.f32 %v6023, %v6316
        %v6413 = vadd.f32 %v5872, %v6317
        %v6414 = vadd.f32 %v5874, %v6318
        %v6415 = vadd.f32 %v6025, %v6319
        %v6416 = vadd.f32 %v6027, %v6320
        %v6417 = vadd.f32 %v5878, %v6321
        %v6418 = vadd.f32 %v5880, %v6322
        %v6419 = vadd.f32 %v6031, %v6323
        %v6420 = vadd.f32 %v6033, %v6324
        %v6421 = vadd.f32 %v5882, %v6325
        %v6422 = vadd.f32 %v5884, %v6326
        %v6423 = vadd.f32 %v6035, %v6327
        %v6424 = vadd.f32 %v6037, %v6328
        %v6425 = vadd.f32 %v5888, %v6329
        %v6426 = vadd.f32 %v5890, %v6330
        %v6427 = vadd.f32 %v6041, %v6331
        %v6428 = vadd.f32 %v6043, %v6332
        %v6429 = vadd.f32 %v5892, %v6333
        %v6430 = vadd.f32 %v5894, %v6334
        %v6431 = vadd.f32 %v6045, %v6335
        %v6432 = vadd.f32 %v6047, %v6336
        %v6433 = vmul.f32 %v6337, 0.7978846
        %v6434 = vmul.f32 %v6338, 0.7978846
        %v6435 = vmul.f32 %v6339, 0.7978846
        %v6436 = vmul.f32 %v6340, 0.7978846
        %v6437 = vmul.f32 %v6341, 0.7978846
        %v6438 = vmul.f32 %v6342, 0.7978846
        %v6439 = vmul.f32 %v6343, 0.7978846
        %v6440 = vmul.f32 %v6344, 0.7978846
        %v6441 = vmul.f32 %v6345, 0.7978846
        %v6442 = vmul.f32 %v6346, 0.7978846
        %v6443 = vmul.f32 %v6347, 0.7978846
        %v6444 = vmul.f32 %v6348, 0.7978846
        %v6445 = vmul.f32 %v6349, 0.7978846
        %v6446 = vmul.f32 %v6350, 0.7978846
        %v6447 = vmul.f32 %v6351, 0.7978846
        %v6448 = vmul.f32 %v6352, 0.7978846
        %v6449 = vmul.f32 %v6353, 0.7978846
        %v6450 = vmul.f32 %v6354, 0.7978846
        %v6451 = vmul.f32 %v6355, 0.7978846
        %v6452 = vmul.f32 %v6356, 0.7978846
        %v6453 = vmul.f32 %v6357, 0.7978846
        %v6454 = vmul.f32 %v6358, 0.7978846
        %v6455 = vmul.f32 %v6359, 0.7978846
        %v6456 = vmul.f32 %v6360, 0.7978846
        %v6457 = vmul.f32 %v6361, 0.7978846
        %v6458 = vmul.f32 %v6362, 0.7978846
        %v6459 = vmul.f32 %v6363, 0.7978846
        %v6460 = vmul.f32 %v6364, 0.7978846
        %v6461 = vmul.f32 %v6365, 0.7978846
        %v6462 = vmul.f32 %v6366, 0.7978846
        %v6463 = vmul.f32 %v6367, 0.7978846
        %v6464 = vmul.f32 %v6368, 0.7978846
        %v6465 = vmul.f32 %v6369, 0.7978846
        %v6466 = vmul.f32 %v6370, 0.7978846
        %v6467 = vmul.f32 %v6371, 0.7978846
        %v6468 = vmul.f32 %v6372, 0.7978846
        %v6469 = vmul.f32 %v6373, 0.7978846
        %v6470 = vmul.f32 %v6374, 0.7978846
        %v6471 = vmul.f32 %v6375, 0.7978846
        %v6472 = vmul.f32 %v6376, 0.7978846
        %v6473 = vmul.f32 %v6377, 0.7978846
        %v6474 = vmul.f32 %v6378, 0.7978846
        %v6475 = vmul.f32 %v6379, 0.7978846
        %v6476 = vmul.f32 %v6380, 0.7978846
        %v6477 = vmul.f32 %v6381, 0.7978846
        %v6478 = vmul.f32 %v6382, 0.7978846
        %v6479 = vmul.f32 %v6383, 0.7978846
        %v6480 = vmul.f32 %v6384, 0.7978846
        %v6481 = vmul.f32 %v6385, 0.7978846
        %v6482 = vmul.f32 %v6386, 0.7978846
        %v6483 = vmul.f32 %v6387, 0.7978846
        %v6484 = vmul.f32 %v6388, 0.7978846
        %v6485 = vmul.f32 %v6389, 0.7978846
        %v6486 = vmul.f32 %v6390, 0.7978846
        %v6487 = vmul.f32 %v6391, 0.7978846
        %v6488 = vmul.f32 %v6392, 0.7978846
        %v6489 = vmul.f32 %v6393, 0.7978846
        %v6490 = vmul.f32 %v6394, 0.7978846
        %v6491 = vmul.f32 %v6395, 0.7978846
        %v6492 = vmul.f32 %v6396, 0.7978846
        %v6493 = vmul.f32 %v6397, 0.7978846
        %v6494 = vmul.f32 %v6398, 0.7978846
        %v6495 = vmul.f32 %v6399, 0.7978846
        %v6496 = vmul.f32 %v6400, 0.7978846
        %v6497 = vmul.f32 %v6401, 0.7978846
        %v6498 = vmul.f32 %v6402, 0.7978846
        %v6499 = vmul.f32 %v6403, 0.7978846
        %v6500 = vmul.f32 %v6404, 0.7978846
        %v6501 = vmul.f32 %v6405, 0.7978846
        %v6502 = vmul.f32 %v6406, 0.7978846
        %v6503 = vmul.f32 %v6407, 0.7978846
        %v6504 = vmul.f32 %v6408, 0.7978846
        %v6505 = vmul.f32 %v6409, 0.7978846
        %v6506 = vmul.f32 %v6410, 0.7978846
        %v6507 = vmul.f32 %v6411, 0.7978846
        %v6508 = vmul.f32 %v6412, 0.7978846
        %v6509 = vmul.f32 %v6413, 0.7978846
        %v6510 = vmul.f32 %v6414, 0.7978846
        %v6511 = vmul.f32 %v6415, 0.7978846
        %v6512 = vmul.f32 %v6416, 0.7978846
        %v6513 = vmul.f32 %v6417, 0.7978846
        %v6514 = vmul.f32 %v6418, 0.7978846
        %v6515 = vmul.f32 %v6419, 0.7978846
        %v6516 = vmul.f32 %v6420, 0.7978846
        %v6517 = vmul.f32 %v6421, 0.7978846
        %v6518 = vmul.f32 %v6422, 0.7978846
        %v6519 = vmul.f32 %v6423, 0.7978846
        %v6520 = vmul.f32 %v6424, 0.7978846
        %v6521 = vmul.f32 %v6425, 0.7978846
        %v6522 = vmul.f32 %v6426, 0.7978846
        %v6523 = vmul.f32 %v6427, 0.7978846
        %v6524 = vmul.f32 %v6428, 0.7978846
        %v6525 = vmul.f32 %v6429, 0.7978846
        %v6526 = vmul.f32 %v6430, 0.7978846
        %v6527 = vmul.f32 %v6431, 0.7978846
        %v6528 = vmul.f32 %v6432, 0.7978846
        %v6529 = vtanh.pop %v6433
        %v6530 = vtanh.pop %v6434
        %v6531 = vtanh.pop %v6435
        %v6532 = vtanh.pop %v6436
        %v6533 = vtanh.pop %v6437
        %v6534 = vtanh.pop %v6438
        %v6535 = vtanh.pop %v6439
        %v6536 = vtanh.pop %v6440
        %v6537 = vtanh.pop %v6441
        %v6538 = vtanh.pop %v6442
        %v6539 = vtanh.pop %v6443
        %v6540 = vtanh.pop %v6444
        %v6541 = vtanh.pop %v6445
        %v6542 = vtanh.pop %v6446
        %v6543 = vtanh.pop %v6447
        %v6544 = vtanh.pop %v6448
        %v6545 = vtanh.pop %v6449
        %v6546 = vtanh.pop %v6450
        %v6547 = vtanh.pop %v6451
        %v6548 = vtanh.pop %v6452
        %v6549 = vtanh.pop %v6453
        %v6550 = vtanh.pop %v6454
        %v6551 = vtanh.pop %v6455
        %v6552 = vtanh.pop %v6456
        %v6553 = vtanh.pop %v6457
        %v6554 = vtanh.pop %v6458
        %v6555 = vtanh.pop %v6459
        %v6556 = vtanh.pop %v6460
        %v6557 = vtanh.pop %v6461
        %v6558 = vtanh.pop %v6462
        %v6559 = vtanh.pop %v6463
        %v6560 = vtanh.pop %v6464
        %v6561 = vtanh.pop %v6465
        %v6562 = vtanh.pop %v6466
        %v6563 = vtanh.pop %v6467
        %v6564 = vtanh.pop %v6468
        %v6565 = vtanh.pop %v6469
        %v6566 = vtanh.pop %v6470
        %v6567 = vtanh.pop %v6471
        %v6568 = vtanh.pop %v6472
        %v6569 = vtanh.pop %v6473
        %v6570 = vtanh.pop %v6474
        %v6571 = vtanh.pop %v6475
        %v6572 = vtanh.pop %v6476
        %v6573 = vtanh.pop %v6477
        %v6574 = vtanh.pop %v6478
        %v6575 = vtanh.pop %v6479
        %v6576 = vtanh.pop %v6480
        %v6577 = vtanh.pop %v6481
        %v6578 = vtanh.pop %v6482
        %v6579 = vtanh.pop %v6483
        %v6580 = vtanh.pop %v6484
        %v6581 = vtanh.pop %v6485
        %v6582 = vtanh.pop %v6486
        %v6583 = vtanh.pop %v6487
        %v6584 = vtanh.pop %v6488
        %v6585 = vtanh.pop %v6489
        %v6586 = vtanh.pop %v6490
        %v6587 = vtanh.pop %v6491
        %v6588 = vtanh.pop %v6492
        %v6589 = vtanh.pop %v6493
        %v6590 = vtanh.pop %v6494
        %v6591 = vtanh.pop %v6495
        %v6592 = vtanh.pop %v6496
        %v6593 = vtanh.pop %v6497
        %v6594 = vtanh.pop %v6498
        %v6595 = vtanh.pop %v6499
        %v6596 = vtanh.pop %v6500
        %v6597 = vtanh.pop %v6501
        %v6598 = vtanh.pop %v6502
        %v6599 = vtanh.pop %v6503
        %v6600 = vtanh.pop %v6504
        %v6601 = vtanh.pop %v6505
        %v6602 = vtanh.pop %v6506
        %v6603 = vtanh.pop %v6507
        %v6604 = vtanh.pop %v6508
        %v6605 = vtanh.pop %v6509
        %v6606 = vtanh.pop %v6510
        %v6607 = vtanh.pop %v6511
        %v6608 = vtanh.pop %v6512
        %v6609 = vtanh.pop %v6513
        %v6610 = vtanh.pop %v6514
        %v6611 = vtanh.pop %v6515
        %v6612 = vtanh.pop %v6516
        %v6613 = vtanh.pop %v6517
        %v6614 = vtanh.pop %v6518
        %v6615 = vtanh.pop %v6519
        %v6616 = vtanh.pop %v6520
        %v6617 = vtanh.pop %v6521
        %v6618 = vtanh.pop %v6522
        %v6619 = vtanh.pop %v6523
        %v6620 = vtanh.pop %v6524
        %v6621 = vtanh.pop %v6525
        %v6622 = vtanh.pop %v6526
        %v6623 = vtanh.pop %v6527
        %v6624 = vtanh.pop %v6528
        %v6625 = vadd.f32 %v6529, 1.0
        %v6626 = vadd.f32 %v6530, 1.0
        %v6627 = vadd.f32 %v6531, 1.0
        %v6628 = vadd.f32 %v6532, 1.0
        %v6629 = vadd.f32 %v6533, 1.0
        %v6630 = vadd.f32 %v6534, 1.0
        %v6631 = vadd.f32 %v6535, 1.0
        %v6632 = vadd.f32 %v6536, 1.0
        %v6633 = vadd.f32 %v6537, 1.0
        %v6634 = vadd.f32 %v6538, 1.0
        %v6635 = vadd.f32 %v6539, 1.0
        %v6636 = vadd.f32 %v6540, 1.0
        %v6637 = vadd.f32 %v6541, 1.0
        %v6638 = vadd.f32 %v6542, 1.0
        %v6639 = vadd.f32 %v6543, 1.0
        %v6640 = vadd.f32 %v6544, 1.0
        %v6641 = vadd.f32 %v6545, 1.0
        %v6642 = vadd.f32 %v6546, 1.0
        %v6643 = vadd.f32 %v6547, 1.0
        %v6644 = vadd.f32 %v6548, 1.0
        %v6645 = vadd.f32 %v6549, 1.0
        %v6646 = vadd.f32 %v6550, 1.0
        %v6647 = vadd.f32 %v6551, 1.0
        %v6648 = vadd.f32 %v6552, 1.0
        %v6649 = vadd.f32 %v6553, 1.0
        %v6650 = vadd.f32 %v6554, 1.0
        %v6651 = vadd.f32 %v6555, 1.0
        %v6652 = vadd.f32 %v6556, 1.0
        %v6653 = vadd.f32 %v6557, 1.0
        %v6654 = vadd.f32 %v6558, 1.0
        %v6655 = vadd.f32 %v6559, 1.0
        %v6656 = vadd.f32 %v6560, 1.0
        %v6657 = vadd.f32 %v6561, 1.0
        %v6658 = vadd.f32 %v6562, 1.0
        %v6659 = vadd.f32 %v6563, 1.0
        %v6660 = vadd.f32 %v6564, 1.0
        %v6661 = vadd.f32 %v6565, 1.0
        %v6662 = vadd.f32 %v6566, 1.0
        %v6663 = vadd.f32 %v6567, 1.0
        %v6664 = vadd.f32 %v6568, 1.0
        %v6665 = vadd.f32 %v6569, 1.0
        %v6666 = vadd.f32 %v6570, 1.0
        %v6667 = vadd.f32 %v6571, 1.0
        %v6668 = vadd.f32 %v6572, 1.0
        %v6669 = vadd.f32 %v6573, 1.0
        %v6670 = vadd.f32 %v6574, 1.0
        %v6671 = vadd.f32 %v6575, 1.0
        %v6672 = vadd.f32 %v6576, 1.0
        %v6673 = vadd.f32 %v6577, 1.0
        %v6674 = vadd.f32 %v6578, 1.0
        %v6675 = vadd.f32 %v6579, 1.0
        %v6676 = vadd.f32 %v6580, 1.0
        %v6677 = vadd.f32 %v6581, 1.0
        %v6678 = vadd.f32 %v6582, 1.0
        %v6679 = vadd.f32 %v6583, 1.0
        %v6680 = vadd.f32 %v6584, 1.0
        %v6681 = vadd.f32 %v6585, 1.0
        %v6682 = vadd.f32 %v6586, 1.0
        %v6683 = vadd.f32 %v6587, 1.0
        %v6684 = vadd.f32 %v6588, 1.0
        %v6685 = vadd.f32 %v6589, 1.0
        %v6686 = vadd.f32 %v6590, 1.0
        %v6687 = vadd.f32 %v6591, 1.0
        %v6688 = vadd.f32 %v6592, 1.0
        %v6689 = vadd.f32 %v6593, 1.0
        %v6690 = vadd.f32 %v6594, 1.0
        %v6691 = vadd.f32 %v6595, 1.0
        %v6692 = vadd.f32 %v6596, 1.0
        %v6693 = vadd.f32 %v6597, 1.0
        %v6694 = vadd.f32 %v6598, 1.0
        %v6695 = vadd.f32 %v6599, 1.0
        %v6696 = vadd.f32 %v6600, 1.0
        %v6697 = vadd.f32 %v6601, 1.0
        %v6698 = vadd.f32 %v6602, 1.0
        %v6699 = vadd.f32 %v6603, 1.0
        %v6700 = vadd.f32 %v6604, 1.0
        %v6701 = vadd.f32 %v6605, 1.0
        %v6702 = vadd.f32 %v6606, 1.0
        %v6703 = vadd.f32 %v6607, 1.0
        %v6704 = vadd.f32 %v6608, 1.0
        %v6705 = vadd.f32 %v6609, 1.0
        %v6706 = vadd.f32 %v6610, 1.0
        %v6707 = vadd.f32 %v6611, 1.0
        %v6708 = vadd.f32 %v6612, 1.0
        %v6709 = vadd.f32 %v6613, 1.0
        %v6710 = vadd.f32 %v6614, 1.0
        %v6711 = vadd.f32 %v6615, 1.0
        %v6712 = vadd.f32 %v6616, 1.0
        %v6713 = vadd.f32 %v6617, 1.0
        %v6714 = vadd.f32 %v6618, 1.0
        %v6715 = vadd.f32 %v6619, 1.0
        %v6716 = vadd.f32 %v6620, 1.0
        %v6717 = vadd.f32 %v6621, 1.0
        %v6718 = vadd.f32 %v6622, 1.0
        %v6719 = vadd.f32 %v6623, 1.0
        %v6720 = vadd.f32 %v6624, 1.0
        %v6721 = vmul.f32 %v6625, 0.5
        %v6722 = vmul.f32 %v6626, 0.5
        %v6723 = vmul.f32 %v6627, 0.5
        %v6724 = vmul.f32 %v6628, 0.5
        %v6725 = vmul.f32 %v6629, 0.5
        %v6726 = vmul.f32 %v6630, 0.5
        %v6727 = vmul.f32 %v6631, 0.5
        %v6728 = vmul.f32 %v6632, 0.5
        %v6729 = vmul.f32 %v6633, 0.5
        %v6730 = vmul.f32 %v6634, 0.5
        %v6731 = vmul.f32 %v6635, 0.5
        %v6732 = vmul.f32 %v6636, 0.5
        %v6733 = vmul.f32 %v6637, 0.5
        %v6734 = vmul.f32 %v6638, 0.5
        %v6735 = vmul.f32 %v6639, 0.5
        %v6736 = vmul.f32 %v6640, 0.5
        %v6737 = vmul.f32 %v6641, 0.5
        %v6738 = vmul.f32 %v6642, 0.5
        %v6739 = vmul.f32 %v6643, 0.5
        %v6740 = vmul.f32 %v6644, 0.5
        %v6741 = vmul.f32 %v6645, 0.5
        %v6742 = vmul.f32 %v6646, 0.5
        %v6743 = vmul.f32 %v6647, 0.5
        %v6744 = vmul.f32 %v6648, 0.5
        %v6745 = vmul.f32 %v6649, 0.5
        %v6746 = vmul.f32 %v6650, 0.5
        %v6747 = vmul.f32 %v6651, 0.5
        %v6748 = vmul.f32 %v6652, 0.5
        %v6749 = vmul.f32 %v6653, 0.5
        %v6750 = vmul.f32 %v6654, 0.5
        %v6751 = vmul.f32 %v6655, 0.5
        %v6752 = vmul.f32 %v6656, 0.5
        %v6753 = vmul.f32 %v6657, 0.5
        %v6754 = vmul.f32 %v6658, 0.5
        %v6755 = vmul.f32 %v6659, 0.5
        %v6756 = vmul.f32 %v6660, 0.5
        %v6757 = vmul.f32 %v6661, 0.5
        %v6758 = vmul.f32 %v6662, 0.5
        %v6759 = vmul.f32 %v6663, 0.5
        %v6760 = vmul.f32 %v6664, 0.5
        %v6761 = vmul.f32 %v6665, 0.5
        %v6762 = vmul.f32 %v6666, 0.5
        %v6763 = vmul.f32 %v6667, 0.5
        %v6764 = vmul.f32 %v6668, 0.5
        %v6765 = vmul.f32 %v6669, 0.5
        %v6766 = vmul.f32 %v6670, 0.5
        %v6767 = vmul.f32 %v6671, 0.5
        %v6768 = vmul.f32 %v6672, 0.5
        %v6769 = vmul.f32 %v6673, 0.5
        %v6770 = vmul.f32 %v6674, 0.5
        %v6771 = vmul.f32 %v6675, 0.5
        %v6772 = vmul.f32 %v6676, 0.5
        %v6773 = vmul.f32 %v6677, 0.5
        %v6774 = vmul.f32 %v6678, 0.5
        %v6775 = vmul.f32 %v6679, 0.5
        %v6776 = vmul.f32 %v6680, 0.5
        %v6777 = vmul.f32 %v6681, 0.5
        %v6778 = vmul.f32 %v6682, 0.5
        %v6779 = vmul.f32 %v6683, 0.5
        %v6780 = vmul.f32 %v6684, 0.5
        %v6781 = vmul.f32 %v6685, 0.5
        %v6782 = vmul.f32 %v6686, 0.5
        %v6783 = vmul.f32 %v6687, 0.5
        %v6784 = vmul.f32 %v6688, 0.5
        %v6785 = vmul.f32 %v6689, 0.5
        %v6786 = vmul.f32 %v6690, 0.5
        %v6787 = vmul.f32 %v6691, 0.5
        %v6788 = vmul.f32 %v6692, 0.5
        %v6789 = vmul.f32 %v6693, 0.5
        %v6790 = vmul.f32 %v6694, 0.5
        %v6791 = vmul.f32 %v6695, 0.5
        %v6792 = vmul.f32 %v6696, 0.5
        %v6793 = vmul.f32 %v6697, 0.5
        %v6794 = vmul.f32 %v6698, 0.5
        %v6795 = vmul.f32 %v6699, 0.5
        %v6796 = vmul.f32 %v6700, 0.5
        %v6797 = vmul.f32 %v6701, 0.5
        %v6798 = vmul.f32 %v6702, 0.5
        %v6799 = vmul.f32 %v6703, 0.5
        %v6800 = vmul.f32 %v6704, 0.5
        %v6801 = vmul.f32 %v6705, 0.5
        %v6802 = vmul.f32 %v6706, 0.5
        %v6803 = vmul.f32 %v6707, 0.5
        %v6804 = vmul.f32 %v6708, 0.5
        %v6805 = vmul.f32 %v6709, 0.5
        %v6806 = vmul.f32 %v6710, 0.5
        %v6807 = vmul.f32 %v6711, 0.5
        %v6808 = vmul.f32 %v6712, 0.5
        %v6809 = vmul.f32 %v6713, 0.5
        %v6810 = vmul.f32 %v6714, 0.5
        %v6811 = vmul.f32 %v6715, 0.5
        %v6812 = vmul.f32 %v6716, 0.5
        %v6813 = vmul.f32 %v6717, 0.5
        %v6814 = vmul.f32 %v6718, 0.5
        %v6815 = vmul.f32 %v6719, 0.5
        %v6816 = vmul.f32 %v6720, 0.5
        %v6817 = vmul.f32 %v5778, %v6721
        %v6818 = vmul.f32 %v5780, %v6722
        %v6819 = vmul.f32 %v5931, %v6723
        %v6820 = vmul.f32 %v5933, %v6724
        %v6821 = vmul.f32 %v5782, %v6725
        %v6822 = vmul.f32 %v5784, %v6726
        %v6823 = vmul.f32 %v5935, %v6727
        %v6824 = vmul.f32 %v5937, %v6728
        %v6825 = vmul.f32 %v5788, %v6729
        %v6826 = vmul.f32 %v5790, %v6730
        %v6827 = vmul.f32 %v5941, %v6731
        %v6828 = vmul.f32 %v5943, %v6732
        %v6829 = vmul.f32 %v5792, %v6733
        %v6830 = vmul.f32 %v5794, %v6734
        %v6831 = vmul.f32 %v5945, %v6735
        %v6832 = vmul.f32 %v5947, %v6736
        %v6833 = vmul.f32 %v5798, %v6737
        %v6834 = vmul.f32 %v5800, %v6738
        %v6835 = vmul.f32 %v5951, %v6739
        %v6836 = vmul.f32 %v5953, %v6740
        %v6837 = vmul.f32 %v5802, %v6741
        %v6838 = vmul.f32 %v5804, %v6742
        %v6839 = vmul.f32 %v5955, %v6743
        %v6840 = vmul.f32 %v5957, %v6744
        %v6841 = vmul.f32 %v5808, %v6745
        %v6842 = vmul.f32 %v5810, %v6746
        %v6843 = vmul.f32 %v5961, %v6747
        %v6844 = vmul.f32 %v5963, %v6748
        %v6845 = vmul.f32 %v5812, %v6749
        %v6846 = vmul.f32 %v5814, %v6750
        %v6847 = vmul.f32 %v5965, %v6751
        %v6848 = vmul.f32 %v5967, %v6752
        %v6849 = vmul.f32 %v5818, %v6753
        %v6850 = vmul.f32 %v5820, %v6754
        %v6851 = vmul.f32 %v5971, %v6755
        %v6852 = vmul.f32 %v5973, %v6756
        %v6853 = vmul.f32 %v5822, %v6757
        %v6854 = vmul.f32 %v5824, %v6758
        %v6855 = vmul.f32 %v5975, %v6759
        %v6856 = vmul.f32 %v5977, %v6760
        %v6857 = vmul.f32 %v5828, %v6761
        %v6858 = vmul.f32 %v5830, %v6762
        %v6859 = vmul.f32 %v5981, %v6763
        %v6860 = vmul.f32 %v5983, %v6764
        %v6861 = vmul.f32 %v5832, %v6765
        %v6862 = vmul.f32 %v5834, %v6766
        %v6863 = vmul.f32 %v5985, %v6767
        %v6864 = vmul.f32 %v5987, %v6768
        %v6865 = vmul.f32 %v5838, %v6769
        %v6866 = vmul.f32 %v5840, %v6770
        %v6867 = vmul.f32 %v5991, %v6771
        %v6868 = vmul.f32 %v5993, %v6772
        %v6869 = vmul.f32 %v5842, %v6773
        %v6870 = vmul.f32 %v5844, %v6774
        %v6871 = vmul.f32 %v5995, %v6775
        %v6872 = vmul.f32 %v5997, %v6776
        %v6873 = vmul.f32 %v5848, %v6777
        %v6874 = vmul.f32 %v5850, %v6778
        %v6875 = vmul.f32 %v6001, %v6779
        %v6876 = vmul.f32 %v6003, %v6780
        %v6877 = vmul.f32 %v5852, %v6781
        %v6878 = vmul.f32 %v5854, %v6782
        %v6879 = vmul.f32 %v6005, %v6783
        %v6880 = vmul.f32 %v6007, %v6784
        %v6881 = vmul.f32 %v5858, %v6785
        %v6882 = vmul.f32 %v5860, %v6786
        %v6883 = vmul.f32 %v6011, %v6787
        %v6884 = vmul.f32 %v6013, %v6788
        %v6885 = vmul.f32 %v5862, %v6789
        %v6886 = vmul.f32 %v5864, %v6790
        %v6887 = vmul.f32 %v6015, %v6791
        %v6888 = vmul.f32 %v6017, %v6792
        %v6889 = vmul.f32 %v5868, %v6793
        %v6890 = vmul.f32 %v5870, %v6794
        %v6891 = vmul.f32 %v6021, %v6795
        %v6892 = vmul.f32 %v6023, %v6796
        %v6893 = vmul.f32 %v5872, %v6797
        %v6894 = vmul.f32 %v5874, %v6798
        %v6895 = vmul.f32 %v6025, %v6799
        %v6896 = vmul.f32 %v6027, %v6800
        %v6897 = vmul.f32 %v5878, %v6801
        %v6898 = vmul.f32 %v5880, %v6802
        %v6899 = vmul.f32 %v6031, %v6803
        %v6900 = vmul.f32 %v6033, %v6804
        %v6901 = vmul.f32 %v5882, %v6805
        %v6902 = vmul.f32 %v5884, %v6806
        %v6903 = vmul.f32 %v6035, %v6807
        %v6904 = vmul.f32 %v6037, %v6808
        %v6905 = vmul.f32 %v5888, %v6809
        %v6906 = vmul.f32 %v5890, %v6810
        %v6907 = vmul.f32 %v6041, %v6811
        %v6908 = vmul.f32 %v6043, %v6812
        %v6909 = vmul.f32 %v5892, %v6813
        %v6910 = vmul.f32 %v5894, %v6814
        %v6911 = vmul.f32 %v6045, %v6815
        %v6912 = vmul.f32 %v6047, %v6816
        %v6913 = vpack.c.bf16 %v6821, %v6817
        %v6914 = vpack.c.bf16 %v6822, %v6818
        %v6915 = vpack.c.bf16 %v6823, %v6819
        %v6916 = vpack.c.bf16 %v6824, %v6820
        %v6917 = vpack.c.bf16 %v6829, %v6825
        %v6918 = vpack.c.bf16 %v6830, %v6826
        %v6919 = vpack.c.bf16 %v6831, %v6827
        %v6920 = vpack.c.bf16 %v6832, %v6828
        %v6921 = vpack.c.bf16 %v6837, %v6833
        %v6922 = vpack.c.bf16 %v6838, %v6834
        %v6923 = vpack.c.bf16 %v6839, %v6835
        %v6924 = vpack.c.bf16 %v6840, %v6836
        %v6925 = vpack.c.bf16 %v6845, %v6841
        %v6926 = vpack.c.bf16 %v6846, %v6842
        %v6927 = vpack.c.bf16 %v6847, %v6843
        %v6928 = vpack.c.bf16 %v6848, %v6844
        %v6929 = vpack.c.bf16 %v6853, %v6849
        %v6930 = vpack.c.bf16 %v6854, %v6850
        %v6931 = vpack.c.bf16 %v6855, %v6851
        %v6932 = vpack.c.bf16 %v6856, %v6852
        %v6933 = vpack.c.bf16 %v6861, %v6857
        %v6934 = vpack.c.bf16 %v6862, %v6858
        %v6935 = vpack.c.bf16 %v6863, %v6859
        %v6936 = vpack.c.bf16 %v6864, %v6860
        %v6937 = vpack.c.bf16 %v6869, %v6865
        %v6938 = vpack.c.bf16 %v6870, %v6866
        %v6939 = vpack.c.bf16 %v6871, %v6867
        %v6940 = vpack.c.bf16 %v6872, %v6868
        %v6941 = vpack.c.bf16 %v6877, %v6873
        %v6942 = vpack.c.bf16 %v6878, %v6874
        %v6943 = vpack.c.bf16 %v6879, %v6875
        %v6944 = vpack.c.bf16 %v6880, %v6876
        %v6945 = vpack.c.bf16 %v6885, %v6881
        %v6946 = vpack.c.bf16 %v6886, %v6882
        %v6947 = vpack.c.bf16 %v6887, %v6883
        %v6948 = vpack.c.bf16 %v6888, %v6884
        %v6949 = vpack.c.bf16 %v6893, %v6889
        %v6950 = vpack.c.bf16 %v6894, %v6890
        %v6951 = vpack.c.bf16 %v6895, %v6891
        %v6952 = vpack.c.bf16 %v6896, %v6892
        %v6953 = vpack.c.bf16 %v6901, %v6897
        %v6954 = vpack.c.bf16 %v6902, %v6898
        %v6955 = vpack.c.bf16 %v6903, %v6899
        %v6956 = vpack.c.bf16 %v6904, %v6900
        %v6957 = vpack.c.bf16 %v6909, %v6905
        %v6958 = vpack.c.bf16 %v6910, %v6906
        %v6959 = vpack.c.bf16 %v6911, %v6907
        %v6960 = vpack.c.bf16 %v6912, %v6908
        %v6961 = vld [vmem:[%s674] sm:$0xf]
        %v6962 = vld [vmem:[%s674 + $0x4] sm:$0xf]
        %v6963 = vld [vmem:[%s674 + $0x8] sm:$0xf]
        %v6964 = vld [vmem:[%s674 + $0xc] sm:$0xf]
        %v6965 = vld [vmem:[%s674 + $0x10] sm:$0xf]
        %v6966 = vld [vmem:[%s674 + $0x14] sm:$0xf]
        %v6967 = vld [vmem:[%s674 + $0x18] sm:$0xf]
        %v6968 = vld [vmem:[%s674 + $0x1c] sm:$0xf]
        %v6969 = vld [vmem:[%s674 + $0x20] sm:$0xf]
        %v6970 = vld [vmem:[%s674 + $0x24] sm:$0xf]
        %v6971 = vld [vmem:[%s674 + $0x28] sm:$0xf]
        %v6972 = vld [vmem:[%s674 + $0x2c] sm:$0xf]
        %v6973 = vld [vmem:[%s674 + $0x30] sm:$0xf]
        %v6974 = vld [vmem:[%s674 + $0x34] sm:$0xf]
        %v6975 = vld [vmem:[%s674 + $0x38] sm:$0xf]
        %v6976 = vld [vmem:[%s674 + $0x3c] sm:$0xf]
        %v6977 = vld [vmem:[%s674 + $0x40] sm:$0xf]
        %v6978 = vld [vmem:[%s674 + $0x44] sm:$0xf]
        %v6979 = vld [vmem:[%s674 + $0x48] sm:$0xf]
        %v6980 = vld [vmem:[%s674 + $0x4c] sm:$0xf]
        %v6981 = vld [vmem:[%s674 + $0x50] sm:$0xf]
        %v6982 = vld [vmem:[%s674 + $0x54] sm:$0xf]
        %v6983 = vld [vmem:[%s674 + $0x58] sm:$0xf]
        %v6984 = vld [vmem:[%s674 + $0x5c] sm:$0xf]
        %v6985 = vld [vmem:[%s674 + $0x60] sm:$0xf]
        %v6986 = vld [vmem:[%s674 + $0x64] sm:$0xf]
        %v6987 = vld [vmem:[%s674 + $0x68] sm:$0xf]
        %v6988 = vld [vmem:[%s674 + $0x6c] sm:$0xf]
        %v6989 = vld [vmem:[%s674 + $0x70] sm:$0xf]
        %v6990 = vld [vmem:[%s674 + $0x74] sm:$0xf]
        %v6991 = vld [vmem:[%s674 + $0x78] sm:$0xf]
        %v6992 = vld [vmem:[%s674 + $0x7c] sm:$0xf]
        %v6993 = vld [vmem:[%s674 + $0x80] sm:$0xf]
        %v6994 = vld [vmem:[%s674 + $0x84] sm:$0xf]
        %v6995 = vld [vmem:[%s674 + $0x88] sm:$0xf]
        %v6996 = vld [vmem:[%s674 + $0x8c] sm:$0xf]
        %v6997 = vld [vmem:[%s674 + $0x90] sm:$0xf]
        %v6998 = vld [vmem:[%s674 + $0x94] sm:$0xf]
        %v6999 = vld [vmem:[%s674 + $0x98] sm:$0xf]
        %v7000 = vld [vmem:[%s674 + $0x9c] sm:$0xf]
        %v7001 = vld [vmem:[%s674 + $0xa0] sm:$0xf]
        %v7002 = vld [vmem:[%s674 + $0xa4] sm:$0xf]
        %v7003 = vld [vmem:[%s674 + $0xa8] sm:$0xf]
        %v7004 = vld [vmem:[%s674 + $0xac] sm:$0xf]
        %v7005 = vld [vmem:[%s674 + $0xb0] sm:$0xf]
        %v7006 = vld [vmem:[%s674 + $0xb4] sm:$0xf]
        %v7007 = vld [vmem:[%s674 + $0xb8] sm:$0xf]
        %v7008 = vld [vmem:[%s674 + $0xbc] sm:$0xf]
        %v7009 = vld [vmem:[%s674 + $0xc0] sm:$0xf]
        %v7010 = vld [vmem:[%s674 + $0xc4] sm:$0xf]
        %v7011 = vld [vmem:[%s674 + $0xc8] sm:$0xf]
        %v7012 = vld [vmem:[%s674 + $0xcc] sm:$0xf]
        %v7013 = vld [vmem:[%s674 + $0xd0] sm:$0xf]
        %v7014 = vld [vmem:[%s674 + $0xd4] sm:$0xf]
        %v7015 = vld [vmem:[%s674 + $0xd8] sm:$0xf]
        %v7016 = vld [vmem:[%s674 + $0xdc] sm:$0xf]
        %v7017 = vld [vmem:[%s674 + $0xe0] sm:$0xf]
        %v7018 = vld [vmem:[%s674 + $0xe4] sm:$0xf]
        %v7019 = vld [vmem:[%s674 + $0xe8] sm:$0xf]
        %v7020 = vld [vmem:[%s674 + $0xec] sm:$0xf]
        %v7021 = vld [vmem:[%s674 + $0xf0] sm:$0xf]
        %v7022 = vld [vmem:[%s674 + $0xf4] sm:$0xf]
        %v7023 = vld [vmem:[%s674 + $0xf8] sm:$0xf]
        %v7024 = vld [vmem:[%s674 + $0xfc] sm:$0xf]
        %v7025 = vld [vmem:[%s558] sm:$0x1]
        %v7027 = vlaneseq
        %v7028 = vshrl.u32 %v7027, 7
        %v7029 = vsub.s32 0, %v7028
        %v7030 = vrot.slane %v7025, %v7029
        %v7096 = vunpack.c.l.b16 %v6961
        %v7097 = vunpack.c.l.b16 %v6962
        %v7098 = vunpack.c.l.b16 %v6963
        %v7099 = vunpack.c.l.b16 %v6964
        %v7100 = vunpack.c.l.b16 %v6965
        %v7101 = vunpack.c.l.b16 %v6966
        %v7102 = vunpack.c.l.b16 %v6967
        %v7103 = vunpack.c.l.b16 %v6968
        %v7104 = vunpack.c.l.b16 %v6969
        %v7105 = vunpack.c.l.b16 %v6970
        %v7106 = vunpack.c.l.b16 %v6971
        %v7107 = vunpack.c.l.b16 %v6972
        %v7108 = vunpack.c.l.b16 %v6973
        %v7109 = vunpack.c.l.b16 %v6974
        %v7110 = vunpack.c.l.b16 %v6975
        %v7111 = vunpack.c.l.b16 %v6976
        %v7112 = vunpack.c.l.b16 %v6977
        %v7113 = vunpack.c.l.b16 %v6978
        %v7114 = vunpack.c.l.b16 %v6979
        %v7115 = vunpack.c.l.b16 %v6980
        %v7116 = vunpack.c.l.b16 %v6981
        %v7117 = vunpack.c.l.b16 %v6982
        %v7118 = vunpack.c.l.b16 %v6983
        %v7119 = vunpack.c.l.b16 %v6984
        %v7120 = vunpack.c.l.b16 %v6985
        %v7121 = vunpack.c.l.b16 %v6986
        %v7122 = vunpack.c.l.b16 %v6987
        %v7123 = vunpack.c.l.b16 %v6988
        %v7124 = vunpack.c.l.b16 %v6989
        %v7125 = vunpack.c.l.b16 %v6990
        %v7126 = vunpack.c.l.b16 %v6991
        %v7127 = vunpack.c.l.b16 %v6992
        %v7128 = vunpack.c.l.b16 %v6993
        %v7129 = vunpack.c.l.b16 %v6994
        %v7130 = vunpack.c.l.b16 %v6995
        %v7131 = vunpack.c.l.b16 %v6996
        %v7132 = vunpack.c.l.b16 %v6997
        %v7133 = vunpack.c.l.b16 %v6998
        %v7134 = vunpack.c.l.b16 %v6999
        %v7135 = vunpack.c.l.b16 %v7000
        %v7136 = vunpack.c.l.b16 %v7001
        %v7137 = vunpack.c.l.b16 %v7002
        %v7138 = vunpack.c.l.b16 %v7003
        %v7139 = vunpack.c.l.b16 %v7004
        %v7140 = vunpack.c.l.b16 %v7005
        %v7141 = vunpack.c.l.b16 %v7006
        %v7142 = vunpack.c.l.b16 %v7007
        %v7143 = vunpack.c.l.b16 %v7008
        %v7144 = vunpack.c.l.b16 %v7009
        %v7145 = vunpack.c.l.b16 %v7010
        %v7146 = vunpack.c.l.b16 %v7011
        %v7147 = vunpack.c.l.b16 %v7012
        %v7148 = vunpack.c.l.b16 %v7013
        %v7149 = vunpack.c.l.b16 %v7014
        %v7150 = vunpack.c.l.b16 %v7015
        %v7151 = vunpack.c.l.b16 %v7016
        %v7152 = vunpack.c.l.b16 %v7017
        %v7153 = vunpack.c.l.b16 %v7018
        %v7154 = vunpack.c.l.b16 %v7019
        %v7155 = vunpack.c.l.b16 %v7020
        %v7156 = vunpack.c.l.b16 %v7021
        %v7157 = vunpack.c.l.b16 %v7022
        %v7158 = vunpack.c.l.b16 %v7023
        %v7159 = vunpack.c.l.b16 %v7024
        %v7160 = vpack.c.b16 %v7097, %v7096
        %v7161 = vpack.c.b16 %v7099, %v7098
        %v7162 = vpack.c.b16 %v7101, %v7100
        %v7163 = vpack.c.b16 %v7103, %v7102
        %v7164 = vpack.c.b16 %v7105, %v7104
        %v7165 = vpack.c.b16 %v7107, %v7106
        %v7166 = vpack.c.b16 %v7109, %v7108
        %v7167 = vpack.c.b16 %v7111, %v7110
        %v7168 = vpack.c.b16 %v7113, %v7112
        %v7169 = vpack.c.b16 %v7115, %v7114
        %v7170 = vpack.c.b16 %v7117, %v7116
        %v7171 = vpack.c.b16 %v7119, %v7118
        %v7172 = vpack.c.b16 %v7121, %v7120
        %v7173 = vpack.c.b16 %v7123, %v7122
        %v7174 = vpack.c.b16 %v7125, %v7124
        %v7175 = vpack.c.b16 %v7127, %v7126
        %v7176 = vpack.c.b16 %v7129, %v7128
        %v7177 = vpack.c.b16 %v7131, %v7130
        %v7178 = vpack.c.b16 %v7133, %v7132
        %v7179 = vpack.c.b16 %v7135, %v7134
        %v7180 = vpack.c.b16 %v7137, %v7136
        %v7181 = vpack.c.b16 %v7139, %v7138
        %v7182 = vpack.c.b16 %v7141, %v7140
        %v7183 = vpack.c.b16 %v7143, %v7142
        %v7184 = vpack.c.b16 %v7145, %v7144
        %v7185 = vpack.c.b16 %v7147, %v7146
        %v7186 = vpack.c.b16 %v7149, %v7148
        %v7187 = vpack.c.b16 %v7151, %v7150
        %v7188 = vpack.c.b16 %v7153, %v7152
        %v7189 = vpack.c.b16 %v7155, %v7154
        %v7190 = vpack.c.b16 %v7157, %v7156
        %v7191 = vpack.c.b16 %v7159, %v7158
        %7224 = vmatprep.subr.bf16.mxu0 0
        %7225 = vmatpush1.bf16.msra.mxu0 %v7167
        %7226 = vmatprep.subr.bf16.mxu0 0
        %7227 = vmatpush1.bf16.msra.mxu0 %v7166
        %7228 = vmatprep.subr.bf16.mxu0 0
        %7229 = vmatpush1.bf16.msra.mxu0 %v7165
        %7230 = vmatprep.subr.bf16.mxu0 0
        %7231 = vmatpush1.bf16.msra.mxu0 %v7164
        %7232 = vmatprep.subr.bf16.mxu0 0
        %7233 = vmatpush1.bf16.msra.mxu0 %v7163
        %7234 = vmatprep.subr.bf16.mxu0 0
        %7235 = vmatpush1.bf16.msra.mxu0 %v7162
        %7236 = vmatprep.subr.bf16.mxu0 0
        %7237 = vmatpush1.bf16.msra.mxu0 %v7161
        %7238 = vmatprep.subr.bf16.mxu0 0
        %7239 = vmatpush1.bf16.msra.mxu0 %v7160
        %7240 = vmatprep.subr.bf16.mxu0 0
        %7241 = vmatpush2.bf16.msra.mxu0 %v7175
        %7242 = vmatprep.subr.bf16.mxu0 0
        %7243 = vmatpush2.bf16.msra.mxu0 %v7174
        %7244 = vmatprep.subr.bf16.mxu0 0
        %7245 = vmatpush2.bf16.msra.mxu0 %v7173
        %7246 = vmatprep.subr.bf16.mxu0 0
        %7247 = vmatpush2.bf16.msra.mxu0 %v7172
        %7248 = vmatprep.subr.bf16.mxu0 0
        %7249 = vmatpush2.bf16.msra.mxu0 %v7171
        %7250 = vmatprep.subr.bf16.mxu0 0
        %7251 = vmatpush2.bf16.msra.mxu0 %v7170
        %7252 = vmatprep.subr.bf16.mxu0 0
        %7253 = vmatpush2.bf16.msra.mxu0 %v7169
        %7254 = vmatprep.subr.bf16.mxu0 0
        %7255 = vmatpush2.bf16.msra.mxu0 %v7168
        %7256 = vmatprep.mubr.bf16.mxu0 %v6914
        %7257 = vmatmul.mubr.bf16.gmra.mxu0 %v6913
        %v7258 = vpop.f32.mrf.mxu0
        %v7259 = vadd.f32 %v7030, %v7258
        %v7260 = vpop.f32.mrf.mxu0
        %v7261 = vpop.f32.mrf.mxu0
        %v7262 = vadd.f32 %v7030, %v7261
        %v7263 = vpop.f32.mrf.mxu0
        %7264 = vmatprep.mubr.bf16.mxu0 %v6918
        %7265 = vmatmul.mubr.bf16.gmra.mxu0 %v6917
        %v7266 = vpop.f32.mrf.mxu0
        %v7267 = vadd.f32 %v7030, %v7266
        %v7268 = vpop.f32.mrf.mxu0
        %v7269 = vpop.f32.mrf.mxu0
        %v7270 = vadd.f32 %v7030, %v7269
        %v7271 = vpop.f32.mrf.mxu0
        %7272 = vmatprep.mubr.bf16.mxu0 %v6922
        %7273 = vmatmul.mubr.bf16.gmra.mxu0 %v6921
        %v7274 = vpop.f32.mrf.mxu0
        %v7275 = vadd.f32 %v7030, %v7274
        %v7276 = vpop.f32.mrf.mxu0
        %v7277 = vpop.f32.mrf.mxu0
        %v7278 = vadd.f32 %v7030, %v7277
        %v7279 = vpop.f32.mrf.mxu0
        %7280 = vmatprep.mubr.bf16.mxu0 %v6926
        %7281 = vmatmul.mubr.bf16.gmra.mxu0 %v6925
        %v7282 = vpop.f32.mrf.mxu0
        %v7283 = vadd.f32 %v7030, %v7282
        %v7284 = vpop.f32.mrf.mxu0
        %v7285 = vpop.f32.mrf.mxu0
        %v7286 = vadd.f32 %v7030, %v7285
        %v7287 = vpop.f32.mrf.mxu0
        %7288 = vmatprep.mubr.bf16.mxu0 %v6930
        %7289 = vmatmul.mubr.bf16.gmra.mxu0 %v6929
        %v7290 = vpop.f32.mrf.mxu0
        %v7291 = vadd.f32 %v7030, %v7290
        %v7292 = vpop.f32.mrf.mxu0
        %v7293 = vpop.f32.mrf.mxu0
        %v7294 = vadd.f32 %v7030, %v7293
        %v7295 = vpop.f32.mrf.mxu0
        %7296 = vmatprep.mubr.bf16.mxu0 %v6934
        %7297 = vmatmul.mubr.bf16.gmra.mxu0 %v6933
        %v7298 = vpop.f32.mrf.mxu0
        %v7299 = vadd.f32 %v7030, %v7298
        %v7300 = vpop.f32.mrf.mxu0
        %v7301 = vpop.f32.mrf.mxu0
        %v7302 = vadd.f32 %v7030, %v7301
        %v7303 = vpop.f32.mrf.mxu0
        %7304 = vmatprep.mubr.bf16.mxu0 %v6938
        %7305 = vmatmul.mubr.bf16.gmra.mxu0 %v6937
        %v7306 = vpop.f32.mrf.mxu0
        %v7307 = vadd.f32 %v7030, %v7306
        %v7308 = vpop.f32.mrf.mxu0
        %v7309 = vpop.f32.mrf.mxu0
        %v7310 = vadd.f32 %v7030, %v7309
        %v7311 = vpop.f32.mrf.mxu0
        %7312 = vmatprep.mubr.bf16.mxu0 %v6942
        %7313 = vmatmul.mubr.bf16.gmra.mxu0 %v6941
        %v7314 = vpop.f32.mrf.mxu0
        %v7315 = vadd.f32 %v7030, %v7314
        %v7316 = vpop.f32.mrf.mxu0
        %v7317 = vpop.f32.mrf.mxu0
        %v7318 = vadd.f32 %v7030, %v7317
        %v7319 = vpop.f32.mrf.mxu0
        %7320 = vmatprep.mubr.bf16.mxu0 %v6946
        %7321 = vmatmul.mubr.bf16.gmra.mxu0 %v6945
        %v7322 = vpop.f32.mrf.mxu0
        %v7323 = vadd.f32 %v7030, %v7322
        %v7324 = vpop.f32.mrf.mxu0
        %v7325 = vpop.f32.mrf.mxu0
        %v7326 = vadd.f32 %v7030, %v7325
        %v7327 = vpop.f32.mrf.mxu0
        %7328 = vmatprep.mubr.bf16.mxu0 %v6950
        %7329 = vmatmul.mubr.bf16.gmra.mxu0 %v6949
        %v7330 = vpop.f32.mrf.mxu0
        %v7331 = vadd.f32 %v7030, %v7330
        %v7332 = vpop.f32.mrf.mxu0
        %v7333 = vpop.f32.mrf.mxu0
        %v7334 = vadd.f32 %v7030, %v7333
        %v7335 = vpop.f32.mrf.mxu0
        %7336 = vmatprep.mubr.bf16.mxu0 %v6954
        %7337 = vmatmul.mubr.bf16.gmra.mxu0 %v6953
        %v7338 = vpop.f32.mrf.mxu0
        %v7339 = vadd.f32 %v7030, %v7338
        %v7340 = vpop.f32.mrf.mxu0
        %v7341 = vpop.f32.mrf.mxu0
        %v7342 = vadd.f32 %v7030, %v7341
        %v7343 = vpop.f32.mrf.mxu0
        %7344 = vmatprep.mubr.bf16.mxu0 %v6958
        %7345 = vmatmul.mubr.bf16.gmra.mxu0 %v6957
        %v7346 = vpop.f32.mrf.mxu0
        %v7347 = vadd.f32 %v7030, %v7346
        %v7348 = vpop.f32.mrf.mxu0
        %v7349 = vpop.f32.mrf.mxu0
        %v7350 = vadd.f32 %v7030, %v7349
        %v7351 = vpop.f32.mrf.mxu0
        %7352 = vdwg.mxu0
        %7353 = vmatprep.subr.bf16.mxu0 0
        %7354 = vmatpush1.bf16.msra.mxu0 %v7183
        %7355 = vmatprep.subr.bf16.mxu0 0
        %7356 = vmatpush1.bf16.msra.mxu0 %v7182
        %7357 = vmatprep.subr.bf16.mxu0 0
        %7358 = vmatpush1.bf16.msra.mxu0 %v7181
        %7359 = vmatprep.subr.bf16.mxu0 0
        %7360 = vmatpush1.bf16.msra.mxu0 %v7180
        %7361 = vmatprep.subr.bf16.mxu0 0
        %7362 = vmatpush1.bf16.msra.mxu0 %v7179
        %7363 = vmatprep.subr.bf16.mxu0 0
        %7364 = vmatpush1.bf16.msra.mxu0 %v7178
        %7365 = vmatprep.subr.bf16.mxu0 0
        %7366 = vmatpush1.bf16.msra.mxu0 %v7177
        %7367 = vmatprep.subr.bf16.mxu0 0
        %7368 = vmatpush1.bf16.msra.mxu0 %v7176
        %7369 = vmatprep.subr.bf16.mxu0 0
        %7370 = vmatpush2.bf16.msra.mxu0 %v7191
        %7371 = vmatprep.subr.bf16.mxu0 0
        %7372 = vmatpush2.bf16.msra.mxu0 %v7190
        %7373 = vmatprep.subr.bf16.mxu0 0
        %7374 = vmatpush2.bf16.msra.mxu0 %v7189
        %7375 = vmatprep.subr.bf16.mxu0 0
        %7376 = vmatpush2.bf16.msra.mxu0 %v7188
        %7377 = vmatprep.subr.bf16.mxu0 0
        %7378 = vmatpush2.bf16.msra.mxu0 %v7187
        %7379 = vmatprep.subr.bf16.mxu0 0
        %7380 = vmatpush2.bf16.msra.mxu0 %v7186
        %7381 = vmatprep.subr.bf16.mxu0 0
        %7382 = vmatpush2.bf16.msra.mxu0 %v7185
        %7383 = vmatprep.subr.bf16.mxu0 0
        %7384 = vmatpush2.bf16.msra.mxu0 %v7184
        %7385 = vmatprep.mubr.bf16.mxu0 %v6916
        %7386 = vmatmul.mubr.bf16.gmra.mxu0 %v6915
        %v7387 = vpop.f32.mrf.mxu0
        %v7388 = vadd.f32 %v7259, %v7387
        %v7389 = vpop.f32.mrf.mxu0
        %v7390 = vpop.f32.mrf.mxu0
        %v7391 = vadd.f32 %v7262, %v7390
        %v7392 = vpop.f32.mrf.mxu0
        %7393 = vmatprep.mubr.bf16.mxu0 %v6920
        %7394 = vmatmul.mubr.bf16.gmra.mxu0 %v6919
        %v7395 = vpop.f32.mrf.mxu0
        %v7396 = vadd.f32 %v7267, %v7395
        %v7397 = vpop.f32.mrf.mxu0
        %v7398 = vpop.f32.mrf.mxu0
        %v7399 = vadd.f32 %v7270, %v7398
        %v7400 = vpop.f32.mrf.mxu0
        %7401 = vmatprep.mubr.bf16.mxu0 %v6924
        %7402 = vmatmul.mubr.bf16.gmra.mxu0 %v6923
        %v7403 = vpop.f32.mrf.mxu0
        %v7404 = vadd.f32 %v7275, %v7403
        %v7405 = vpop.f32.mrf.mxu0
        %v7406 = vpop.f32.mrf.mxu0
        %v7407 = vadd.f32 %v7278, %v7406
        %v7408 = vpop.f32.mrf.mxu0
        %7409 = vmatprep.mubr.bf16.mxu0 %v6928
        %7410 = vmatmul.mubr.bf16.gmra.mxu0 %v6927
        %v7411 = vpop.f32.mrf.mxu0
        %v7412 = vadd.f32 %v7283, %v7411
        %v7413 = vpop.f32.mrf.mxu0
        %v7414 = vpop.f32.mrf.mxu0
        %v7415 = vadd.f32 %v7286, %v7414
        %v7416 = vpop.f32.mrf.mxu0
        %7417 = vmatprep.mubr.bf16.mxu0 %v6932
        %7418 = vmatmul.mubr.bf16.gmra.mxu0 %v6931
        %v7419 = vpop.f32.mrf.mxu0
        %v7420 = vadd.f32 %v7291, %v7419
        %v7421 = vpop.f32.mrf.mxu0
        %v7422 = vpop.f32.mrf.mxu0
        %v7423 = vadd.f32 %v7294, %v7422
        %v7424 = vpop.f32.mrf.mxu0
        %7425 = vmatprep.mubr.bf16.mxu0 %v6936
        %7426 = vmatmul.mubr.bf16.gmra.mxu0 %v6935
        %v7427 = vpop.f32.mrf.mxu0
        %v7428 = vadd.f32 %v7299, %v7427
        %v7429 = vpop.f32.mrf.mxu0
        %v7430 = vpop.f32.mrf.mxu0
        %v7431 = vadd.f32 %v7302, %v7430
        %v7432 = vpop.f32.mrf.mxu0
        %7433 = vmatprep.mubr.bf16.mxu0 %v6940
        %7434 = vmatmul.mubr.bf16.gmra.mxu0 %v6939
        %v7435 = vpop.f32.mrf.mxu0
        %v7436 = vadd.f32 %v7307, %v7435
        %v7437 = vpop.f32.mrf.mxu0
        %v7438 = vpop.f32.mrf.mxu0
        %v7439 = vadd.f32 %v7310, %v7438
        %v7440 = vpop.f32.mrf.mxu0
        %7441 = vmatprep.mubr.bf16.mxu0 %v6944
        %7442 = vmatmul.mubr.bf16.gmra.mxu0 %v6943
        %v7443 = vpop.f32.mrf.mxu0
        %v7444 = vadd.f32 %v7315, %v7443
        %v7445 = vpop.f32.mrf.mxu0
        %v7446 = vpop.f32.mrf.mxu0
        %v7447 = vadd.f32 %v7318, %v7446
        %v7448 = vpop.f32.mrf.mxu0
        %7449 = vmatprep.mubr.bf16.mxu0 %v6948
        %7450 = vmatmul.mubr.bf16.gmra.mxu0 %v6947
        %v7451 = vpop.f32.mrf.mxu0
        %v7452 = vadd.f32 %v7323, %v7451
        %v7453 = vpop.f32.mrf.mxu0
        %v7454 = vpop.f32.mrf.mxu0
        %v7455 = vadd.f32 %v7326, %v7454
        %v7456 = vpop.f32.mrf.mxu0
        %7457 = vmatprep.mubr.bf16.mxu0 %v6952
        %7458 = vmatmul.mubr.bf16.gmra.mxu0 %v6951
        %v7459 = vpop.f32.mrf.mxu0
        %v7460 = vadd.f32 %v7331, %v7459
        %v7461 = vpop.f32.mrf.mxu0
        %v7462 = vpop.f32.mrf.mxu0
        %v7463 = vadd.f32 %v7334, %v7462
        %v7464 = vpop.f32.mrf.mxu0
        %7465 = vmatprep.mubr.bf16.mxu0 %v6956
        %7466 = vmatmul.mubr.bf16.gmra.mxu0 %v6955
        %v7467 = vpop.f32.mrf.mxu0
        %v7468 = vadd.f32 %v7339, %v7467
        %v7469 = vpop.f32.mrf.mxu0
        %v7470 = vpop.f32.mrf.mxu0
        %v7471 = vadd.f32 %v7342, %v7470
        %v7472 = vpop.f32.mrf.mxu0
        %7473 = vmatprep.mubr.bf16.mxu0 %v6960
        %7474 = vmatmul.mubr.bf16.gmra.mxu0 %v6959
        %v7475 = vpop.f32.mrf.mxu0
        %v7476 = vadd.f32 %v7347, %v7475
        %v7477 = vpop.f32.mrf.mxu0
        %v7478 = vpop.f32.mrf.mxu0
        %v7479 = vadd.f32 %v7350, %v7478
        %v7480 = vpop.f32.mrf.mxu0
        %7481 = vdwg.mxu0
        %v7482 = vadd.f32 %v5493, %v7388
        %v7483 = vadd.f32 %v5494, %v7391
        %v7484 = vadd.f32 %v5495, %v7396
        %v7485 = vadd.f32 %v5496, %v7399
        %v7486 = vadd.f32 %v5497, %v7404
        %v7487 = vadd.f32 %v5498, %v7407
        %v7488 = vadd.f32 %v5499, %v7412
        %v7489 = vadd.f32 %v5500, %v7415
        %v7490 = vadd.f32 %v5501, %v7420
        %v7491 = vadd.f32 %v5502, %v7423
        %v7492 = vadd.f32 %v5503, %v7428
        %v7493 = vadd.f32 %v5504, %v7431
        %v7494 = vadd.f32 %v5505, %v7436
        %v7495 = vadd.f32 %v5506, %v7439
        %v7496 = vadd.f32 %v5507, %v7444
        %v7497 = vadd.f32 %v5508, %v7447
        %v7498 = vadd.f32 %v5509, %v7452
        %v7499 = vadd.f32 %v5510, %v7455
        %v7500 = vadd.f32 %v5511, %v7460
        %v7501 = vadd.f32 %v5512, %v7463
        %v7502 = vadd.f32 %v5513, %v7468
        %v7503 = vadd.f32 %v5514, %v7471
        %v7504 = vadd.f32 %v5515, %v7476
        %v7505 = vadd.f32 %v5516, %v7479
        %7506 = vst [vmem:[#allocation2] sm:$0xff] %v7482
        %7507 = vst [vmem:[#allocation2 + $0x8] sm:$0xff] %v7483
        %7508 = vst [vmem:[#allocation2 + $0x10] sm:$0xff] %v7484
        %7509 = vst [vmem:[#allocation2 + $0x18] sm:$0xff] %v7485
        %7510 = vst [vmem:[#allocation2 + $0x20] sm:$0xff] %v7486
        %7511 = vst [vmem:[#allocation2 + $0x28] sm:$0xff] %v7487
        %7512 = vst [vmem:[#allocation2 + $0x30] sm:$0xff] %v7488
        %7513 = vst [vmem:[#allocation2 + $0x38] sm:$0xff] %v7489
        %7514 = vst [vmem:[#allocation2 + $0x40] sm:$0xff] %v7490
        %7515 = vst [vmem:[#allocation2 + $0x48] sm:$0xff] %v7491
        %7516 = vst [vmem:[#allocation2 + $0x50] sm:$0xff] %v7492
        %7517 = vst [vmem:[#allocation2 + $0x58] sm:$0xff] %v7493
        %7518 = vst [vmem:[#allocation2 + $0x60] sm:$0xff] %v7494
        %7519 = vst [vmem:[#allocation2 + $0x68] sm:$0xff] %v7495
        %7520 = vst [vmem:[#allocation2 + $0x70] sm:$0xff] %v7496
        %7521 = vst [vmem:[#allocation2 + $0x78] sm:$0xff] %v7497
        %7522 = vst [vmem:[#allocation2 + $0x80] sm:$0xff] %v7498
        %7523 = vst [vmem:[#allocation2 + $0x88] sm:$0xff] %v7499
        %7524 = vst [vmem:[#allocation2 + $0x90] sm:$0xff] %v7500
        %7525 = vst [vmem:[#allocation2 + $0x98] sm:$0xff] %v7501
        %7526 = vst [vmem:[#allocation2 + $0xa0] sm:$0xff] %v7502
        %7527 = vst [vmem:[#allocation2 + $0xa8] sm:$0xff] %v7503
        %7528 = vst [vmem:[#allocation2 + $0xb0] sm:$0xff] %v7504
        %7529 = vst [vmem:[#allocation2 + $0xb8] sm:$0xff] %v7505
        %p7530 = scmp.eq.s32.totalorder %s35, 1
        // Predicated region
        $region89: #{cct_forward.4} parent=71 // pred_check
          %p7531 = pneg %p7530
        $region90: #{cct_forward.4} parent=71 // pred_check_branch
          %7533 = sbr.rel (%p7531) target = $region92
        $region91: #{cct_forward.4} parent=71 // pred_region
          %v7534 = vld [vmem:[%s11] sm:$0x1]
          %v7535 = vld [vmem:[%s12] sm:$0x1]
          %7536 = vadd.xlane.f32.xlu0 %v7482
          %v7537 = vpop.xlane.xlu0 %7536
          %7538 = vadd.xlane.f32.xlu0 %v7483
          %v7539 = vpop.xlane.xlu0 %7538
          %7540 = vadd.xlane.f32.xlu0 %v7484
          %v7541 = vpop.xlane.xlu0 %7540
          %7542 = vadd.xlane.f32.xlu0 %v7485
          %v7543 = vpop.xlane.xlu0 %7542
          %7544 = vadd.xlane.f32.xlu0 %v7486
          %v7545 = vpop.xlane.xlu0 %7544
          %7546 = vadd.xlane.f32.xlu0 %v7487
          %v7547 = vpop.xlane.xlu0 %7546
          %7548 = vadd.xlane.f32.xlu0 %v7488
          %v7549 = vpop.xlane.xlu0 %7548
          %7550 = vadd.xlane.f32.xlu0 %v7489
          %v7551 = vpop.xlane.xlu0 %7550
          %7552 = vadd.xlane.f32.xlu0 %v7490
          %v7553 = vpop.xlane.xlu0 %7552
          %7554 = vadd.xlane.f32.xlu0 %v7491
          %v7555 = vpop.xlane.xlu0 %7554
          %7556 = vadd.xlane.f32.xlu0 %v7492
          %v7557 = vpop.xlane.xlu0 %7556
          %7558 = vadd.xlane.f32.xlu0 %v7493
          %v7559 = vpop.xlane.xlu0 %7558
          %7560 = vadd.xlane.f32.xlu0 %v7494
          %v7561 = vpop.xlane.xlu0 %7560
          %7562 = vadd.xlane.f32.xlu0 %v7495
          %v7563 = vpop.xlane.xlu0 %7562
          %7564 = vadd.xlane.f32.xlu0 %v7496
          %v7565 = vpop.xlane.xlu0 %7564
          %7566 = vadd.xlane.f32.xlu0 %v7497
          %v7567 = vpop.xlane.xlu0 %7566
          %7568 = vadd.xlane.f32.xlu0 %v7498
          %v7569 = vpop.xlane.xlu0 %7568
          %7570 = vadd.xlane.f32.xlu0 %v7499
          %v7571 = vpop.xlane.xlu0 %7570
          %7572 = vadd.xlane.f32.xlu0 %v7500
          %v7573 = vpop.xlane.xlu0 %7572
          %7574 = vadd.xlane.f32.xlu0 %v7501
          %v7575 = vpop.xlane.xlu0 %7574
          %7576 = vadd.xlane.f32.xlu0 %v7502
          %v7577 = vpop.xlane.xlu0 %7576
          %7578 = vadd.xlane.f32.xlu0 %v7503
          %v7579 = vpop.xlane.xlu0 %7578
          %7580 = vadd.xlane.f32.xlu0 %v7504
          %v7581 = vpop.xlane.xlu0 %7580
          %7582 = vadd.xlane.f32.xlu0 %v7505
          %v7583 = vpop.xlane.xlu0 %7582
          %v7584 = vmul.f32 %v7537, %v808
          %v7585 = vmul.f32 %v7539, %v808
          %v7586 = vmul.f32 %v7541, %v808
          %v7587 = vmul.f32 %v7543, %v808
          %v7588 = vmul.f32 %v7545, %v808
          %v7589 = vmul.f32 %v7547, %v808
          %v7590 = vmul.f32 %v7549, %v808
          %v7591 = vmul.f32 %v7551, %v808
          %v7592 = vmul.f32 %v7553, %v808
          %v7593 = vmul.f32 %v7555, %v808
          %v7594 = vmul.f32 %v7557, %v808
          %v7595 = vmul.f32 %v7559, %v808
          %v7596 = vmul.f32 %v7561, %v808
          %v7597 = vmul.f32 %v7563, %v808
          %v7598 = vmul.f32 %v7565, %v808
          %v7599 = vmul.f32 %v7567, %v808
          %v7600 = vmul.f32 %v7569, %v808
          %v7601 = vmul.f32 %v7571, %v808
          %v7602 = vmul.f32 %v7573, %v808
          %v7603 = vmul.f32 %v7575, %v808
          %v7604 = vmul.f32 %v7577, %v808
          %v7605 = vmul.f32 %v7579, %v808
          %v7606 = vmul.f32 %v7581, %v808
          %v7607 = vmul.f32 %v7583, %v808
          %v7608 = vsub.f32 %v7482, %v7584
          %v7609 = vsub.f32 %v7483, %v7585
          %v7610 = vsub.f32 %v7484, %v7586
          %v7611 = vsub.f32 %v7485, %v7587
          %v7612 = vsub.f32 %v7486, %v7588
          %v7613 = vsub.f32 %v7487, %v7589
          %v7614 = vsub.f32 %v7488, %v7590
          %v7615 = vsub.f32 %v7489, %v7591
          %v7616 = vsub.f32 %v7490, %v7592
          %v7617 = vsub.f32 %v7491, %v7593
          %v7618 = vsub.f32 %v7492, %v7594
          %v7619 = vsub.f32 %v7493, %v7595
          %v7620 = vsub.f32 %v7494, %v7596
          %v7621 = vsub.f32 %v7495, %v7597
          %v7622 = vsub.f32 %v7496, %v7598
          %v7623 = vsub.f32 %v7497, %v7599
          %v7624 = vsub.f32 %v7498, %v7600
          %v7625 = vsub.f32 %v7499, %v7601
          %v7626 = vsub.f32 %v7500, %v7602
          %v7627 = vsub.f32 %v7501, %v7603
          %v7628 = vsub.f32 %v7502, %v7604
          %v7629 = vsub.f32 %v7503, %v7605
          %v7630 = vsub.f32 %v7504, %v7606
          %v7631 = vsub.f32 %v7505, %v7607
          %v7632 = vmul.f32 %v7608, %v7608
          %v7633 = vmul.f32 %v7609, %v7609
          %v7634 = vmul.f32 %v7610, %v7610
          %v7635 = vmul.f32 %v7611, %v7611
          %v7636 = vmul.f32 %v7612, %v7612
          %v7637 = vmul.f32 %v7613, %v7613
          %v7638 = vmul.f32 %v7614, %v7614
          %v7639 = vmul.f32 %v7615, %v7615
          %v7640 = vmul.f32 %v7616, %v7616
          %v7641 = vmul.f32 %v7617, %v7617
          %v7642 = vmul.f32 %v7618, %v7618
          %v7643 = vmul.f32 %v7619, %v7619
          %v7644 = vmul.f32 %v7620, %v7620
          %v7645 = vmul.f32 %v7621, %v7621
          %v7646 = vmul.f32 %v7622, %v7622
          %v7647 = vmul.f32 %v7623, %v7623
          %v7648 = vmul.f32 %v7624, %v7624
          %v7649 = vmul.f32 %v7625, %v7625
          %v7650 = vmul.f32 %v7626, %v7626
          %v7651 = vmul.f32 %v7627, %v7627
          %v7652 = vmul.f32 %v7628, %v7628
          %v7653 = vmul.f32 %v7629, %v7629
          %v7654 = vmul.f32 %v7630, %v7630
          %v7655 = vmul.f32 %v7631, %v7631
          %7656 = vadd.xlane.f32.xlu0 %v7632
          %v7657 = vpop.xlane.xlu0 %7656
          %7658 = vadd.xlane.f32.xlu0 %v7633
          %v7659 = vpop.xlane.xlu0 %7658
          %7660 = vadd.xlane.f32.xlu0 %v7634
          %v7661 = vpop.xlane.xlu0 %7660
          %7662 = vadd.xlane.f32.xlu0 %v7635
          %v7663 = vpop.xlane.xlu0 %7662
          %7664 = vadd.xlane.f32.xlu0 %v7636
          %v7665 = vpop.xlane.xlu0 %7664
          %7666 = vadd.xlane.f32.xlu0 %v7637
          %v7667 = vpop.xlane.xlu0 %7666
          %7668 = vadd.xlane.f32.xlu0 %v7638
          %v7669 = vpop.xlane.xlu0 %7668
          %7670 = vadd.xlane.f32.xlu0 %v7639
          %v7671 = vpop.xlane.xlu0 %7670
          %7672 = vadd.xlane.f32.xlu0 %v7640
          %v7673 = vpop.xlane.xlu0 %7672
          %7674 = vadd.xlane.f32.xlu0 %v7641
          %v7675 = vpop.xlane.xlu0 %7674
          %7676 = vadd.xlane.f32.xlu0 %v7642
          %v7677 = vpop.xlane.xlu0 %7676
          %7678 = vadd.xlane.f32.xlu0 %v7643
          %v7679 = vpop.xlane.xlu0 %7678
          %7680 = vadd.xlane.f32.xlu0 %v7644
          %v7681 = vpop.xlane.xlu0 %7680
          %7682 = vadd.xlane.f32.xlu0 %v7645
          %v7683 = vpop.xlane.xlu0 %7682
          %7684 = vadd.xlane.f32.xlu0 %v7646
          %v7685 = vpop.xlane.xlu0 %7684
          %7686 = vadd.xlane.f32.xlu0 %v7647
          %v7687 = vpop.xlane.xlu0 %7686
          %7688 = vadd.xlane.f32.xlu0 %v7648
          %v7689 = vpop.xlane.xlu0 %7688
          %7690 = vadd.xlane.f32.xlu0 %v7649
          %v7691 = vpop.xlane.xlu0 %7690
          %7692 = vadd.xlane.f32.xlu0 %v7650
          %v7693 = vpop.xlane.xlu0 %7692
          %7694 = vadd.xlane.f32.xlu0 %v7651
          %v7695 = vpop.xlane.xlu0 %7694
          %7696 = vadd.xlane.f32.xlu0 %v7652
          %v7697 = vpop.xlane.xlu0 %7696
          %7698 = vadd.xlane.f32.xlu0 %v7653
          %v7699 = vpop.xlane.xlu0 %7698
          %7700 = vadd.xlane.f32.xlu0 %v7654
          %v7701 = vpop.xlane.xlu0 %7700
          %7702 = vadd.xlane.f32.xlu0 %v7655
          %v7703 = vpop.xlane.xlu0 %7702
          %v7704 = vmul.f32 %v7657, %v808
          %v7705 = vmul.f32 %v7659, %v808
          %v7706 = vmul.f32 %v7661, %v808
          %v7707 = vmul.f32 %v7663, %v808
          %v7708 = vmul.f32 %v7665, %v808
          %v7709 = vmul.f32 %v7667, %v808
          %v7710 = vmul.f32 %v7669, %v808
          %v7711 = vmul.f32 %v7671, %v808
          %v7712 = vmul.f32 %v7673, %v808
          %v7713 = vmul.f32 %v7675, %v808
          %v7714 = vmul.f32 %v7677, %v808
          %v7715 = vmul.f32 %v7679, %v808
          %v7716 = vmul.f32 %v7681, %v808
          %v7717 = vmul.f32 %v7683, %v808
          %v7718 = vmul.f32 %v7685, %v808
          %v7719 = vmul.f32 %v7687, %v808
          %v7720 = vmul.f32 %v7689, %v808
          %v7721 = vmul.f32 %v7691, %v808
          %v7722 = vmul.f32 %v7693, %v808
          %v7723 = vmul.f32 %v7695, %v808
          %v7724 = vmul.f32 %v7697, %v808
          %v7725 = vmul.f32 %v7699, %v808
          %v7726 = vmul.f32 %v7701, %v808
          %v7727 = vmul.f32 %v7703, %v808
          %v7728 = vadd.f32 %v7704, 1e-05
          %v7729 = vadd.f32 %v7705, 1e-05
          %v7730 = vadd.f32 %v7706, 1e-05
          %v7731 = vadd.f32 %v7707, 1e-05
          %v7732 = vadd.f32 %v7708, 1e-05
          %v7733 = vadd.f32 %v7709, 1e-05
          %v7734 = vadd.f32 %v7710, 1e-05
          %v7735 = vadd.f32 %v7711, 1e-05
          %v7736 = vadd.f32 %v7712, 1e-05
          %v7737 = vadd.f32 %v7713, 1e-05
          %v7738 = vadd.f32 %v7714, 1e-05
          %v7739 = vadd.f32 %v7715, 1e-05
          %v7740 = vadd.f32 %v7716, 1e-05
          %v7741 = vadd.f32 %v7717, 1e-05
          %v7742 = vadd.f32 %v7718, 1e-05
          %v7743 = vadd.f32 %v7719, 1e-05
          %v7744 = vadd.f32 %v7720, 1e-05
          %v7745 = vadd.f32 %v7721, 1e-05
          %v7746 = vadd.f32 %v7722, 1e-05
          %v7747 = vadd.f32 %v7723, 1e-05
          %v7748 = vadd.f32 %v7724, 1e-05
          %v7749 = vadd.f32 %v7725, 1e-05
          %v7750 = vadd.f32 %v7726, 1e-05
          %v7751 = vadd.f32 %v7727, 1e-05
          %v7752 = vrsqrt.pop %v7728
          %v7753 = vrsqrt.pop %v7729
          %v7754 = vrsqrt.pop %v7730
          %v7755 = vrsqrt.pop %v7731
          %v7756 = vrsqrt.pop %v7732
          %v7757 = vrsqrt.pop %v7733
          %v7758 = vrsqrt.pop %v7734
          %v7759 = vrsqrt.pop %v7735
          %v7760 = vrsqrt.pop %v7736
          %v7761 = vrsqrt.pop %v7737
          %v7762 = vrsqrt.pop %v7738
          %v7763 = vrsqrt.pop %v7739
          %v7764 = vrsqrt.pop %v7740
          %v7765 = vrsqrt.pop %v7741
          %v7766 = vrsqrt.pop %v7742
          %v7767 = vrsqrt.pop %v7743
          %v7768 = vrsqrt.pop %v7744
          %v7769 = vrsqrt.pop %v7745
          %v7770 = vrsqrt.pop %v7746
          %v7771 = vrsqrt.pop %v7747
          %v7772 = vrsqrt.pop %v7748
          %v7773 = vrsqrt.pop %v7749
          %v7774 = vrsqrt.pop %v7750
          %v7775 = vrsqrt.pop %v7751
          %v7776 = vmul.f32 %v7608, %v7752
          %v7777 = vmul.f32 %v7609, %v7753
          %v7778 = vmul.f32 %v7610, %v7754
          %v7779 = vmul.f32 %v7611, %v7755
          %v7780 = vmul.f32 %v7612, %v7756
          %v7781 = vmul.f32 %v7613, %v7757
          %v7782 = vmul.f32 %v7614, %v7758
          %v7783 = vmul.f32 %v7615, %v7759
          %v7784 = vmul.f32 %v7616, %v7760
          %v7785 = vmul.f32 %v7617, %v7761
          %v7786 = vmul.f32 %v7618, %v7762
          %v7787 = vmul.f32 %v7619, %v7763
          %v7788 = vmul.f32 %v7620, %v7764
          %v7789 = vmul.f32 %v7621, %v7765
          %v7790 = vmul.f32 %v7622, %v7766
          %v7791 = vmul.f32 %v7623, %v7767
          %v7792 = vmul.f32 %v7624, %v7768
          %v7793 = vmul.f32 %v7625, %v7769
          %v7794 = vmul.f32 %v7626, %v7770
          %v7795 = vmul.f32 %v7627, %v7771
          %v7796 = vmul.f32 %v7628, %v7772
          %v7797 = vmul.f32 %v7629, %v7773
          %v7798 = vmul.f32 %v7630, %v7774
          %v7799 = vmul.f32 %v7631, %v7775
          %v7801 = vlaneseq
          %v7802 = vshrl.u32 %v7801, 7
          %v7803 = vsub.s32 0, %v7802
          %v7804 = vrot.slane %v7534, %v7803
          %v7806 = vmul.f32 %v7776, %v7804
          %v7807 = vmul.f32 %v7777, %v7804
          %v7808 = vmul.f32 %v7778, %v7804
          %v7809 = vmul.f32 %v7779, %v7804
          %v7810 = vmul.f32 %v7780, %v7804
          %v7811 = vmul.f32 %v7781, %v7804
          %v7812 = vmul.f32 %v7782, %v7804
          %v7813 = vmul.f32 %v7783, %v7804
          %v7814 = vmul.f32 %v7784, %v7804
          %v7815 = vmul.f32 %v7785, %v7804
          %v7816 = vmul.f32 %v7786, %v7804
          %v7817 = vmul.f32 %v7787, %v7804
          %v7818 = vmul.f32 %v7788, %v7804
          %v7819 = vmul.f32 %v7789, %v7804
          %v7820 = vmul.f32 %v7790, %v7804
          %v7821 = vmul.f32 %v7791, %v7804
          %v7822 = vmul.f32 %v7792, %v7804
          %v7823 = vmul.f32 %v7793, %v7804
          %v7824 = vmul.f32 %v7794, %v7804
          %v7825 = vmul.f32 %v7795, %v7804
          %v7826 = vmul.f32 %v7796, %v7804
          %v7827 = vmul.f32 %v7797, %v7804
          %v7828 = vmul.f32 %v7798, %v7804
          %v7829 = vmul.f32 %v7799, %v7804
          %v7831 = vlaneseq
          %v7832 = vshrl.u32 %v7831, 7
          %v7833 = vsub.s32 0, %v7832
          %v7834 = vrot.slane %v7535, %v7833
          %v7836 = vadd.f32 %v7806, %v7834
          %v7837 = vadd.f32 %v7807, %v7834
          %v7838 = vadd.f32 %v7808, %v7834
          %v7839 = vadd.f32 %v7809, %v7834
          %v7840 = vadd.f32 %v7810, %v7834
          %v7841 = vadd.f32 %v7811, %v7834
          %v7842 = vadd.f32 %v7812, %v7834
          %v7843 = vadd.f32 %v7813, %v7834
          %v7844 = vadd.f32 %v7814, %v7834
          %v7845 = vadd.f32 %v7815, %v7834
          %v7846 = vadd.f32 %v7816, %v7834
          %v7847 = vadd.f32 %v7817, %v7834
          %v7848 = vadd.f32 %v7818, %v7834
          %v7849 = vadd.f32 %v7819, %v7834
          %v7850 = vadd.f32 %v7820, %v7834
          %v7851 = vadd.f32 %v7821, %v7834
          %v7852 = vadd.f32 %v7822, %v7834
          %v7853 = vadd.f32 %v7823, %v7834
          %v7854 = vadd.f32 %v7824, %v7834
          %v7855 = vadd.f32 %v7825, %v7834
          %v7856 = vadd.f32 %v7826, %v7834
          %v7857 = vadd.f32 %v7827, %v7834
          %v7858 = vadd.f32 %v7828, %v7834
          %v7859 = vadd.f32 %v7829, %v7834
          %7860 = vst [vmem:[%s679] sm:$0xff] %v7836
          %7861 = vst [vmem:[%s679 + $0x8] sm:$0xff] %v7837
          %7862 = vst [vmem:[%s679 + $0x10] sm:$0xff] %v7838
          %7863 = vst [vmem:[%s679 + $0x18] sm:$0xff] %v7839
          %7864 = vst [vmem:[%s679 + $0x20] sm:$0xff] %v7840
          %7865 = vst [vmem:[%s679 + $0x28] sm:$0xff] %v7841
          %7866 = vst [vmem:[%s679 + $0x30] sm:$0xff] %v7842
          %7867 = vst [vmem:[%s679 + $0x38] sm:$0xff] %v7843
          %7868 = vst [vmem:[%s679 + $0x40] sm:$0xff] %v7844
          %7869 = vst [vmem:[%s679 + $0x48] sm:$0xff] %v7845
          %7870 = vst [vmem:[%s679 + $0x50] sm:$0xff] %v7846
          %7871 = vst [vmem:[%s679 + $0x58] sm:$0xff] %v7847
          %7872 = vst [vmem:[%s679 + $0x60] sm:$0xff] %v7848
          %7873 = vst [vmem:[%s679 + $0x68] sm:$0xff] %v7849
          %7874 = vst [vmem:[%s679 + $0x70] sm:$0xff] %v7850
          %7875 = vst [vmem:[%s679 + $0x78] sm:$0xff] %v7851
          %7876 = vst [vmem:[%s679 + $0x80] sm:$0xff] %v7852
          %7877 = vst [vmem:[%s679 + $0x88] sm:$0xff] %v7853
          %7878 = vst [vmem:[%s679 + $0x90] sm:$0xff] %v7854
          %7879 = vst [vmem:[%s679 + $0x98] sm:$0xff] %v7855
          %7880 = vst [vmem:[%s679 + $0xa0] sm:$0xff] %v7856
          %7881 = vst [vmem:[%s679 + $0xa8] sm:$0xff] %v7857
          %7882 = vst [vmem:[%s679 + $0xb0] sm:$0xff] %v7858
          %7883 = vst [vmem:[%s679 + $0xb8] sm:$0xff] %v7859
        $region92: #{cct_forward.4} parent=71 // pred_fallthru
          _
        %s7884 = smul.u32 24, %s34
        %p7885 = scmp.lt.s32.totalorder %s7884, 23
        %s7886 = scalar_select %p7885, %s7884, 23
        %s7887 = smul.addr %s7886, 8
        %s7888 = scalar_lea.vmem %s13, %s7887
        // Predicated region
        $region93: #{cct_forward.4} parent=71 // pred_check
          %p7889 = pneg %p388
        $region94: #{cct_forward.4} parent=71 // pred_check_branch
          %7891 = sbr.rel (%p7889) target = $region96
        $region95: #{cct_forward.4} parent=71 // pred_region
          %s7892 = smul.u32 24, %s34
        $region96: #{cct_forward.4} parent=71 // pred_fallthru
          _
        // Predicated region
        $region97: #{cct_forward.4} parent=71 // pred_check
          %p7893 = pneg %p388
        $region98: #{cct_forward.4} parent=71 // pred_check_branch
          %7895 = sbr.rel (%p7893) target = $region100
        $region99: #{cct_forward.4} parent=71 // pred_region
          %s7896 = smul.u32 24, %s34
          %p7897 = scmp.lt.s32.totalorder %s7896, 23
          %s7898 = scalar_select %p7897, %s7896, 23
          %s7899 = smul.addr %s7898, 8
          %s7900 = scalar_lea.vmem %s13, %s7899
        $region100: #{cct_forward.4} parent=71 // pred_fallthru
          _
      $region72: #{cct_forward.4} parent=5 // pred_fallthru
        _
      %p7901 = scmp.le.s32.totalorder 2, %s25
      // Predicated region
      $region101: #{cct_forward.4} parent=5 // pred_check
        %p7902 = pneg %p7901
      $region102: #{cct_forward.4} parent=5 // pred_check_branch
        %7904 = sbr.rel (%p7902) target = $region104
      $region103: #{cct_forward.4} parent=5 // pred_region
        %s7905 = ssub.s32 %s25, 2
      $region104: #{cct_forward.4} parent=5 // pred_fallthru
        _
    $region6: #{cct_forward.4} parent=1 // loop_footer
      %s29 = sadd.s32 1, %s25
    $region7: #{cct_forward.4} parent=1 // loop_footer_branch
      %24 = sbr.rel target = $region3
    $region8: #{cct_forward.4} parent=1 // loop_exit
      _
    %7906 = vsyncpa [#allocation4], 1
    %s7907 = scalar_lea.sflag [#allocation4], 1
    %7908 = vsyncpa %s7907, 1
    %7909 = vsyncpa [#allocation6], 1
    %s7910 = scalar_lea.sflag [#allocation6], 1
    %7911 = vsyncpa %s7910, 1

</llo_original>
